<compile_context>
chip_gen: v7x
topology: tpu7x:2x2x1
jax: 0.10.0
libtpu: 0.0.40
codegen_flags: <defaults>
</compile_context>

<pallas_src>
import functools

import jax
import jax.numpy as jnp
import numpy as np
from jax.experimental import pallas as pl
from jax.experimental.pallas import tpu as pltpu

EPS = 1e-5


def _conv_accumulate(x_ref, w_ref, acc_ref, H, W):
    """3x3 'same' conv as 9 MXU taps, accumulated into a VMEM-resident block.

    x_ref:   (1, H+2, W+2, Cin)  halo-padded NHWC input (one image)
    w_ref:   (3, 3, Cin, CPAD)   conv weights HWIO, Cout zero-padded to CPAD
    acc_ref: (1, H, W, CPAD)     f32 accumulator block (scratch or output block)
    """
    first = True
    for kh in range(3):
        for kw in range(3):
            patch = x_ref[:, kh:kh + H, kw:kw + W, :]            # (1, H, W, Cin)
            contrib = jax.lax.dot_general(                       # MXU, K=Cin, N=CPAD
                patch, w_ref[kh, kw],
                dimension_numbers=(((3,), (0,)), ((), ())),
                preferred_element_type=jnp.float32)              # (1, H, W, CPAD)
            if first:
                acc_ref[...] = contrib
                first = False
            else:
                acc_ref[...] += contrib


def _conv_stats_kernel(x_ref, w_ref, sum_ref, ssq_ref, acc_ref, *, H, W, CPAD):
    # Pass 1: conv into VMEM scratch, emit per-image channel sum / sum-of-squares.
    _conv_accumulate(x_ref, w_ref, acc_ref, H, W)
    acc2d = acc_ref[...].reshape(H * W, CPAD)                    # layout-preserving collapse
    sum_ref[...] = jnp.sum(acc2d, axis=0).reshape(1, 1, CPAD)
    ssq_ref[...] = jnp.sum(acc2d * acc2d, axis=0).reshape(1, 1, CPAD)


def _conv_bn_relu_kernel(x_ref, w_ref, sum_ref, ssq_ref, gamma_ref, beta_ref,
                         out_ref, *, H, W, CPAD, count):
    # Pass 2: fold BN (training-mode batch stats) into one per-channel scale/shift,
    # recompute the conv into the output block, apply FMA + ReLU, lane-dense stores.
    s = jnp.sum(sum_ref[...], axis=0)                            # (1, CPAD)
    ss = jnp.sum(ssq_ref[...], axis=0)                           # (1, CPAD)
    inv_n = 1.0 / count
    mean = s * inv_n
    var = jnp.maximum(ss * inv_n - mean * mean, 0.0)             # biased variance (PyTorch BN)
    inv_std = jax.lax.rsqrt(var + EPS)
    scale = gamma_ref[...] * inv_std                             # (1, CPAD)
    shift = beta_ref[...] - mean * scale

    _conv_accumulate(x_ref, w_ref, out_ref, H, W)
    y = out_ref[...] * scale.reshape(1, 1, 1, CPAD) + shift.reshape(1, 1, 1, CPAD)
    out_ref[...] = jnp.maximum(y, 0.0).astype(out_ref.dtype)


def block_forward(x_nchw, w_oihw, b, gamma, beta, *, compute_dtype=jnp.float32):
    """Fused Conv3x3(same) + BatchNorm2d(train) + ReLU.  Input/output NCHW."""
    N, Cin, H, W = x_nchw.shape
    Cout = w_oihw.shape[0]
    CPAD = max(128, ((Cout + 127) // 128) * 128)   # lane-dense channel padding
    count = float(N * H * W)

    # ---- wrapper glue (layout only) ------------------------------------
    # NCHW -> NHWC so channels sit on the 128-wide lane axis, + 1-px halo pad.
    x_nhwc = jnp.transpose(x_nchw, (0, 2, 3, 1)).astype(compute_dtype)
    xp = jnp.pad(x_nhwc, ((0, 0), (1, 1), (1, 1), (0, 0)))
    # OIHW -> HWIO, Cout zero-padded to CPAD so MXU output / stores are lane-dense.
    w_hwio = jnp.transpose(w_oihw, (2, 3, 1, 0)).astype(compute_dtype)
    w_p = jnp.pad(w_hwio, ((0, 0), (0, 0), (0, 0), (0, CPAD - Cout)))
    g_p = jnp.pad(gamma.reshape(1, Cout).astype(jnp.float32), ((0, 0), (0, CPAD - Cout)))
    b_p = jnp.pad(beta.reshape(1, Cout).astype(jnp.float32), ((0, 0), (0, CPAD - Cout)))
    # Conv bias is intentionally unused: a per-channel constant added before
    # training-mode BatchNorm cancels exactly in (x - mean) and leaves the
    # batch variance unchanged.
    del b

    cparams = pltpu.CompilerParams(
        dimension_semantics=("parallel",),          # megacore: split batch across TCs
        vmem_limit_bytes=32 * 1024 * 1024,
    )

    # ---- pass 1: conv (9 MXU taps) + per-image channel sum / sumsq ------
    # Only the tiny statistics go back to HBM; the conv stays in VMEM scratch.
    psum, pssq = pl.pallas_call(
        functools.partial(_conv_stats_kernel, H=H, W=W, CPAD=CPAD),
        grid=(N,),
        in_specs=[
            pl.BlockSpec((1, H + 2, W + 2, Cin), lambda n: (n, 0, 0, 0)),
            pl.BlockSpec((3, 3, Cin, CPAD), lambda n: (0, 0, 0, 0)),
        ],
        out_specs=(
            pl.BlockSpec((1, 1, CPAD), lambda n: (n, 0, 0)),
            pl.BlockSpec((1, 1, CPAD), lambda n: (n, 0, 0)),
        ),
        out_shape=(
            jax.ShapeDtypeStruct((N, 1, CPAD), jnp.float32),
            jax.ShapeDtypeStruct((N, 1, CPAD), jnp.float32),
        ),
        scratch_shapes=[pltpu.VMEM((1, H, W, CPAD), jnp.float32)],
        compiler_params=cparams,
    )(xp, w_p)

    # ---- pass 2: reduce stats, recompute conv, folded BN FMA + ReLU ------
    out_pad = pl.pallas_call(
        functools.partial(_conv_bn_relu_kernel, H=H, W=W, CPAD=CPAD, count=count),
        grid=(N,),
        in_specs=[
            pl.BlockSpec((1, H + 2, W + 2, Cin), lambda n: (n, 0, 0, 0)),
            pl.BlockSpec((3, 3, Cin, CPAD), lambda n: (0, 0, 0, 0)),
            pl.BlockSpec((N, 1, CPAD), lambda n: (0, 0, 0)),
            pl.BlockSpec((N, 1, CPAD), lambda n: (0, 0, 0)),
            pl.BlockSpec((1, CPAD), lambda n: (0, 0)),
            pl.BlockSpec((1, CPAD), lambda n: (0, 0)),
        ],
        out_specs=pl.BlockSpec((1, H, W, CPAD), lambda n: (n, 0, 0, 0)),
        out_shape=jax.ShapeDtypeStruct((N, H, W, CPAD), jnp.float32),
        compiler_params=cparams,
    )(xp, w_p, psum, pssq, g_p, b_p)

    # back to the module's NCHW convention; drop the lane padding.
    return jnp.transpose(out_pad[..., :Cout], (0, 3, 1, 2))


def _reference(x_nchw, w_oihw, b, gamma, beta):
    """Pure-JAX reference matching PyTorch semantics (training-mode BN)."""
    y = jax.lax.conv_general_dilated(
        x_nchw.astype(jnp.float32), w_oihw.astype(jnp.float32),
        window_strides=(1, 1), padding="SAME",
        dimension_numbers=("NCHW", "OIHW", "NCHW"),
    ) + b.reshape(1, -1, 1, 1)
    mean = y.mean(axis=(0, 2, 3), keepdims=True)
    var = y.var(axis=(0, 2, 3), keepdims=True)  # biased, like PyTorch BN normalization
    yn = (y - mean) / jnp.sqrt(var + EPS)
    yn = yn * gamma.reshape(1, -1, 1, 1) + beta.reshape(1, -1, 1, 1)
    return jnp.maximum(yn, 0.0)


if __name__ == "__main__":
    key = jax.random.PRNGKey(0)
    k_x, k_w, k_b, k_g, k_be = jax.random.split(key, 5)

    N, Cin, Cout, H, W = 2, 4, 8, 16, 16

    x = jax.random.normal(k_x, (N, Cin, H, W), dtype=jnp.float32)
    # Conv2d(in_ch, out_ch, 3): weight (out_ch, in_ch, 3, 3), bias (out_ch,)
    fan_in = Cin * 3 * 3
    bound = 1.0 / np.sqrt(fan_in)
    w = jax.random.uniform(k_w, (Cout, Cin, 3, 3), minval=-bound, maxval=bound, dtype=jnp.float32)
    b = jax.random.uniform(k_b, (Cout,), minval=-bound, maxval=bound, dtype=jnp.float32)
    # BatchNorm2d(out_ch): weight (gamma), bias (beta)
    gamma = 1.0 + 0.1 * jax.random.normal(k_g, (Cout,), dtype=jnp.float32)
    beta = 0.1 * jax.random.normal(k_be, (Cout,), dtype=jnp.float32)

    fwd = jax.jit(block_forward)
    out = jax.block_until_ready(fwd(x, w, b, gamma, beta))

    ref = jax.block_until_ready(_reference(x, w, b, gamma, beta))
    assert out.shape == (N, Cout, H, W), out.shape
    np.testing.assert_allclose(np.asarray(out), np.asarray(ref), rtol=1e-4, atol=1e-4)

    print("KERNEL_OK")
</pallas_src>

<mosaic_0001>
module attributes {stable_mosaic.version = 11 : i64} {
  func.func @_conv_stats_kernel(%arg0: i32, %arg1: memref<1x18x18x4xf32, #tpu.memory_space<vmem>>, %arg2: memref<3x3x4x128xf32, #tpu.memory_space<vmem>>, %arg3: memref<1x1x128xf32, #tpu.memory_space<vmem>>, %arg4: memref<1x1x128xf32, #tpu.memory_space<vmem>>, %arg5: memref<1x16x16x128xf32, #tpu.memory_space<vmem>>) attributes {dimension_semantics = [#tpu.dimension_semantics<parallel>], iteration_bounds = array<i64: 2>, scalar_prefetch = 0 : i64, scratch_operands = 1 : i64, tpu.core_type = #tpu.core_type<tc>, window_params = [{transform_indices = @transform_0, window_bounds = array<i64: 1, 18, 18, 4>}, {pipeline_mode = #tpu.pipeline_mode<synchronous>, transform_indices = @transform_1, window_bounds = array<i64: 3, 3, 4, 128>}, {transform_indices = @transform_2, window_bounds = array<i64: 1, 1, 128>}, {transform_indices = @transform_3, window_bounds = array<i64: 1, 1, 128>}]} {
    %c0 = arith.constant 0 : index
    %c0_0 = arith.constant 0 : index
    %c0_1 = arith.constant 0 : index
    %c0_2 = arith.constant 0 : index
    %0 = vector.load %arg1[%c0, %c0_0, %c0_1, %c0_2] : memref<1x18x18x4xf32, #tpu.memory_space<vmem>>, vector<1x16x16x4xf32>
    %c0_3 = arith.constant 0 : index
    %c0_4 = arith.constant 0 : index
    %c0_5 = arith.constant 0 : index
    %c0_6 = arith.constant 0 : index
    %1 = vector.load %arg2[%c0_3, %c0_4, %c0_5, %c0_6] : memref<3x3x4x128xf32, #tpu.memory_space<vmem>>, vector<1x1x4x128xf32>
    %2 = vector.shape_cast %1 : vector<1x1x4x128xf32> to vector<4x128xf32>
    %cst = arith.constant dense<0.000000e+00> : vector<1x16x16x128xf32>
    %3 = tpu.matmul %0, %2, %cst {dimension_numbers = #tpu.dot_dimension_numbers<[3], [0], [0, 1, 2], [1], [0, 0, 0, 1, 0, 2, 1, 1], [], []>} : vector<1x16x16x4xf32>, vector<4x128xf32>, vector<1x16x16x128xf32> -> vector<1x16x16x128xf32>
    %c0_7 = arith.constant 0 : index
    %c0_8 = arith.constant 0 : index
    %c0_9 = arith.constant 0 : index
    %c0_10 = arith.constant 0 : index
    %4 = vector.load %arg5[%c0_7, %c0_8, %c0_9, %c0_10] : memref<1x16x16x128xf32, #tpu.memory_space<vmem>>, vector<1x16x16x128xf32>
    tpu.vector_store %arg5[%c0_7, %c0_8, %c0_9, %c0_10], %3 {strides = array<i32>} : memref<1x16x16x128xf32, #tpu.memory_space<vmem>>, vector<1x16x16x128xf32>,
    %c0_11 = arith.constant 0 : index
    %c0_12 = arith.constant 0 : index
    %c1 = arith.constant 1 : index
    %c0_13 = arith.constant 0 : index
    %5 = vector.load %arg1[%c0_11, %c0_12, %c1, %c0_13] : memref<1x18x18x4xf32, #tpu.memory_space<vmem>>, vector<1x16x16x4xf32>
    %c0_14 = arith.constant 0 : index
    %c1_15 = arith.constant 1 : index
    %c0_16 = arith.constant 0 : index
    %c0_17 = arith.constant 0 : index
    %6 = vector.load %arg2[%c0_14, %c1_15, %c0_16, %c0_17] : memref<3x3x4x128xf32, #tpu.memory_space<vmem>>, vector<1x1x4x128xf32>
    %7 = vector.shape_cast %6 : vector<1x1x4x128xf32> to vector<4x128xf32>
    %cst_18 = arith.constant dense<0.000000e+00> : vector<1x16x16x128xf32>
    %8 = tpu.matmul %5, %7, %cst_18 {dimension_numbers = #tpu.dot_dimension_numbers<[3], [0], [0, 1, 2], [1], [0, 0, 0, 1, 0, 2, 1, 1], [], []>} : vector<1x16x16x4xf32>, vector<4x128xf32>, vector<1x16x16x128xf32> -> vector<1x16x16x128xf32>
    %c0_19 = arith.constant 0 : index
    %c0_20 = arith.constant 0 : index
    %c0_21 = arith.constant 0 : index
    %c0_22 = arith.constant 0 : index
    %9 = vector.load %arg5[%c0_19, %c0_20, %c0_21, %c0_22] : memref<1x16x16x128xf32, #tpu.memory_space<vmem>>, vector<1x16x16x128xf32>
    %10 = arith.addf %9, %8 : vector<1x16x16x128xf32>
    %c0_23 = arith.constant 0 : index
    %c0_24 = arith.constant 0 : index
    %c0_25 = arith.constant 0 : index
    %c0_26 = arith.constant 0 : index
    %11 = vector.load %arg5[%c0_23, %c0_24, %c0_25, %c0_26] : memref<1x16x16x128xf32, #tpu.memory_space<vmem>>, vector<1x16x16x128xf32>
    tpu.vector_store %arg5[%c0_23, %c0_24, %c0_25, %c0_26], %10 {strides = array<i32>} : memref<1x16x16x128xf32, #tpu.memory_space<vmem>>, vector<1x16x16x128xf32>,
    %c0_27 = arith.constant 0 : index
    %c0_28 = arith.constant 0 : index
    %c2 = arith.constant 2 : index
    %c0_29 = arith.constant 0 : index
    %12 = vector.load %arg1[%c0_27, %c0_28, %c2, %c0_29] : memref<1x18x18x4xf32, #tpu.memory_space<vmem>>, vector<1x16x16x4xf32>
    %c0_30 = arith.constant 0 : index
    %c2_31 = arith.constant 2 : index
    %c0_32 = arith.constant 0 : index
    %c0_33 = arith.constant 0 : index
    %13 = vector.load %arg2[%c0_30, %c2_31, %c0_32, %c0_33] : memref<3x3x4x128xf32, #tpu.memory_space<vmem>>, vector<1x1x4x128xf32>
    %14 = vector.shape_cast %13 : vector<1x1x4x128xf32> to vector<4x128xf32>
    %cst_34 = arith.constant dense<0.000000e+00> : vector<1x16x16x128xf32>
    %15 = tpu.matmul %12, %14, %cst_34 {dimension_numbers = #tpu.dot_dimension_numbers<[3], [0], [0, 1, 2], [1], [0, 0, 0, 1, 0, 2, 1, 1], [], []>} : vector<1x16x16x4xf32>, vector<4x128xf32>, vector<1x16x16x128xf32> -> vector<1x16x16x128xf32>
    %c0_35 = arith.constant 0 : index
    %c0_36 = arith.constant 0 : index
    %c0_37 = arith.constant 0 : index
    %c0_38 = arith.constant 0 : index
    %16 = vector.load %arg5[%c0_35, %c0_36, %c0_37, %c0_38] : memref<1x16x16x128xf32, #tpu.memory_space<vmem>>, vector<1x16x16x128xf32>
    %17 = arith.addf %16, %15 : vector<1x16x16x128xf32>
    %c0_39 = arith.constant 0 : index
    %c0_40 = arith.constant 0 : index
    %c0_41 = arith.constant 0 : index
    %c0_42 = arith.constant 0 : index
    %18 = vector.load %arg5[%c0_39, %c0_40, %c0_41, %c0_42] : memref<1x16x16x128xf32, #tpu.memory_space<vmem>>, vector<1x16x16x128xf32>
    tpu.vector_store %arg5[%c0_39, %c0_40, %c0_41, %c0_42], %17 {strides = array<i32>} : memref<1x16x16x128xf32, #tpu.memory_space<vmem>>, vector<1x16x16x128xf32>,
    %c0_43 = arith.constant 0 : index
    %c1_44 = arith.constant 1 : index
    %c0_45 = arith.constant 0 : index
    %c0_46 = arith.constant 0 : index
    %19 = vector.load %arg1[%c0_43, %c1_44, %c0_45, %c0_46] : memref<1x18x18x4xf32, #tpu.memory_space<vmem>>, vector<1x16x16x4xf32>
    %c1_47 = arith.constant 1 : index
    %c0_48 = arith.constant 0 : index
    %c0_49 = arith.constant 0 : index
    %c0_50 = arith.constant 0 : index
    %20 = vector.load %arg2[%c1_47, %c0_48, %c0_49, %c0_50] : memref<3x3x4x128xf32, #tpu.memory_space<vmem>>, vector<1x1x4x128xf32>
    %21 = vector.shape_cast %20 : vector<1x1x4x128xf32> to vector<4x128xf32>
    %cst_51 = arith.constant dense<0.000000e+00> : vector<1x16x16x128xf32>
    %22 = tpu.matmul %19, %21, %cst_51 {dimension_numbers = #tpu.dot_dimension_numbers<[3], [0], [0, 1, 2], [1], [0, 0, 0, 1, 0, 2, 1, 1], [], []>} : vector<1x16x16x4xf32>, vector<4x128xf32>, vector<1x16x16x128xf32> -> vector<1x16x16x128xf32>
    %c0_52 = arith.constant 0 : index
    %c0_53 = arith.constant 0 : index
    %c0_54 = arith.constant 0 : index
    %c0_55 = arith.constant 0 : index
    %23 = vector.load %arg5[%c0_52, %c0_53, %c0_54, %c0_55] : memref<1x16x16x128xf32, #tpu.memory_space<vmem>>, vector<1x16x16x128xf32>
    %24 = arith.addf %23, %22 : vector<1x16x16x128xf32>
    %c0_56 = arith.constant 0 : index
    %c0_57 = arith.constant 0 : index
    %c0_58 = arith.constant 0 : index
    %c0_59 = arith.constant 0 : index
    %25 = vector.load %arg5[%c0_56, %c0_57, %c0_58, %c0_59] : memref<1x16x16x128xf32, #tpu.memory_space<vmem>>, vector<1x16x16x128xf32>
    tpu.vector_store %arg5[%c0_56, %c0_57, %c0_58, %c0_59], %24 {strides = array<i32>} : memref<1x16x16x128xf32, #tpu.memory_space<vmem>>, vector<1x16x16x128xf32>,
    %c0_60 = arith.constant 0 : index
    %c1_61 = arith.constant 1 : index
    %c1_62 = arith.constant 1 : index
    %c0_63 = arith.constant 0 : index
    %26 = vector.load %arg1[%c0_60, %c1_61, %c1_62, %c0_63] : memref<1x18x18x4xf32, #tpu.memory_space<vmem>>, vector<1x16x16x4xf32>
    %c1_64 = arith.constant 1 : index
    %c1_65 = arith.constant 1 : index
    %c0_66 = arith.constant 0 : index
    %c0_67 = arith.constant 0 : index
    %27 = vector.load %arg2[%c1_64, %c1_65, %c0_66, %c0_67] : memref<3x3x4x128xf32, #tpu.memory_space<vmem>>, vector<1x1x4x128xf32>
    %28 = vector.shape_cast %27 : vector<1x1x4x128xf32> to vector<4x128xf32>
    %cst_68 = arith.constant dense<0.000000e+00> : vector<1x16x16x128xf32>
    %29 = tpu.matmul %26, %28, %cst_68 {dimension_numbers = #tpu.dot_dimension_numbers<[3], [0], [0, 1, 2], [1], [0, 0, 0, 1, 0, 2, 1, 1], [], []>} : vector<1x16x16x4xf32>, vector<4x128xf32>, vector<1x16x16x128xf32> -> vector<1x16x16x128xf32>
    %c0_69 = arith.constant 0 : index
    %c0_70 = arith.constant 0 : index
    %c0_71 = arith.constant 0 : index
    %c0_72 = arith.constant 0 : index
    %30 = vector.load %arg5[%c0_69, %c0_70, %c0_71, %c0_72] : memref<1x16x16x128xf32, #tpu.memory_space<vmem>>, vector<1x16x16x128xf32>
    %31 = arith.addf %30, %29 : vector<1x16x16x128xf32>
    %c0_73 = arith.constant 0 : index
    %c0_74 = arith.constant 0 : index
    %c0_75 = arith.constant 0 : index
    %c0_76 = arith.constant 0 : index
    %32 = vector.load %arg5[%c0_73, %c0_74, %c0_75, %c0_76] : memref<1x16x16x128xf32, #tpu.memory_space<vmem>>, vector<1x16x16x128xf32>
    tpu.vector_store %arg5[%c0_73, %c0_74, %c0_75, %c0_76], %31 {strides = array<i32>} : memref<1x16x16x128xf32, #tpu.memory_space<vmem>>, vector<1x16x16x128xf32>,
    %c0_77 = arith.constant 0 : index
    %c1_78 = arith.constant 1 : index
    %c2_79 = arith.constant 2 : index
    %c0_80 = arith.constant 0 : index
    %33 = vector.load %arg1[%c0_77, %c1_78, %c2_79, %c0_80] : memref<1x18x18x4xf32, #tpu.memory_space<vmem>>, vector<1x16x16x4xf32>
    %c1_81 = arith.constant 1 : index
    %c2_82 = arith.constant 2 : index
    %c0_83 = arith.constant 0 : index
    %c0_84 = arith.constant 0 : index
    %34 = vector.load %arg2[%c1_81, %c2_82, %c0_83, %c0_84] : memref<3x3x4x128xf32, #tpu.memory_space<vmem>>, vector<1x1x4x128xf32>
    %35 = vector.shape_cast %34 : vector<1x1x4x128xf32> to vector<4x128xf32>
    %cst_85 = arith.constant dense<0.000000e+00> : vector<1x16x16x128xf32>
    %36 = tpu.matmul %33, %35, %cst_85 {dimension_numbers = #tpu.dot_dimension_numbers<[3], [0], [0, 1, 2], [1], [0, 0, 0, 1, 0, 2, 1, 1], [], []>} : vector<1x16x16x4xf32>, vector<4x128xf32>, vector<1x16x16x128xf32> -> vector<1x16x16x128xf32>
    %c0_86 = arith.constant 0 : index
    %c0_87 = arith.constant 0 : index
    %c0_88 = arith.constant 0 : index
    %c0_89 = arith.constant 0 : index
    %37 = vector.load %arg5[%c0_86, %c0_87, %c0_88, %c0_89] : memref<1x16x16x128xf32, #tpu.memory_space<vmem>>, vector<1x16x16x128xf32>
    %38 = arith.addf %37, %36 : vector<1x16x16x128xf32>
    %c0_90 = arith.constant 0 : index
    %c0_91 = arith.constant 0 : index
    %c0_92 = arith.constant 0 : index
    %c0_93 = arith.constant 0 : index
    %39 = vector.load %arg5[%c0_90, %c0_91, %c0_92, %c0_93] : memref<1x16x16x128xf32, #tpu.memory_space<vmem>>, vector<1x16x16x128xf32>
    tpu.vector_store %arg5[%c0_90, %c0_91, %c0_92, %c0_93], %38 {strides = array<i32>} : memref<1x16x16x128xf32, #tpu.memory_space<vmem>>, vector<1x16x16x128xf32>,
    %c0_94 = arith.constant 0 : index
    %c2_95 = arith.constant 2 : index
    %c0_96 = arith.constant 0 : index
    %c0_97 = arith.constant 0 : index
    %40 = vector.load %arg1[%c0_94, %c2_95, %c0_96, %c0_97] : memref<1x18x18x4xf32, #tpu.memory_space<vmem>>, vector<1x16x16x4xf32>
    %c2_98 = arith.constant 2 : index
    %c0_99 = arith.constant 0 : index
    %c0_100 = arith.constant 0 : index
    %c0_101 = arith.constant 0 : index
    %41 = vector.load %arg2[%c2_98, %c0_99, %c0_100, %c0_101] : memref<3x3x4x128xf32, #tpu.memory_space<vmem>>, vector<1x1x4x128xf32>
    %42 = vector.shape_cast %41 : vector<1x1x4x128xf32> to vector<4x128xf32>
    %cst_102 = arith.constant dense<0.000000e+00> : vector<1x16x16x128xf32>
    %43 = tpu.matmul %40, %42, %cst_102 {dimension_numbers = #tpu.dot_dimension_numbers<[3], [0], [0, 1, 2], [1], [0, 0, 0, 1, 0, 2, 1, 1], [], []>} : vector<1x16x16x4xf32>, vector<4x128xf32>, vector<1x16x16x128xf32> -> vector<1x16x16x128xf32>
    %c0_103 = arith.constant 0 : index
    %c0_104 = arith.constant 0 : index
    %c0_105 = arith.constant 0 : index
    %c0_106 = arith.constant 0 : index
    %44 = vector.load %arg5[%c0_103, %c0_104, %c0_105, %c0_106] : memref<1x16x16x128xf32, #tpu.memory_space<vmem>>, vector<1x16x16x128xf32>
    %45 = arith.addf %44, %43 : vector<1x16x16x128xf32>
    %c0_107 = arith.constant 0 : index
    %c0_108 = arith.constant 0 : index
    %c0_109 = arith.constant 0 : index
    %c0_110 = arith.constant 0 : index
    %46 = vector.load %arg5[%c0_107, %c0_108, %c0_109, %c0_110] : memref<1x16x16x128xf32, #tpu.memory_space<vmem>>, vector<1x16x16x128xf32>
    tpu.vector_store %arg5[%c0_107, %c0_108, %c0_109, %c0_110], %45 {strides = array<i32>} : memref<1x16x16x128xf32, #tpu.memory_space<vmem>>, vector<1x16x16x128xf32>,
    %c0_111 = arith.constant 0 : index
    %c2_112 = arith.constant 2 : index
    %c1_113 = arith.constant 1 : index
    %c0_114 = arith.constant 0 : index
    %47 = vector.load %arg1[%c0_111, %c2_112, %c1_113, %c0_114] : memref<1x18x18x4xf32, #tpu.memory_space<vmem>>, vector<1x16x16x4xf32>
    %c2_115 = arith.constant 2 : index
    %c1_116 = arith.constant 1 : index
    %c0_117 = arith.constant 0 : index
    %c0_118 = arith.constant 0 : index
    %48 = vector.load %arg2[%c2_115, %c1_116, %c0_117, %c0_118] : memref<3x3x4x128xf32, #tpu.memory_space<vmem>>, vector<1x1x4x128xf32>
    %49 = vector.shape_cast %48 : vector<1x1x4x128xf32> to vector<4x128xf32>
    %cst_119 = arith.constant dense<0.000000e+00> : vector<1x16x16x128xf32>
    %50 = tpu.matmul %47, %49, %cst_119 {dimension_numbers = #tpu.dot_dimension_numbers<[3], [0], [0, 1, 2], [1], [0, 0, 0, 1, 0, 2, 1, 1], [], []>} : vector<1x16x16x4xf32>, vector<4x128xf32>, vector<1x16x16x128xf32> -> vector<1x16x16x128xf32>
    %c0_120 = arith.constant 0 : index
    %c0_121 = arith.constant 0 : index
    %c0_122 = arith.constant 0 : index
    %c0_123 = arith.constant 0 : index
    %51 = vector.load %arg5[%c0_120, %c0_121, %c0_122, %c0_123] : memref<1x16x16x128xf32, #tpu.memory_space<vmem>>, vector<1x16x16x128xf32>
    %52 = arith.addf %51, %50 : vector<1x16x16x128xf32>
    %c0_124 = arith.constant 0 : index
    %c0_125 = arith.constant 0 : index
    %c0_126 = arith.constant 0 : index
    %c0_127 = arith.constant 0 : index
    %53 = vector.load %arg5[%c0_124, %c0_125, %c0_126, %c0_127] : memref<1x16x16x128xf32, #tpu.memory_space<vmem>>, vector<1x16x16x128xf32>
    tpu.vector_store %arg5[%c0_124, %c0_125, %c0_126, %c0_127], %52 {strides = array<i32>} : memref<1x16x16x128xf32, #tpu.memory_space<vmem>>, vector<1x16x16x128xf32>,
    %c0_128 = arith.constant 0 : index
    %c2_129 = arith.constant 2 : index
    %c2_130 = arith.constant 2 : index
    %c0_131 = arith.constant 0 : index
    %54 = vector.load %arg1[%c0_128, %c2_129, %c2_130, %c0_131] : memref<1x18x18x4xf32, #tpu.memory_space<vmem>>, vector<1x16x16x4xf32>
    %c2_132 = arith.constant 2 : index
    %c2_133 = arith.constant 2 : index
    %c0_134 = arith.constant 0 : index
    %c0_135 = arith.constant 0 : index
    %55 = vector.load %arg2[%c2_132, %c2_133, %c0_134, %c0_135] : memref<3x3x4x128xf32, #tpu.memory_space<vmem>>, vector<1x1x4x128xf32>
    %56 = vector.shape_cast %55 : vector<1x1x4x128xf32> to vector<4x128xf32>
    %cst_136 = arith.constant dense<0.000000e+00> : vector<1x16x16x128xf32>
    %57 = tpu.matmul %54, %56, %cst_136 {dimension_numbers = #tpu.dot_dimension_numbers<[3], [0], [0, 1, 2], [1], [0, 0, 0, 1, 0, 2, 1, 1], [], []>} : vector<1x16x16x4xf32>, vector<4x128xf32>, vector<1x16x16x128xf32> -> vector<1x16x16x128xf32>
    %c0_137 = arith.constant 0 : index
    %c0_138 = arith.constant 0 : index
    %c0_139 = arith.constant 0 : index
    %c0_140 = arith.constant 0 : index
    %58 = vector.load %arg5[%c0_137, %c0_138, %c0_139, %c0_140] : memref<1x16x16x128xf32, #tpu.memory_space<vmem>>, vector<1x16x16x128xf32>
    %59 = arith.addf %58, %57 : vector<1x16x16x128xf32>
    %c0_141 = arith.constant 0 : index
    %c0_142 = arith.constant 0 : index
    %c0_143 = arith.constant 0 : index
    %c0_144 = arith.constant 0 : index
    %60 = vector.load %arg5[%c0_141, %c0_142, %c0_143, %c0_144] : memref<1x16x16x128xf32, #tpu.memory_space<vmem>>, vector<1x16x16x128xf32>
    tpu.vector_store %arg5[%c0_141, %c0_142, %c0_143, %c0_144], %59 {strides = array<i32>} : memref<1x16x16x128xf32, #tpu.memory_space<vmem>>, vector<1x16x16x128xf32>,
    %c0_145 = arith.constant 0 : index
    %c0_146 = arith.constant 0 : index
    %c0_147 = arith.constant 0 : index
    %c0_148 = arith.constant 0 : index
    %61 = vector.load %arg5[%c0_145, %c0_146, %c0_147, %c0_148] : memref<1x16x16x128xf32, #tpu.memory_space<vmem>>, vector<1x16x16x128xf32>
    %62 = vector.shape_cast %61 : vector<1x16x16x128xf32> to vector<256x128xf32>
    %cst_149 = arith.constant dense<0.000000e+00> : vector<128xf32>
    %63 = vector.multi_reduction <add>, %62, %cst_149 [0] : vector<256x128xf32> to vector<128xf32>
    %64 = vector.shape_cast %63 : vector<128xf32> to vector<1x1x128xf32>
    %c0_150 = arith.constant 0 : index
    %c0_151 = arith.constant 0 : index
    %c0_152 = arith.constant 0 : index
    %65 = vector.load %arg3[%c0_150, %c0_151, %c0_152] : memref<1x1x128xf32, #tpu.memory_space<vmem>>, vector<1x1x128xf32>
    tpu.vector_store %arg3[%c0_150, %c0_151, %c0_152], %64 {strides = array<i32>} : memref<1x1x128xf32, #tpu.memory_space<vmem>>, vector<1x1x128xf32>,
    %66 = arith.mulf %62, %62 : vector<256x128xf32>
    %cst_153 = arith.constant dense<0.000000e+00> : vector<128xf32>
    %67 = vector.multi_reduction <add>, %66, %cst_153 [0] : vector<256x128xf32> to vector<128xf32>
    %68 = vector.shape_cast %67 : vector<128xf32> to vector<1x1x128xf32>
    %c0_154 = arith.constant 0 : index
    %c0_155 = arith.constant 0 : index
    %c0_156 = arith.constant 0 : index
    %69 = vector.load %arg4[%c0_154, %c0_155, %c0_156] : memref<1x1x128xf32, #tpu.memory_space<vmem>>, vector<1x1x128xf32>
    tpu.vector_store %arg4[%c0_154, %c0_155, %c0_156], %68 {strides = array<i32>} : memref<1x1x128xf32, #tpu.memory_space<vmem>>, vector<1x1x128xf32>,
    return
  }
  func.func @transform_0(%arg0: i32) -> (i32, i32, i32, i32) {
    %c0_i32 = arith.constant 0 : i32
    %c0_i32_0 = arith.constant 0 : i32
    %c0_i32_1 = arith.constant 0 : i32
    %c0_i32_2 = arith.constant 0 : i32
    return %arg0, %c0_i32, %c0_i32_0, %c0_i32_1 : i32, i32, i32, i32
  }
  func.func @transform_1(%arg0: i32) -> (i32, i32, i32, i32) {
    %c0_i32 = arith.constant 0 : i32
    %c0_i32_0 = arith.constant 0 : i32
    %c0_i32_1 = arith.constant 0 : i32
    %c0_i32_2 = arith.constant 0 : i32
    %c0_i32_3 = arith.constant 0 : i32
    return %c0_i32, %c0_i32_0, %c0_i32_1, %c0_i32_2 : i32, i32, i32, i32
  }
  func.func @transform_2(%arg0: i32) -> (i32, i32, i32) {
    %c0_i32 = arith.constant 0 : i32
    %c0_i32_0 = arith.constant 0 : i32
    %c0_i32_1 = arith.constant 0 : i32
    return %arg0, %c0_i32, %c0_i32_0 : i32, i32, i32
  }
  func.func @transform_3(%arg0: i32) -> (i32, i32, i32) {
    %c0_i32 = arith.constant 0 : i32
    %c0_i32_0 = arith.constant 0 : i32
    %c0_i32_1 = arith.constant 0 : i32
    return %arg0, %c0_i32, %c0_i32_0 : i32, i32, i32
  }
}

module attributes {stable_mosaic.version = 11 : i64} {
  func.func @_conv_bn_relu_kernel(%arg0: i32, %arg1: memref<1x18x18x4xf32, #tpu.memory_space<vmem>>, %arg2: memref<3x3x4x128xf32, #tpu.memory_space<vmem>>, %arg3: memref<2x1x128xf32, #tpu.memory_space<vmem>>, %arg4: memref<2x1x128xf32, #tpu.memory_space<vmem>>, %arg5: memref<1x128xf32, #tpu.memory_space<vmem>>, %arg6: memref<1x128xf32, #tpu.memory_space<vmem>>, %arg7: memref<1x16x16x128xf32, #tpu.memory_space<vmem>>) attributes {dimension_semantics = [#tpu.dimension_semantics<parallel>], iteration_bounds = array<i64: 2>, scalar_prefetch = 0 : i64, scratch_operands = 0 : i64, tpu.core_type = #tpu.core_type<tc>, window_params = [{transform_indices = @transform_0, window_bounds = array<i64: 1, 18, 18, 4>}, {pipeline_mode = #tpu.pipeline_mode<synchronous>, transform_indices = @transform_1, window_bounds = array<i64: 3, 3, 4, 128>}, {pipeline_mode = #tpu.pipeline_mode<synchronous>, transform_indices = @transform_2, window_bounds = array<i64: 2, 1, 128>}, {pipeline_mode = #tpu.pipeline_mode<synchronous>, transform_indices = @transform_3, window_bounds = array<i64: 2, 1, 128>}, {pipeline_mode = #tpu.pipeline_mode<synchronous>, transform_indices = @transform_4, window_bounds = array<i64: 1, 128>}, {pipeline_mode = #tpu.pipeline_mode<synchronous>, transform_indices = @transform_5, window_bounds = array<i64: 1, 128>}, {transform_indices = @transform_6, window_bounds = array<i64: 1, 16, 16, 128>}]} {
    %c0 = arith.constant 0 : index
    %c0_0 = arith.constant 0 : index
    %c0_1 = arith.constant 0 : index
    %0 = vector.load %arg3[%c0, %c0_0, %c0_1] : memref<2x1x128xf32, #tpu.memory_space<vmem>>, vector<2x1x128xf32>
    %cst = arith.constant dense<0.000000e+00> : vector<1x128xf32>
    %1 = vector.multi_reduction <add>, %0, %cst [0] : vector<2x1x128xf32> to vector<1x128xf32>
    %c0_2 = arith.constant 0 : index
    %c0_3 = arith.constant 0 : index
    %c0_4 = arith.constant 0 : index
    %2 = vector.load %arg4[%c0_2, %c0_3, %c0_4] : memref<2x1x128xf32, #tpu.memory_space<vmem>>, vector<2x1x128xf32>
    %cst_5 = arith.constant dense<0.000000e+00> : vector<1x128xf32>
    %3 = vector.multi_reduction <add>, %2, %cst_5 [0] : vector<2x1x128xf32> to vector<1x128xf32>
    %cst_6 = arith.constant 0.001953125 : f32
    %4 = vector.broadcast %cst_6 : f32 to vector<1x128xf32>
    %5 = arith.mulf %1, %4 : vector<1x128xf32>
    %cst_7 = arith.constant 0.001953125 : f32
    %6 = vector.broadcast %cst_7 : f32 to vector<1x128xf32>
    %7 = arith.mulf %3, %6 : vector<1x128xf32>
    %8 = arith.mulf %5, %5 : vector<1x128xf32>
    %9 = arith.subf %7, %8 : vector<1x128xf32>
    %cst_8 = arith.constant 0.000000e+00 : f32
    %10 = vector.broadcast %cst_8 : f32 to vector<1x128xf32>
    %11 = arith.maximumf %9, %10 : vector<1x128xf32>
    %cst_9 = arith.constant 9.99999974E-6 : f32
    %12 = vector.broadcast %cst_9 : f32 to vector<1x128xf32>
    %13 = arith.addf %11, %12 : vector<1x128xf32>
    %14 = math.rsqrt %13 : vector<1x128xf32>
    %c0_10 = arith.constant 0 : index
    %c0_11 = arith.constant 0 : index
    %15 = vector.load %arg5[%c0_10, %c0_11] : memref<1x128xf32, #tpu.memory_space<vmem>>, vector<1x128xf32>
    %16 = arith.mulf %15, %14 : vector<1x128xf32>
    %c0_12 = arith.constant 0 : index
    %c0_13 = arith.constant 0 : index
    %17 = vector.load %arg6[%c0_12, %c0_13] : memref<1x128xf32, #tpu.memory_space<vmem>>, vector<1x128xf32>
    %18 = arith.mulf %5, %16 : vector<1x128xf32>
    %19 = arith.subf %17, %18 : vector<1x128xf32>
    %c0_14 = arith.constant 0 : index
    %c0_15 = arith.constant 0 : index
    %c0_16 = arith.constant 0 : index
    %c0_17 = arith.constant 0 : index
    %20 = vector.load %arg1[%c0_14, %c0_15, %c0_16, %c0_17] : memref<1x18x18x4xf32, #tpu.memory_space<vmem>>, vector<1x16x16x4xf32>
    %c0_18 = arith.constant 0 : index
    %c0_19 = arith.constant 0 : index
    %c0_20 = arith.constant 0 : index
    %c0_21 = arith.constant 0 : index
    %21 = vector.load %arg2[%c0_18, %c0_19, %c0_20, %c0_21] : memref<3x3x4x128xf32, #tpu.memory_space<vmem>>, vector<1x1x4x128xf32>
    %22 = vector.shape_cast %21 : vector<1x1x4x128xf32> to vector<4x128xf32>
    %cst_22 = arith.constant dense<0.000000e+00> : vector<1x16x16x128xf32>
    %23 = tpu.matmul %20, %22, %cst_22 {dimension_numbers = #tpu.dot_dimension_numbers<[3], [0], [0, 1, 2], [1], [0, 0, 0, 1, 0, 2, 1, 1], [], []>} : vector<1x16x16x4xf32>, vector<4x128xf32>, vector<1x16x16x128xf32> -> vector<1x16x16x128xf32>
    %c0_23 = arith.constant 0 : index
    %c0_24 = arith.constant 0 : index
    %c0_25 = arith.constant 0 : index
    %c0_26 = arith.constant 0 : index
    %24 = vector.load %arg7[%c0_23, %c0_24, %c0_25, %c0_26] : memref<1x16x16x128xf32, #tpu.memory_space<vmem>>, vector<1x16x16x128xf32>
    tpu.vector_store %arg7[%c0_23, %c0_24, %c0_25, %c0_26], %23 {strides = array<i32>} : memref<1x16x16x128xf32, #tpu.memory_space<vmem>>, vector<1x16x16x128xf32>,
    %c0_27 = arith.constant 0 : index
    %c0_28 = arith.constant 0 : index
    %c1 = arith.constant 1 : index
    %c0_29 = arith.constant 0 : index
    %25 = vector.load %arg1[%c0_27, %c0_28, %c1, %c0_29] : memref<1x18x18x4xf32, #tpu.memory_space<vmem>>, vector<1x16x16x4xf32>
    %c0_30 = arith.constant 0 : index
    %c1_31 = arith.constant 1 : index
    %c0_32 = arith.constant 0 : index
    %c0_33 = arith.constant 0 : index
    %26 = vector.load %arg2[%c0_30, %c1_31, %c0_32, %c0_33] : memref<3x3x4x128xf32, #tpu.memory_space<vmem>>, vector<1x1x4x128xf32>
    %27 = vector.shape_cast %26 : vector<1x1x4x128xf32> to vector<4x128xf32>
    %cst_34 = arith.constant dense<0.000000e+00> : vector<1x16x16x128xf32>
    %28 = tpu.matmul %25, %27, %cst_34 {dimension_numbers = #tpu.dot_dimension_numbers<[3], [0], [0, 1, 2], [1], [0, 0, 0, 1, 0, 2, 1, 1], [], []>} : vector<1x16x16x4xf32>, vector<4x128xf32>, vector<1x16x16x128xf32> -> vector<1x16x16x128xf32>
    %c0_35 = arith.constant 0 : index
    %c0_36 = arith.constant 0 : index
    %c0_37 = arith.constant 0 : index
    %c0_38 = arith.constant 0 : index
    %29 = vector.load %arg7[%c0_35, %c0_36, %c0_37, %c0_38] : memref<1x16x16x128xf32, #tpu.memory_space<vmem>>, vector<1x16x16x128xf32>
    %30 = arith.addf %29, %28 : vector<1x16x16x128xf32>
    %c0_39 = arith.constant 0 : index
    %c0_40 = arith.constant 0 : index
    %c0_41 = arith.constant 0 : index
    %c0_42 = arith.constant 0 : index
    %31 = vector.load %arg7[%c0_39, %c0_40, %c0_41, %c0_42] : memref<1x16x16x128xf32, #tpu.memory_space<vmem>>, vector<1x16x16x128xf32>
    tpu.vector_store %arg7[%c0_39, %c0_40, %c0_41, %c0_42], %30 {strides = array<i32>} : memref<1x16x16x128xf32, #tpu.memory_space<vmem>>, vector<1x16x16x128xf32>,
    %c0_43 = arith.constant 0 : index
    %c0_44 = arith.constant 0 : index
    %c2 = arith.constant 2 : index
    %c0_45 = arith.constant 0 : index
    %32 = vector.load %arg1[%c0_43, %c0_44, %c2, %c0_45] : memref<1x18x18x4xf32, #tpu.memory_space<vmem>>, vector<1x16x16x4xf32>
    %c0_46 = arith.constant 0 : index
    %c2_47 = arith.constant 2 : index
    %c0_48 = arith.constant 0 : index
    %c0_49 = arith.constant 0 : index
    %33 = vector.load %arg2[%c0_46, %c2_47, %c0_48, %c0_49] : memref<3x3x4x128xf32, #tpu.memory_space<vmem>>, vector<1x1x4x128xf32>
    %34 = vector.shape_cast %33 : vector<1x1x4x128xf32> to vector<4x128xf32>
    %cst_50 = arith.constant dense<0.000000e+00> : vector<1x16x16x128xf32>
    %35 = tpu.matmul %32, %34, %cst_50 {dimension_numbers = #tpu.dot_dimension_numbers<[3], [0], [0, 1, 2], [1], [0, 0, 0, 1, 0, 2, 1, 1], [], []>} : vector<1x16x16x4xf32>, vector<4x128xf32>, vector<1x16x16x128xf32> -> vector<1x16x16x128xf32>
    %c0_51 = arith.constant 0 : index
    %c0_52 = arith.constant 0 : index
    %c0_53 = arith.constant 0 : index
    %c0_54 = arith.constant 0 : index
    %36 = vector.load %arg7[%c0_51, %c0_52, %c0_53, %c0_54] : memref<1x16x16x128xf32, #tpu.memory_space<vmem>>, vector<1x16x16x128xf32>
    %37 = arith.addf %36, %35 : vector<1x16x16x128xf32>
    %c0_55 = arith.constant 0 : index
    %c0_56 = arith.constant 0 : index
    %c0_57 = arith.constant 0 : index
    %c0_58 = arith.constant 0 : index
    %38 = vector.load %arg7[%c0_55, %c0_56, %c0_57, %c0_58] : memref<1x16x16x128xf32, #tpu.memory_space<vmem>>, vector<1x16x16x128xf32>
    tpu.vector_store %arg7[%c0_55, %c0_56, %c0_57, %c0_58], %37 {strides = array<i32>} : memref<1x16x16x128xf32, #tpu.memory_space<vmem>>, vector<1x16x16x128xf32>,
    %c0_59 = arith.constant 0 : index
    %c1_60 = arith.constant 1 : index
    %c0_61 = arith.constant 0 : index
    %c0_62 = arith.constant 0 : index
    %39 = vector.load %arg1[%c0_59, %c1_60, %c0_61, %c0_62] : memref<1x18x18x4xf32, #tpu.memory_space<vmem>>, vector<1x16x16x4xf32>
    %c1_63 = arith.constant 1 : index
    %c0_64 = arith.constant 0 : index
    %c0_65 = arith.constant 0 : index
    %c0_66 = arith.constant 0 : index
    %40 = vector.load %arg2[%c1_63, %c0_64, %c0_65, %c0_66] : memref<3x3x4x128xf32, #tpu.memory_space<vmem>>, vector<1x1x4x128xf32>
    %41 = vector.shape_cast %40 : vector<1x1x4x128xf32> to vector<4x128xf32>
    %cst_67 = arith.constant dense<0.000000e+00> : vector<1x16x16x128xf32>
    %42 = tpu.matmul %39, %41, %cst_67 {dimension_numbers = #tpu.dot_dimension_numbers<[3], [0], [0, 1, 2], [1], [0, 0, 0, 1, 0, 2, 1, 1], [], []>} : vector<1x16x16x4xf32>, vector<4x128xf32>, vector<1x16x16x128xf32> -> vector<1x16x16x128xf32>
    %c0_68 = arith.constant 0 : index
    %c0_69 = arith.constant 0 : index
    %c0_70 = arith.constant 0 : index
    %c0_71 = arith.constant 0 : index
    %43 = vector.load %arg7[%c0_68, %c0_69, %c0_70, %c0_71] : memref<1x16x16x128xf32, #tpu.memory_space<vmem>>, vector<1x16x16x128xf32>
    %44 = arith.addf %43, %42 : vector<1x16x16x128xf32>
    %c0_72 = arith.constant 0 : index
    %c0_73 = arith.constant 0 : index
    %c0_74 = arith.constant 0 : index
    %c0_75 = arith.constant 0 : index
    %45 = vector.load %arg7[%c0_72, %c0_73, %c0_74, %c0_75] : memref<1x16x16x128xf32, #tpu.memory_space<vmem>>, vector<1x16x16x128xf32>
    tpu.vector_store %arg7[%c0_72, %c0_73, %c0_74, %c0_75], %44 {strides = array<i32>} : memref<1x16x16x128xf32, #tpu.memory_space<vmem>>, vector<1x16x16x128xf32>,
    %c0_76 = arith.constant 0 : index
    %c1_77 = arith.constant 1 : index
    %c1_78 = arith.constant 1 : index
    %c0_79 = arith.constant 0 : index
    %46 = vector.load %arg1[%c0_76, %c1_77, %c1_78, %c0_79] : memref<1x18x18x4xf32, #tpu.memory_space<vmem>>, vector<1x16x16x4xf32>
    %c1_80 = arith.constant 1 : index
    %c1_81 = arith.constant 1 : index
    %c0_82 = arith.constant 0 : index
    %c0_83 = arith.constant 0 : index
    %47 = vector.load %arg2[%c1_80, %c1_81, %c0_82, %c0_83] : memref<3x3x4x128xf32, #tpu.memory_space<vmem>>, vector<1x1x4x128xf32>
    %48 = vector.shape_cast %47 : vector<1x1x4x128xf32> to vector<4x128xf32>
    %cst_84 = arith.constant dense<0.000000e+00> : vector<1x16x16x128xf32>
    %49 = tpu.matmul %46, %48, %cst_84 {dimension_numbers = #tpu.dot_dimension_numbers<[3], [0], [0, 1, 2], [1], [0, 0, 0, 1, 0, 2, 1, 1], [], []>} : vector<1x16x16x4xf32>, vector<4x128xf32>, vector<1x16x16x128xf32> -> vector<1x16x16x128xf32>
    %c0_85 = arith.constant 0 : index
    %c0_86 = arith.constant 0 : index
    %c0_87 = arith.constant 0 : index
    %c0_88 = arith.constant 0 : index
    %50 = vector.load %arg7[%c0_85, %c0_86, %c0_87, %c0_88] : memref<1x16x16x128xf32, #tpu.memory_space<vmem>>, vector<1x16x16x128xf32>
    %51 = arith.addf %50, %49 : vector<1x16x16x128xf32>
    %c0_89 = arith.constant 0 : index
    %c0_90 = arith.constant 0 : index
    %c0_91 = arith.constant 0 : index
    %c0_92 = arith.constant 0 : index
    %52 = vector.load %arg7[%c0_89, %c0_90, %c0_91, %c0_92] : memref<1x16x16x128xf32, #tpu.memory_space<vmem>>, vector<1x16x16x128xf32>
    tpu.vector_store %arg7[%c0_89, %c0_90, %c0_91, %c0_92], %51 {strides = array<i32>} : memref<1x16x16x128xf32, #tpu.memory_space<vmem>>, vector<1x16x16x128xf32>,
    %c0_93 = arith.constant 0 : index
    %c1_94 = arith.constant 1 : index
    %c2_95 = arith.constant 2 : index
    %c0_96 = arith.constant 0 : index
    %53 = vector.load %arg1[%c0_93, %c1_94, %c2_95, %c0_96] : memref<1x18x18x4xf32, #tpu.memory_space<vmem>>, vector<1x16x16x4xf32>
    %c1_97 = arith.constant 1 : index
    %c2_98 = arith.constant 2 : index
    %c0_99 = arith.constant 0 : index
    %c0_100 = arith.constant 0 : index
    %54 = vector.load %arg2[%c1_97, %c2_98, %c0_99, %c0_100] : memref<3x3x4x128xf32, #tpu.memory_space<vmem>>, vector<1x1x4x128xf32>
    %55 = vector.shape_cast %54 : vector<1x1x4x128xf32> to vector<4x128xf32>
    %cst_101 = arith.constant dense<0.000000e+00> : vector<1x16x16x128xf32>
    %56 = tpu.matmul %53, %55, %cst_101 {dimension_numbers = #tpu.dot_dimension_numbers<[3], [0], [0, 1, 2], [1], [0, 0, 0, 1, 0, 2, 1, 1], [], []>} : vector<1x16x16x4xf32>, vector<4x128xf32>, vector<1x16x16x128xf32> -> vector<1x16x16x128xf32>
    %c0_102 = arith.constant 0 : index
    %c0_103 = arith.constant 0 : index
    %c0_104 = arith.constant 0 : index
    %c0_105 = arith.constant 0 : index
    %57 = vector.load %arg7[%c0_102, %c0_103, %c0_104, %c0_105] : memref<1x16x16x128xf32, #tpu.memory_space<vmem>>, vector<1x16x16x128xf32>
    %58 = arith.addf %57, %56 : vector<1x16x16x128xf32>
    %c0_106 = arith.constant 0 : index
    %c0_107 = arith.constant 0 : index
    %c0_108 = arith.constant 0 : index
    %c0_109 = arith.constant 0 : index
    %59 = vector.load %arg7[%c0_106, %c0_107, %c0_108, %c0_109] : memref<1x16x16x128xf32, #tpu.memory_space<vmem>>, vector<1x16x16x128xf32>
    tpu.vector_store %arg7[%c0_106, %c0_107, %c0_108, %c0_109], %58 {strides = array<i32>} : memref<1x16x16x128xf32, #tpu.memory_space<vmem>>, vector<1x16x16x128xf32>,
    %c0_110 = arith.constant 0 : index
    %c2_111 = arith.constant 2 : index
    %c0_112 = arith.constant 0 : index
    %c0_113 = arith.constant 0 : index
    %60 = vector.load %arg1[%c0_110, %c2_111, %c0_112, %c0_113] : memref<1x18x18x4xf32, #tpu.memory_space<vmem>>, vector<1x16x16x4xf32>
    %c2_114 = arith.constant 2 : index
    %c0_115 = arith.constant 0 : index
    %c0_116 = arith.constant 0 : index
    %c0_117 = arith.constant 0 : index
    %61 = vector.load %arg2[%c2_114, %c0_115, %c0_116, %c0_117] : memref<3x3x4x128xf32, #tpu.memory_space<vmem>>, vector<1x1x4x128xf32>
    %62 = vector.shape_cast %61 : vector<1x1x4x128xf32> to vector<4x128xf32>
    %cst_118 = arith.constant dense<0.000000e+00> : vector<1x16x16x128xf32>
    %63 = tpu.matmul %60, %62, %cst_118 {dimension_numbers = #tpu.dot_dimension_numbers<[3], [0], [0, 1, 2], [1], [0, 0, 0, 1, 0, 2, 1, 1], [], []>} : vector<1x16x16x4xf32>, vector<4x128xf32>, vector<1x16x16x128xf32> -> vector<1x16x16x128xf32>
    %c0_119 = arith.constant 0 : index
    %c0_120 = arith.constant 0 : index
    %c0_121 = arith.constant 0 : index
    %c0_122 = arith.constant 0 : index
    %64 = vector.load %arg7[%c0_119, %c0_120, %c0_121, %c0_122] : memref<1x16x16x128xf32, #tpu.memory_space<vmem>>, vector<1x16x16x128xf32>
    %65 = arith.addf %64, %63 : vector<1x16x16x128xf32>
    %c0_123 = arith.constant 0 : index
    %c0_124 = arith.constant 0 : index
    %c0_125 = arith.constant 0 : index
    %c0_126 = arith.constant 0 : index
    %66 = vector.load %arg7[%c0_123, %c0_124, %c0_125, %c0_126] : memref<1x16x16x128xf32, #tpu.memory_space<vmem>>, vector<1x16x16x128xf32>
    tpu.vector_store %arg7[%c0_123, %c0_124, %c0_125, %c0_126], %65 {strides = array<i32>} : memref<1x16x16x128xf32, #tpu.memory_space<vmem>>, vector<1x16x16x128xf32>,
    %c0_127 = arith.constant 0 : index
    %c2_128 = arith.constant 2 : index
    %c1_129 = arith.constant 1 : index
    %c0_130 = arith.constant 0 : index
    %67 = vector.load %arg1[%c0_127, %c2_128, %c1_129, %c0_130] : memref<1x18x18x4xf32, #tpu.memory_space<vmem>>, vector<1x16x16x4xf32>
    %c2_131 = arith.constant 2 : index
    %c1_132 = arith.constant 1 : index
    %c0_133 = arith.constant 0 : index
    %c0_134 = arith.constant 0 : index
    %68 = vector.load %arg2[%c2_131, %c1_132, %c0_133, %c0_134] : memref<3x3x4x128xf32, #tpu.memory_space<vmem>>, vector<1x1x4x128xf32>
    %69 = vector.shape_cast %68 : vector<1x1x4x128xf32> to vector<4x128xf32>
    %cst_135 = arith.constant dense<0.000000e+00> : vector<1x16x16x128xf32>
    %70 = tpu.matmul %67, %69, %cst_135 {dimension_numbers = #tpu.dot_dimension_numbers<[3], [0], [0, 1, 2], [1], [0, 0, 0, 1, 0, 2, 1, 1], [], []>} : vector<1x16x16x4xf32>, vector<4x128xf32>, vector<1x16x16x128xf32> -> vector<1x16x16x128xf32>
    %c0_136 = arith.constant 0 : index
    %c0_137 = arith.constant 0 : index
    %c0_138 = arith.constant 0 : index
    %c0_139 = arith.constant 0 : index
    %71 = vector.load %arg7[%c0_136, %c0_137, %c0_138, %c0_139] : memref<1x16x16x128xf32, #tpu.memory_space<vmem>>, vector<1x16x16x128xf32>
    %72 = arith.addf %71, %70 : vector<1x16x16x128xf32>
    %c0_140 = arith.constant 0 : index
    %c0_141 = arith.constant 0 : index
    %c0_142 = arith.constant 0 : index
    %c0_143 = arith.constant 0 : index
    %73 = vector.load %arg7[%c0_140, %c0_141, %c0_142, %c0_143] : memref<1x16x16x128xf32, #tpu.memory_space<vmem>>, vector<1x16x16x128xf32>
    tpu.vector_store %arg7[%c0_140, %c0_141, %c0_142, %c0_143], %72 {strides = array<i32>} : memref<1x16x16x128xf32, #tpu.memory_space<vmem>>, vector<1x16x16x128xf32>,
    %c0_144 = arith.constant 0 : index
    %c2_145 = arith.constant 2 : index
    %c2_146 = arith.constant 2 : index
    %c0_147 = arith.constant 0 : index
    %74 = vector.load %arg1[%c0_144, %c2_145, %c2_146, %c0_147] : memref<1x18x18x4xf32, #tpu.memory_space<vmem>>, vector<1x16x16x4xf32>
    %c2_148 = arith.constant 2 : index
    %c2_149 = arith.constant 2 : index
    %c0_150 = arith.constant 0 : index
    %c0_151 = arith.constant 0 : index
    %75 = vector.load %arg2[%c2_148, %c2_149, %c0_150, %c0_151] : memref<3x3x4x128xf32, #tpu.memory_space<vmem>>, vector<1x1x4x128xf32>
    %76 = vector.shape_cast %75 : vector<1x1x4x128xf32> to vector<4x128xf32>
    %cst_152 = arith.constant dense<0.000000e+00> : vector<1x16x16x128xf32>
    %77 = tpu.matmul %74, %76, %cst_152 {dimension_numbers = #tpu.dot_dimension_numbers<[3], [0], [0, 1, 2], [1], [0, 0, 0, 1, 0, 2, 1, 1], [], []>} : vector<1x16x16x4xf32>, vector<4x128xf32>, vector<1x16x16x128xf32> -> vector<1x16x16x128xf32>
    %c0_153 = arith.constant 0 : index
    %c0_154 = arith.constant 0 : index
    %c0_155 = arith.constant 0 : index
    %c0_156 = arith.constant 0 : index
    %78 = vector.load %arg7[%c0_153, %c0_154, %c0_155, %c0_156] : memref<1x16x16x128xf32, #tpu.memory_space<vmem>>, vector<1x16x16x128xf32>
    %79 = arith.addf %78, %77 : vector<1x16x16x128xf32>
    %c0_157 = arith.constant 0 : index
    %c0_158 = arith.constant 0 : index
    %c0_159 = arith.constant 0 : index
    %c0_160 = arith.constant 0 : index
    %80 = vector.load %arg7[%c0_157, %c0_158, %c0_159, %c0_160] : memref<1x16x16x128xf32, #tpu.memory_space<vmem>>, vector<1x16x16x128xf32>
    tpu.vector_store %arg7[%c0_157, %c0_158, %c0_159, %c0_160], %79 {strides = array<i32>} : memref<1x16x16x128xf32, #tpu.memory_space<vmem>>, vector<1x16x16x128xf32>,
    %c0_161 = arith.constant 0 : index
    %c0_162 = arith.constant 0 : index
    %c0_163 = arith.constant 0 : index
    %c0_164 = arith.constant 0 : index
    %81 = vector.load %arg7[%c0_161, %c0_162, %c0_163, %c0_164] : memref<1x16x16x128xf32, #tpu.memory_space<vmem>>, vector<1x16x16x128xf32>
    %82 = vector.shape_cast %16 : vector<1x128xf32> to vector<1x1x1x128xf32>
    %83 = vector.broadcast %82 : vector<1x1x1x128xf32> to vector<1x16x16x128xf32>
    %84 = arith.mulf %81, %83 : vector<1x16x16x128xf32>
    %85 = vector.shape_cast %19 : vector<1x128xf32> to vector<1x1x1x128xf32>
    %86 = vector.broadcast %85 : vector<1x1x1x128xf32> to vector<1x16x16x128xf32>
    %87 = arith.addf %84, %86 : vector<1x16x16x128xf32>
    %cst_165 = arith.constant 0.000000e+00 : f32
    %88 = vector.broadcast %cst_165 : f32 to vector<1x16x16x128xf32>
    %89 = arith.maximumf %87, %88 : vector<1x16x16x128xf32>
    %c0_166 = arith.constant 0 : index
    %c0_167 = arith.constant 0 : index
    %c0_168 = arith.constant 0 : index
    %c0_169 = arith.constant 0 : index
    %90 = vector.load %arg7[%c0_166, %c0_167, %c0_168, %c0_169] : memref<1x16x16x128xf32, #tpu.memory_space<vmem>>, vector<1x16x16x128xf32>
    tpu.vector_store %arg7[%c0_166, %c0_167, %c0_168, %c0_169], %89 {strides = array<i32>} : memref<1x16x16x128xf32, #tpu.memory_space<vmem>>, vector<1x16x16x128xf32>,
    return
  }
  func.func @transform_0(%arg0: i32) -> (i32, i32, i32, i32) {
    %c0_i32 = arith.constant 0 : i32
    %c0_i32_0 = arith.constant 0 : i32
    %c0_i32_1 = arith.constant 0 : i32
    %c0_i32_2 = arith.constant 0 : i32
    return %arg0, %c0_i32, %c0_i32_0, %c0_i32_1 : i32, i32, i32, i32
  }
  func.func @transform_1(%arg0: i32) -> (i32, i32, i32, i32) {
    %c0_i32 = arith.constant 0 : i32
    %c0_i32_0 = arith.constant 0 : i32
    %c0_i32_1 = arith.constant 0 : i32
    %c0_i32_2 = arith.constant 0 : i32
    %c0_i32_3 = arith.constant 0 : i32
    return %c0_i32, %c0_i32_0, %c0_i32_1, %c0_i32_2 : i32, i32, i32, i32
  }
  func.func @transform_2(%arg0: i32) -> (i32, i32, i32) {
    %c0_i32 = arith.constant 0 : i32
    %c0_i32_0 = arith.constant 0 : i32
    %c0_i32_1 = arith.constant 0 : i32
    %c0_i32_2 = arith.constant 0 : i32
    return %c0_i32, %c0_i32_0, %c0_i32_1 : i32, i32, i32
  }
  func.func @transform_3(%arg0: i32) -> (i32, i32, i32) {
    %c0_i32 = arith.constant 0 : i32
    %c0_i32_0 = arith.constant 0 : i32
    %c0_i32_1 = arith.constant 0 : i32
    %c0_i32_2 = arith.constant 0 : i32
    return %c0_i32, %c0_i32_0, %c0_i32_1 : i32, i32, i32
  }
  func.func @transform_4(%arg0: i32) -> (i32, i32) {
    %c0_i32 = arith.constant 0 : i32
    %c0_i32_0 = arith.constant 0 : i32
    %c0_i32_1 = arith.constant 0 : i32
    return %c0_i32, %c0_i32_0 : i32, i32
  }
  func.func @transform_5(%arg0: i32) -> (i32, i32) {
    %c0_i32 = arith.constant 0 : i32
    %c0_i32_0 = arith.constant 0 : i32
    %c0_i32_1 = arith.constant 0 : i32
    return %c0_i32, %c0_i32_0 : i32, i32
  }
  func.func @transform_6(%arg0: i32) -> (i32, i32, i32, i32) {
    %c0_i32 = arith.constant 0 : i32
    %c0_i32_0 = arith.constant 0 : i32
    %c0_i32_1 = arith.constant 0 : i32
    %c0_i32_2 = arith.constant 0 : i32
    return %arg0, %c0_i32, %c0_i32_0, %c0_i32_1 : i32, i32, i32, i32
  }
}

</mosaic_0001>

<llo_original>
// kernel: block_forward.3
$region0: #{block_forward.3}
  #allocation0 [shape = 'u32[]', space=smem, size = 0x4, offset = 0x4, fixed_abs, tag = 'smem constant byte address 0x4 - core index']
  #allocation1 [shape = 'u32[144,128]{1,0:T(1,128)}', space=vmem, size = 0x12000, scoped, tag = 'internal scratch']
  %s0 = inlined_call_operand.vmem [shape: f32[2,18,18,4], index: 0, kind: input, shape index: {}]
  %s1 = inlined_call_operand.vmem [shape: f32[3,3,4,128], index: 1, kind: input, shape index: {}]
  %s2 = inlined_call_operand.vmem [shape: f32[2,1,128], index: 2, kind: input, shape index: {}]
  %s3 = inlined_call_operand.vmem [shape: f32[2,1,128], index: 3, kind: input, shape index: {}]
  %s4 = inlined_call_operand.vmem [shape: f32[1,128], index: 4, kind: input, shape index: {}]
  %s5 = inlined_call_operand.vmem [shape: f32[1,128], index: 5, kind: input, shape index: {}]
  %s6 = inlined_call_operand.vmem [shape: f32[2,16,16,128], index: 6, kind: output, shape index: {}]
  %s7 = sld [smem:[#allocation0]]
  $region57: #{block_forward.3} parent=0
    _
  %s9 = ssub.s32 1, %s7
  %s10 = scalar_select 0, %s9, %s7
  loop: start=0, step=1, limit=4
  $region2: #{block_forward.3} parent=0 // loop_pre_header
    _
  $region3: #{block_forward.3} parent=0 // loop_header
    %s12 = sphi 0, %s16
    %p13 = scmp.ge.s32.totalorder %s12, 4
    %s22 = sphi 0, %s24
    %s25 = sphi 0, %s22
    %s26 = sphi 0, %s25
    %s42 = sphi 0, %s26
    %s46 = sphi 0, %s46
    %s48 = sphi 0, %s46
    %s49 = sphi 0, %s48
    %s63 = sphi 0, %s49
    %s67 = sphi 0, %s67
    %s69 = sphi 0, %s67
    %s70 = sphi 0, %s69
    %s84 = sphi 0, %s70
    %s88 = sphi 0, %s88
    %s90 = sphi 0, %s88
    %s91 = sphi 0, %s90
    %s105 = sphi 0, %s91
    %s109 = sphi 0, %s109
    %s111 = sphi 0, %s109
    %s112 = sphi 0, %s111
    %s126 = sphi 0, %s112
    %s130 = sphi 0, %s130
    %s132 = sphi 0, %s130
    %s133 = sphi 0, %s132
    %s147 = sphi 0, %s133
    %s153 = sphi 0, %s155
    %s156 = sphi 0, %s153
    %s157 = sphi 0, %s156
    %s173 = sphi 0, %s157
  $region4: #{block_forward.3} parent=0 // loop_header_branch
    %15 = sbr.rel (%p13) target = $region8
  $region5: #{block_forward.3} parent=0 // loop_body
    %s17 = ssub.s32 %s12, 1
    %s18 = ssub.s32 %s12, 2
    %s19 = sadd.s32 %s12, 1
    %s20 = ssub.s32 %s12, %s19
    %p21 = scmp.eq.s32.totalorder %s20, 0
    %s23 = sadd.s32 %s22, 1
    %s24 = scalar_select %p21, %s22, %s23
    %p27 = pneg %p21
    %p28 = scmp.eq.s32.totalorder %s12, 1
    %p29 = por %p27, %p28
    %p30 = scmp.ne.s32.totalorder %s22, %s25
    %p31 = scmp.eq.s32.totalorder %s12, 0
    %p32 = por %p30, %p31
    %p33 = scmp.ne.s32.totalorder %s22, %s25
    %p34 = scmp.eq.s32.totalorder %s17, 1
    %p35 = por %p33, %p34
    %p36 = scmp.ne.s32.totalorder %s25, %s26
    %p37 = scmp.eq.s32.totalorder %s17, 0
    %p38 = por %p36, %p37
    %p39 = scmp.ne.s32.totalorder %s25, %s26
    %p40 = scmp.eq.s32.totalorder %s18, 1
    %p41 = por %p39, %p40
    %p43 = scmp.ne.s32.totalorder %s26, %s42
    %p44 = scmp.eq.s32.totalorder %s18, 0
    %p45 = por %p43, %p44
    %s47 = sadd.s32 %s46, 1
    %p50 = scmp.eq.s32.totalorder %s12, 1
    %p51 = scmp.ne.s32.totalorder %s46, %s48
    %p52 = scmp.eq.s32.totalorder %s12, 0
    %p53 = por %p51, %p52
    %p54 = scmp.ne.s32.totalorder %s46, %s48
    %p55 = scmp.eq.s32.totalorder %s17, 1
    %p56 = por %p54, %p55
    %p57 = scmp.ne.s32.totalorder %s48, %s49
    %p58 = scmp.eq.s32.totalorder %s17, 0
    %p59 = por %p57, %p58
    %p60 = scmp.ne.s32.totalorder %s48, %s49
    %p61 = scmp.eq.s32.totalorder %s18, 1
    %p62 = por %p60, %p61
    %p64 = scmp.ne.s32.totalorder %s49, %s63
    %p65 = scmp.eq.s32.totalorder %s18, 0
    %p66 = por %p64, %p65
    %s68 = sadd.s32 %s67, 1
    %p71 = scmp.eq.s32.totalorder %s12, 1
    %p72 = scmp.ne.s32.totalorder %s67, %s69
    %p73 = scmp.eq.s32.totalorder %s12, 0
    %p74 = por %p72, %p73
    %p75 = scmp.ne.s32.totalorder %s67, %s69
    %p76 = scmp.eq.s32.totalorder %s17, 1
    %p77 = por %p75, %p76
    %p78 = scmp.ne.s32.totalorder %s69, %s70
    %p79 = scmp.eq.s32.totalorder %s17, 0
    %p80 = por %p78, %p79
    %p81 = scmp.ne.s32.totalorder %s69, %s70
    %p82 = scmp.eq.s32.totalorder %s18, 1
    %p83 = por %p81, %p82
    %p85 = scmp.ne.s32.totalorder %s70, %s84
    %p86 = scmp.eq.s32.totalorder %s18, 0
    %p87 = por %p85, %p86
    %s89 = sadd.s32 %s88, 1
    %p92 = scmp.eq.s32.totalorder %s12, 1
    %p93 = scmp.ne.s32.totalorder %s88, %s90
    %p94 = scmp.eq.s32.totalorder %s12, 0
    %p95 = por %p93, %p94
    %p96 = scmp.ne.s32.totalorder %s88, %s90
    %p97 = scmp.eq.s32.totalorder %s17, 1
    %p98 = por %p96, %p97
    %p99 = scmp.ne.s32.totalorder %s90, %s91
    %p100 = scmp.eq.s32.totalorder %s17, 0
    %p101 = por %p99, %p100
    %p102 = scmp.ne.s32.totalorder %s90, %s91
    %p103 = scmp.eq.s32.totalorder %s18, 1
    %p104 = por %p102, %p103
    %p106 = scmp.ne.s32.totalorder %s91, %s105
    %p107 = scmp.eq.s32.totalorder %s18, 0
    %p108 = por %p106, %p107
    %s110 = sadd.s32 %s109, 1
    %p113 = scmp.eq.s32.totalorder %s12, 1
    %p114 = scmp.ne.s32.totalorder %s109, %s111
    %p115 = scmp.eq.s32.totalorder %s12, 0
    %p116 = por %p114, %p115
    %p117 = scmp.ne.s32.totalorder %s109, %s111
    %p118 = scmp.eq.s32.totalorder %s17, 1
    %p119 = por %p117, %p118
    %p120 = scmp.ne.s32.totalorder %s111, %s112
    %p121 = scmp.eq.s32.totalorder %s17, 0
    %p122 = por %p120, %p121
    %p123 = scmp.ne.s32.totalorder %s111, %s112
    %p124 = scmp.eq.s32.totalorder %s18, 1
    %p125 = por %p123, %p124
    %p127 = scmp.ne.s32.totalorder %s112, %s126
    %p128 = scmp.eq.s32.totalorder %s18, 0
    %p129 = por %p127, %p128
    %s131 = sadd.s32 %s130, 1
    %p134 = scmp.eq.s32.totalorder %s12, 1
    %p135 = scmp.ne.s32.totalorder %s130, %s132
    %p136 = scmp.eq.s32.totalorder %s12, 0
    %p137 = por %p135, %p136
    %p138 = scmp.ne.s32.totalorder %s130, %s132
    %p139 = scmp.eq.s32.totalorder %s17, 1
    %p140 = por %p138, %p139
    %p141 = scmp.ne.s32.totalorder %s132, %s133
    %p142 = scmp.eq.s32.totalorder %s17, 0
    %p143 = por %p141, %p142
    %p144 = scmp.ne.s32.totalorder %s132, %s133
    %p145 = scmp.eq.s32.totalorder %s18, 1
    %p146 = por %p144, %p145
    %p148 = scmp.ne.s32.totalorder %s133, %s147
    %p149 = scmp.eq.s32.totalorder %s18, 0
    %p150 = por %p148, %p149
    %s151 = ssub.s32 %s12, %s19
    %p152 = scmp.eq.s32.totalorder %s151, 0
    %s154 = sadd.s32 %s153, 1
    %s155 = scalar_select %p152, %s153, %s154
    %p158 = pneg %p152
    %p159 = scmp.eq.s32.totalorder %s12, 1
    %p160 = por %p158, %p159
    %p161 = scmp.ne.s32.totalorder %s153, %s156
    %p162 = scmp.eq.s32.totalorder %s12, 0
    %p163 = por %p161, %p162
    %p164 = scmp.ne.s32.totalorder %s153, %s156
    %p165 = scmp.eq.s32.totalorder %s17, 1
    %p166 = por %p164, %p165
    %p167 = scmp.ne.s32.totalorder %s156, %s157
    %p168 = scmp.eq.s32.totalorder %s17, 0
    %p169 = por %p167, %p168
    %p170 = scmp.ne.s32.totalorder %s156, %s157
    %p171 = scmp.eq.s32.totalorder %s18, 1
    %p172 = por %p170, %p171
    %p174 = scmp.ne.s32.totalorder %s157, %s173
    %p175 = scmp.eq.s32.totalorder %s18, 0
    %p176 = por %p174, %p175
    %p177 = scmp.le.s32.totalorder 1, %s12
    %p178 = scmp.lt.s32.totalorder %s12, 3
    %p179 = pnand %p177, %p178
    %p180 = pneg %p179
    // Predicated region
    $region9: #{block_forward.3} parent=5 // pred_check
      _
    $region10: #{block_forward.3} parent=5 // pred_check_branch
      %182 = sbr.rel (%p179) target = $region12
    $region11: #{block_forward.3} parent=5 // pred_region
      %s183 = ssub.s32 %s12, 1
      // Predicated region
      $region13: #{block_forward.3} parent=11 // pred_check
        %p184 = pneg %p59
      $region14: #{block_forward.3} parent=11 // pred_check_branch
        %186 = sbr.rel (%p184) target = $region16
      $region15: #{block_forward.3} parent=11 // pred_region
        _
      $region16: #{block_forward.3} parent=11 // pred_fallthru
        _
      // Predicated region
      $region17: #{block_forward.3} parent=11 // pred_check
        %p187 = pneg %p80
      $region18: #{block_forward.3} parent=11 // pred_check_branch
        %189 = sbr.rel (%p187) target = $region20
      $region19: #{block_forward.3} parent=11 // pred_region
        _
      $region20: #{block_forward.3} parent=11 // pred_fallthru
        _
      // Predicated region
      $region21: #{block_forward.3} parent=11 // pred_check
        %p190 = pneg %p101
      $region22: #{block_forward.3} parent=11 // pred_check_branch
        %192 = sbr.rel (%p190) target = $region24
      $region23: #{block_forward.3} parent=11 // pred_region
        _
      $region24: #{block_forward.3} parent=11 // pred_fallthru
        _
      // Predicated region
      $region25: #{block_forward.3} parent=11 // pred_check
        %p193 = pneg %p122
      $region26: #{block_forward.3} parent=11 // pred_check_branch
        %195 = sbr.rel (%p193) target = $region28
      $region27: #{block_forward.3} parent=11 // pred_region
        _
      $region28: #{block_forward.3} parent=11 // pred_fallthru
        _
      // Predicated region
      $region29: #{block_forward.3} parent=11 // pred_check
        %p196 = pneg %p143
      $region30: #{block_forward.3} parent=11 // pred_check_branch
        %198 = sbr.rel (%p196) target = $region32
      $region31: #{block_forward.3} parent=11 // pred_region
        _
      $region32: #{block_forward.3} parent=11 // pred_fallthru
        _
    $region12: #{block_forward.3} parent=5 // pred_fallthru
      _
    %p199 = scmp.lt.s32.totalorder %s12, 2
    // Predicated region
    $region33: #{block_forward.3} parent=5 // pred_check
      %p200 = pneg %p199
    $region34: #{block_forward.3} parent=5 // pred_check_branch
      %202 = sbr.rel (%p200) target = $region36
    $region35: #{block_forward.3} parent=5 // pred_region
      // Predicated region
      $region37: #{block_forward.3} parent=35 // pred_check
        %p203 = pneg %p32
      $region38: #{block_forward.3} parent=35 // pred_check_branch
        %205 = sbr.rel (%p203) target = $region40
      $region39: #{block_forward.3} parent=35 // pred_region
        %p206 = scmp.lt.s32.totalorder %s12, 1
        %s207 = scalar_select %p206, %s12, 1
        %s208 = smul.addr %s207, 54
        %s209 = smul.addr %s208, 8
        %s210 = scalar_lea.vmem %s0, %s209
      $region40: #{block_forward.3} parent=35 // pred_fallthru
        _
    $region36: #{block_forward.3} parent=5 // pred_fallthru
      _
    %p211 = scmp.le.s32.totalorder 1, %s12
    %p212 = scmp.lt.s32.totalorder %s12, 3
    %p213 = pnand %p211, %p212
    %p214 = pneg %p213
    // Predicated region
    $region41: #{block_forward.3} parent=5 // pred_check
      _
    $region42: #{block_forward.3} parent=5 // pred_check_branch
      %216 = sbr.rel (%p213) target = $region44
    $region43: #{block_forward.3} parent=5 // pred_region
      %s217 = ssub.s32 %s12, 1
      %p218 = scmp.lt.s32.totalorder %s17, 1
      %s219 = scalar_select %p218, %s17, 1
      %s220 = smul.addr %s219, 54
      %s221 = smul.addr %s220, 8
      %s222 = scalar_lea.vmem %s0, %s221
      %p223 = pneg %p38
      %p224 = pneg %p35
      %p225 = pneg %p59
      %p226 = pneg %p56
      %p227 = pneg %p80
      %p228 = pneg %p77
      %p229 = pneg %p101
      %p230 = pneg %p98
      %p231 = pneg %p122
      %p232 = pneg %p119
      %p233 = pneg %p143
      %p234 = pneg %p140
      %p235 = pneg %p169
      %p236 = pneg %p166
      %p237 = scmp.lt.s32.totalorder %s17, 1
      %s238 = scalar_select %p237, %s17, 1
      %s239 = smul.addr %s238, 32
      %s240 = smul.addr %s239, 8
      %s241 = scalar_lea.vmem %s6, %s240
      %p242 = scmp.lt.s32.totalorder %s17, 1
      %s243 = scalar_select %p242, %s17, 1
      %s244 = smul.addr %s243, 54
      %s245 = smul.addr %s244, 8
      %s246 = scalar_lea.vmem %s0, %s245
      %p247 = scmp.lt.s32.totalorder %s17, 1
      %s248 = scalar_select %p247, %s17, 1
      %s249 = smul.addr %s248, 32
      %s250 = smul.addr %s249, 8
      %s251 = scalar_lea.vmem %s6, %s250
      %v252 = vld [vmem:[%s2] sm:$0x1]
      %v253 = vld [vmem:[%s2 + $0x1] sm:$0x1]
      %vm254 = vcmask 1040384
      %v255 = vsel %vm254, %v252, 0.0
      %v256 = vsel %vm254, %v253, 0.0
      %v257 = vadd.f32 %v255, %v256
      %v258 = vld [vmem:[%s3] sm:$0x1]
      %v259 = vld [vmem:[%s3 + $0x1] sm:$0x1]
      %v260 = vsel %vm254, %v258, 0.0
      %v261 = vsel %vm254, %v259, 0.0
      %v262 = vadd.f32 %v260, %v261
      %v263 = vmul.f32 %v257, 0.001953125
      %v264 = vmul.f32 %v262, 0.001953125
      %v265 = vmul.f32 %v263, %v263
      %v266 = vsub.f32 %v264, %v265
      %v267 = vmax.f32 %v266, 0.0
      %v268 = vadd.f32 %v267, 1e-05
      %v269 = vrsqrt.pop %v268
      %v270 = vld [vmem:[%s4] sm:$0x1]
      %v271 = vmul.f32 %v270, %v269
      %v272 = vld [vmem:[%s5] sm:$0x1]
      %v273 = vmul.f32 %v263, %v271
      %v274 = vsub.f32 %v272, %v273
      %v275 = vld [vmem:[%s246] sm:$0xff]
      %v276 = vld [vmem:[%s246 + $0x8] sm:$0xff]
      %v277 = vld [vmem:[%s246 + $0x18] sm:$0xff]
      %v278 = vld [vmem:[%s246 + $0x20] sm:$0xff]
      %v279 = vld [vmem:[%s246 + $0x30] sm:$0xff]
      %v280 = vld [vmem:[%s246 + $0x38] sm:$0xff]
      %v281 = vld [vmem:[%s246 + $0x48] sm:$0xff]
      %v282 = vld [vmem:[%s246 + $0x50] sm:$0xff]
      %v283 = vld [vmem:[%s246 + $0x60] sm:$0xff]
      %v284 = vld [vmem:[%s246 + $0x68] sm:$0xff]
      %v285 = vld [vmem:[%s246 + $0x78] sm:$0xff]
      %v286 = vld [vmem:[%s246 + $0x80] sm:$0xff]
      %v287 = vld [vmem:[%s246 + $0x90] sm:$0xff]
      %v288 = vld [vmem:[%s246 + $0x98] sm:$0xff]
      %v289 = vld [vmem:[%s246 + $0xa8] sm:$0xff]
      %v290 = vld [vmem:[%s246 + $0xb0] sm:$0xff]
      %v291 = vld [vmem:[%s246 + $0xc0] sm:$0xff]
      %v292 = vld [vmem:[%s246 + $0xc8] sm:$0xff]
      %v293 = vld [vmem:[%s246 + $0xd8] sm:$0xff]
      %v294 = vld [vmem:[%s246 + $0xe0] sm:$0xff]
      %v295 = vld [vmem:[%s246 + $0xf0] sm:$0xff]
      %v296 = vld [vmem:[%s246 + $0xf8] sm:$0xff]
      %v297 = vld [vmem:[%s246 + $0x108] sm:$0xff]
      %v298 = vld [vmem:[%s246 + $0x110] sm:$0xff]
      %v299 = vld [vmem:[%s246 + $0x120] sm:$0xff]
      %v300 = vld [vmem:[%s246 + $0x128] sm:$0xff]
      %v301 = vld [vmem:[%s246 + $0x138] sm:$0xff]
      %v302 = vld [vmem:[%s246 + $0x140] sm:$0xff]
      %v303 = vld [vmem:[%s246 + $0x150] sm:$0xff]
      %v304 = vld [vmem:[%s246 + $0x158] sm:$0xff]
      %v305 = vld [vmem:[%s246 + $0x168] sm:$0xff]
      %v306 = vld [vmem:[%s246 + $0x170] sm:$0xff]
      %v307 = vld [vmem:[%s1] sm:$0xf]
      %vm308 = vcmask 31744
      %v310 = vsel %vm308, %v275, 0
      %v313 = vsel %vm308, %v276, 0
      %v316 = vsel %vm308, %v277, 0
      %v319 = vsel %vm308, %v278, 0
      %v322 = vsel %vm308, %v279, 0
      %v325 = vsel %vm308, %v280, 0
      %v328 = vsel %vm308, %v281, 0
      %v331 = vsel %vm308, %v282, 0
      %v334 = vsel %vm308, %v283, 0
      %v337 = vsel %vm308, %v284, 0
      %v340 = vsel %vm308, %v285, 0
      %v343 = vsel %vm308, %v286, 0
      %v346 = vsel %vm308, %v287, 0
      %v349 = vsel %vm308, %v288, 0
      %v352 = vsel %vm308, %v289, 0
      %v355 = vsel %vm308, %v290, 0
      %v358 = vsel %vm308, %v291, 0
      %v361 = vsel %vm308, %v292, 0
      %v364 = vsel %vm308, %v293, 0
      %v367 = vsel %vm308, %v294, 0
      %v370 = vsel %vm308, %v295, 0
      %v373 = vsel %vm308, %v296, 0
      %v376 = vsel %vm308, %v297, 0
      %v379 = vsel %vm308, %v298, 0
      %v382 = vsel %vm308, %v299, 0
      %v385 = vsel %vm308, %v300, 0
      %v388 = vsel %vm308, %v301, 0
      %v391 = vsel %vm308, %v302, 0
      %v394 = vsel %vm308, %v303, 0
      %v397 = vsel %vm308, %v304, 0
      %v400 = vsel %vm308, %v305, 0
      %v403 = vsel %vm308, %v306, 0
      %vm405 = vcmask 1043456
      %v407 = vsel %vm405, %v307, 0
      %409 = vmatprep.subr.mxu0 0.0
      %410 = vmatpush1.msra.mxu0 %v407
      %411 = vmatprep.subr.mxu0 0.0
      %412 = vmatpush1.msra.mxu0 0.0
      %413 = vmatprep.subr.mxu0 0.0
      %414 = vmatpush1.msra.mxu0 0.0
      %415 = vmatprep.subr.mxu0 0.0
      %416 = vmatpush1.msra.mxu0 0.0
      %417 = vmatprep.subr.mxu0 0.0
      %418 = vmatpush1.msra.mxu0 0.0
      %419 = vmatprep.subr.mxu0 0.0
      %420 = vmatpush1.msra.mxu0 0.0
      %421 = vmatprep.subr.mxu0 0.0
      %422 = vmatpush1.msra.mxu0 0.0
      %423 = vmatprep.subr.mxu0 0.0
      %424 = vmatpush1.msra.mxu0 0.0
      %425 = vmatprep.subr.mxu0 0.0
      %426 = vmatpush1.msra.mxu0 0.0
      %427 = vmatprep.subr.mxu0 0.0
      %428 = vmatpush1.msra.mxu0 0.0
      %429 = vmatprep.subr.mxu0 0.0
      %430 = vmatpush1.msra.mxu0 0.0
      %431 = vmatprep.subr.mxu0 0.0
      %432 = vmatpush1.msra.mxu0 0.0
      %433 = vmatprep.subr.mxu0 0.0
      %434 = vmatpush1.msra.mxu0 0.0
      %435 = vmatprep.subr.mxu0 0.0
      %436 = vmatpush1.msra.mxu0 0.0
      %437 = vmatprep.subr.mxu0 0.0
      %438 = vmatpush1.msra.mxu0 0.0
      %439 = vmatprep.subr.mxu0 0.0
      %440 = vmatpush1.msra.mxu0 0.0
      %441 = vmatprep.subr.mxu0 0.0
      %442 = vmatpush1.msra.mxu0 0.0
      %443 = vmatprep.subr.mxu0 0.0
      %444 = vmatpush1.msra.mxu0 0.0
      %445 = vmatprep.subr.mxu0 0.0
      %446 = vmatpush1.msra.mxu0 0.0
      %447 = vmatprep.subr.mxu0 0.0
      %448 = vmatpush1.msra.mxu0 0.0
      %449 = vmatprep.subr.mxu0 0.0
      %450 = vmatpush1.msra.mxu0 0.0
      %451 = vmatprep.subr.mxu0 0.0
      %452 = vmatpush1.msra.mxu0 0.0
      %453 = vmatprep.subr.mxu0 0.0
      %454 = vmatpush1.msra.mxu0 0.0
      %455 = vmatprep.subr.mxu0 0.0
      %456 = vmatpush1.msra.mxu0 0.0
      %457 = vmatprep.subr.mxu0 0.0
      %458 = vmatpush1.msra.mxu0 0.0
      %459 = vmatprep.subr.mxu0 0.0
      %460 = vmatpush1.msra.mxu0 0.0
      %461 = vmatprep.subr.mxu0 0.0
      %462 = vmatpush1.msra.mxu0 0.0
      %463 = vmatprep.subr.mxu0 0.0
      %464 = vmatpush1.msra.mxu0 0.0
      %465 = vmatprep.subr.mxu0 0.0
      %466 = vmatpush1.msra.mxu0 0.0
      %467 = vmatprep.subr.mxu0 0.0
      %468 = vmatpush1.msra.mxu0 0.0
      %469 = vmatprep.subr.mxu0 0.0
      %470 = vmatpush1.msra.mxu0 0.0
      %471 = vmatprep.subr.mxu0 0.0
      %472 = vmatpush1.msra.mxu0 0.0
      %473 = vmatprep.mubr.f32.mxu0 0.0
      %474 = vmatmul.mubr.f32.gmra.mrb[0].mxu0 %v310
      %v475 = vpop.f32.mrb[0].mxu0
      %v476 = vadd.f32 0.0, %v475
      %v477 = vpop.f32.mrb[0].mxu0
      %478 = vmatprep.mubr.f32.mxu0 0.0
      %479 = vmatmul.mubr.f32.gmra.mrb[0].mxu0 %v313
      %v480 = vpop.f32.mrb[0].mxu0
      %v481 = vadd.f32 0.0, %v480
      %v482 = vpop.f32.mrb[0].mxu0
      %483 = vmatprep.mubr.f32.mxu0 0.0
      %484 = vmatmul.mubr.f32.gmra.mrb[0].mxu0 %v316
      %v485 = vpop.f32.mrb[0].mxu0
      %v486 = vadd.f32 0.0, %v485
      %v487 = vpop.f32.mrb[0].mxu0
      %488 = vmatprep.mubr.f32.mxu0 0.0
      %489 = vmatmul.mubr.f32.gmra.mrb[0].mxu0 %v319
      %v490 = vpop.f32.mrb[0].mxu0
      %v491 = vadd.f32 0.0, %v490
      %v492 = vpop.f32.mrb[0].mxu0
      %493 = vmatprep.mubr.f32.mxu0 0.0
      %494 = vmatmul.mubr.f32.gmra.mrb[0].mxu0 %v322
      %v495 = vpop.f32.mrb[0].mxu0
      %v496 = vadd.f32 0.0, %v495
      %v497 = vpop.f32.mrb[0].mxu0
      %498 = vmatprep.mubr.f32.mxu0 0.0
      %499 = vmatmul.mubr.f32.gmra.mrb[0].mxu0 %v325
      %v500 = vpop.f32.mrb[0].mxu0
      %v501 = vadd.f32 0.0, %v500
      %v502 = vpop.f32.mrb[0].mxu0
      %503 = vmatprep.mubr.f32.mxu0 0.0
      %504 = vmatmul.mubr.f32.gmra.mrb[0].mxu0 %v328
      %v505 = vpop.f32.mrb[0].mxu0
      %v506 = vadd.f32 0.0, %v505
      %v507 = vpop.f32.mrb[0].mxu0
      %508 = vmatprep.mubr.f32.mxu0 0.0
      %509 = vmatmul.mubr.f32.gmra.mrb[0].mxu0 %v331
      %v510 = vpop.f32.mrb[0].mxu0
      %v511 = vadd.f32 0.0, %v510
      %v512 = vpop.f32.mrb[0].mxu0
      %513 = vmatprep.mubr.f32.mxu0 0.0
      %514 = vmatmul.mubr.f32.gmra.mrb[0].mxu0 %v334
      %v515 = vpop.f32.mrb[0].mxu0
      %v516 = vadd.f32 0.0, %v515
      %v517 = vpop.f32.mrb[0].mxu0
      %518 = vmatprep.mubr.f32.mxu0 0.0
      %519 = vmatmul.mubr.f32.gmra.mrb[0].mxu0 %v337
      %v520 = vpop.f32.mrb[0].mxu0
      %v521 = vadd.f32 0.0, %v520
      %v522 = vpop.f32.mrb[0].mxu0
      %523 = vmatprep.mubr.f32.mxu0 0.0
      %524 = vmatmul.mubr.f32.gmra.mrb[0].mxu0 %v340
      %v525 = vpop.f32.mrb[0].mxu0
      %v526 = vadd.f32 0.0, %v525
      %v527 = vpop.f32.mrb[0].mxu0
      %528 = vmatprep.mubr.f32.mxu0 0.0
      %529 = vmatmul.mubr.f32.gmra.mrb[0].mxu0 %v343
      %v530 = vpop.f32.mrb[0].mxu0
      %v531 = vadd.f32 0.0, %v530
      %v532 = vpop.f32.mrb[0].mxu0
      %533 = vmatprep.mubr.f32.mxu0 0.0
      %534 = vmatmul.mubr.f32.gmra.mrb[0].mxu0 %v346
      %v535 = vpop.f32.mrb[0].mxu0
      %v536 = vadd.f32 0.0, %v535
      %v537 = vpop.f32.mrb[0].mxu0
      %538 = vmatprep.mubr.f32.mxu0 0.0
      %539 = vmatmul.mubr.f32.gmra.mrb[0].mxu0 %v349
      %v540 = vpop.f32.mrb[0].mxu0
      %v541 = vadd.f32 0.0, %v540
      %v542 = vpop.f32.mrb[0].mxu0
      %543 = vmatprep.mubr.f32.mxu0 0.0
      %544 = vmatmul.mubr.f32.gmra.mrb[0].mxu0 %v352
      %v545 = vpop.f32.mrb[0].mxu0
      %v546 = vadd.f32 0.0, %v545
      %v547 = vpop.f32.mrb[0].mxu0
      %548 = vmatprep.mubr.f32.mxu0 0.0
      %549 = vmatmul.mubr.f32.gmra.mrb[0].mxu0 %v355
      %v550 = vpop.f32.mrb[0].mxu0
      %v551 = vadd.f32 0.0, %v550
      %v552 = vpop.f32.mrb[0].mxu0
      %553 = vmatprep.mubr.f32.mxu0 0.0
      %554 = vmatmul.mubr.f32.gmra.mrb[0].mxu0 %v358
      %v555 = vpop.f32.mrb[0].mxu0
      %v556 = vadd.f32 0.0, %v555
      %v557 = vpop.f32.mrb[0].mxu0
      %558 = vmatprep.mubr.f32.mxu0 0.0
      %559 = vmatmul.mubr.f32.gmra.mrb[0].mxu0 %v361
      %v560 = vpop.f32.mrb[0].mxu0
      %v561 = vadd.f32 0.0, %v560
      %v562 = vpop.f32.mrb[0].mxu0
      %563 = vmatprep.mubr.f32.mxu0 0.0
      %564 = vmatmul.mubr.f32.gmra.mrb[0].mxu0 %v364
      %v565 = vpop.f32.mrb[0].mxu0
      %v566 = vadd.f32 0.0, %v565
      %v567 = vpop.f32.mrb[0].mxu0
      %568 = vmatprep.mubr.f32.mxu0 0.0
      %569 = vmatmul.mubr.f32.gmra.mrb[0].mxu0 %v367
      %v570 = vpop.f32.mrb[0].mxu0
      %v571 = vadd.f32 0.0, %v570
      %v572 = vpop.f32.mrb[0].mxu0
      %573 = vmatprep.mubr.f32.mxu0 0.0
      %574 = vmatmul.mubr.f32.gmra.mrb[0].mxu0 %v370
      %v575 = vpop.f32.mrb[0].mxu0
      %v576 = vadd.f32 0.0, %v575
      %v577 = vpop.f32.mrb[0].mxu0
      %578 = vmatprep.mubr.f32.mxu0 0.0
      %579 = vmatmul.mubr.f32.gmra.mrb[0].mxu0 %v373
      %v580 = vpop.f32.mrb[0].mxu0
      %v581 = vadd.f32 0.0, %v580
      %v582 = vpop.f32.mrb[0].mxu0
      %583 = vmatprep.mubr.f32.mxu0 0.0
      %584 = vmatmul.mubr.f32.gmra.mrb[0].mxu0 %v376
      %v585 = vpop.f32.mrb[0].mxu0
      %v586 = vadd.f32 0.0, %v585
      %v587 = vpop.f32.mrb[0].mxu0
      %588 = vmatprep.mubr.f32.mxu0 0.0
      %589 = vmatmul.mubr.f32.gmra.mrb[0].mxu0 %v379
      %v590 = vpop.f32.mrb[0].mxu0
      %v591 = vadd.f32 0.0, %v590
      %v592 = vpop.f32.mrb[0].mxu0
      %593 = vmatprep.mubr.f32.mxu0 0.0
      %594 = vmatmul.mubr.f32.gmra.mrb[0].mxu0 %v382
      %v595 = vpop.f32.mrb[0].mxu0
      %v596 = vadd.f32 0.0, %v595
      %v597 = vpop.f32.mrb[0].mxu0
      %598 = vmatprep.mubr.f32.mxu0 0.0
      %599 = vmatmul.mubr.f32.gmra.mrb[0].mxu0 %v385
      %v600 = vpop.f32.mrb[0].mxu0
      %v601 = vadd.f32 0.0, %v600
      %v602 = vpop.f32.mrb[0].mxu0
      %603 = vmatprep.mubr.f32.mxu0 0.0
      %604 = vmatmul.mubr.f32.gmra.mrb[0].mxu0 %v388
      %v605 = vpop.f32.mrb[0].mxu0
      %v606 = vadd.f32 0.0, %v605
      %v607 = vpop.f32.mrb[0].mxu0
      %608 = vmatprep.mubr.f32.mxu0 0.0
      %609 = vmatmul.mubr.f32.gmra.mrb[0].mxu0 %v391
      %v610 = vpop.f32.mrb[0].mxu0
      %v611 = vadd.f32 0.0, %v610
      %v612 = vpop.f32.mrb[0].mxu0
      %613 = vmatprep.mubr.f32.mxu0 0.0
      %614 = vmatmul.mubr.f32.gmra.mrb[0].mxu0 %v394
      %v615 = vpop.f32.mrb[0].mxu0
      %v616 = vadd.f32 0.0, %v615
      %v617 = vpop.f32.mrb[0].mxu0
      %618 = vmatprep.mubr.f32.mxu0 0.0
      %619 = vmatmul.mubr.f32.gmra.mrb[0].mxu0 %v397
      %v620 = vpop.f32.mrb[0].mxu0
      %v621 = vadd.f32 0.0, %v620
      %v622 = vpop.f32.mrb[0].mxu0
      %623 = vmatprep.mubr.f32.mxu0 0.0
      %624 = vmatmul.mubr.f32.gmra.mrb[0].mxu0 %v400
      %v625 = vpop.f32.mrb[0].mxu0
      %v626 = vadd.f32 0.0, %v625
      %v627 = vpop.f32.mrb[0].mxu0
      %628 = vmatprep.mubr.f32.mxu0 0.0
      %629 = vmatmul.mubr.f32.gmra.mrb[0].mxu0 %v403
      %v630 = vpop.f32.mrb[0].mxu0
      %v631 = vadd.f32 0.0, %v630
      %v632 = vpop.f32.mrb[0].mxu0
      %633 = vdwg.mxu0
      %634 = vst [vmem:[%s251] sm:$0xff] %v476
      %635 = vst [vmem:[%s251 + $0x8] sm:$0xff] %v481
      %636 = vst [vmem:[%s251 + $0x10] sm:$0xff] %v486
      %637 = vst [vmem:[%s251 + $0x18] sm:$0xff] %v491
      %638 = vst [vmem:[%s251 + $0x20] sm:$0xff] %v496
      %639 = vst [vmem:[%s251 + $0x28] sm:$0xff] %v501
      %640 = vst [vmem:[%s251 + $0x30] sm:$0xff] %v506
      %641 = vst [vmem:[%s251 + $0x38] sm:$0xff] %v511
      %642 = vst [vmem:[%s251 + $0x40] sm:$0xff] %v516
      %643 = vst [vmem:[%s251 + $0x48] sm:$0xff] %v521
      %644 = vst [vmem:[%s251 + $0x50] sm:$0xff] %v526
      %645 = vst [vmem:[%s251 + $0x58] sm:$0xff] %v531
      %646 = vst [vmem:[%s251 + $0x60] sm:$0xff] %v536
      %647 = vst [vmem:[%s251 + $0x68] sm:$0xff] %v541
      %648 = vst [vmem:[%s251 + $0x70] sm:$0xff] %v546
      %649 = vst [vmem:[%s251 + $0x78] sm:$0xff] %v551
      %650 = vst [vmem:[%s251 + $0x80] sm:$0xff] %v556
      %651 = vst [vmem:[%s251 + $0x88] sm:$0xff] %v561
      %652 = vst [vmem:[%s251 + $0x90] sm:$0xff] %v566
      %653 = vst [vmem:[%s251 + $0x98] sm:$0xff] %v571
      %654 = vst [vmem:[%s251 + $0xa0] sm:$0xff] %v576
      %655 = vst [vmem:[%s251 + $0xa8] sm:$0xff] %v581
      %656 = vst [vmem:[%s251 + $0xb0] sm:$0xff] %v586
      %657 = vst [vmem:[%s251 + $0xb8] sm:$0xff] %v591
      %658 = vst [vmem:[%s251 + $0xc0] sm:$0xff] %v596
      %659 = vst [vmem:[%s251 + $0xc8] sm:$0xff] %v601
      %660 = vst [vmem:[%s251 + $0xd0] sm:$0xff] %v606
      %661 = vst [vmem:[%s251 + $0xd8] sm:$0xff] %v611
      %662 = vst [vmem:[%s251 + $0xe0] sm:$0xff] %v616
      %663 = vst [vmem:[%s251 + $0xe8] sm:$0xff] %v621
      %664 = vst [vmem:[%s251 + $0xf0] sm:$0xff] %v626
      %665 = vst [vmem:[%s251 + $0xf8] sm:$0xff] %v631
      %v666 = vld [vmem:[%s246 + $0x1] sm:$0xff]
      %v667 = vld [vmem:[%s246 + $0x9] sm:$0xff]
      %v668 = vld [vmem:[%s246 + $0x19] sm:$0xff]
      %v669 = vld [vmem:[%s246 + $0x21] sm:$0xff]
      %v670 = vld [vmem:[%s246 + $0x31] sm:$0xff]
      %v671 = vld [vmem:[%s246 + $0x39] sm:$0xff]
      %v672 = vld [vmem:[%s246 + $0x49] sm:$0xff]
      %v673 = vld [vmem:[%s246 + $0x51] sm:$0xff]
      %v674 = vld [vmem:[%s246 + $0x61] sm:$0xff]
      %v675 = vld [vmem:[%s246 + $0x69] sm:$0xff]
      %v676 = vld [vmem:[%s246 + $0x79] sm:$0xff]
      %v677 = vld [vmem:[%s246 + $0x81] sm:$0xff]
      %v678 = vld [vmem:[%s246 + $0x91] sm:$0xff]
      %v679 = vld [vmem:[%s246 + $0x99] sm:$0xff]
      %v680 = vld [vmem:[%s246 + $0xa9] sm:$0xff]
      %v681 = vld [vmem:[%s246 + $0xb1] sm:$0xff]
      %v682 = vld [vmem:[%s246 + $0xc1] sm:$0xff]
      %v683 = vld [vmem:[%s246 + $0xc9] sm:$0xff]
      %v684 = vld [vmem:[%s246 + $0xd9] sm:$0xff]
      %v685 = vld [vmem:[%s246 + $0xe1] sm:$0xff]
      %v686 = vld [vmem:[%s246 + $0xf1] sm:$0xff]
      %v687 = vld [vmem:[%s246 + $0xf9] sm:$0xff]
      %v688 = vld [vmem:[%s246 + $0x109] sm:$0xff]
      %v689 = vld [vmem:[%s246 + $0x111] sm:$0xff]
      %v690 = vld [vmem:[%s246 + $0x121] sm:$0xff]
      %v691 = vld [vmem:[%s246 + $0x129] sm:$0xff]
      %v692 = vld [vmem:[%s246 + $0x139] sm:$0xff]
      %v693 = vld [vmem:[%s246 + $0x141] sm:$0xff]
      %v694 = vld [vmem:[%s246 + $0x151] sm:$0xff]
      %v695 = vld [vmem:[%s246 + $0x159] sm:$0xff]
      %v696 = vld [vmem:[%s246 + $0x169] sm:$0xff]
      %v697 = vld [vmem:[%s246 + $0x171] sm:$0xff]
      %s698 = scalar_lea.vmem %s1, 4
      %v699 = vld [vmem:[%s698] sm:$0xf]
      %v701 = vsel %vm308, %v666, 0
      %v704 = vsel %vm308, %v667, 0
      %v707 = vsel %vm308, %v668, 0
      %v710 = vsel %vm308, %v669, 0
      %v713 = vsel %vm308, %v670, 0
      %v716 = vsel %vm308, %v671, 0
      %v719 = vsel %vm308, %v672, 0
      %v722 = vsel %vm308, %v673, 0
      %v725 = vsel %vm308, %v674, 0
      %v728 = vsel %vm308, %v675, 0
      %v731 = vsel %vm308, %v676, 0
      %v734 = vsel %vm308, %v677, 0
      %v737 = vsel %vm308, %v678, 0
      %v740 = vsel %vm308, %v679, 0
      %v743 = vsel %vm308, %v680, 0
      %v746 = vsel %vm308, %v681, 0
      %v749 = vsel %vm308, %v682, 0
      %v752 = vsel %vm308, %v683, 0
      %v755 = vsel %vm308, %v684, 0
      %v758 = vsel %vm308, %v685, 0
      %v761 = vsel %vm308, %v686, 0
      %v764 = vsel %vm308, %v687, 0
      %v767 = vsel %vm308, %v688, 0
      %v770 = vsel %vm308, %v689, 0
      %v773 = vsel %vm308, %v690, 0
      %v776 = vsel %vm308, %v691, 0
      %v779 = vsel %vm308, %v692, 0
      %v782 = vsel %vm308, %v693, 0
      %v785 = vsel %vm308, %v694, 0
      %v788 = vsel %vm308, %v695, 0
      %v791 = vsel %vm308, %v696, 0
      %v794 = vsel %vm308, %v697, 0
      %v797 = vsel %vm405, %v699, 0
      %799 = vmatprep.subr.mxu0 0.0
      %800 = vmatpush1.msra.mxu0 %v797
      %801 = vmatprep.subr.mxu0 0.0
      %802 = vmatpush1.msra.mxu0 0.0
      %803 = vmatprep.subr.mxu0 0.0
      %804 = vmatpush1.msra.mxu0 0.0
      %805 = vmatprep.subr.mxu0 0.0
      %806 = vmatpush1.msra.mxu0 0.0
      %807 = vmatprep.subr.mxu0 0.0
      %808 = vmatpush1.msra.mxu0 0.0
      %809 = vmatprep.subr.mxu0 0.0
      %810 = vmatpush1.msra.mxu0 0.0
      %811 = vmatprep.subr.mxu0 0.0
      %812 = vmatpush1.msra.mxu0 0.0
      %813 = vmatprep.subr.mxu0 0.0
      %814 = vmatpush1.msra.mxu0 0.0
      %815 = vmatprep.subr.mxu0 0.0
      %816 = vmatpush1.msra.mxu0 0.0
      %817 = vmatprep.subr.mxu0 0.0
      %818 = vmatpush1.msra.mxu0 0.0
      %819 = vmatprep.subr.mxu0 0.0
      %820 = vmatpush1.msra.mxu0 0.0
      %821 = vmatprep.subr.mxu0 0.0
      %822 = vmatpush1.msra.mxu0 0.0
      %823 = vmatprep.subr.mxu0 0.0
      %824 = vmatpush1.msra.mxu0 0.0
      %825 = vmatprep.subr.mxu0 0.0
      %826 = vmatpush1.msra.mxu0 0.0
      %827 = vmatprep.subr.mxu0 0.0
      %828 = vmatpush1.msra.mxu0 0.0
      %829 = vmatprep.subr.mxu0 0.0
      %830 = vmatpush1.msra.mxu0 0.0
      %831 = vmatprep.subr.mxu0 0.0
      %832 = vmatpush1.msra.mxu0 0.0
      %833 = vmatprep.subr.mxu0 0.0
      %834 = vmatpush1.msra.mxu0 0.0
      %835 = vmatprep.subr.mxu0 0.0
      %836 = vmatpush1.msra.mxu0 0.0
      %837 = vmatprep.subr.mxu0 0.0
      %838 = vmatpush1.msra.mxu0 0.0
      %839 = vmatprep.subr.mxu0 0.0
      %840 = vmatpush1.msra.mxu0 0.0
      %841 = vmatprep.subr.mxu0 0.0
      %842 = vmatpush1.msra.mxu0 0.0
      %843 = vmatprep.subr.mxu0 0.0
      %844 = vmatpush1.msra.mxu0 0.0
      %845 = vmatprep.subr.mxu0 0.0
      %846 = vmatpush1.msra.mxu0 0.0
      %847 = vmatprep.subr.mxu0 0.0
      %848 = vmatpush1.msra.mxu0 0.0
      %849 = vmatprep.subr.mxu0 0.0
      %850 = vmatpush1.msra.mxu0 0.0
      %851 = vmatprep.subr.mxu0 0.0
      %852 = vmatpush1.msra.mxu0 0.0
      %853 = vmatprep.subr.mxu0 0.0
      %854 = vmatpush1.msra.mxu0 0.0
      %855 = vmatprep.subr.mxu0 0.0
      %856 = vmatpush1.msra.mxu0 0.0
      %857 = vmatprep.subr.mxu0 0.0
      %858 = vmatpush1.msra.mxu0 0.0
      %859 = vmatprep.subr.mxu0 0.0
      %860 = vmatpush1.msra.mxu0 0.0
      %861 = vmatprep.subr.mxu0 0.0
      %862 = vmatpush1.msra.mxu0 0.0
      %863 = vmatprep.mubr.f32.mxu0 0.0
      %864 = vmatmul.mubr.f32.gmra.mrb[0].mxu0 %v701
      %v865 = vpop.f32.mrb[0].mxu0
      %v866 = vadd.f32 0.0, %v865
      %v867 = vpop.f32.mrb[0].mxu0
      %868 = vmatprep.mubr.f32.mxu0 0.0
      %869 = vmatmul.mubr.f32.gmra.mrb[0].mxu0 %v704
      %v870 = vpop.f32.mrb[0].mxu0
      %v871 = vadd.f32 0.0, %v870
      %v872 = vpop.f32.mrb[0].mxu0
      %873 = vmatprep.mubr.f32.mxu0 0.0
      %874 = vmatmul.mubr.f32.gmra.mrb[0].mxu0 %v707
      %v875 = vpop.f32.mrb[0].mxu0
      %v876 = vadd.f32 0.0, %v875
      %v877 = vpop.f32.mrb[0].mxu0
      %878 = vmatprep.mubr.f32.mxu0 0.0
      %879 = vmatmul.mubr.f32.gmra.mrb[0].mxu0 %v710
      %v880 = vpop.f32.mrb[0].mxu0
      %v881 = vadd.f32 0.0, %v880
      %v882 = vpop.f32.mrb[0].mxu0
      %883 = vmatprep.mubr.f32.mxu0 0.0
      %884 = vmatmul.mubr.f32.gmra.mrb[0].mxu0 %v713
      %v885 = vpop.f32.mrb[0].mxu0
      %v886 = vadd.f32 0.0, %v885
      %v887 = vpop.f32.mrb[0].mxu0
      %888 = vmatprep.mubr.f32.mxu0 0.0
      %889 = vmatmul.mubr.f32.gmra.mrb[0].mxu0 %v716
      %v890 = vpop.f32.mrb[0].mxu0
      %v891 = vadd.f32 0.0, %v890
      %v892 = vpop.f32.mrb[0].mxu0
      %893 = vmatprep.mubr.f32.mxu0 0.0
      %894 = vmatmul.mubr.f32.gmra.mrb[0].mxu0 %v719
      %v895 = vpop.f32.mrb[0].mxu0
      %v896 = vadd.f32 0.0, %v895
      %v897 = vpop.f32.mrb[0].mxu0
      %898 = vmatprep.mubr.f32.mxu0 0.0
      %899 = vmatmul.mubr.f32.gmra.mrb[0].mxu0 %v722
      %v900 = vpop.f32.mrb[0].mxu0
      %v901 = vadd.f32 0.0, %v900
      %v902 = vpop.f32.mrb[0].mxu0
      %903 = vmatprep.mubr.f32.mxu0 0.0
      %904 = vmatmul.mubr.f32.gmra.mrb[0].mxu0 %v725
      %v905 = vpop.f32.mrb[0].mxu0
      %v906 = vadd.f32 0.0, %v905
      %v907 = vpop.f32.mrb[0].mxu0
      %908 = vmatprep.mubr.f32.mxu0 0.0
      %909 = vmatmul.mubr.f32.gmra.mrb[0].mxu0 %v728
      %v910 = vpop.f32.mrb[0].mxu0
      %v911 = vadd.f32 0.0, %v910
      %v912 = vpop.f32.mrb[0].mxu0
      %913 = vmatprep.mubr.f32.mxu0 0.0
      %914 = vmatmul.mubr.f32.gmra.mrb[0].mxu0 %v731
      %v915 = vpop.f32.mrb[0].mxu0
      %v916 = vadd.f32 0.0, %v915
      %v917 = vpop.f32.mrb[0].mxu0
      %918 = vmatprep.mubr.f32.mxu0 0.0
      %919 = vmatmul.mubr.f32.gmra.mrb[0].mxu0 %v734
      %v920 = vpop.f32.mrb[0].mxu0
      %v921 = vadd.f32 0.0, %v920
      %v922 = vpop.f32.mrb[0].mxu0
      %923 = vmatprep.mubr.f32.mxu0 0.0
      %924 = vmatmul.mubr.f32.gmra.mrb[0].mxu0 %v737
      %v925 = vpop.f32.mrb[0].mxu0
      %v926 = vadd.f32 0.0, %v925
      %v927 = vpop.f32.mrb[0].mxu0
      %928 = vmatprep.mubr.f32.mxu0 0.0
      %929 = vmatmul.mubr.f32.gmra.mrb[0].mxu0 %v740
      %v930 = vpop.f32.mrb[0].mxu0
      %v931 = vadd.f32 0.0, %v930
      %v932 = vpop.f32.mrb[0].mxu0
      %933 = vmatprep.mubr.f32.mxu0 0.0
      %934 = vmatmul.mubr.f32.gmra.mrb[0].mxu0 %v743
      %v935 = vpop.f32.mrb[0].mxu0
      %v936 = vadd.f32 0.0, %v935
      %v937 = vpop.f32.mrb[0].mxu0
      %938 = vmatprep.mubr.f32.mxu0 0.0
      %939 = vmatmul.mubr.f32.gmra.mrb[0].mxu0 %v746
      %v940 = vpop.f32.mrb[0].mxu0
      %v941 = vadd.f32 0.0, %v940
      %v942 = vpop.f32.mrb[0].mxu0
      %943 = vmatprep.mubr.f32.mxu0 0.0
      %944 = vmatmul.mubr.f32.gmra.mrb[0].mxu0 %v749
      %v945 = vpop.f32.mrb[0].mxu0
      %v946 = vadd.f32 0.0, %v945
      %v947 = vpop.f32.mrb[0].mxu0
      %948 = vmatprep.mubr.f32.mxu0 0.0
      %949 = vmatmul.mubr.f32.gmra.mrb[0].mxu0 %v752
      %v950 = vpop.f32.mrb[0].mxu0
      %v951 = vadd.f32 0.0, %v950
      %v952 = vpop.f32.mrb[0].mxu0
      %953 = vmatprep.mubr.f32.mxu0 0.0
      %954 = vmatmul.mubr.f32.gmra.mrb[0].mxu0 %v755
      %v955 = vpop.f32.mrb[0].mxu0
      %v956 = vadd.f32 0.0, %v955
      %v957 = vpop.f32.mrb[0].mxu0
      %958 = vmatprep.mubr.f32.mxu0 0.0
      %959 = vmatmul.mubr.f32.gmra.mrb[0].mxu0 %v758
      %v960 = vpop.f32.mrb[0].mxu0
      %v961 = vadd.f32 0.0, %v960
      %v962 = vpop.f32.mrb[0].mxu0
      %963 = vmatprep.mubr.f32.mxu0 0.0
      %964 = vmatmul.mubr.f32.gmra.mrb[0].mxu0 %v761
      %v965 = vpop.f32.mrb[0].mxu0
      %v966 = vadd.f32 0.0, %v965
      %v967 = vpop.f32.mrb[0].mxu0
      %968 = vmatprep.mubr.f32.mxu0 0.0
      %969 = vmatmul.mubr.f32.gmra.mrb[0].mxu0 %v764
      %v970 = vpop.f32.mrb[0].mxu0
      %v971 = vadd.f32 0.0, %v970
      %v972 = vpop.f32.mrb[0].mxu0
      %973 = vmatprep.mubr.f32.mxu0 0.0
      %974 = vmatmul.mubr.f32.gmra.mrb[0].mxu0 %v767
      %v975 = vpop.f32.mrb[0].mxu0
      %v976 = vadd.f32 0.0, %v975
      %v977 = vpop.f32.mrb[0].mxu0
      %978 = vmatprep.mubr.f32.mxu0 0.0
      %979 = vmatmul.mubr.f32.gmra.mrb[0].mxu0 %v770
      %v980 = vpop.f32.mrb[0].mxu0
      %v981 = vadd.f32 0.0, %v980
      %v982 = vpop.f32.mrb[0].mxu0
      %983 = vmatprep.mubr.f32.mxu0 0.0
      %984 = vmatmul.mubr.f32.gmra.mrb[0].mxu0 %v773
      %v985 = vpop.f32.mrb[0].mxu0
      %v986 = vadd.f32 0.0, %v985
      %v987 = vpop.f32.mrb[0].mxu0
      %988 = vmatprep.mubr.f32.mxu0 0.0
      %989 = vmatmul.mubr.f32.gmra.mrb[0].mxu0 %v776
      %v990 = vpop.f32.mrb[0].mxu0
      %v991 = vadd.f32 0.0, %v990
      %v992 = vpop.f32.mrb[0].mxu0
      %993 = vmatprep.mubr.f32.mxu0 0.0
      %994 = vmatmul.mubr.f32.gmra.mrb[0].mxu0 %v779
      %v995 = vpop.f32.mrb[0].mxu0
      %v996 = vadd.f32 0.0, %v995
      %v997 = vpop.f32.mrb[0].mxu0
      %998 = vmatprep.mubr.f32.mxu0 0.0
      %999 = vmatmul.mubr.f32.gmra.mrb[0].mxu0 %v782
      %v1000 = vpop.f32.mrb[0].mxu0
      %v1001 = vadd.f32 0.0, %v1000
      %v1002 = vpop.f32.mrb[0].mxu0
      %1003 = vmatprep.mubr.f32.mxu0 0.0
      %1004 = vmatmul.mubr.f32.gmra.mrb[0].mxu0 %v785
      %v1005 = vpop.f32.mrb[0].mxu0
      %v1006 = vadd.f32 0.0, %v1005
      %v1007 = vpop.f32.mrb[0].mxu0
      %1008 = vmatprep.mubr.f32.mxu0 0.0
      %1009 = vmatmul.mubr.f32.gmra.mrb[0].mxu0 %v788
      %v1010 = vpop.f32.mrb[0].mxu0
      %v1011 = vadd.f32 0.0, %v1010
      %v1012 = vpop.f32.mrb[0].mxu0
      %1013 = vmatprep.mubr.f32.mxu0 0.0
      %1014 = vmatmul.mubr.f32.gmra.mrb[0].mxu0 %v791
      %v1015 = vpop.f32.mrb[0].mxu0
      %v1016 = vadd.f32 0.0, %v1015
      %v1017 = vpop.f32.mrb[0].mxu0
      %1018 = vmatprep.mubr.f32.mxu0 0.0
      %1019 = vmatmul.mubr.f32.gmra.mrb[0].mxu0 %v794
      %v1020 = vpop.f32.mrb[0].mxu0
      %v1021 = vadd.f32 0.0, %v1020
      %v1022 = vpop.f32.mrb[0].mxu0
      %1023 = vdwg.mxu0
      %v1024 = vld [vmem:[%s251] sm:$0xff]
      %v1025 = vld [vmem:[%s251 + $0x8] sm:$0xff]
      %v1026 = vld [vmem:[%s251 + $0x10] sm:$0xff]
      %v1027 = vld [vmem:[%s251 + $0x18] sm:$0xff]
      %v1028 = vld [vmem:[%s251 + $0x20] sm:$0xff]
      %v1029 = vld [vmem:[%s251 + $0x28] sm:$0xff]
      %v1030 = vld [vmem:[%s251 + $0x30] sm:$0xff]
      %v1031 = vld [vmem:[%s251 + $0x38] sm:$0xff]
      %v1032 = vld [vmem:[%s251 + $0x40] sm:$0xff]
      %v1033 = vld [vmem:[%s251 + $0x48] sm:$0xff]
      %v1034 = vld [vmem:[%s251 + $0x50] sm:$0xff]
      %v1035 = vld [vmem:[%s251 + $0x58] sm:$0xff]
      %v1036 = vld [vmem:[%s251 + $0x60] sm:$0xff]
      %v1037 = vld [vmem:[%s251 + $0x68] sm:$0xff]
      %v1038 = vld [vmem:[%s251 + $0x70] sm:$0xff]
      %v1039 = vld [vmem:[%s251 + $0x78] sm:$0xff]
      %v1040 = vld [vmem:[%s251 + $0x80] sm:$0xff]
      %v1041 = vld [vmem:[%s251 + $0x88] sm:$0xff]
      %v1042 = vld [vmem:[%s251 + $0x90] sm:$0xff]
      %v1043 = vld [vmem:[%s251 + $0x98] sm:$0xff]
      %v1044 = vld [vmem:[%s251 + $0xa0] sm:$0xff]
      %v1045 = vld [vmem:[%s251 + $0xa8] sm:$0xff]
      %v1046 = vld [vmem:[%s251 + $0xb0] sm:$0xff]
      %v1047 = vld [vmem:[%s251 + $0xb8] sm:$0xff]
      %v1048 = vld [vmem:[%s251 + $0xc0] sm:$0xff]
      %v1049 = vld [vmem:[%s251 + $0xc8] sm:$0xff]
      %v1050 = vld [vmem:[%s251 + $0xd0] sm:$0xff]
      %v1051 = vld [vmem:[%s251 + $0xd8] sm:$0xff]
      %v1052 = vld [vmem:[%s251 + $0xe0] sm:$0xff]
      %v1053 = vld [vmem:[%s251 + $0xe8] sm:$0xff]
      %v1054 = vld [vmem:[%s251 + $0xf0] sm:$0xff]
      %v1055 = vld [vmem:[%s251 + $0xf8] sm:$0xff]
      %v1056 = vadd.f32 %v1024, %v866
      %v1057 = vadd.f32 %v1025, %v871
      %v1058 = vadd.f32 %v1026, %v876
      %v1059 = vadd.f32 %v1027, %v881
      %v1060 = vadd.f32 %v1028, %v886
      %v1061 = vadd.f32 %v1029, %v891
      %v1062 = vadd.f32 %v1030, %v896
      %v1063 = vadd.f32 %v1031, %v901
      %v1064 = vadd.f32 %v1032, %v906
      %v1065 = vadd.f32 %v1033, %v911
      %v1066 = vadd.f32 %v1034, %v916
      %v1067 = vadd.f32 %v1035, %v921
      %v1068 = vadd.f32 %v1036, %v926
      %v1069 = vadd.f32 %v1037, %v931
      %v1070 = vadd.f32 %v1038, %v936
      %v1071 = vadd.f32 %v1039, %v941
      %v1072 = vadd.f32 %v1040, %v946
      %v1073 = vadd.f32 %v1041, %v951
      %v1074 = vadd.f32 %v1042, %v956
      %v1075 = vadd.f32 %v1043, %v961
      %v1076 = vadd.f32 %v1044, %v966
      %v1077 = vadd.f32 %v1045, %v971
      %v1078 = vadd.f32 %v1046, %v976
      %v1079 = vadd.f32 %v1047, %v981
      %v1080 = vadd.f32 %v1048, %v986
      %v1081 = vadd.f32 %v1049, %v991
      %v1082 = vadd.f32 %v1050, %v996
      %v1083 = vadd.f32 %v1051, %v1001
      %v1084 = vadd.f32 %v1052, %v1006
      %v1085 = vadd.f32 %v1053, %v1011
      %v1086 = vadd.f32 %v1054, %v1016
      %v1087 = vadd.f32 %v1055, %v1021
      %1088 = vst [vmem:[%s251] sm:$0xff] %v1056
      %1089 = vst [vmem:[%s251 + $0x8] sm:$0xff] %v1057
      %1090 = vst [vmem:[%s251 + $0x10] sm:$0xff] %v1058
      %1091 = vst [vmem:[%s251 + $0x18] sm:$0xff] %v1059
      %1092 = vst [vmem:[%s251 + $0x20] sm:$0xff] %v1060
      %1093 = vst [vmem:[%s251 + $0x28] sm:$0xff] %v1061
      %1094 = vst [vmem:[%s251 + $0x30] sm:$0xff] %v1062
      %1095 = vst [vmem:[%s251 + $0x38] sm:$0xff] %v1063
      %1096 = vst [vmem:[%s251 + $0x40] sm:$0xff] %v1064
      %1097 = vst [vmem:[%s251 + $0x48] sm:$0xff] %v1065
      %1098 = vst [vmem:[%s251 + $0x50] sm:$0xff] %v1066
      %1099 = vst [vmem:[%s251 + $0x58] sm:$0xff] %v1067
      %1100 = vst [vmem:[%s251 + $0x60] sm:$0xff] %v1068
      %1101 = vst [vmem:[%s251 + $0x68] sm:$0xff] %v1069
      %1102 = vst [vmem:[%s251 + $0x70] sm:$0xff] %v1070
      %1103 = vst [vmem:[%s251 + $0x78] sm:$0xff] %v1071
      %1104 = vst [vmem:[%s251 + $0x80] sm:$0xff] %v1072
      %1105 = vst [vmem:[%s251 + $0x88] sm:$0xff] %v1073
      %1106 = vst [vmem:[%s251 + $0x90] sm:$0xff] %v1074
      %1107 = vst [vmem:[%s251 + $0x98] sm:$0xff] %v1075
      %1108 = vst [vmem:[%s251 + $0xa0] sm:$0xff] %v1076
      %1109 = vst [vmem:[%s251 + $0xa8] sm:$0xff] %v1077
      %1110 = vst [vmem:[%s251 + $0xb0] sm:$0xff] %v1078
      %1111 = vst [vmem:[%s251 + $0xb8] sm:$0xff] %v1079
      %1112 = vst [vmem:[%s251 + $0xc0] sm:$0xff] %v1080
      %1113 = vst [vmem:[%s251 + $0xc8] sm:$0xff] %v1081
      %1114 = vst [vmem:[%s251 + $0xd0] sm:$0xff] %v1082
      %1115 = vst [vmem:[%s251 + $0xd8] sm:$0xff] %v1083
      %1116 = vst [vmem:[%s251 + $0xe0] sm:$0xff] %v1084
      %1117 = vst [vmem:[%s251 + $0xe8] sm:$0xff] %v1085
      %1118 = vst [vmem:[%s251 + $0xf0] sm:$0xff] %v1086
      %1119 = vst [vmem:[%s251 + $0xf8] sm:$0xff] %v1087
      %v1120 = vld [vmem:[%s246 + $0x2] sm:$0xff]
      %v1121 = vld [vmem:[%s246 + $0xa] sm:$0xff]
      %v1122 = vld [vmem:[%s246 + $0x1a] sm:$0xff]
      %v1123 = vld [vmem:[%s246 + $0x22] sm:$0xff]
      %v1124 = vld [vmem:[%s246 + $0x32] sm:$0xff]
      %v1125 = vld [vmem:[%s246 + $0x3a] sm:$0xff]
      %v1126 = vld [vmem:[%s246 + $0x4a] sm:$0xff]
      %v1127 = vld [vmem:[%s246 + $0x52] sm:$0xff]
      %v1128 = vld [vmem:[%s246 + $0x62] sm:$0xff]
      %v1129 = vld [vmem:[%s246 + $0x6a] sm:$0xff]
      %v1130 = vld [vmem:[%s246 + $0x7a] sm:$0xff]
      %v1131 = vld [vmem:[%s246 + $0x82] sm:$0xff]
      %v1132 = vld [vmem:[%s246 + $0x92] sm:$0xff]
      %v1133 = vld [vmem:[%s246 + $0x9a] sm:$0xff]
      %v1134 = vld [vmem:[%s246 + $0xaa] sm:$0xff]
      %v1135 = vld [vmem:[%s246 + $0xb2] sm:$0xff]
      %v1136 = vld [vmem:[%s246 + $0xc2] sm:$0xff]
      %v1137 = vld [vmem:[%s246 + $0xca] sm:$0xff]
      %v1138 = vld [vmem:[%s246 + $0xda] sm:$0xff]
      %v1139 = vld [vmem:[%s246 + $0xe2] sm:$0xff]
      %v1140 = vld [vmem:[%s246 + $0xf2] sm:$0xff]
      %v1141 = vld [vmem:[%s246 + $0xfa] sm:$0xff]
      %v1142 = vld [vmem:[%s246 + $0x10a] sm:$0xff]
      %v1143 = vld [vmem:[%s246 + $0x112] sm:$0xff]
      %v1144 = vld [vmem:[%s246 + $0x122] sm:$0xff]
      %v1145 = vld [vmem:[%s246 + $0x12a] sm:$0xff]
      %v1146 = vld [vmem:[%s246 + $0x13a] sm:$0xff]
      %v1147 = vld [vmem:[%s246 + $0x142] sm:$0xff]
      %v1148 = vld [vmem:[%s246 + $0x152] sm:$0xff]
      %v1149 = vld [vmem:[%s246 + $0x15a] sm:$0xff]
      %v1150 = vld [vmem:[%s246 + $0x16a] sm:$0xff]
      %v1151 = vld [vmem:[%s246 + $0x172] sm:$0xff]
      %s1152 = scalar_lea.vmem %s1, 8
      %v1153 = vld [vmem:[%s1152] sm:$0xf]
      %v1155 = vsel %vm308, %v1120, 0
      %v1158 = vsel %vm308, %v1121, 0
      %v1161 = vsel %vm308, %v1122, 0
      %v1164 = vsel %vm308, %v1123, 0
      %v1167 = vsel %vm308, %v1124, 0
      %v1170 = vsel %vm308, %v1125, 0
      %v1173 = vsel %vm308, %v1126, 0
      %v1176 = vsel %vm308, %v1127, 0
      %v1179 = vsel %vm308, %v1128, 0
      %v1182 = vsel %vm308, %v1129, 0
      %v1185 = vsel %vm308, %v1130, 0
      %v1188 = vsel %vm308, %v1131, 0
      %v1191 = vsel %vm308, %v1132, 0
      %v1194 = vsel %vm308, %v1133, 0
      %v1197 = vsel %vm308, %v1134, 0
      %v1200 = vsel %vm308, %v1135, 0
      %v1203 = vsel %vm308, %v1136, 0
      %v1206 = vsel %vm308, %v1137, 0
      %v1209 = vsel %vm308, %v1138, 0
      %v1212 = vsel %vm308, %v1139, 0
      %v1215 = vsel %vm308, %v1140, 0
      %v1218 = vsel %vm308, %v1141, 0
      %v1221 = vsel %vm308, %v1142, 0
      %v1224 = vsel %vm308, %v1143, 0
      %v1227 = vsel %vm308, %v1144, 0
      %v1230 = vsel %vm308, %v1145, 0
      %v1233 = vsel %vm308, %v1146, 0
      %v1236 = vsel %vm308, %v1147, 0
      %v1239 = vsel %vm308, %v1148, 0
      %v1242 = vsel %vm308, %v1149, 0
      %v1245 = vsel %vm308, %v1150, 0
      %v1248 = vsel %vm308, %v1151, 0
      %v1251 = vsel %vm405, %v1153, 0
      %1253 = vmatprep.subr.mxu0 0.0
      %1254 = vmatpush1.msra.mxu0 %v1251
      %1255 = vmatprep.subr.mxu0 0.0
      %1256 = vmatpush1.msra.mxu0 0.0
      %1257 = vmatprep.subr.mxu0 0.0
      %1258 = vmatpush1.msra.mxu0 0.0
      %1259 = vmatprep.subr.mxu0 0.0
      %1260 = vmatpush1.msra.mxu0 0.0
      %1261 = vmatprep.subr.mxu0 0.0
      %1262 = vmatpush1.msra.mxu0 0.0
      %1263 = vmatprep.subr.mxu0 0.0
      %1264 = vmatpush1.msra.mxu0 0.0
      %1265 = vmatprep.subr.mxu0 0.0
      %1266 = vmatpush1.msra.mxu0 0.0
      %1267 = vmatprep.subr.mxu0 0.0
      %1268 = vmatpush1.msra.mxu0 0.0
      %1269 = vmatprep.subr.mxu0 0.0
      %1270 = vmatpush1.msra.mxu0 0.0
      %1271 = vmatprep.subr.mxu0 0.0
      %1272 = vmatpush1.msra.mxu0 0.0
      %1273 = vmatprep.subr.mxu0 0.0
      %1274 = vmatpush1.msra.mxu0 0.0
      %1275 = vmatprep.subr.mxu0 0.0
      %1276 = vmatpush1.msra.mxu0 0.0
      %1277 = vmatprep.subr.mxu0 0.0
      %1278 = vmatpush1.msra.mxu0 0.0
      %1279 = vmatprep.subr.mxu0 0.0
      %1280 = vmatpush1.msra.mxu0 0.0
      %1281 = vmatprep.subr.mxu0 0.0
      %1282 = vmatpush1.msra.mxu0 0.0
      %1283 = vmatprep.subr.mxu0 0.0
      %1284 = vmatpush1.msra.mxu0 0.0
      %1285 = vmatprep.subr.mxu0 0.0
      %1286 = vmatpush1.msra.mxu0 0.0
      %1287 = vmatprep.subr.mxu0 0.0
      %1288 = vmatpush1.msra.mxu0 0.0
      %1289 = vmatprep.subr.mxu0 0.0
      %1290 = vmatpush1.msra.mxu0 0.0
      %1291 = vmatprep.subr.mxu0 0.0
      %1292 = vmatpush1.msra.mxu0 0.0
      %1293 = vmatprep.subr.mxu0 0.0
      %1294 = vmatpush1.msra.mxu0 0.0
      %1295 = vmatprep.subr.mxu0 0.0
      %1296 = vmatpush1.msra.mxu0 0.0
      %1297 = vmatprep.subr.mxu0 0.0
      %1298 = vmatpush1.msra.mxu0 0.0
      %1299 = vmatprep.subr.mxu0 0.0
      %1300 = vmatpush1.msra.mxu0 0.0
      %1301 = vmatprep.subr.mxu0 0.0
      %1302 = vmatpush1.msra.mxu0 0.0
      %1303 = vmatprep.subr.mxu0 0.0
      %1304 = vmatpush1.msra.mxu0 0.0
      %1305 = vmatprep.subr.mxu0 0.0
      %1306 = vmatpush1.msra.mxu0 0.0
      %1307 = vmatprep.subr.mxu0 0.0
      %1308 = vmatpush1.msra.mxu0 0.0
      %1309 = vmatprep.subr.mxu0 0.0
      %1310 = vmatpush1.msra.mxu0 0.0
      %1311 = vmatprep.subr.mxu0 0.0
      %1312 = vmatpush1.msra.mxu0 0.0
      %1313 = vmatprep.subr.mxu0 0.0
      %1314 = vmatpush1.msra.mxu0 0.0
      %1315 = vmatprep.subr.mxu0 0.0
      %1316 = vmatpush1.msra.mxu0 0.0
      %1317 = vmatprep.mubr.f32.mxu0 0.0
      %1318 = vmatmul.mubr.f32.gmra.mrb[0].mxu0 %v1155
      %v1319 = vpop.f32.mrb[0].mxu0
      %v1320 = vadd.f32 0.0, %v1319
      %v1321 = vpop.f32.mrb[0].mxu0
      %1322 = vmatprep.mubr.f32.mxu0 0.0
      %1323 = vmatmul.mubr.f32.gmra.mrb[0].mxu0 %v1158
      %v1324 = vpop.f32.mrb[0].mxu0
      %v1325 = vadd.f32 0.0, %v1324
      %v1326 = vpop.f32.mrb[0].mxu0
      %1327 = vmatprep.mubr.f32.mxu0 0.0
      %1328 = vmatmul.mubr.f32.gmra.mrb[0].mxu0 %v1161
      %v1329 = vpop.f32.mrb[0].mxu0
      %v1330 = vadd.f32 0.0, %v1329
      %v1331 = vpop.f32.mrb[0].mxu0
      %1332 = vmatprep.mubr.f32.mxu0 0.0
      %1333 = vmatmul.mubr.f32.gmra.mrb[0].mxu0 %v1164
      %v1334 = vpop.f32.mrb[0].mxu0
      %v1335 = vadd.f32 0.0, %v1334
      %v1336 = vpop.f32.mrb[0].mxu0
      %1337 = vmatprep.mubr.f32.mxu0 0.0
      %1338 = vmatmul.mubr.f32.gmra.mrb[0].mxu0 %v1167
      %v1339 = vpop.f32.mrb[0].mxu0
      %v1340 = vadd.f32 0.0, %v1339
      %v1341 = vpop.f32.mrb[0].mxu0
      %1342 = vmatprep.mubr.f32.mxu0 0.0
      %1343 = vmatmul.mubr.f32.gmra.mrb[0].mxu0 %v1170
      %v1344 = vpop.f32.mrb[0].mxu0
      %v1345 = vadd.f32 0.0, %v1344
      %v1346 = vpop.f32.mrb[0].mxu0
      %1347 = vmatprep.mubr.f32.mxu0 0.0
      %1348 = vmatmul.mubr.f32.gmra.mrb[0].mxu0 %v1173
      %v1349 = vpop.f32.mrb[0].mxu0
      %v1350 = vadd.f32 0.0, %v1349
      %v1351 = vpop.f32.mrb[0].mxu0
      %1352 = vmatprep.mubr.f32.mxu0 0.0
      %1353 = vmatmul.mubr.f32.gmra.mrb[0].mxu0 %v1176
      %v1354 = vpop.f32.mrb[0].mxu0
      %v1355 = vadd.f32 0.0, %v1354
      %v1356 = vpop.f32.mrb[0].mxu0
      %1357 = vmatprep.mubr.f32.mxu0 0.0
      %1358 = vmatmul.mubr.f32.gmra.mrb[0].mxu0 %v1179
      %v1359 = vpop.f32.mrb[0].mxu0
      %v1360 = vadd.f32 0.0, %v1359
      %v1361 = vpop.f32.mrb[0].mxu0
      %1362 = vmatprep.mubr.f32.mxu0 0.0
      %1363 = vmatmul.mubr.f32.gmra.mrb[0].mxu0 %v1182
      %v1364 = vpop.f32.mrb[0].mxu0
      %v1365 = vadd.f32 0.0, %v1364
      %v1366 = vpop.f32.mrb[0].mxu0
      %1367 = vmatprep.mubr.f32.mxu0 0.0
      %1368 = vmatmul.mubr.f32.gmra.mrb[0].mxu0 %v1185
      %v1369 = vpop.f32.mrb[0].mxu0
      %v1370 = vadd.f32 0.0, %v1369
      %v1371 = vpop.f32.mrb[0].mxu0
      %1372 = vmatprep.mubr.f32.mxu0 0.0
      %1373 = vmatmul.mubr.f32.gmra.mrb[0].mxu0 %v1188
      %v1374 = vpop.f32.mrb[0].mxu0
      %v1375 = vadd.f32 0.0, %v1374
      %v1376 = vpop.f32.mrb[0].mxu0
      %1377 = vmatprep.mubr.f32.mxu0 0.0
      %1378 = vmatmul.mubr.f32.gmra.mrb[0].mxu0 %v1191
      %v1379 = vpop.f32.mrb[0].mxu0
      %v1380 = vadd.f32 0.0, %v1379
      %v1381 = vpop.f32.mrb[0].mxu0
      %1382 = vmatprep.mubr.f32.mxu0 0.0
      %1383 = vmatmul.mubr.f32.gmra.mrb[0].mxu0 %v1194
      %v1384 = vpop.f32.mrb[0].mxu0
      %v1385 = vadd.f32 0.0, %v1384
      %v1386 = vpop.f32.mrb[0].mxu0
      %1387 = vmatprep.mubr.f32.mxu0 0.0
      %1388 = vmatmul.mubr.f32.gmra.mrb[0].mxu0 %v1197
      %v1389 = vpop.f32.mrb[0].mxu0
      %v1390 = vadd.f32 0.0, %v1389
      %v1391 = vpop.f32.mrb[0].mxu0
      %1392 = vmatprep.mubr.f32.mxu0 0.0
      %1393 = vmatmul.mubr.f32.gmra.mrb[0].mxu0 %v1200
      %v1394 = vpop.f32.mrb[0].mxu0
      %v1395 = vadd.f32 0.0, %v1394
      %v1396 = vpop.f32.mrb[0].mxu0
      %1397 = vmatprep.mubr.f32.mxu0 0.0
      %1398 = vmatmul.mubr.f32.gmra.mrb[0].mxu0 %v1203
      %v1399 = vpop.f32.mrb[0].mxu0
      %v1400 = vadd.f32 0.0, %v1399
      %v1401 = vpop.f32.mrb[0].mxu0
      %1402 = vmatprep.mubr.f32.mxu0 0.0
      %1403 = vmatmul.mubr.f32.gmra.mrb[0].mxu0 %v1206
      %v1404 = vpop.f32.mrb[0].mxu0
      %v1405 = vadd.f32 0.0, %v1404
      %v1406 = vpop.f32.mrb[0].mxu0
      %1407 = vmatprep.mubr.f32.mxu0 0.0
      %1408 = vmatmul.mubr.f32.gmra.mrb[0].mxu0 %v1209
      %v1409 = vpop.f32.mrb[0].mxu0
      %v1410 = vadd.f32 0.0, %v1409
      %v1411 = vpop.f32.mrb[0].mxu0
      %1412 = vmatprep.mubr.f32.mxu0 0.0
      %1413 = vmatmul.mubr.f32.gmra.mrb[0].mxu0 %v1212
      %v1414 = vpop.f32.mrb[0].mxu0
      %v1415 = vadd.f32 0.0, %v1414
      %v1416 = vpop.f32.mrb[0].mxu0
      %1417 = vmatprep.mubr.f32.mxu0 0.0
      %1418 = vmatmul.mubr.f32.gmra.mrb[0].mxu0 %v1215
      %v1419 = vpop.f32.mrb[0].mxu0
      %v1420 = vadd.f32 0.0, %v1419
      %v1421 = vpop.f32.mrb[0].mxu0
      %1422 = vmatprep.mubr.f32.mxu0 0.0
      %1423 = vmatmul.mubr.f32.gmra.mrb[0].mxu0 %v1218
      %v1424 = vpop.f32.mrb[0].mxu0
      %v1425 = vadd.f32 0.0, %v1424
      %v1426 = vpop.f32.mrb[0].mxu0
      %1427 = vmatprep.mubr.f32.mxu0 0.0
      %1428 = vmatmul.mubr.f32.gmra.mrb[0].mxu0 %v1221
      %v1429 = vpop.f32.mrb[0].mxu0
      %v1430 = vadd.f32 0.0, %v1429
      %v1431 = vpop.f32.mrb[0].mxu0
      %1432 = vmatprep.mubr.f32.mxu0 0.0
      %1433 = vmatmul.mubr.f32.gmra.mrb[0].mxu0 %v1224
      %v1434 = vpop.f32.mrb[0].mxu0
      %v1435 = vadd.f32 0.0, %v1434
      %v1436 = vpop.f32.mrb[0].mxu0
      %1437 = vmatprep.mubr.f32.mxu0 0.0
      %1438 = vmatmul.mubr.f32.gmra.mrb[0].mxu0 %v1227
      %v1439 = vpop.f32.mrb[0].mxu0
      %v1440 = vadd.f32 0.0, %v1439
      %v1441 = vpop.f32.mrb[0].mxu0
      %1442 = vmatprep.mubr.f32.mxu0 0.0
      %1443 = vmatmul.mubr.f32.gmra.mrb[0].mxu0 %v1230
      %v1444 = vpop.f32.mrb[0].mxu0
      %v1445 = vadd.f32 0.0, %v1444
      %v1446 = vpop.f32.mrb[0].mxu0
      %1447 = vmatprep.mubr.f32.mxu0 0.0
      %1448 = vmatmul.mubr.f32.gmra.mrb[0].mxu0 %v1233
      %v1449 = vpop.f32.mrb[0].mxu0
      %v1450 = vadd.f32 0.0, %v1449
      %v1451 = vpop.f32.mrb[0].mxu0
      %1452 = vmatprep.mubr.f32.mxu0 0.0
      %1453 = vmatmul.mubr.f32.gmra.mrb[0].mxu0 %v1236
      %v1454 = vpop.f32.mrb[0].mxu0
      %v1455 = vadd.f32 0.0, %v1454
      %v1456 = vpop.f32.mrb[0].mxu0
      %1457 = vmatprep.mubr.f32.mxu0 0.0
      %1458 = vmatmul.mubr.f32.gmra.mrb[0].mxu0 %v1239
      %v1459 = vpop.f32.mrb[0].mxu0
      %v1460 = vadd.f32 0.0, %v1459
      %v1461 = vpop.f32.mrb[0].mxu0
      %1462 = vmatprep.mubr.f32.mxu0 0.0
      %1463 = vmatmul.mubr.f32.gmra.mrb[0].mxu0 %v1242
      %v1464 = vpop.f32.mrb[0].mxu0
      %v1465 = vadd.f32 0.0, %v1464
      %v1466 = vpop.f32.mrb[0].mxu0
      %1467 = vmatprep.mubr.f32.mxu0 0.0
      %1468 = vmatmul.mubr.f32.gmra.mrb[0].mxu0 %v1245
      %v1469 = vpop.f32.mrb[0].mxu0
      %v1470 = vadd.f32 0.0, %v1469
      %v1471 = vpop.f32.mrb[0].mxu0
      %1472 = vmatprep.mubr.f32.mxu0 0.0
      %1473 = vmatmul.mubr.f32.gmra.mrb[0].mxu0 %v1248
      %v1474 = vpop.f32.mrb[0].mxu0
      %v1475 = vadd.f32 0.0, %v1474
      %v1476 = vpop.f32.mrb[0].mxu0
      %1477 = vdwg.mxu0
      %v1478 = vld [vmem:[%s251] sm:$0xff]
      %v1479 = vld [vmem:[%s251 + $0x8] sm:$0xff]
      %v1480 = vld [vmem:[%s251 + $0x10] sm:$0xff]
      %v1481 = vld [vmem:[%s251 + $0x18] sm:$0xff]
      %v1482 = vld [vmem:[%s251 + $0x20] sm:$0xff]
      %v1483 = vld [vmem:[%s251 + $0x28] sm:$0xff]
      %v1484 = vld [vmem:[%s251 + $0x30] sm:$0xff]
      %v1485 = vld [vmem:[%s251 + $0x38] sm:$0xff]
      %v1486 = vld [vmem:[%s251 + $0x40] sm:$0xff]
      %v1487 = vld [vmem:[%s251 + $0x48] sm:$0xff]
      %v1488 = vld [vmem:[%s251 + $0x50] sm:$0xff]
      %v1489 = vld [vmem:[%s251 + $0x58] sm:$0xff]
      %v1490 = vld [vmem:[%s251 + $0x60] sm:$0xff]
      %v1491 = vld [vmem:[%s251 + $0x68] sm:$0xff]
      %v1492 = vld [vmem:[%s251 + $0x70] sm:$0xff]
      %v1493 = vld [vmem:[%s251 + $0x78] sm:$0xff]
      %v1494 = vld [vmem:[%s251 + $0x80] sm:$0xff]
      %v1495 = vld [vmem:[%s251 + $0x88] sm:$0xff]
      %v1496 = vld [vmem:[%s251 + $0x90] sm:$0xff]
      %v1497 = vld [vmem:[%s251 + $0x98] sm:$0xff]
      %v1498 = vld [vmem:[%s251 + $0xa0] sm:$0xff]
      %v1499 = vld [vmem:[%s251 + $0xa8] sm:$0xff]
      %v1500 = vld [vmem:[%s251 + $0xb0] sm:$0xff]
      %v1501 = vld [vmem:[%s251 + $0xb8] sm:$0xff]
      %v1502 = vld [vmem:[%s251 + $0xc0] sm:$0xff]
      %v1503 = vld [vmem:[%s251 + $0xc8] sm:$0xff]
      %v1504 = vld [vmem:[%s251 + $0xd0] sm:$0xff]
      %v1505 = vld [vmem:[%s251 + $0xd8] sm:$0xff]
      %v1506 = vld [vmem:[%s251 + $0xe0] sm:$0xff]
      %v1507 = vld [vmem:[%s251 + $0xe8] sm:$0xff]
      %v1508 = vld [vmem:[%s251 + $0xf0] sm:$0xff]
      %v1509 = vld [vmem:[%s251 + $0xf8] sm:$0xff]
      %v1510 = vadd.f32 %v1478, %v1320
      %v1511 = vadd.f32 %v1479, %v1325
      %v1512 = vadd.f32 %v1480, %v1330
      %v1513 = vadd.f32 %v1481, %v1335
      %v1514 = vadd.f32 %v1482, %v1340
      %v1515 = vadd.f32 %v1483, %v1345
      %v1516 = vadd.f32 %v1484, %v1350
      %v1517 = vadd.f32 %v1485, %v1355
      %v1518 = vadd.f32 %v1486, %v1360
      %v1519 = vadd.f32 %v1487, %v1365
      %v1520 = vadd.f32 %v1488, %v1370
      %v1521 = vadd.f32 %v1489, %v1375
      %v1522 = vadd.f32 %v1490, %v1380
      %v1523 = vadd.f32 %v1491, %v1385
      %v1524 = vadd.f32 %v1492, %v1390
      %v1525 = vadd.f32 %v1493, %v1395
      %v1526 = vadd.f32 %v1494, %v1400
      %v1527 = vadd.f32 %v1495, %v1405
      %v1528 = vadd.f32 %v1496, %v1410
      %v1529 = vadd.f32 %v1497, %v1415
      %v1530 = vadd.f32 %v1498, %v1420
      %v1531 = vadd.f32 %v1499, %v1425
      %v1532 = vadd.f32 %v1500, %v1430
      %v1533 = vadd.f32 %v1501, %v1435
      %v1534 = vadd.f32 %v1502, %v1440
      %v1535 = vadd.f32 %v1503, %v1445
      %v1536 = vadd.f32 %v1504, %v1450
      %v1537 = vadd.f32 %v1505, %v1455
      %v1538 = vadd.f32 %v1506, %v1460
      %v1539 = vadd.f32 %v1507, %v1465
      %v1540 = vadd.f32 %v1508, %v1470
      %v1541 = vadd.f32 %v1509, %v1475
      %1542 = vst [vmem:[%s251] sm:$0xff] %v1510
      %1543 = vst [vmem:[%s251 + $0x8] sm:$0xff] %v1511
      %1544 = vst [vmem:[%s251 + $0x10] sm:$0xff] %v1512
      %1545 = vst [vmem:[%s251 + $0x18] sm:$0xff] %v1513
      %1546 = vst [vmem:[%s251 + $0x20] sm:$0xff] %v1514
      %1547 = vst [vmem:[%s251 + $0x28] sm:$0xff] %v1515
      %1548 = vst [vmem:[%s251 + $0x30] sm:$0xff] %v1516
      %1549 = vst [vmem:[%s251 + $0x38] sm:$0xff] %v1517
      %1550 = vst [vmem:[%s251 + $0x40] sm:$0xff] %v1518
      %1551 = vst [vmem:[%s251 + $0x48] sm:$0xff] %v1519
      %1552 = vst [vmem:[%s251 + $0x50] sm:$0xff] %v1520
      %1553 = vst [vmem:[%s251 + $0x58] sm:$0xff] %v1521
      %1554 = vst [vmem:[%s251 + $0x60] sm:$0xff] %v1522
      %1555 = vst [vmem:[%s251 + $0x68] sm:$0xff] %v1523
      %1556 = vst [vmem:[%s251 + $0x70] sm:$0xff] %v1524
      %1557 = vst [vmem:[%s251 + $0x78] sm:$0xff] %v1525
      %1558 = vst [vmem:[%s251 + $0x80] sm:$0xff] %v1526
      %1559 = vst [vmem:[%s251 + $0x88] sm:$0xff] %v1527
      %1560 = vst [vmem:[%s251 + $0x90] sm:$0xff] %v1528
      %1561 = vst [vmem:[%s251 + $0x98] sm:$0xff] %v1529
      %1562 = vst [vmem:[%s251 + $0xa0] sm:$0xff] %v1530
      %1563 = vst [vmem:[%s251 + $0xa8] sm:$0xff] %v1531
      %1564 = vst [vmem:[%s251 + $0xb0] sm:$0xff] %v1532
      %1565 = vst [vmem:[%s251 + $0xb8] sm:$0xff] %v1533
      %1566 = vst [vmem:[%s251 + $0xc0] sm:$0xff] %v1534
      %1567 = vst [vmem:[%s251 + $0xc8] sm:$0xff] %v1535
      %1568 = vst [vmem:[%s251 + $0xd0] sm:$0xff] %v1536
      %1569 = vst [vmem:[%s251 + $0xd8] sm:$0xff] %v1537
      %1570 = vst [vmem:[%s251 + $0xe0] sm:$0xff] %v1538
      %1571 = vst [vmem:[%s251 + $0xe8] sm:$0xff] %v1539
      %1572 = vst [vmem:[%s251 + $0xf0] sm:$0xff] %v1540
      %1573 = vst [vmem:[%s251 + $0xf8] sm:$0xff] %v1541
      %s1574 = scalar_lea.vmem %s246, 24
      %v1575 = vld [vmem:[%s1574] sm:$0xff]
      %v1576 = vld [vmem:[%s1574 + $0x8] sm:$0xff]
      %v1577 = vld [vmem:[%s1574 + $0x18] sm:$0xff]
      %v1578 = vld [vmem:[%s1574 + $0x20] sm:$0xff]
      %v1579 = vld [vmem:[%s1574 + $0x30] sm:$0xff]
      %v1580 = vld [vmem:[%s1574 + $0x38] sm:$0xff]
      %v1581 = vld [vmem:[%s1574 + $0x48] sm:$0xff]
      %v1582 = vld [vmem:[%s1574 + $0x50] sm:$0xff]
      %v1583 = vld [vmem:[%s1574 + $0x60] sm:$0xff]
      %v1584 = vld [vmem:[%s1574 + $0x68] sm:$0xff]
      %v1585 = vld [vmem:[%s1574 + $0x78] sm:$0xff]
      %v1586 = vld [vmem:[%s1574 + $0x80] sm:$0xff]
      %v1587 = vld [vmem:[%s1574 + $0x90] sm:$0xff]
      %v1588 = vld [vmem:[%s1574 + $0x98] sm:$0xff]
      %v1589 = vld [vmem:[%s1574 + $0xa8] sm:$0xff]
      %v1590 = vld [vmem:[%s1574 + $0xb0] sm:$0xff]
      %v1591 = vld [vmem:[%s1574 + $0xc0] sm:$0xff]
      %v1592 = vld [vmem:[%s1574 + $0xc8] sm:$0xff]
      %v1593 = vld [vmem:[%s1574 + $0xd8] sm:$0xff]
      %v1594 = vld [vmem:[%s1574 + $0xe0] sm:$0xff]
      %v1595 = vld [vmem:[%s1574 + $0xf0] sm:$0xff]
      %v1596 = vld [vmem:[%s1574 + $0xf8] sm:$0xff]
      %v1597 = vld [vmem:[%s1574 + $0x108] sm:$0xff]
      %v1598 = vld [vmem:[%s1574 + $0x110] sm:$0xff]
      %v1599 = vld [vmem:[%s1574 + $0x120] sm:$0xff]
      %v1600 = vld [vmem:[%s1574 + $0x128] sm:$0xff]
      %v1601 = vld [vmem:[%s1574 + $0x138] sm:$0xff]
      %v1602 = vld [vmem:[%s1574 + $0x140] sm:$0xff]
      %v1603 = vld [vmem:[%s1574 + $0x150] sm:$0xff]
      %v1604 = vld [vmem:[%s1574 + $0x158] sm:$0xff]
      %v1605 = vld [vmem:[%s1574 + $0x168] sm:$0xff]
      %v1606 = vld [vmem:[%s1574 + $0x170] sm:$0xff]
      %s1607 = scalar_lea.vmem %s1, 12
      %v1608 = vld [vmem:[%s1607] sm:$0xf]
      %v1610 = vsel %vm308, %v1575, 0
      %v1613 = vsel %vm308, %v1576, 0
      %v1616 = vsel %vm308, %v1577, 0
      %v1619 = vsel %vm308, %v1578, 0
      %v1622 = vsel %vm308, %v1579, 0
      %v1625 = vsel %vm308, %v1580, 0
      %v1628 = vsel %vm308, %v1581, 0
      %v1631 = vsel %vm308, %v1582, 0
      %v1634 = vsel %vm308, %v1583, 0
      %v1637 = vsel %vm308, %v1584, 0
      %v1640 = vsel %vm308, %v1585, 0
      %v1643 = vsel %vm308, %v1586, 0
      %v1646 = vsel %vm308, %v1587, 0
      %v1649 = vsel %vm308, %v1588, 0
      %v1652 = vsel %vm308, %v1589, 0
      %v1655 = vsel %vm308, %v1590, 0
      %v1658 = vsel %vm308, %v1591, 0
      %v1661 = vsel %vm308, %v1592, 0
      %v1664 = vsel %vm308, %v1593, 0
      %v1667 = vsel %vm308, %v1594, 0
      %v1670 = vsel %vm308, %v1595, 0
      %v1673 = vsel %vm308, %v1596, 0
      %v1676 = vsel %vm308, %v1597, 0
      %v1679 = vsel %vm308, %v1598, 0
      %v1682 = vsel %vm308, %v1599, 0
      %v1685 = vsel %vm308, %v1600, 0
      %v1688 = vsel %vm308, %v1601, 0
      %v1691 = vsel %vm308, %v1602, 0
      %v1694 = vsel %vm308, %v1603, 0
      %v1697 = vsel %vm308, %v1604, 0
      %v1700 = vsel %vm308, %v1605, 0
      %v1703 = vsel %vm308, %v1606, 0
      %v1706 = vsel %vm405, %v1608, 0
      %1708 = vmatprep.subr.mxu0 0.0
      %1709 = vmatpush1.msra.mxu0 %v1706
      %1710 = vmatprep.subr.mxu0 0.0
      %1711 = vmatpush1.msra.mxu0 0.0
      %1712 = vmatprep.subr.mxu0 0.0
      %1713 = vmatpush1.msra.mxu0 0.0
      %1714 = vmatprep.subr.mxu0 0.0
      %1715 = vmatpush1.msra.mxu0 0.0
      %1716 = vmatprep.subr.mxu0 0.0
      %1717 = vmatpush1.msra.mxu0 0.0
      %1718 = vmatprep.subr.mxu0 0.0
      %1719 = vmatpush1.msra.mxu0 0.0
      %1720 = vmatprep.subr.mxu0 0.0
      %1721 = vmatpush1.msra.mxu0 0.0
      %1722 = vmatprep.subr.mxu0 0.0
      %1723 = vmatpush1.msra.mxu0 0.0
      %1724 = vmatprep.subr.mxu0 0.0
      %1725 = vmatpush1.msra.mxu0 0.0
      %1726 = vmatprep.subr.mxu0 0.0
      %1727 = vmatpush1.msra.mxu0 0.0
      %1728 = vmatprep.subr.mxu0 0.0
      %1729 = vmatpush1.msra.mxu0 0.0
      %1730 = vmatprep.subr.mxu0 0.0
      %1731 = vmatpush1.msra.mxu0 0.0
      %1732 = vmatprep.subr.mxu0 0.0
      %1733 = vmatpush1.msra.mxu0 0.0
      %1734 = vmatprep.subr.mxu0 0.0
      %1735 = vmatpush1.msra.mxu0 0.0
      %1736 = vmatprep.subr.mxu0 0.0
      %1737 = vmatpush1.msra.mxu0 0.0
      %1738 = vmatprep.subr.mxu0 0.0
      %1739 = vmatpush1.msra.mxu0 0.0
      %1740 = vmatprep.subr.mxu0 0.0
      %1741 = vmatpush1.msra.mxu0 0.0
      %1742 = vmatprep.subr.mxu0 0.0
      %1743 = vmatpush1.msra.mxu0 0.0
      %1744 = vmatprep.subr.mxu0 0.0
      %1745 = vmatpush1.msra.mxu0 0.0
      %1746 = vmatprep.subr.mxu0 0.0
      %1747 = vmatpush1.msra.mxu0 0.0
      %1748 = vmatprep.subr.mxu0 0.0
      %1749 = vmatpush1.msra.mxu0 0.0
      %1750 = vmatprep.subr.mxu0 0.0
      %1751 = vmatpush1.msra.mxu0 0.0
      %1752 = vmatprep.subr.mxu0 0.0
      %1753 = vmatpush1.msra.mxu0 0.0
      %1754 = vmatprep.subr.mxu0 0.0
      %1755 = vmatpush1.msra.mxu0 0.0
      %1756 = vmatprep.subr.mxu0 0.0
      %1757 = vmatpush1.msra.mxu0 0.0
      %1758 = vmatprep.subr.mxu0 0.0
      %1759 = vmatpush1.msra.mxu0 0.0
      %1760 = vmatprep.subr.mxu0 0.0
      %1761 = vmatpush1.msra.mxu0 0.0
      %1762 = vmatprep.subr.mxu0 0.0
      %1763 = vmatpush1.msra.mxu0 0.0
      %1764 = vmatprep.subr.mxu0 0.0
      %1765 = vmatpush1.msra.mxu0 0.0
      %1766 = vmatprep.subr.mxu0 0.0
      %1767 = vmatpush1.msra.mxu0 0.0
      %1768 = vmatprep.subr.mxu0 0.0
      %1769 = vmatpush1.msra.mxu0 0.0
      %1770 = vmatprep.subr.mxu0 0.0
      %1771 = vmatpush1.msra.mxu0 0.0
      %1772 = vmatprep.mubr.f32.mxu0 0.0
      %1773 = vmatmul.mubr.f32.gmra.mrb[0].mxu0 %v1610
      %v1774 = vpop.f32.mrb[0].mxu0
      %v1775 = vadd.f32 0.0, %v1774
      %v1776 = vpop.f32.mrb[0].mxu0
      %1777 = vmatprep.mubr.f32.mxu0 0.0
      %1778 = vmatmul.mubr.f32.gmra.mrb[0].mxu0 %v1613
      %v1779 = vpop.f32.mrb[0].mxu0
      %v1780 = vadd.f32 0.0, %v1779
      %v1781 = vpop.f32.mrb[0].mxu0
      %1782 = vmatprep.mubr.f32.mxu0 0.0
      %1783 = vmatmul.mubr.f32.gmra.mrb[0].mxu0 %v1616
      %v1784 = vpop.f32.mrb[0].mxu0
      %v1785 = vadd.f32 0.0, %v1784
      %v1786 = vpop.f32.mrb[0].mxu0
      %1787 = vmatprep.mubr.f32.mxu0 0.0
      %1788 = vmatmul.mubr.f32.gmra.mrb[0].mxu0 %v1619
      %v1789 = vpop.f32.mrb[0].mxu0
      %v1790 = vadd.f32 0.0, %v1789
      %v1791 = vpop.f32.mrb[0].mxu0
      %1792 = vmatprep.mubr.f32.mxu0 0.0
      %1793 = vmatmul.mubr.f32.gmra.mrb[0].mxu0 %v1622
      %v1794 = vpop.f32.mrb[0].mxu0
      %v1795 = vadd.f32 0.0, %v1794
      %v1796 = vpop.f32.mrb[0].mxu0
      %1797 = vmatprep.mubr.f32.mxu0 0.0
      %1798 = vmatmul.mubr.f32.gmra.mrb[0].mxu0 %v1625
      %v1799 = vpop.f32.mrb[0].mxu0
      %v1800 = vadd.f32 0.0, %v1799
      %v1801 = vpop.f32.mrb[0].mxu0
      %1802 = vmatprep.mubr.f32.mxu0 0.0
      %1803 = vmatmul.mubr.f32.gmra.mrb[0].mxu0 %v1628
      %v1804 = vpop.f32.mrb[0].mxu0
      %v1805 = vadd.f32 0.0, %v1804
      %v1806 = vpop.f32.mrb[0].mxu0
      %1807 = vmatprep.mubr.f32.mxu0 0.0
      %1808 = vmatmul.mubr.f32.gmra.mrb[0].mxu0 %v1631
      %v1809 = vpop.f32.mrb[0].mxu0
      %v1810 = vadd.f32 0.0, %v1809
      %v1811 = vpop.f32.mrb[0].mxu0
      %1812 = vmatprep.mubr.f32.mxu0 0.0
      %1813 = vmatmul.mubr.f32.gmra.mrb[0].mxu0 %v1634
      %v1814 = vpop.f32.mrb[0].mxu0
      %v1815 = vadd.f32 0.0, %v1814
      %v1816 = vpop.f32.mrb[0].mxu0
      %1817 = vmatprep.mubr.f32.mxu0 0.0
      %1818 = vmatmul.mubr.f32.gmra.mrb[0].mxu0 %v1637
      %v1819 = vpop.f32.mrb[0].mxu0
      %v1820 = vadd.f32 0.0, %v1819
      %v1821 = vpop.f32.mrb[0].mxu0
      %1822 = vmatprep.mubr.f32.mxu0 0.0
      %1823 = vmatmul.mubr.f32.gmra.mrb[0].mxu0 %v1640
      %v1824 = vpop.f32.mrb[0].mxu0
      %v1825 = vadd.f32 0.0, %v1824
      %v1826 = vpop.f32.mrb[0].mxu0
      %1827 = vmatprep.mubr.f32.mxu0 0.0
      %1828 = vmatmul.mubr.f32.gmra.mrb[0].mxu0 %v1643
      %v1829 = vpop.f32.mrb[0].mxu0
      %v1830 = vadd.f32 0.0, %v1829
      %v1831 = vpop.f32.mrb[0].mxu0
      %1832 = vmatprep.mubr.f32.mxu0 0.0
      %1833 = vmatmul.mubr.f32.gmra.mrb[0].mxu0 %v1646
      %v1834 = vpop.f32.mrb[0].mxu0
      %v1835 = vadd.f32 0.0, %v1834
      %v1836 = vpop.f32.mrb[0].mxu0
      %1837 = vmatprep.mubr.f32.mxu0 0.0
      %1838 = vmatmul.mubr.f32.gmra.mrb[0].mxu0 %v1649
      %v1839 = vpop.f32.mrb[0].mxu0
      %v1840 = vadd.f32 0.0, %v1839
      %v1841 = vpop.f32.mrb[0].mxu0
      %1842 = vmatprep.mubr.f32.mxu0 0.0
      %1843 = vmatmul.mubr.f32.gmra.mrb[0].mxu0 %v1652
      %v1844 = vpop.f32.mrb[0].mxu0
      %v1845 = vadd.f32 0.0, %v1844
      %v1846 = vpop.f32.mrb[0].mxu0
      %1847 = vmatprep.mubr.f32.mxu0 0.0
      %1848 = vmatmul.mubr.f32.gmra.mrb[0].mxu0 %v1655
      %v1849 = vpop.f32.mrb[0].mxu0
      %v1850 = vadd.f32 0.0, %v1849
      %v1851 = vpop.f32.mrb[0].mxu0
      %1852 = vmatprep.mubr.f32.mxu0 0.0
      %1853 = vmatmul.mubr.f32.gmra.mrb[0].mxu0 %v1658
      %v1854 = vpop.f32.mrb[0].mxu0
      %v1855 = vadd.f32 0.0, %v1854
      %v1856 = vpop.f32.mrb[0].mxu0
      %1857 = vmatprep.mubr.f32.mxu0 0.0
      %1858 = vmatmul.mubr.f32.gmra.mrb[0].mxu0 %v1661
      %v1859 = vpop.f32.mrb[0].mxu0
      %v1860 = vadd.f32 0.0, %v1859
      %v1861 = vpop.f32.mrb[0].mxu0
      %1862 = vmatprep.mubr.f32.mxu0 0.0
      %1863 = vmatmul.mubr.f32.gmra.mrb[0].mxu0 %v1664
      %v1864 = vpop.f32.mrb[0].mxu0
      %v1865 = vadd.f32 0.0, %v1864
      %v1866 = vpop.f32.mrb[0].mxu0
      %1867 = vmatprep.mubr.f32.mxu0 0.0
      %1868 = vmatmul.mubr.f32.gmra.mrb[0].mxu0 %v1667
      %v1869 = vpop.f32.mrb[0].mxu0
      %v1870 = vadd.f32 0.0, %v1869
      %v1871 = vpop.f32.mrb[0].mxu0
      %1872 = vmatprep.mubr.f32.mxu0 0.0
      %1873 = vmatmul.mubr.f32.gmra.mrb[0].mxu0 %v1670
      %v1874 = vpop.f32.mrb[0].mxu0
      %v1875 = vadd.f32 0.0, %v1874
      %v1876 = vpop.f32.mrb[0].mxu0
      %1877 = vmatprep.mubr.f32.mxu0 0.0
      %1878 = vmatmul.mubr.f32.gmra.mrb[0].mxu0 %v1673
      %v1879 = vpop.f32.mrb[0].mxu0
      %v1880 = vadd.f32 0.0, %v1879
      %v1881 = vpop.f32.mrb[0].mxu0
      %1882 = vmatprep.mubr.f32.mxu0 0.0
      %1883 = vmatmul.mubr.f32.gmra.mrb[0].mxu0 %v1676
      %v1884 = vpop.f32.mrb[0].mxu0
      %v1885 = vadd.f32 0.0, %v1884
      %v1886 = vpop.f32.mrb[0].mxu0
      %1887 = vmatprep.mubr.f32.mxu0 0.0
      %1888 = vmatmul.mubr.f32.gmra.mrb[0].mxu0 %v1679
      %v1889 = vpop.f32.mrb[0].mxu0
      %v1890 = vadd.f32 0.0, %v1889
      %v1891 = vpop.f32.mrb[0].mxu0
      %1892 = vmatprep.mubr.f32.mxu0 0.0
      %1893 = vmatmul.mubr.f32.gmra.mrb[0].mxu0 %v1682
      %v1894 = vpop.f32.mrb[0].mxu0
      %v1895 = vadd.f32 0.0, %v1894
      %v1896 = vpop.f32.mrb[0].mxu0
      %1897 = vmatprep.mubr.f32.mxu0 0.0
      %1898 = vmatmul.mubr.f32.gmra.mrb[0].mxu0 %v1685
      %v1899 = vpop.f32.mrb[0].mxu0
      %v1900 = vadd.f32 0.0, %v1899
      %v1901 = vpop.f32.mrb[0].mxu0
      %1902 = vmatprep.mubr.f32.mxu0 0.0
      %1903 = vmatmul.mubr.f32.gmra.mrb[0].mxu0 %v1688
      %v1904 = vpop.f32.mrb[0].mxu0
      %v1905 = vadd.f32 0.0, %v1904
      %v1906 = vpop.f32.mrb[0].mxu0
      %1907 = vmatprep.mubr.f32.mxu0 0.0
      %1908 = vmatmul.mubr.f32.gmra.mrb[0].mxu0 %v1691
      %v1909 = vpop.f32.mrb[0].mxu0
      %v1910 = vadd.f32 0.0, %v1909
      %v1911 = vpop.f32.mrb[0].mxu0
      %1912 = vmatprep.mubr.f32.mxu0 0.0
      %1913 = vmatmul.mubr.f32.gmra.mrb[0].mxu0 %v1694
      %v1914 = vpop.f32.mrb[0].mxu0
      %v1915 = vadd.f32 0.0, %v1914
      %v1916 = vpop.f32.mrb[0].mxu0
      %1917 = vmatprep.mubr.f32.mxu0 0.0
      %1918 = vmatmul.mubr.f32.gmra.mrb[0].mxu0 %v1697
      %v1919 = vpop.f32.mrb[0].mxu0
      %v1920 = vadd.f32 0.0, %v1919
      %v1921 = vpop.f32.mrb[0].mxu0
      %1922 = vmatprep.mubr.f32.mxu0 0.0
      %1923 = vmatmul.mubr.f32.gmra.mrb[0].mxu0 %v1700
      %v1924 = vpop.f32.mrb[0].mxu0
      %v1925 = vadd.f32 0.0, %v1924
      %v1926 = vpop.f32.mrb[0].mxu0
      %1927 = vmatprep.mubr.f32.mxu0 0.0
      %1928 = vmatmul.mubr.f32.gmra.mrb[0].mxu0 %v1703
      %v1929 = vpop.f32.mrb[0].mxu0
      %v1930 = vadd.f32 0.0, %v1929
      %v1931 = vpop.f32.mrb[0].mxu0
      %1932 = vdwg.mxu0
      %v1933 = vld [vmem:[%s251] sm:$0xff]
      %v1934 = vld [vmem:[%s251 + $0x8] sm:$0xff]
      %v1935 = vld [vmem:[%s251 + $0x10] sm:$0xff]
      %v1936 = vld [vmem:[%s251 + $0x18] sm:$0xff]
      %v1937 = vld [vmem:[%s251 + $0x20] sm:$0xff]
      %v1938 = vld [vmem:[%s251 + $0x28] sm:$0xff]
      %v1939 = vld [vmem:[%s251 + $0x30] sm:$0xff]
      %v1940 = vld [vmem:[%s251 + $0x38] sm:$0xff]
      %v1941 = vld [vmem:[%s251 + $0x40] sm:$0xff]
      %v1942 = vld [vmem:[%s251 + $0x48] sm:$0xff]
      %v1943 = vld [vmem:[%s251 + $0x50] sm:$0xff]
      %v1944 = vld [vmem:[%s251 + $0x58] sm:$0xff]
      %v1945 = vld [vmem:[%s251 + $0x60] sm:$0xff]
      %v1946 = vld [vmem:[%s251 + $0x68] sm:$0xff]
      %v1947 = vld [vmem:[%s251 + $0x70] sm:$0xff]
      %v1948 = vld [vmem:[%s251 + $0x78] sm:$0xff]
      %v1949 = vld [vmem:[%s251 + $0x80] sm:$0xff]
      %v1950 = vld [vmem:[%s251 + $0x88] sm:$0xff]
      %v1951 = vld [vmem:[%s251 + $0x90] sm:$0xff]
      %v1952 = vld [vmem:[%s251 + $0x98] sm:$0xff]
      %v1953 = vld [vmem:[%s251 + $0xa0] sm:$0xff]
      %v1954 = vld [vmem:[%s251 + $0xa8] sm:$0xff]
      %v1955 = vld [vmem:[%s251 + $0xb0] sm:$0xff]
      %v1956 = vld [vmem:[%s251 + $0xb8] sm:$0xff]
      %v1957 = vld [vmem:[%s251 + $0xc0] sm:$0xff]
      %v1958 = vld [vmem:[%s251 + $0xc8] sm:$0xff]
      %v1959 = vld [vmem:[%s251 + $0xd0] sm:$0xff]
      %v1960 = vld [vmem:[%s251 + $0xd8] sm:$0xff]
      %v1961 = vld [vmem:[%s251 + $0xe0] sm:$0xff]
      %v1962 = vld [vmem:[%s251 + $0xe8] sm:$0xff]
      %v1963 = vld [vmem:[%s251 + $0xf0] sm:$0xff]
      %v1964 = vld [vmem:[%s251 + $0xf8] sm:$0xff]
      %v1965 = vadd.f32 %v1933, %v1775
      %v1966 = vadd.f32 %v1934, %v1780
      %v1967 = vadd.f32 %v1935, %v1785
      %v1968 = vadd.f32 %v1936, %v1790
      %v1969 = vadd.f32 %v1937, %v1795
      %v1970 = vadd.f32 %v1938, %v1800
      %v1971 = vadd.f32 %v1939, %v1805
      %v1972 = vadd.f32 %v1940, %v1810
      %v1973 = vadd.f32 %v1941, %v1815
      %v1974 = vadd.f32 %v1942, %v1820
      %v1975 = vadd.f32 %v1943, %v1825
      %v1976 = vadd.f32 %v1944, %v1830
      %v1977 = vadd.f32 %v1945, %v1835
      %v1978 = vadd.f32 %v1946, %v1840
      %v1979 = vadd.f32 %v1947, %v1845
      %v1980 = vadd.f32 %v1948, %v1850
      %v1981 = vadd.f32 %v1949, %v1855
      %v1982 = vadd.f32 %v1950, %v1860
      %v1983 = vadd.f32 %v1951, %v1865
      %v1984 = vadd.f32 %v1952, %v1870
      %v1985 = vadd.f32 %v1953, %v1875
      %v1986 = vadd.f32 %v1954, %v1880
      %v1987 = vadd.f32 %v1955, %v1885
      %v1988 = vadd.f32 %v1956, %v1890
      %v1989 = vadd.f32 %v1957, %v1895
      %v1990 = vadd.f32 %v1958, %v1900
      %v1991 = vadd.f32 %v1959, %v1905
      %v1992 = vadd.f32 %v1960, %v1910
      %v1993 = vadd.f32 %v1961, %v1915
      %v1994 = vadd.f32 %v1962, %v1920
      %v1995 = vadd.f32 %v1963, %v1925
      %v1996 = vadd.f32 %v1964, %v1930
      %1997 = vst [vmem:[%s251] sm:$0xff] %v1965
      %1998 = vst [vmem:[%s251 + $0x8] sm:$0xff] %v1966
      %1999 = vst [vmem:[%s251 + $0x10] sm:$0xff] %v1967
      %2000 = vst [vmem:[%s251 + $0x18] sm:$0xff] %v1968
      %2001 = vst [vmem:[%s251 + $0x20] sm:$0xff] %v1969
      %2002 = vst [vmem:[%s251 + $0x28] sm:$0xff] %v1970
      %2003 = vst [vmem:[%s251 + $0x30] sm:$0xff] %v1971
      %2004 = vst [vmem:[%s251 + $0x38] sm:$0xff] %v1972
      %2005 = vst [vmem:[%s251 + $0x40] sm:$0xff] %v1973
      %2006 = vst [vmem:[%s251 + $0x48] sm:$0xff] %v1974
      %2007 = vst [vmem:[%s251 + $0x50] sm:$0xff] %v1975
      %2008 = vst [vmem:[%s251 + $0x58] sm:$0xff] %v1976
      %2009 = vst [vmem:[%s251 + $0x60] sm:$0xff] %v1977
      %2010 = vst [vmem:[%s251 + $0x68] sm:$0xff] %v1978
      %2011 = vst [vmem:[%s251 + $0x70] sm:$0xff] %v1979
      %2012 = vst [vmem:[%s251 + $0x78] sm:$0xff] %v1980
      %2013 = vst [vmem:[%s251 + $0x80] sm:$0xff] %v1981
      %2014 = vst [vmem:[%s251 + $0x88] sm:$0xff] %v1982
      %2015 = vst [vmem:[%s251 + $0x90] sm:$0xff] %v1983
      %2016 = vst [vmem:[%s251 + $0x98] sm:$0xff] %v1984
      %2017 = vst [vmem:[%s251 + $0xa0] sm:$0xff] %v1985
      %2018 = vst [vmem:[%s251 + $0xa8] sm:$0xff] %v1986
      %2019 = vst [vmem:[%s251 + $0xb0] sm:$0xff] %v1987
      %2020 = vst [vmem:[%s251 + $0xb8] sm:$0xff] %v1988
      %2021 = vst [vmem:[%s251 + $0xc0] sm:$0xff] %v1989
      %2022 = vst [vmem:[%s251 + $0xc8] sm:$0xff] %v1990
      %2023 = vst [vmem:[%s251 + $0xd0] sm:$0xff] %v1991
      %2024 = vst [vmem:[%s251 + $0xd8] sm:$0xff] %v1992
      %2025 = vst [vmem:[%s251 + $0xe0] sm:$0xff] %v1993
      %2026 = vst [vmem:[%s251 + $0xe8] sm:$0xff] %v1994
      %2027 = vst [vmem:[%s251 + $0xf0] sm:$0xff] %v1995
      %2028 = vst [vmem:[%s251 + $0xf8] sm:$0xff] %v1996
      %v2029 = vld [vmem:[%s1574 + $0x1] sm:$0xff]
      %v2030 = vld [vmem:[%s1574 + $0x9] sm:$0xff]
      %v2031 = vld [vmem:[%s1574 + $0x19] sm:$0xff]
      %v2032 = vld [vmem:[%s1574 + $0x21] sm:$0xff]
      %v2033 = vld [vmem:[%s1574 + $0x31] sm:$0xff]
      %v2034 = vld [vmem:[%s1574 + $0x39] sm:$0xff]
      %v2035 = vld [vmem:[%s1574 + $0x49] sm:$0xff]
      %v2036 = vld [vmem:[%s1574 + $0x51] sm:$0xff]
      %v2037 = vld [vmem:[%s1574 + $0x61] sm:$0xff]
      %v2038 = vld [vmem:[%s1574 + $0x69] sm:$0xff]
      %v2039 = vld [vmem:[%s1574 + $0x79] sm:$0xff]
      %v2040 = vld [vmem:[%s1574 + $0x81] sm:$0xff]
      %v2041 = vld [vmem:[%s1574 + $0x91] sm:$0xff]
      %v2042 = vld [vmem:[%s1574 + $0x99] sm:$0xff]
      %v2043 = vld [vmem:[%s1574 + $0xa9] sm:$0xff]
      %v2044 = vld [vmem:[%s1574 + $0xb1] sm:$0xff]
      %v2045 = vld [vmem:[%s1574 + $0xc1] sm:$0xff]
      %v2046 = vld [vmem:[%s1574 + $0xc9] sm:$0xff]
      %v2047 = vld [vmem:[%s1574 + $0xd9] sm:$0xff]
      %v2048 = vld [vmem:[%s1574 + $0xe1] sm:$0xff]
      %v2049 = vld [vmem:[%s1574 + $0xf1] sm:$0xff]
      %v2050 = vld [vmem:[%s1574 + $0xf9] sm:$0xff]
      %v2051 = vld [vmem:[%s1574 + $0x109] sm:$0xff]
      %v2052 = vld [vmem:[%s1574 + $0x111] sm:$0xff]
      %v2053 = vld [vmem:[%s1574 + $0x121] sm:$0xff]
      %v2054 = vld [vmem:[%s1574 + $0x129] sm:$0xff]
      %v2055 = vld [vmem:[%s1574 + $0x139] sm:$0xff]
      %v2056 = vld [vmem:[%s1574 + $0x141] sm:$0xff]
      %v2057 = vld [vmem:[%s1574 + $0x151] sm:$0xff]
      %v2058 = vld [vmem:[%s1574 + $0x159] sm:$0xff]
      %v2059 = vld [vmem:[%s1574 + $0x169] sm:$0xff]
      %v2060 = vld [vmem:[%s1574 + $0x171] sm:$0xff]
      %s2061 = scalar_lea.vmem %s1, 16
      %v2062 = vld [vmem:[%s2061] sm:$0xf]
      %v2064 = vsel %vm308, %v2029, 0
      %v2067 = vsel %vm308, %v2030, 0
      %v2070 = vsel %vm308, %v2031, 0
      %v2073 = vsel %vm308, %v2032, 0
      %v2076 = vsel %vm308, %v2033, 0
      %v2079 = vsel %vm308, %v2034, 0
      %v2082 = vsel %vm308, %v2035, 0
      %v2085 = vsel %vm308, %v2036, 0
      %v2088 = vsel %vm308, %v2037, 0
      %v2091 = vsel %vm308, %v2038, 0
      %v2094 = vsel %vm308, %v2039, 0
      %v2097 = vsel %vm308, %v2040, 0
      %v2100 = vsel %vm308, %v2041, 0
      %v2103 = vsel %vm308, %v2042, 0
      %v2106 = vsel %vm308, %v2043, 0
      %v2109 = vsel %vm308, %v2044, 0
      %v2112 = vsel %vm308, %v2045, 0
      %v2115 = vsel %vm308, %v2046, 0
      %v2118 = vsel %vm308, %v2047, 0
      %v2121 = vsel %vm308, %v2048, 0
      %v2124 = vsel %vm308, %v2049, 0
      %v2127 = vsel %vm308, %v2050, 0
      %v2130 = vsel %vm308, %v2051, 0
      %v2133 = vsel %vm308, %v2052, 0
      %v2136 = vsel %vm308, %v2053, 0
      %v2139 = vsel %vm308, %v2054, 0
      %v2142 = vsel %vm308, %v2055, 0
      %v2145 = vsel %vm308, %v2056, 0
      %v2148 = vsel %vm308, %v2057, 0
      %v2151 = vsel %vm308, %v2058, 0
      %v2154 = vsel %vm308, %v2059, 0
      %v2157 = vsel %vm308, %v2060, 0
      %v2160 = vsel %vm405, %v2062, 0
      %2162 = vmatprep.subr.mxu0 0.0
      %2163 = vmatpush1.msra.mxu0 %v2160
      %2164 = vmatprep.subr.mxu0 0.0
      %2165 = vmatpush1.msra.mxu0 0.0
      %2166 = vmatprep.subr.mxu0 0.0
      %2167 = vmatpush1.msra.mxu0 0.0
      %2168 = vmatprep.subr.mxu0 0.0
      %2169 = vmatpush1.msra.mxu0 0.0
      %2170 = vmatprep.subr.mxu0 0.0
      %2171 = vmatpush1.msra.mxu0 0.0
      %2172 = vmatprep.subr.mxu0 0.0
      %2173 = vmatpush1.msra.mxu0 0.0
      %2174 = vmatprep.subr.mxu0 0.0
      %2175 = vmatpush1.msra.mxu0 0.0
      %2176 = vmatprep.subr.mxu0 0.0
      %2177 = vmatpush1.msra.mxu0 0.0
      %2178 = vmatprep.subr.mxu0 0.0
      %2179 = vmatpush1.msra.mxu0 0.0
      %2180 = vmatprep.subr.mxu0 0.0
      %2181 = vmatpush1.msra.mxu0 0.0
      %2182 = vmatprep.subr.mxu0 0.0
      %2183 = vmatpush1.msra.mxu0 0.0
      %2184 = vmatprep.subr.mxu0 0.0
      %2185 = vmatpush1.msra.mxu0 0.0
      %2186 = vmatprep.subr.mxu0 0.0
      %2187 = vmatpush1.msra.mxu0 0.0
      %2188 = vmatprep.subr.mxu0 0.0
      %2189 = vmatpush1.msra.mxu0 0.0
      %2190 = vmatprep.subr.mxu0 0.0
      %2191 = vmatpush1.msra.mxu0 0.0
      %2192 = vmatprep.subr.mxu0 0.0
      %2193 = vmatpush1.msra.mxu0 0.0
      %2194 = vmatprep.subr.mxu0 0.0
      %2195 = vmatpush1.msra.mxu0 0.0
      %2196 = vmatprep.subr.mxu0 0.0
      %2197 = vmatpush1.msra.mxu0 0.0
      %2198 = vmatprep.subr.mxu0 0.0
      %2199 = vmatpush1.msra.mxu0 0.0
      %2200 = vmatprep.subr.mxu0 0.0
      %2201 = vmatpush1.msra.mxu0 0.0
      %2202 = vmatprep.subr.mxu0 0.0
      %2203 = vmatpush1.msra.mxu0 0.0
      %2204 = vmatprep.subr.mxu0 0.0
      %2205 = vmatpush1.msra.mxu0 0.0
      %2206 = vmatprep.subr.mxu0 0.0
      %2207 = vmatpush1.msra.mxu0 0.0
      %2208 = vmatprep.subr.mxu0 0.0
      %2209 = vmatpush1.msra.mxu0 0.0
      %2210 = vmatprep.subr.mxu0 0.0
      %2211 = vmatpush1.msra.mxu0 0.0
      %2212 = vmatprep.subr.mxu0 0.0
      %2213 = vmatpush1.msra.mxu0 0.0
      %2214 = vmatprep.subr.mxu0 0.0
      %2215 = vmatpush1.msra.mxu0 0.0
      %2216 = vmatprep.subr.mxu0 0.0
      %2217 = vmatpush1.msra.mxu0 0.0
      %2218 = vmatprep.subr.mxu0 0.0
      %2219 = vmatpush1.msra.mxu0 0.0
      %2220 = vmatprep.subr.mxu0 0.0
      %2221 = vmatpush1.msra.mxu0 0.0
      %2222 = vmatprep.subr.mxu0 0.0
      %2223 = vmatpush1.msra.mxu0 0.0
      %2224 = vmatprep.subr.mxu0 0.0
      %2225 = vmatpush1.msra.mxu0 0.0
      %2226 = vmatprep.mubr.f32.mxu0 0.0
      %2227 = vmatmul.mubr.f32.gmra.mrb[0].mxu0 %v2064
      %v2228 = vpop.f32.mrb[0].mxu0
      %v2229 = vadd.f32 0.0, %v2228
      %v2230 = vpop.f32.mrb[0].mxu0
      %2231 = vmatprep.mubr.f32.mxu0 0.0
      %2232 = vmatmul.mubr.f32.gmra.mrb[0].mxu0 %v2067
      %v2233 = vpop.f32.mrb[0].mxu0
      %v2234 = vadd.f32 0.0, %v2233
      %v2235 = vpop.f32.mrb[0].mxu0
      %2236 = vmatprep.mubr.f32.mxu0 0.0
      %2237 = vmatmul.mubr.f32.gmra.mrb[0].mxu0 %v2070
      %v2238 = vpop.f32.mrb[0].mxu0
      %v2239 = vadd.f32 0.0, %v2238
      %v2240 = vpop.f32.mrb[0].mxu0
      %2241 = vmatprep.mubr.f32.mxu0 0.0
      %2242 = vmatmul.mubr.f32.gmra.mrb[0].mxu0 %v2073
      %v2243 = vpop.f32.mrb[0].mxu0
      %v2244 = vadd.f32 0.0, %v2243
      %v2245 = vpop.f32.mrb[0].mxu0
      %2246 = vmatprep.mubr.f32.mxu0 0.0
      %2247 = vmatmul.mubr.f32.gmra.mrb[0].mxu0 %v2076
      %v2248 = vpop.f32.mrb[0].mxu0
      %v2249 = vadd.f32 0.0, %v2248
      %v2250 = vpop.f32.mrb[0].mxu0
      %2251 = vmatprep.mubr.f32.mxu0 0.0
      %2252 = vmatmul.mubr.f32.gmra.mrb[0].mxu0 %v2079
      %v2253 = vpop.f32.mrb[0].mxu0
      %v2254 = vadd.f32 0.0, %v2253
      %v2255 = vpop.f32.mrb[0].mxu0
      %2256 = vmatprep.mubr.f32.mxu0 0.0
      %2257 = vmatmul.mubr.f32.gmra.mrb[0].mxu0 %v2082
      %v2258 = vpop.f32.mrb[0].mxu0
      %v2259 = vadd.f32 0.0, %v2258
      %v2260 = vpop.f32.mrb[0].mxu0
      %2261 = vmatprep.mubr.f32.mxu0 0.0
      %2262 = vmatmul.mubr.f32.gmra.mrb[0].mxu0 %v2085
      %v2263 = vpop.f32.mrb[0].mxu0
      %v2264 = vadd.f32 0.0, %v2263
      %v2265 = vpop.f32.mrb[0].mxu0
      %2266 = vmatprep.mubr.f32.mxu0 0.0
      %2267 = vmatmul.mubr.f32.gmra.mrb[0].mxu0 %v2088
      %v2268 = vpop.f32.mrb[0].mxu0
      %v2269 = vadd.f32 0.0, %v2268
      %v2270 = vpop.f32.mrb[0].mxu0
      %2271 = vmatprep.mubr.f32.mxu0 0.0
      %2272 = vmatmul.mubr.f32.gmra.mrb[0].mxu0 %v2091
      %v2273 = vpop.f32.mrb[0].mxu0
      %v2274 = vadd.f32 0.0, %v2273
      %v2275 = vpop.f32.mrb[0].mxu0
      %2276 = vmatprep.mubr.f32.mxu0 0.0
      %2277 = vmatmul.mubr.f32.gmra.mrb[0].mxu0 %v2094
      %v2278 = vpop.f32.mrb[0].mxu0
      %v2279 = vadd.f32 0.0, %v2278
      %v2280 = vpop.f32.mrb[0].mxu0
      %2281 = vmatprep.mubr.f32.mxu0 0.0
      %2282 = vmatmul.mubr.f32.gmra.mrb[0].mxu0 %v2097
      %v2283 = vpop.f32.mrb[0].mxu0
      %v2284 = vadd.f32 0.0, %v2283
      %v2285 = vpop.f32.mrb[0].mxu0
      %2286 = vmatprep.mubr.f32.mxu0 0.0
      %2287 = vmatmul.mubr.f32.gmra.mrb[0].mxu0 %v2100
      %v2288 = vpop.f32.mrb[0].mxu0
      %v2289 = vadd.f32 0.0, %v2288
      %v2290 = vpop.f32.mrb[0].mxu0
      %2291 = vmatprep.mubr.f32.mxu0 0.0
      %2292 = vmatmul.mubr.f32.gmra.mrb[0].mxu0 %v2103
      %v2293 = vpop.f32.mrb[0].mxu0
      %v2294 = vadd.f32 0.0, %v2293
      %v2295 = vpop.f32.mrb[0].mxu0
      %2296 = vmatprep.mubr.f32.mxu0 0.0
      %2297 = vmatmul.mubr.f32.gmra.mrb[0].mxu0 %v2106
      %v2298 = vpop.f32.mrb[0].mxu0
      %v2299 = vadd.f32 0.0, %v2298
      %v2300 = vpop.f32.mrb[0].mxu0
      %2301 = vmatprep.mubr.f32.mxu0 0.0
      %2302 = vmatmul.mubr.f32.gmra.mrb[0].mxu0 %v2109
      %v2303 = vpop.f32.mrb[0].mxu0
      %v2304 = vadd.f32 0.0, %v2303
      %v2305 = vpop.f32.mrb[0].mxu0
      %2306 = vmatprep.mubr.f32.mxu0 0.0
      %2307 = vmatmul.mubr.f32.gmra.mrb[0].mxu0 %v2112
      %v2308 = vpop.f32.mrb[0].mxu0
      %v2309 = vadd.f32 0.0, %v2308
      %v2310 = vpop.f32.mrb[0].mxu0
      %2311 = vmatprep.mubr.f32.mxu0 0.0
      %2312 = vmatmul.mubr.f32.gmra.mrb[0].mxu0 %v2115
      %v2313 = vpop.f32.mrb[0].mxu0
      %v2314 = vadd.f32 0.0, %v2313
      %v2315 = vpop.f32.mrb[0].mxu0
      %2316 = vmatprep.mubr.f32.mxu0 0.0
      %2317 = vmatmul.mubr.f32.gmra.mrb[0].mxu0 %v2118
      %v2318 = vpop.f32.mrb[0].mxu0
      %v2319 = vadd.f32 0.0, %v2318
      %v2320 = vpop.f32.mrb[0].mxu0
      %2321 = vmatprep.mubr.f32.mxu0 0.0
      %2322 = vmatmul.mubr.f32.gmra.mrb[0].mxu0 %v2121
      %v2323 = vpop.f32.mrb[0].mxu0
      %v2324 = vadd.f32 0.0, %v2323
      %v2325 = vpop.f32.mrb[0].mxu0
      %2326 = vmatprep.mubr.f32.mxu0 0.0
      %2327 = vmatmul.mubr.f32.gmra.mrb[0].mxu0 %v2124
      %v2328 = vpop.f32.mrb[0].mxu0
      %v2329 = vadd.f32 0.0, %v2328
      %v2330 = vpop.f32.mrb[0].mxu0
      %2331 = vmatprep.mubr.f32.mxu0 0.0
      %2332 = vmatmul.mubr.f32.gmra.mrb[0].mxu0 %v2127
      %v2333 = vpop.f32.mrb[0].mxu0
      %v2334 = vadd.f32 0.0, %v2333
      %v2335 = vpop.f32.mrb[0].mxu0
      %2336 = vmatprep.mubr.f32.mxu0 0.0
      %2337 = vmatmul.mubr.f32.gmra.mrb[0].mxu0 %v2130
      %v2338 = vpop.f32.mrb[0].mxu0
      %v2339 = vadd.f32 0.0, %v2338
      %v2340 = vpop.f32.mrb[0].mxu0
      %2341 = vmatprep.mubr.f32.mxu0 0.0
      %2342 = vmatmul.mubr.f32.gmra.mrb[0].mxu0 %v2133
      %v2343 = vpop.f32.mrb[0].mxu0
      %v2344 = vadd.f32 0.0, %v2343
      %v2345 = vpop.f32.mrb[0].mxu0
      %2346 = vmatprep.mubr.f32.mxu0 0.0
      %2347 = vmatmul.mubr.f32.gmra.mrb[0].mxu0 %v2136
      %v2348 = vpop.f32.mrb[0].mxu0
      %v2349 = vadd.f32 0.0, %v2348
      %v2350 = vpop.f32.mrb[0].mxu0
      %2351 = vmatprep.mubr.f32.mxu0 0.0
      %2352 = vmatmul.mubr.f32.gmra.mrb[0].mxu0 %v2139
      %v2353 = vpop.f32.mrb[0].mxu0
      %v2354 = vadd.f32 0.0, %v2353
      %v2355 = vpop.f32.mrb[0].mxu0
      %2356 = vmatprep.mubr.f32.mxu0 0.0
      %2357 = vmatmul.mubr.f32.gmra.mrb[0].mxu0 %v2142
      %v2358 = vpop.f32.mrb[0].mxu0
      %v2359 = vadd.f32 0.0, %v2358
      %v2360 = vpop.f32.mrb[0].mxu0
      %2361 = vmatprep.mubr.f32.mxu0 0.0
      %2362 = vmatmul.mubr.f32.gmra.mrb[0].mxu0 %v2145
      %v2363 = vpop.f32.mrb[0].mxu0
      %v2364 = vadd.f32 0.0, %v2363
      %v2365 = vpop.f32.mrb[0].mxu0
      %2366 = vmatprep.mubr.f32.mxu0 0.0
      %2367 = vmatmul.mubr.f32.gmra.mrb[0].mxu0 %v2148
      %v2368 = vpop.f32.mrb[0].mxu0
      %v2369 = vadd.f32 0.0, %v2368
      %v2370 = vpop.f32.mrb[0].mxu0
      %2371 = vmatprep.mubr.f32.mxu0 0.0
      %2372 = vmatmul.mubr.f32.gmra.mrb[0].mxu0 %v2151
      %v2373 = vpop.f32.mrb[0].mxu0
      %v2374 = vadd.f32 0.0, %v2373
      %v2375 = vpop.f32.mrb[0].mxu0
      %2376 = vmatprep.mubr.f32.mxu0 0.0
      %2377 = vmatmul.mubr.f32.gmra.mrb[0].mxu0 %v2154
      %v2378 = vpop.f32.mrb[0].mxu0
      %v2379 = vadd.f32 0.0, %v2378
      %v2380 = vpop.f32.mrb[0].mxu0
      %2381 = vmatprep.mubr.f32.mxu0 0.0
      %2382 = vmatmul.mubr.f32.gmra.mrb[0].mxu0 %v2157
      %v2383 = vpop.f32.mrb[0].mxu0
      %v2384 = vadd.f32 0.0, %v2383
      %v2385 = vpop.f32.mrb[0].mxu0
      %2386 = vdwg.mxu0
      %v2387 = vld [vmem:[%s251] sm:$0xff]
      %v2388 = vld [vmem:[%s251 + $0x8] sm:$0xff]
      %v2389 = vld [vmem:[%s251 + $0x10] sm:$0xff]
      %v2390 = vld [vmem:[%s251 + $0x18] sm:$0xff]
      %v2391 = vld [vmem:[%s251 + $0x20] sm:$0xff]
      %v2392 = vld [vmem:[%s251 + $0x28] sm:$0xff]
      %v2393 = vld [vmem:[%s251 + $0x30] sm:$0xff]
      %v2394 = vld [vmem:[%s251 + $0x38] sm:$0xff]
      %v2395 = vld [vmem:[%s251 + $0x40] sm:$0xff]
      %v2396 = vld [vmem:[%s251 + $0x48] sm:$0xff]
      %v2397 = vld [vmem:[%s251 + $0x50] sm:$0xff]
      %v2398 = vld [vmem:[%s251 + $0x58] sm:$0xff]
      %v2399 = vld [vmem:[%s251 + $0x60] sm:$0xff]
      %v2400 = vld [vmem:[%s251 + $0x68] sm:$0xff]
      %v2401 = vld [vmem:[%s251 + $0x70] sm:$0xff]
      %v2402 = vld [vmem:[%s251 + $0x78] sm:$0xff]
      %v2403 = vld [vmem:[%s251 + $0x80] sm:$0xff]
      %v2404 = vld [vmem:[%s251 + $0x88] sm:$0xff]
      %v2405 = vld [vmem:[%s251 + $0x90] sm:$0xff]
      %v2406 = vld [vmem:[%s251 + $0x98] sm:$0xff]
      %v2407 = vld [vmem:[%s251 + $0xa0] sm:$0xff]
      %v2408 = vld [vmem:[%s251 + $0xa8] sm:$0xff]
      %v2409 = vld [vmem:[%s251 + $0xb0] sm:$0xff]
      %v2410 = vld [vmem:[%s251 + $0xb8] sm:$0xff]
      %v2411 = vld [vmem:[%s251 + $0xc0] sm:$0xff]
      %v2412 = vld [vmem:[%s251 + $0xc8] sm:$0xff]
      %v2413 = vld [vmem:[%s251 + $0xd0] sm:$0xff]
      %v2414 = vld [vmem:[%s251 + $0xd8] sm:$0xff]
      %v2415 = vld [vmem:[%s251 + $0xe0] sm:$0xff]
      %v2416 = vld [vmem:[%s251 + $0xe8] sm:$0xff]
      %v2417 = vld [vmem:[%s251 + $0xf0] sm:$0xff]
      %v2418 = vld [vmem:[%s251 + $0xf8] sm:$0xff]
      %v2419 = vadd.f32 %v2387, %v2229
      %v2420 = vadd.f32 %v2388, %v2234
      %v2421 = vadd.f32 %v2389, %v2239
      %v2422 = vadd.f32 %v2390, %v2244
      %v2423 = vadd.f32 %v2391, %v2249
      %v2424 = vadd.f32 %v2392, %v2254
      %v2425 = vadd.f32 %v2393, %v2259
      %v2426 = vadd.f32 %v2394, %v2264
      %v2427 = vadd.f32 %v2395, %v2269
      %v2428 = vadd.f32 %v2396, %v2274
      %v2429 = vadd.f32 %v2397, %v2279
      %v2430 = vadd.f32 %v2398, %v2284
      %v2431 = vadd.f32 %v2399, %v2289
      %v2432 = vadd.f32 %v2400, %v2294
      %v2433 = vadd.f32 %v2401, %v2299
      %v2434 = vadd.f32 %v2402, %v2304
      %v2435 = vadd.f32 %v2403, %v2309
      %v2436 = vadd.f32 %v2404, %v2314
      %v2437 = vadd.f32 %v2405, %v2319
      %v2438 = vadd.f32 %v2406, %v2324
      %v2439 = vadd.f32 %v2407, %v2329
      %v2440 = vadd.f32 %v2408, %v2334
      %v2441 = vadd.f32 %v2409, %v2339
      %v2442 = vadd.f32 %v2410, %v2344
      %v2443 = vadd.f32 %v2411, %v2349
      %v2444 = vadd.f32 %v2412, %v2354
      %v2445 = vadd.f32 %v2413, %v2359
      %v2446 = vadd.f32 %v2414, %v2364
      %v2447 = vadd.f32 %v2415, %v2369
      %v2448 = vadd.f32 %v2416, %v2374
      %v2449 = vadd.f32 %v2417, %v2379
      %v2450 = vadd.f32 %v2418, %v2384
      %2451 = vst [vmem:[%s251] sm:$0xff] %v2419
      %2452 = vst [vmem:[%s251 + $0x8] sm:$0xff] %v2420
      %2453 = vst [vmem:[%s251 + $0x10] sm:$0xff] %v2421
      %2454 = vst [vmem:[%s251 + $0x18] sm:$0xff] %v2422
      %2455 = vst [vmem:[%s251 + $0x20] sm:$0xff] %v2423
      %2456 = vst [vmem:[%s251 + $0x28] sm:$0xff] %v2424
      %2457 = vst [vmem:[%s251 + $0x30] sm:$0xff] %v2425
      %2458 = vst [vmem:[%s251 + $0x38] sm:$0xff] %v2426
      %2459 = vst [vmem:[%s251 + $0x40] sm:$0xff] %v2427
      %2460 = vst [vmem:[%s251 + $0x48] sm:$0xff] %v2428
      %2461 = vst [vmem:[%s251 + $0x50] sm:$0xff] %v2429
      %2462 = vst [vmem:[%s251 + $0x58] sm:$0xff] %v2430
      %2463 = vst [vmem:[%s251 + $0x60] sm:$0xff] %v2431
      %2464 = vst [vmem:[%s251 + $0x68] sm:$0xff] %v2432
      %2465 = vst [vmem:[%s251 + $0x70] sm:$0xff] %v2433
      %2466 = vst [vmem:[%s251 + $0x78] sm:$0xff] %v2434
      %2467 = vst [vmem:[%s251 + $0x80] sm:$0xff] %v2435
      %2468 = vst [vmem:[%s251 + $0x88] sm:$0xff] %v2436
      %2469 = vst [vmem:[%s251 + $0x90] sm:$0xff] %v2437
      %2470 = vst [vmem:[%s251 + $0x98] sm:$0xff] %v2438
      %2471 = vst [vmem:[%s251 + $0xa0] sm:$0xff] %v2439
      %2472 = vst [vmem:[%s251 + $0xa8] sm:$0xff] %v2440
      %2473 = vst [vmem:[%s251 + $0xb0] sm:$0xff] %v2441
      %2474 = vst [vmem:[%s251 + $0xb8] sm:$0xff] %v2442
      %2475 = vst [vmem:[%s251 + $0xc0] sm:$0xff] %v2443
      %2476 = vst [vmem:[%s251 + $0xc8] sm:$0xff] %v2444
      %2477 = vst [vmem:[%s251 + $0xd0] sm:$0xff] %v2445
      %2478 = vst [vmem:[%s251 + $0xd8] sm:$0xff] %v2446
      %2479 = vst [vmem:[%s251 + $0xe0] sm:$0xff] %v2447
      %2480 = vst [vmem:[%s251 + $0xe8] sm:$0xff] %v2448
      %2481 = vst [vmem:[%s251 + $0xf0] sm:$0xff] %v2449
      %2482 = vst [vmem:[%s251 + $0xf8] sm:$0xff] %v2450
      %v2483 = vld [vmem:[%s1574 + $0x2] sm:$0xff]
      %v2484 = vld [vmem:[%s1574 + $0xa] sm:$0xff]
      %v2485 = vld [vmem:[%s1574 + $0x1a] sm:$0xff]
      %v2486 = vld [vmem:[%s1574 + $0x22] sm:$0xff]
      %v2487 = vld [vmem:[%s1574 + $0x32] sm:$0xff]
      %v2488 = vld [vmem:[%s1574 + $0x3a] sm:$0xff]
      %v2489 = vld [vmem:[%s1574 + $0x4a] sm:$0xff]
      %v2490 = vld [vmem:[%s1574 + $0x52] sm:$0xff]
      %v2491 = vld [vmem:[%s1574 + $0x62] sm:$0xff]
      %v2492 = vld [vmem:[%s1574 + $0x6a] sm:$0xff]
      %v2493 = vld [vmem:[%s1574 + $0x7a] sm:$0xff]
      %v2494 = vld [vmem:[%s1574 + $0x82] sm:$0xff]
      %v2495 = vld [vmem:[%s1574 + $0x92] sm:$0xff]
      %v2496 = vld [vmem:[%s1574 + $0x9a] sm:$0xff]
      %v2497 = vld [vmem:[%s1574 + $0xaa] sm:$0xff]
      %v2498 = vld [vmem:[%s1574 + $0xb2] sm:$0xff]
      %v2499 = vld [vmem:[%s1574 + $0xc2] sm:$0xff]
      %v2500 = vld [vmem:[%s1574 + $0xca] sm:$0xff]
      %v2501 = vld [vmem:[%s1574 + $0xda] sm:$0xff]
      %v2502 = vld [vmem:[%s1574 + $0xe2] sm:$0xff]
      %v2503 = vld [vmem:[%s1574 + $0xf2] sm:$0xff]
      %v2504 = vld [vmem:[%s1574 + $0xfa] sm:$0xff]
      %v2505 = vld [vmem:[%s1574 + $0x10a] sm:$0xff]
      %v2506 = vld [vmem:[%s1574 + $0x112] sm:$0xff]
      %v2507 = vld [vmem:[%s1574 + $0x122] sm:$0xff]
      %v2508 = vld [vmem:[%s1574 + $0x12a] sm:$0xff]
      %v2509 = vld [vmem:[%s1574 + $0x13a] sm:$0xff]
      %v2510 = vld [vmem:[%s1574 + $0x142] sm:$0xff]
      %v2511 = vld [vmem:[%s1574 + $0x152] sm:$0xff]
      %v2512 = vld [vmem:[%s1574 + $0x15a] sm:$0xff]
      %v2513 = vld [vmem:[%s1574 + $0x16a] sm:$0xff]
      %v2514 = vld [vmem:[%s1574 + $0x172] sm:$0xff]
      %s2515 = scalar_lea.vmem %s1, 20
      %v2516 = vld [vmem:[%s2515] sm:$0xf]
      %v2518 = vsel %vm308, %v2483, 0
      %v2521 = vsel %vm308, %v2484, 0
      %v2524 = vsel %vm308, %v2485, 0
      %v2527 = vsel %vm308, %v2486, 0
      %v2530 = vsel %vm308, %v2487, 0
      %v2533 = vsel %vm308, %v2488, 0
      %v2536 = vsel %vm308, %v2489, 0
      %v2539 = vsel %vm308, %v2490, 0
      %v2542 = vsel %vm308, %v2491, 0
      %v2545 = vsel %vm308, %v2492, 0
      %v2548 = vsel %vm308, %v2493, 0
      %v2551 = vsel %vm308, %v2494, 0
      %v2554 = vsel %vm308, %v2495, 0
      %v2557 = vsel %vm308, %v2496, 0
      %v2560 = vsel %vm308, %v2497, 0
      %v2563 = vsel %vm308, %v2498, 0
      %v2566 = vsel %vm308, %v2499, 0
      %v2569 = vsel %vm308, %v2500, 0
      %v2572 = vsel %vm308, %v2501, 0
      %v2575 = vsel %vm308, %v2502, 0
      %v2578 = vsel %vm308, %v2503, 0
      %v2581 = vsel %vm308, %v2504, 0
      %v2584 = vsel %vm308, %v2505, 0
      %v2587 = vsel %vm308, %v2506, 0
      %v2590 = vsel %vm308, %v2507, 0
      %v2593 = vsel %vm308, %v2508, 0
      %v2596 = vsel %vm308, %v2509, 0
      %v2599 = vsel %vm308, %v2510, 0
      %v2602 = vsel %vm308, %v2511, 0
      %v2605 = vsel %vm308, %v2512, 0
      %v2608 = vsel %vm308, %v2513, 0
      %v2611 = vsel %vm308, %v2514, 0
      %v2614 = vsel %vm405, %v2516, 0
      %2616 = vmatprep.subr.mxu0 0.0
      %2617 = vmatpush1.msra.mxu0 %v2614
      %2618 = vmatprep.subr.mxu0 0.0
      %2619 = vmatpush1.msra.mxu0 0.0
      %2620 = vmatprep.subr.mxu0 0.0
      %2621 = vmatpush1.msra.mxu0 0.0
      %2622 = vmatprep.subr.mxu0 0.0
      %2623 = vmatpush1.msra.mxu0 0.0
      %2624 = vmatprep.subr.mxu0 0.0
      %2625 = vmatpush1.msra.mxu0 0.0
      %2626 = vmatprep.subr.mxu0 0.0
      %2627 = vmatpush1.msra.mxu0 0.0
      %2628 = vmatprep.subr.mxu0 0.0
      %2629 = vmatpush1.msra.mxu0 0.0
      %2630 = vmatprep.subr.mxu0 0.0
      %2631 = vmatpush1.msra.mxu0 0.0
      %2632 = vmatprep.subr.mxu0 0.0
      %2633 = vmatpush1.msra.mxu0 0.0
      %2634 = vmatprep.subr.mxu0 0.0
      %2635 = vmatpush1.msra.mxu0 0.0
      %2636 = vmatprep.subr.mxu0 0.0
      %2637 = vmatpush1.msra.mxu0 0.0
      %2638 = vmatprep.subr.mxu0 0.0
      %2639 = vmatpush1.msra.mxu0 0.0
      %2640 = vmatprep.subr.mxu0 0.0
      %2641 = vmatpush1.msra.mxu0 0.0
      %2642 = vmatprep.subr.mxu0 0.0
      %2643 = vmatpush1.msra.mxu0 0.0
      %2644 = vmatprep.subr.mxu0 0.0
      %2645 = vmatpush1.msra.mxu0 0.0
      %2646 = vmatprep.subr.mxu0 0.0
      %2647 = vmatpush1.msra.mxu0 0.0
      %2648 = vmatprep.subr.mxu0 0.0
      %2649 = vmatpush1.msra.mxu0 0.0
      %2650 = vmatprep.subr.mxu0 0.0
      %2651 = vmatpush1.msra.mxu0 0.0
      %2652 = vmatprep.subr.mxu0 0.0
      %2653 = vmatpush1.msra.mxu0 0.0
      %2654 = vmatprep.subr.mxu0 0.0
      %2655 = vmatpush1.msra.mxu0 0.0
      %2656 = vmatprep.subr.mxu0 0.0
      %2657 = vmatpush1.msra.mxu0 0.0
      %2658 = vmatprep.subr.mxu0 0.0
      %2659 = vmatpush1.msra.mxu0 0.0
      %2660 = vmatprep.subr.mxu0 0.0
      %2661 = vmatpush1.msra.mxu0 0.0
      %2662 = vmatprep.subr.mxu0 0.0
      %2663 = vmatpush1.msra.mxu0 0.0
      %2664 = vmatprep.subr.mxu0 0.0
      %2665 = vmatpush1.msra.mxu0 0.0
      %2666 = vmatprep.subr.mxu0 0.0
      %2667 = vmatpush1.msra.mxu0 0.0
      %2668 = vmatprep.subr.mxu0 0.0
      %2669 = vmatpush1.msra.mxu0 0.0
      %2670 = vmatprep.subr.mxu0 0.0
      %2671 = vmatpush1.msra.mxu0 0.0
      %2672 = vmatprep.subr.mxu0 0.0
      %2673 = vmatpush1.msra.mxu0 0.0
      %2674 = vmatprep.subr.mxu0 0.0
      %2675 = vmatpush1.msra.mxu0 0.0
      %2676 = vmatprep.subr.mxu0 0.0
      %2677 = vmatpush1.msra.mxu0 0.0
      %2678 = vmatprep.subr.mxu0 0.0
      %2679 = vmatpush1.msra.mxu0 0.0
      %2680 = vmatprep.mubr.f32.mxu0 0.0
      %2681 = vmatmul.mubr.f32.gmra.mrb[0].mxu0 %v2518
      %v2682 = vpop.f32.mrb[0].mxu0
      %v2683 = vadd.f32 0.0, %v2682
      %v2684 = vpop.f32.mrb[0].mxu0
      %2685 = vmatprep.mubr.f32.mxu0 0.0
      %2686 = vmatmul.mubr.f32.gmra.mrb[0].mxu0 %v2521
      %v2687 = vpop.f32.mrb[0].mxu0
      %v2688 = vadd.f32 0.0, %v2687
      %v2689 = vpop.f32.mrb[0].mxu0
      %2690 = vmatprep.mubr.f32.mxu0 0.0
      %2691 = vmatmul.mubr.f32.gmra.mrb[0].mxu0 %v2524
      %v2692 = vpop.f32.mrb[0].mxu0
      %v2693 = vadd.f32 0.0, %v2692
      %v2694 = vpop.f32.mrb[0].mxu0
      %2695 = vmatprep.mubr.f32.mxu0 0.0
      %2696 = vmatmul.mubr.f32.gmra.mrb[0].mxu0 %v2527
      %v2697 = vpop.f32.mrb[0].mxu0
      %v2698 = vadd.f32 0.0, %v2697
      %v2699 = vpop.f32.mrb[0].mxu0
      %2700 = vmatprep.mubr.f32.mxu0 0.0
      %2701 = vmatmul.mubr.f32.gmra.mrb[0].mxu0 %v2530
      %v2702 = vpop.f32.mrb[0].mxu0
      %v2703 = vadd.f32 0.0, %v2702
      %v2704 = vpop.f32.mrb[0].mxu0
      %2705 = vmatprep.mubr.f32.mxu0 0.0
      %2706 = vmatmul.mubr.f32.gmra.mrb[0].mxu0 %v2533
      %v2707 = vpop.f32.mrb[0].mxu0
      %v2708 = vadd.f32 0.0, %v2707
      %v2709 = vpop.f32.mrb[0].mxu0
      %2710 = vmatprep.mubr.f32.mxu0 0.0
      %2711 = vmatmul.mubr.f32.gmra.mrb[0].mxu0 %v2536
      %v2712 = vpop.f32.mrb[0].mxu0
      %v2713 = vadd.f32 0.0, %v2712
      %v2714 = vpop.f32.mrb[0].mxu0
      %2715 = vmatprep.mubr.f32.mxu0 0.0
      %2716 = vmatmul.mubr.f32.gmra.mrb[0].mxu0 %v2539
      %v2717 = vpop.f32.mrb[0].mxu0
      %v2718 = vadd.f32 0.0, %v2717
      %v2719 = vpop.f32.mrb[0].mxu0
      %2720 = vmatprep.mubr.f32.mxu0 0.0
      %2721 = vmatmul.mubr.f32.gmra.mrb[0].mxu0 %v2542
      %v2722 = vpop.f32.mrb[0].mxu0
      %v2723 = vadd.f32 0.0, %v2722
      %v2724 = vpop.f32.mrb[0].mxu0
      %2725 = vmatprep.mubr.f32.mxu0 0.0
      %2726 = vmatmul.mubr.f32.gmra.mrb[0].mxu0 %v2545
      %v2727 = vpop.f32.mrb[0].mxu0
      %v2728 = vadd.f32 0.0, %v2727
      %v2729 = vpop.f32.mrb[0].mxu0
      %2730 = vmatprep.mubr.f32.mxu0 0.0
      %2731 = vmatmul.mubr.f32.gmra.mrb[0].mxu0 %v2548
      %v2732 = vpop.f32.mrb[0].mxu0
      %v2733 = vadd.f32 0.0, %v2732
      %v2734 = vpop.f32.mrb[0].mxu0
      %2735 = vmatprep.mubr.f32.mxu0 0.0
      %2736 = vmatmul.mubr.f32.gmra.mrb[0].mxu0 %v2551
      %v2737 = vpop.f32.mrb[0].mxu0
      %v2738 = vadd.f32 0.0, %v2737
      %v2739 = vpop.f32.mrb[0].mxu0
      %2740 = vmatprep.mubr.f32.mxu0 0.0
      %2741 = vmatmul.mubr.f32.gmra.mrb[0].mxu0 %v2554
      %v2742 = vpop.f32.mrb[0].mxu0
      %v2743 = vadd.f32 0.0, %v2742
      %v2744 = vpop.f32.mrb[0].mxu0
      %2745 = vmatprep.mubr.f32.mxu0 0.0
      %2746 = vmatmul.mubr.f32.gmra.mrb[0].mxu0 %v2557
      %v2747 = vpop.f32.mrb[0].mxu0
      %v2748 = vadd.f32 0.0, %v2747
      %v2749 = vpop.f32.mrb[0].mxu0
      %2750 = vmatprep.mubr.f32.mxu0 0.0
      %2751 = vmatmul.mubr.f32.gmra.mrb[0].mxu0 %v2560
      %v2752 = vpop.f32.mrb[0].mxu0
      %v2753 = vadd.f32 0.0, %v2752
      %v2754 = vpop.f32.mrb[0].mxu0
      %2755 = vmatprep.mubr.f32.mxu0 0.0
      %2756 = vmatmul.mubr.f32.gmra.mrb[0].mxu0 %v2563
      %v2757 = vpop.f32.mrb[0].mxu0
      %v2758 = vadd.f32 0.0, %v2757
      %v2759 = vpop.f32.mrb[0].mxu0
      %2760 = vmatprep.mubr.f32.mxu0 0.0
      %2761 = vmatmul.mubr.f32.gmra.mrb[0].mxu0 %v2566
      %v2762 = vpop.f32.mrb[0].mxu0
      %v2763 = vadd.f32 0.0, %v2762
      %v2764 = vpop.f32.mrb[0].mxu0
      %2765 = vmatprep.mubr.f32.mxu0 0.0
      %2766 = vmatmul.mubr.f32.gmra.mrb[0].mxu0 %v2569
      %v2767 = vpop.f32.mrb[0].mxu0
      %v2768 = vadd.f32 0.0, %v2767
      %v2769 = vpop.f32.mrb[0].mxu0
      %2770 = vmatprep.mubr.f32.mxu0 0.0
      %2771 = vmatmul.mubr.f32.gmra.mrb[0].mxu0 %v2572
      %v2772 = vpop.f32.mrb[0].mxu0
      %v2773 = vadd.f32 0.0, %v2772
      %v2774 = vpop.f32.mrb[0].mxu0
      %2775 = vmatprep.mubr.f32.mxu0 0.0
      %2776 = vmatmul.mubr.f32.gmra.mrb[0].mxu0 %v2575
      %v2777 = vpop.f32.mrb[0].mxu0
      %v2778 = vadd.f32 0.0, %v2777
      %v2779 = vpop.f32.mrb[0].mxu0
      %2780 = vmatprep.mubr.f32.mxu0 0.0
      %2781 = vmatmul.mubr.f32.gmra.mrb[0].mxu0 %v2578
      %v2782 = vpop.f32.mrb[0].mxu0
      %v2783 = vadd.f32 0.0, %v2782
      %v2784 = vpop.f32.mrb[0].mxu0
      %2785 = vmatprep.mubr.f32.mxu0 0.0
      %2786 = vmatmul.mubr.f32.gmra.mrb[0].mxu0 %v2581
      %v2787 = vpop.f32.mrb[0].mxu0
      %v2788 = vadd.f32 0.0, %v2787
      %v2789 = vpop.f32.mrb[0].mxu0
      %2790 = vmatprep.mubr.f32.mxu0 0.0
      %2791 = vmatmul.mubr.f32.gmra.mrb[0].mxu0 %v2584
      %v2792 = vpop.f32.mrb[0].mxu0
      %v2793 = vadd.f32 0.0, %v2792
      %v2794 = vpop.f32.mrb[0].mxu0
      %2795 = vmatprep.mubr.f32.mxu0 0.0
      %2796 = vmatmul.mubr.f32.gmra.mrb[0].mxu0 %v2587
      %v2797 = vpop.f32.mrb[0].mxu0
      %v2798 = vadd.f32 0.0, %v2797
      %v2799 = vpop.f32.mrb[0].mxu0
      %2800 = vmatprep.mubr.f32.mxu0 0.0
      %2801 = vmatmul.mubr.f32.gmra.mrb[0].mxu0 %v2590
      %v2802 = vpop.f32.mrb[0].mxu0
      %v2803 = vadd.f32 0.0, %v2802
      %v2804 = vpop.f32.mrb[0].mxu0
      %2805 = vmatprep.mubr.f32.mxu0 0.0
      %2806 = vmatmul.mubr.f32.gmra.mrb[0].mxu0 %v2593
      %v2807 = vpop.f32.mrb[0].mxu0
      %v2808 = vadd.f32 0.0, %v2807
      %v2809 = vpop.f32.mrb[0].mxu0
      %2810 = vmatprep.mubr.f32.mxu0 0.0
      %2811 = vmatmul.mubr.f32.gmra.mrb[0].mxu0 %v2596
      %v2812 = vpop.f32.mrb[0].mxu0
      %v2813 = vadd.f32 0.0, %v2812
      %v2814 = vpop.f32.mrb[0].mxu0
      %2815 = vmatprep.mubr.f32.mxu0 0.0
      %2816 = vmatmul.mubr.f32.gmra.mrb[0].mxu0 %v2599
      %v2817 = vpop.f32.mrb[0].mxu0
      %v2818 = vadd.f32 0.0, %v2817
      %v2819 = vpop.f32.mrb[0].mxu0
      %2820 = vmatprep.mubr.f32.mxu0 0.0
      %2821 = vmatmul.mubr.f32.gmra.mrb[0].mxu0 %v2602
      %v2822 = vpop.f32.mrb[0].mxu0
      %v2823 = vadd.f32 0.0, %v2822
      %v2824 = vpop.f32.mrb[0].mxu0
      %2825 = vmatprep.mubr.f32.mxu0 0.0
      %2826 = vmatmul.mubr.f32.gmra.mrb[0].mxu0 %v2605
      %v2827 = vpop.f32.mrb[0].mxu0
      %v2828 = vadd.f32 0.0, %v2827
      %v2829 = vpop.f32.mrb[0].mxu0
      %2830 = vmatprep.mubr.f32.mxu0 0.0
      %2831 = vmatmul.mubr.f32.gmra.mrb[0].mxu0 %v2608
      %v2832 = vpop.f32.mrb[0].mxu0
      %v2833 = vadd.f32 0.0, %v2832
      %v2834 = vpop.f32.mrb[0].mxu0
      %2835 = vmatprep.mubr.f32.mxu0 0.0
      %2836 = vmatmul.mubr.f32.gmra.mrb[0].mxu0 %v2611
      %v2837 = vpop.f32.mrb[0].mxu0
      %v2838 = vadd.f32 0.0, %v2837
      %v2839 = vpop.f32.mrb[0].mxu0
      %2840 = vdwg.mxu0
      %v2841 = vld [vmem:[%s251] sm:$0xff]
      %v2842 = vld [vmem:[%s251 + $0x8] sm:$0xff]
      %v2843 = vld [vmem:[%s251 + $0x10] sm:$0xff]
      %v2844 = vld [vmem:[%s251 + $0x18] sm:$0xff]
      %v2845 = vld [vmem:[%s251 + $0x20] sm:$0xff]
      %v2846 = vld [vmem:[%s251 + $0x28] sm:$0xff]
      %v2847 = vld [vmem:[%s251 + $0x30] sm:$0xff]
      %v2848 = vld [vmem:[%s251 + $0x38] sm:$0xff]
      %v2849 = vld [vmem:[%s251 + $0x40] sm:$0xff]
      %v2850 = vld [vmem:[%s251 + $0x48] sm:$0xff]
      %v2851 = vld [vmem:[%s251 + $0x50] sm:$0xff]
      %v2852 = vld [vmem:[%s251 + $0x58] sm:$0xff]
      %v2853 = vld [vmem:[%s251 + $0x60] sm:$0xff]
      %v2854 = vld [vmem:[%s251 + $0x68] sm:$0xff]
      %v2855 = vld [vmem:[%s251 + $0x70] sm:$0xff]
      %v2856 = vld [vmem:[%s251 + $0x78] sm:$0xff]
      %v2857 = vld [vmem:[%s251 + $0x80] sm:$0xff]
      %v2858 = vld [vmem:[%s251 + $0x88] sm:$0xff]
      %v2859 = vld [vmem:[%s251 + $0x90] sm:$0xff]
      %v2860 = vld [vmem:[%s251 + $0x98] sm:$0xff]
      %v2861 = vld [vmem:[%s251 + $0xa0] sm:$0xff]
      %v2862 = vld [vmem:[%s251 + $0xa8] sm:$0xff]
      %v2863 = vld [vmem:[%s251 + $0xb0] sm:$0xff]
      %v2864 = vld [vmem:[%s251 + $0xb8] sm:$0xff]
      %v2865 = vld [vmem:[%s251 + $0xc0] sm:$0xff]
      %v2866 = vld [vmem:[%s251 + $0xc8] sm:$0xff]
      %v2867 = vld [vmem:[%s251 + $0xd0] sm:$0xff]
      %v2868 = vld [vmem:[%s251 + $0xd8] sm:$0xff]
      %v2869 = vld [vmem:[%s251 + $0xe0] sm:$0xff]
      %v2870 = vld [vmem:[%s251 + $0xe8] sm:$0xff]
      %v2871 = vld [vmem:[%s251 + $0xf0] sm:$0xff]
      %v2872 = vld [vmem:[%s251 + $0xf8] sm:$0xff]
      %v2873 = vadd.f32 %v2841, %v2683
      %v2874 = vadd.f32 %v2842, %v2688
      %v2875 = vadd.f32 %v2843, %v2693
      %v2876 = vadd.f32 %v2844, %v2698
      %v2877 = vadd.f32 %v2845, %v2703
      %v2878 = vadd.f32 %v2846, %v2708
      %v2879 = vadd.f32 %v2847, %v2713
      %v2880 = vadd.f32 %v2848, %v2718
      %v2881 = vadd.f32 %v2849, %v2723
      %v2882 = vadd.f32 %v2850, %v2728
      %v2883 = vadd.f32 %v2851, %v2733
      %v2884 = vadd.f32 %v2852, %v2738
      %v2885 = vadd.f32 %v2853, %v2743
      %v2886 = vadd.f32 %v2854, %v2748
      %v2887 = vadd.f32 %v2855, %v2753
      %v2888 = vadd.f32 %v2856, %v2758
      %v2889 = vadd.f32 %v2857, %v2763
      %v2890 = vadd.f32 %v2858, %v2768
      %v2891 = vadd.f32 %v2859, %v2773
      %v2892 = vadd.f32 %v2860, %v2778
      %v2893 = vadd.f32 %v2861, %v2783
      %v2894 = vadd.f32 %v2862, %v2788
      %v2895 = vadd.f32 %v2863, %v2793
      %v2896 = vadd.f32 %v2864, %v2798
      %v2897 = vadd.f32 %v2865, %v2803
      %v2898 = vadd.f32 %v2866, %v2808
      %v2899 = vadd.f32 %v2867, %v2813
      %v2900 = vadd.f32 %v2868, %v2818
      %v2901 = vadd.f32 %v2869, %v2823
      %v2902 = vadd.f32 %v2870, %v2828
      %v2903 = vadd.f32 %v2871, %v2833
      %v2904 = vadd.f32 %v2872, %v2838
      %2905 = vst [vmem:[%s251] sm:$0xff] %v2873
      %2906 = vst [vmem:[%s251 + $0x8] sm:$0xff] %v2874
      %2907 = vst [vmem:[%s251 + $0x10] sm:$0xff] %v2875
      %2908 = vst [vmem:[%s251 + $0x18] sm:$0xff] %v2876
      %2909 = vst [vmem:[%s251 + $0x20] sm:$0xff] %v2877
      %2910 = vst [vmem:[%s251 + $0x28] sm:$0xff] %v2878
      %2911 = vst [vmem:[%s251 + $0x30] sm:$0xff] %v2879
      %2912 = vst [vmem:[%s251 + $0x38] sm:$0xff] %v2880
      %2913 = vst [vmem:[%s251 + $0x40] sm:$0xff] %v2881
      %2914 = vst [vmem:[%s251 + $0x48] sm:$0xff] %v2882
      %2915 = vst [vmem:[%s251 + $0x50] sm:$0xff] %v2883
      %2916 = vst [vmem:[%s251 + $0x58] sm:$0xff] %v2884
      %2917 = vst [vmem:[%s251 + $0x60] sm:$0xff] %v2885
      %2918 = vst [vmem:[%s251 + $0x68] sm:$0xff] %v2886
      %2919 = vst [vmem:[%s251 + $0x70] sm:$0xff] %v2887
      %2920 = vst [vmem:[%s251 + $0x78] sm:$0xff] %v2888
      %2921 = vst [vmem:[%s251 + $0x80] sm:$0xff] %v2889
      %2922 = vst [vmem:[%s251 + $0x88] sm:$0xff] %v2890
      %2923 = vst [vmem:[%s251 + $0x90] sm:$0xff] %v2891
      %2924 = vst [vmem:[%s251 + $0x98] sm:$0xff] %v2892
      %2925 = vst [vmem:[%s251 + $0xa0] sm:$0xff] %v2893
      %2926 = vst [vmem:[%s251 + $0xa8] sm:$0xff] %v2894
      %2927 = vst [vmem:[%s251 + $0xb0] sm:$0xff] %v2895
      %2928 = vst [vmem:[%s251 + $0xb8] sm:$0xff] %v2896
      %2929 = vst [vmem:[%s251 + $0xc0] sm:$0xff] %v2897
      %2930 = vst [vmem:[%s251 + $0xc8] sm:$0xff] %v2898
      %2931 = vst [vmem:[%s251 + $0xd0] sm:$0xff] %v2899
      %2932 = vst [vmem:[%s251 + $0xd8] sm:$0xff] %v2900
      %2933 = vst [vmem:[%s251 + $0xe0] sm:$0xff] %v2901
      %2934 = vst [vmem:[%s251 + $0xe8] sm:$0xff] %v2902
      %2935 = vst [vmem:[%s251 + $0xf0] sm:$0xff] %v2903
      %2936 = vst [vmem:[%s251 + $0xf8] sm:$0xff] %v2904
      %s2937 = scalar_lea.vmem %s246, 48
      %v2938 = vld [vmem:[%s2937] sm:$0xff]
      %v2939 = vld [vmem:[%s2937 + $0x8] sm:$0xff]
      %v2940 = vld [vmem:[%s2937 + $0x18] sm:$0xff]
      %v2941 = vld [vmem:[%s2937 + $0x20] sm:$0xff]
      %v2942 = vld [vmem:[%s2937 + $0x30] sm:$0xff]
      %v2943 = vld [vmem:[%s2937 + $0x38] sm:$0xff]
      %v2944 = vld [vmem:[%s2937 + $0x48] sm:$0xff]
      %v2945 = vld [vmem:[%s2937 + $0x50] sm:$0xff]
      %v2946 = vld [vmem:[%s2937 + $0x60] sm:$0xff]
      %v2947 = vld [vmem:[%s2937 + $0x68] sm:$0xff]
      %v2948 = vld [vmem:[%s2937 + $0x78] sm:$0xff]
      %v2949 = vld [vmem:[%s2937 + $0x80] sm:$0xff]
      %v2950 = vld [vmem:[%s2937 + $0x90] sm:$0xff]
      %v2951 = vld [vmem:[%s2937 + $0x98] sm:$0xff]
      %v2952 = vld [vmem:[%s2937 + $0xa8] sm:$0xff]
      %v2953 = vld [vmem:[%s2937 + $0xb0] sm:$0xff]
      %v2954 = vld [vmem:[%s2937 + $0xc0] sm:$0xff]
      %v2955 = vld [vmem:[%s2937 + $0xc8] sm:$0xff]
      %v2956 = vld [vmem:[%s2937 + $0xd8] sm:$0xff]
      %v2957 = vld [vmem:[%s2937 + $0xe0] sm:$0xff]
      %v2958 = vld [vmem:[%s2937 + $0xf0] sm:$0xff]
      %v2959 = vld [vmem:[%s2937 + $0xf8] sm:$0xff]
      %v2960 = vld [vmem:[%s2937 + $0x108] sm:$0xff]
      %v2961 = vld [vmem:[%s2937 + $0x110] sm:$0xff]
      %v2962 = vld [vmem:[%s2937 + $0x120] sm:$0xff]
      %v2963 = vld [vmem:[%s2937 + $0x128] sm:$0xff]
      %v2964 = vld [vmem:[%s2937 + $0x138] sm:$0xff]
      %v2965 = vld [vmem:[%s2937 + $0x140] sm:$0xff]
      %v2966 = vld [vmem:[%s2937 + $0x150] sm:$0xff]
      %v2967 = vld [vmem:[%s2937 + $0x158] sm:$0xff]
      %v2968 = vld [vmem:[%s2937 + $0x168] sm:$0xff]
      %v2969 = vld [vmem:[%s2937 + $0x170] sm:$0xff]
      %s2970 = scalar_lea.vmem %s1, 24
      %v2971 = vld [vmem:[%s2970] sm:$0xf]
      %v2973 = vsel %vm308, %v2938, 0
      %v2976 = vsel %vm308, %v2939, 0
      %v2979 = vsel %vm308, %v2940, 0
      %v2982 = vsel %vm308, %v2941, 0
      %v2985 = vsel %vm308, %v2942, 0
      %v2988 = vsel %vm308, %v2943, 0
      %v2991 = vsel %vm308, %v2944, 0
      %v2994 = vsel %vm308, %v2945, 0
      %v2997 = vsel %vm308, %v2946, 0
      %v3000 = vsel %vm308, %v2947, 0
      %v3003 = vsel %vm308, %v2948, 0
      %v3006 = vsel %vm308, %v2949, 0
      %v3009 = vsel %vm308, %v2950, 0
      %v3012 = vsel %vm308, %v2951, 0
      %v3015 = vsel %vm308, %v2952, 0
      %v3018 = vsel %vm308, %v2953, 0
      %v3021 = vsel %vm308, %v2954, 0
      %v3024 = vsel %vm308, %v2955, 0
      %v3027 = vsel %vm308, %v2956, 0
      %v3030 = vsel %vm308, %v2957, 0
      %v3033 = vsel %vm308, %v2958, 0
      %v3036 = vsel %vm308, %v2959, 0
      %v3039 = vsel %vm308, %v2960, 0
      %v3042 = vsel %vm308, %v2961, 0
      %v3045 = vsel %vm308, %v2962, 0
      %v3048 = vsel %vm308, %v2963, 0
      %v3051 = vsel %vm308, %v2964, 0
      %v3054 = vsel %vm308, %v2965, 0
      %v3057 = vsel %vm308, %v2966, 0
      %v3060 = vsel %vm308, %v2967, 0
      %v3063 = vsel %vm308, %v2968, 0
      %v3066 = vsel %vm308, %v2969, 0
      %v3069 = vsel %vm405, %v2971, 0
      %3071 = vmatprep.subr.mxu0 0.0
      %3072 = vmatpush1.msra.mxu0 %v3069
      %3073 = vmatprep.subr.mxu0 0.0
      %3074 = vmatpush1.msra.mxu0 0.0
      %3075 = vmatprep.subr.mxu0 0.0
      %3076 = vmatpush1.msra.mxu0 0.0
      %3077 = vmatprep.subr.mxu0 0.0
      %3078 = vmatpush1.msra.mxu0 0.0
      %3079 = vmatprep.subr.mxu0 0.0
      %3080 = vmatpush1.msra.mxu0 0.0
      %3081 = vmatprep.subr.mxu0 0.0
      %3082 = vmatpush1.msra.mxu0 0.0
      %3083 = vmatprep.subr.mxu0 0.0
      %3084 = vmatpush1.msra.mxu0 0.0
      %3085 = vmatprep.subr.mxu0 0.0
      %3086 = vmatpush1.msra.mxu0 0.0
      %3087 = vmatprep.subr.mxu0 0.0
      %3088 = vmatpush1.msra.mxu0 0.0
      %3089 = vmatprep.subr.mxu0 0.0
      %3090 = vmatpush1.msra.mxu0 0.0
      %3091 = vmatprep.subr.mxu0 0.0
      %3092 = vmatpush1.msra.mxu0 0.0
      %3093 = vmatprep.subr.mxu0 0.0
      %3094 = vmatpush1.msra.mxu0 0.0
      %3095 = vmatprep.subr.mxu0 0.0
      %3096 = vmatpush1.msra.mxu0 0.0
      %3097 = vmatprep.subr.mxu0 0.0
      %3098 = vmatpush1.msra.mxu0 0.0
      %3099 = vmatprep.subr.mxu0 0.0
      %3100 = vmatpush1.msra.mxu0 0.0
      %3101 = vmatprep.subr.mxu0 0.0
      %3102 = vmatpush1.msra.mxu0 0.0
      %3103 = vmatprep.subr.mxu0 0.0
      %3104 = vmatpush1.msra.mxu0 0.0
      %3105 = vmatprep.subr.mxu0 0.0
      %3106 = vmatpush1.msra.mxu0 0.0
      %3107 = vmatprep.subr.mxu0 0.0
      %3108 = vmatpush1.msra.mxu0 0.0
      %3109 = vmatprep.subr.mxu0 0.0
      %3110 = vmatpush1.msra.mxu0 0.0
      %3111 = vmatprep.subr.mxu0 0.0
      %3112 = vmatpush1.msra.mxu0 0.0
      %3113 = vmatprep.subr.mxu0 0.0
      %3114 = vmatpush1.msra.mxu0 0.0
      %3115 = vmatprep.subr.mxu0 0.0
      %3116 = vmatpush1.msra.mxu0 0.0
      %3117 = vmatprep.subr.mxu0 0.0
      %3118 = vmatpush1.msra.mxu0 0.0
      %3119 = vmatprep.subr.mxu0 0.0
      %3120 = vmatpush1.msra.mxu0 0.0
      %3121 = vmatprep.subr.mxu0 0.0
      %3122 = vmatpush1.msra.mxu0 0.0
      %3123 = vmatprep.subr.mxu0 0.0
      %3124 = vmatpush1.msra.mxu0 0.0
      %3125 = vmatprep.subr.mxu0 0.0
      %3126 = vmatpush1.msra.mxu0 0.0
      %3127 = vmatprep.subr.mxu0 0.0
      %3128 = vmatpush1.msra.mxu0 0.0
      %3129 = vmatprep.subr.mxu0 0.0
      %3130 = vmatpush1.msra.mxu0 0.0
      %3131 = vmatprep.subr.mxu0 0.0
      %3132 = vmatpush1.msra.mxu0 0.0
      %3133 = vmatprep.subr.mxu0 0.0
      %3134 = vmatpush1.msra.mxu0 0.0
      %3135 = vmatprep.mubr.f32.mxu0 0.0
      %3136 = vmatmul.mubr.f32.gmra.mrb[0].mxu0 %v2973
      %v3137 = vpop.f32.mrb[0].mxu0
      %v3138 = vadd.f32 0.0, %v3137
      %v3139 = vpop.f32.mrb[0].mxu0
      %3140 = vmatprep.mubr.f32.mxu0 0.0
      %3141 = vmatmul.mubr.f32.gmra.mrb[0].mxu0 %v2976
      %v3142 = vpop.f32.mrb[0].mxu0
      %v3143 = vadd.f32 0.0, %v3142
      %v3144 = vpop.f32.mrb[0].mxu0
      %3145 = vmatprep.mubr.f32.mxu0 0.0
      %3146 = vmatmul.mubr.f32.gmra.mrb[0].mxu0 %v2979
      %v3147 = vpop.f32.mrb[0].mxu0
      %v3148 = vadd.f32 0.0, %v3147
      %v3149 = vpop.f32.mrb[0].mxu0
      %3150 = vmatprep.mubr.f32.mxu0 0.0
      %3151 = vmatmul.mubr.f32.gmra.mrb[0].mxu0 %v2982
      %v3152 = vpop.f32.mrb[0].mxu0
      %v3153 = vadd.f32 0.0, %v3152
      %v3154 = vpop.f32.mrb[0].mxu0
      %3155 = vmatprep.mubr.f32.mxu0 0.0
      %3156 = vmatmul.mubr.f32.gmra.mrb[0].mxu0 %v2985
      %v3157 = vpop.f32.mrb[0].mxu0
      %v3158 = vadd.f32 0.0, %v3157
      %v3159 = vpop.f32.mrb[0].mxu0
      %3160 = vmatprep.mubr.f32.mxu0 0.0
      %3161 = vmatmul.mubr.f32.gmra.mrb[0].mxu0 %v2988
      %v3162 = vpop.f32.mrb[0].mxu0
      %v3163 = vadd.f32 0.0, %v3162
      %v3164 = vpop.f32.mrb[0].mxu0
      %3165 = vmatprep.mubr.f32.mxu0 0.0
      %3166 = vmatmul.mubr.f32.gmra.mrb[0].mxu0 %v2991
      %v3167 = vpop.f32.mrb[0].mxu0
      %v3168 = vadd.f32 0.0, %v3167
      %v3169 = vpop.f32.mrb[0].mxu0
      %3170 = vmatprep.mubr.f32.mxu0 0.0
      %3171 = vmatmul.mubr.f32.gmra.mrb[0].mxu0 %v2994
      %v3172 = vpop.f32.mrb[0].mxu0
      %v3173 = vadd.f32 0.0, %v3172
      %v3174 = vpop.f32.mrb[0].mxu0
      %3175 = vmatprep.mubr.f32.mxu0 0.0
      %3176 = vmatmul.mubr.f32.gmra.mrb[0].mxu0 %v2997
      %v3177 = vpop.f32.mrb[0].mxu0
      %v3178 = vadd.f32 0.0, %v3177
      %v3179 = vpop.f32.mrb[0].mxu0
      %3180 = vmatprep.mubr.f32.mxu0 0.0
      %3181 = vmatmul.mubr.f32.gmra.mrb[0].mxu0 %v3000
      %v3182 = vpop.f32.mrb[0].mxu0
      %v3183 = vadd.f32 0.0, %v3182
      %v3184 = vpop.f32.mrb[0].mxu0
      %3185 = vmatprep.mubr.f32.mxu0 0.0
      %3186 = vmatmul.mubr.f32.gmra.mrb[0].mxu0 %v3003
      %v3187 = vpop.f32.mrb[0].mxu0
      %v3188 = vadd.f32 0.0, %v3187
      %v3189 = vpop.f32.mrb[0].mxu0
      %3190 = vmatprep.mubr.f32.mxu0 0.0
      %3191 = vmatmul.mubr.f32.gmra.mrb[0].mxu0 %v3006
      %v3192 = vpop.f32.mrb[0].mxu0
      %v3193 = vadd.f32 0.0, %v3192
      %v3194 = vpop.f32.mrb[0].mxu0
      %3195 = vmatprep.mubr.f32.mxu0 0.0
      %3196 = vmatmul.mubr.f32.gmra.mrb[0].mxu0 %v3009
      %v3197 = vpop.f32.mrb[0].mxu0
      %v3198 = vadd.f32 0.0, %v3197
      %v3199 = vpop.f32.mrb[0].mxu0
      %3200 = vmatprep.mubr.f32.mxu0 0.0
      %3201 = vmatmul.mubr.f32.gmra.mrb[0].mxu0 %v3012
      %v3202 = vpop.f32.mrb[0].mxu0
      %v3203 = vadd.f32 0.0, %v3202
      %v3204 = vpop.f32.mrb[0].mxu0
      %3205 = vmatprep.mubr.f32.mxu0 0.0
      %3206 = vmatmul.mubr.f32.gmra.mrb[0].mxu0 %v3015
      %v3207 = vpop.f32.mrb[0].mxu0
      %v3208 = vadd.f32 0.0, %v3207
      %v3209 = vpop.f32.mrb[0].mxu0
      %3210 = vmatprep.mubr.f32.mxu0 0.0
      %3211 = vmatmul.mubr.f32.gmra.mrb[0].mxu0 %v3018
      %v3212 = vpop.f32.mrb[0].mxu0
      %v3213 = vadd.f32 0.0, %v3212
      %v3214 = vpop.f32.mrb[0].mxu0
      %3215 = vmatprep.mubr.f32.mxu0 0.0
      %3216 = vmatmul.mubr.f32.gmra.mrb[0].mxu0 %v3021
      %v3217 = vpop.f32.mrb[0].mxu0
      %v3218 = vadd.f32 0.0, %v3217
      %v3219 = vpop.f32.mrb[0].mxu0
      %3220 = vmatprep.mubr.f32.mxu0 0.0
      %3221 = vmatmul.mubr.f32.gmra.mrb[0].mxu0 %v3024
      %v3222 = vpop.f32.mrb[0].mxu0
      %v3223 = vadd.f32 0.0, %v3222
      %v3224 = vpop.f32.mrb[0].mxu0
      %3225 = vmatprep.mubr.f32.mxu0 0.0
      %3226 = vmatmul.mubr.f32.gmra.mrb[0].mxu0 %v3027
      %v3227 = vpop.f32.mrb[0].mxu0
      %v3228 = vadd.f32 0.0, %v3227
      %v3229 = vpop.f32.mrb[0].mxu0
      %3230 = vmatprep.mubr.f32.mxu0 0.0
      %3231 = vmatmul.mubr.f32.gmra.mrb[0].mxu0 %v3030
      %v3232 = vpop.f32.mrb[0].mxu0
      %v3233 = vadd.f32 0.0, %v3232
      %v3234 = vpop.f32.mrb[0].mxu0
      %3235 = vmatprep.mubr.f32.mxu0 0.0
      %3236 = vmatmul.mubr.f32.gmra.mrb[0].mxu0 %v3033
      %v3237 = vpop.f32.mrb[0].mxu0
      %v3238 = vadd.f32 0.0, %v3237
      %v3239 = vpop.f32.mrb[0].mxu0
      %3240 = vmatprep.mubr.f32.mxu0 0.0
      %3241 = vmatmul.mubr.f32.gmra.mrb[0].mxu0 %v3036
      %v3242 = vpop.f32.mrb[0].mxu0
      %v3243 = vadd.f32 0.0, %v3242
      %v3244 = vpop.f32.mrb[0].mxu0
      %3245 = vmatprep.mubr.f32.mxu0 0.0
      %3246 = vmatmul.mubr.f32.gmra.mrb[0].mxu0 %v3039
      %v3247 = vpop.f32.mrb[0].mxu0
      %v3248 = vadd.f32 0.0, %v3247
      %v3249 = vpop.f32.mrb[0].mxu0
      %3250 = vmatprep.mubr.f32.mxu0 0.0
      %3251 = vmatmul.mubr.f32.gmra.mrb[0].mxu0 %v3042
      %v3252 = vpop.f32.mrb[0].mxu0
      %v3253 = vadd.f32 0.0, %v3252
      %v3254 = vpop.f32.mrb[0].mxu0
      %3255 = vmatprep.mubr.f32.mxu0 0.0
      %3256 = vmatmul.mubr.f32.gmra.mrb[0].mxu0 %v3045
      %v3257 = vpop.f32.mrb[0].mxu0
      %v3258 = vadd.f32 0.0, %v3257
      %v3259 = vpop.f32.mrb[0].mxu0
      %3260 = vmatprep.mubr.f32.mxu0 0.0
      %3261 = vmatmul.mubr.f32.gmra.mrb[0].mxu0 %v3048
      %v3262 = vpop.f32.mrb[0].mxu0
      %v3263 = vadd.f32 0.0, %v3262
      %v3264 = vpop.f32.mrb[0].mxu0
      %3265 = vmatprep.mubr.f32.mxu0 0.0
      %3266 = vmatmul.mubr.f32.gmra.mrb[0].mxu0 %v3051
      %v3267 = vpop.f32.mrb[0].mxu0
      %v3268 = vadd.f32 0.0, %v3267
      %v3269 = vpop.f32.mrb[0].mxu0
      %3270 = vmatprep.mubr.f32.mxu0 0.0
      %3271 = vmatmul.mubr.f32.gmra.mrb[0].mxu0 %v3054
      %v3272 = vpop.f32.mrb[0].mxu0
      %v3273 = vadd.f32 0.0, %v3272
      %v3274 = vpop.f32.mrb[0].mxu0
      %3275 = vmatprep.mubr.f32.mxu0 0.0
      %3276 = vmatmul.mubr.f32.gmra.mrb[0].mxu0 %v3057
      %v3277 = vpop.f32.mrb[0].mxu0
      %v3278 = vadd.f32 0.0, %v3277
      %v3279 = vpop.f32.mrb[0].mxu0
      %3280 = vmatprep.mubr.f32.mxu0 0.0
      %3281 = vmatmul.mubr.f32.gmra.mrb[0].mxu0 %v3060
      %v3282 = vpop.f32.mrb[0].mxu0
      %v3283 = vadd.f32 0.0, %v3282
      %v3284 = vpop.f32.mrb[0].mxu0
      %3285 = vmatprep.mubr.f32.mxu0 0.0
      %3286 = vmatmul.mubr.f32.gmra.mrb[0].mxu0 %v3063
      %v3287 = vpop.f32.mrb[0].mxu0
      %v3288 = vadd.f32 0.0, %v3287
      %v3289 = vpop.f32.mrb[0].mxu0
      %3290 = vmatprep.mubr.f32.mxu0 0.0
      %3291 = vmatmul.mubr.f32.gmra.mrb[0].mxu0 %v3066
      %v3292 = vpop.f32.mrb[0].mxu0
      %v3293 = vadd.f32 0.0, %v3292
      %v3294 = vpop.f32.mrb[0].mxu0
      %3295 = vdwg.mxu0
      %v3296 = vld [vmem:[%s251] sm:$0xff]
      %v3297 = vld [vmem:[%s251 + $0x8] sm:$0xff]
      %v3298 = vld [vmem:[%s251 + $0x10] sm:$0xff]
      %v3299 = vld [vmem:[%s251 + $0x18] sm:$0xff]
      %v3300 = vld [vmem:[%s251 + $0x20] sm:$0xff]
      %v3301 = vld [vmem:[%s251 + $0x28] sm:$0xff]
      %v3302 = vld [vmem:[%s251 + $0x30] sm:$0xff]
      %v3303 = vld [vmem:[%s251 + $0x38] sm:$0xff]
      %v3304 = vld [vmem:[%s251 + $0x40] sm:$0xff]
      %v3305 = vld [vmem:[%s251 + $0x48] sm:$0xff]
      %v3306 = vld [vmem:[%s251 + $0x50] sm:$0xff]
      %v3307 = vld [vmem:[%s251 + $0x58] sm:$0xff]
      %v3308 = vld [vmem:[%s251 + $0x60] sm:$0xff]
      %v3309 = vld [vmem:[%s251 + $0x68] sm:$0xff]
      %v3310 = vld [vmem:[%s251 + $0x70] sm:$0xff]
      %v3311 = vld [vmem:[%s251 + $0x78] sm:$0xff]
      %v3312 = vld [vmem:[%s251 + $0x80] sm:$0xff]
      %v3313 = vld [vmem:[%s251 + $0x88] sm:$0xff]
      %v3314 = vld [vmem:[%s251 + $0x90] sm:$0xff]
      %v3315 = vld [vmem:[%s251 + $0x98] sm:$0xff]
      %v3316 = vld [vmem:[%s251 + $0xa0] sm:$0xff]
      %v3317 = vld [vmem:[%s251 + $0xa8] sm:$0xff]
      %v3318 = vld [vmem:[%s251 + $0xb0] sm:$0xff]
      %v3319 = vld [vmem:[%s251 + $0xb8] sm:$0xff]
      %v3320 = vld [vmem:[%s251 + $0xc0] sm:$0xff]
      %v3321 = vld [vmem:[%s251 + $0xc8] sm:$0xff]
      %v3322 = vld [vmem:[%s251 + $0xd0] sm:$0xff]
      %v3323 = vld [vmem:[%s251 + $0xd8] sm:$0xff]
      %v3324 = vld [vmem:[%s251 + $0xe0] sm:$0xff]
      %v3325 = vld [vmem:[%s251 + $0xe8] sm:$0xff]
      %v3326 = vld [vmem:[%s251 + $0xf0] sm:$0xff]
      %v3327 = vld [vmem:[%s251 + $0xf8] sm:$0xff]
      %v3328 = vadd.f32 %v3296, %v3138
      %v3329 = vadd.f32 %v3297, %v3143
      %v3330 = vadd.f32 %v3298, %v3148
      %v3331 = vadd.f32 %v3299, %v3153
      %v3332 = vadd.f32 %v3300, %v3158
      %v3333 = vadd.f32 %v3301, %v3163
      %v3334 = vadd.f32 %v3302, %v3168
      %v3335 = vadd.f32 %v3303, %v3173
      %v3336 = vadd.f32 %v3304, %v3178
      %v3337 = vadd.f32 %v3305, %v3183
      %v3338 = vadd.f32 %v3306, %v3188
      %v3339 = vadd.f32 %v3307, %v3193
      %v3340 = vadd.f32 %v3308, %v3198
      %v3341 = vadd.f32 %v3309, %v3203
      %v3342 = vadd.f32 %v3310, %v3208
      %v3343 = vadd.f32 %v3311, %v3213
      %v3344 = vadd.f32 %v3312, %v3218
      %v3345 = vadd.f32 %v3313, %v3223
      %v3346 = vadd.f32 %v3314, %v3228
      %v3347 = vadd.f32 %v3315, %v3233
      %v3348 = vadd.f32 %v3316, %v3238
      %v3349 = vadd.f32 %v3317, %v3243
      %v3350 = vadd.f32 %v3318, %v3248
      %v3351 = vadd.f32 %v3319, %v3253
      %v3352 = vadd.f32 %v3320, %v3258
      %v3353 = vadd.f32 %v3321, %v3263
      %v3354 = vadd.f32 %v3322, %v3268
      %v3355 = vadd.f32 %v3323, %v3273
      %v3356 = vadd.f32 %v3324, %v3278
      %v3357 = vadd.f32 %v3325, %v3283
      %v3358 = vadd.f32 %v3326, %v3288
      %v3359 = vadd.f32 %v3327, %v3293
      %3360 = vst [vmem:[%s251] sm:$0xff] %v3328
      %3361 = vst [vmem:[%s251 + $0x8] sm:$0xff] %v3329
      %3362 = vst [vmem:[%s251 + $0x10] sm:$0xff] %v3330
      %3363 = vst [vmem:[%s251 + $0x18] sm:$0xff] %v3331
      %3364 = vst [vmem:[%s251 + $0x20] sm:$0xff] %v3332
      %3365 = vst [vmem:[%s251 + $0x28] sm:$0xff] %v3333
      %3366 = vst [vmem:[%s251 + $0x30] sm:$0xff] %v3334
      %3367 = vst [vmem:[%s251 + $0x38] sm:$0xff] %v3335
      %3368 = vst [vmem:[%s251 + $0x40] sm:$0xff] %v3336
      %3369 = vst [vmem:[%s251 + $0x48] sm:$0xff] %v3337
      %3370 = vst [vmem:[%s251 + $0x50] sm:$0xff] %v3338
      %3371 = vst [vmem:[%s251 + $0x58] sm:$0xff] %v3339
      %3372 = vst [vmem:[%s251 + $0x60] sm:$0xff] %v3340
      %3373 = vst [vmem:[%s251 + $0x68] sm:$0xff] %v3341
      %3374 = vst [vmem:[%s251 + $0x70] sm:$0xff] %v3342
      %3375 = vst [vmem:[%s251 + $0x78] sm:$0xff] %v3343
      %3376 = vst [vmem:[%s251 + $0x80] sm:$0xff] %v3344
      %3377 = vst [vmem:[%s251 + $0x88] sm:$0xff] %v3345
      %3378 = vst [vmem:[%s251 + $0x90] sm:$0xff] %v3346
      %3379 = vst [vmem:[%s251 + $0x98] sm:$0xff] %v3347
      %3380 = vst [vmem:[%s251 + $0xa0] sm:$0xff] %v3348
      %3381 = vst [vmem:[%s251 + $0xa8] sm:$0xff] %v3349
      %3382 = vst [vmem:[%s251 + $0xb0] sm:$0xff] %v3350
      %3383 = vst [vmem:[%s251 + $0xb8] sm:$0xff] %v3351
      %3384 = vst [vmem:[%s251 + $0xc0] sm:$0xff] %v3352
      %3385 = vst [vmem:[%s251 + $0xc8] sm:$0xff] %v3353
      %3386 = vst [vmem:[%s251 + $0xd0] sm:$0xff] %v3354
      %3387 = vst [vmem:[%s251 + $0xd8] sm:$0xff] %v3355
      %3388 = vst [vmem:[%s251 + $0xe0] sm:$0xff] %v3356
      %3389 = vst [vmem:[%s251 + $0xe8] sm:$0xff] %v3357
      %3390 = vst [vmem:[%s251 + $0xf0] sm:$0xff] %v3358
      %3391 = vst [vmem:[%s251 + $0xf8] sm:$0xff] %v3359
      %v3392 = vld [vmem:[%s2937 + $0x1] sm:$0xff]
      %v3393 = vld [vmem:[%s2937 + $0x9] sm:$0xff]
      %v3394 = vld [vmem:[%s2937 + $0x19] sm:$0xff]
      %v3395 = vld [vmem:[%s2937 + $0x21] sm:$0xff]
      %v3396 = vld [vmem:[%s2937 + $0x31] sm:$0xff]
      %v3397 = vld [vmem:[%s2937 + $0x39] sm:$0xff]
      %v3398 = vld [vmem:[%s2937 + $0x49] sm:$0xff]
      %v3399 = vld [vmem:[%s2937 + $0x51] sm:$0xff]
      %v3400 = vld [vmem:[%s2937 + $0x61] sm:$0xff]
      %v3401 = vld [vmem:[%s2937 + $0x69] sm:$0xff]
      %v3402 = vld [vmem:[%s2937 + $0x79] sm:$0xff]
      %v3403 = vld [vmem:[%s2937 + $0x81] sm:$0xff]
      %v3404 = vld [vmem:[%s2937 + $0x91] sm:$0xff]
      %v3405 = vld [vmem:[%s2937 + $0x99] sm:$0xff]
      %v3406 = vld [vmem:[%s2937 + $0xa9] sm:$0xff]
      %v3407 = vld [vmem:[%s2937 + $0xb1] sm:$0xff]
      %v3408 = vld [vmem:[%s2937 + $0xc1] sm:$0xff]
      %v3409 = vld [vmem:[%s2937 + $0xc9] sm:$0xff]
      %v3410 = vld [vmem:[%s2937 + $0xd9] sm:$0xff]
      %v3411 = vld [vmem:[%s2937 + $0xe1] sm:$0xff]
      %v3412 = vld [vmem:[%s2937 + $0xf1] sm:$0xff]
      %v3413 = vld [vmem:[%s2937 + $0xf9] sm:$0xff]
      %v3414 = vld [vmem:[%s2937 + $0x109] sm:$0xff]
      %v3415 = vld [vmem:[%s2937 + $0x111] sm:$0xff]
      %v3416 = vld [vmem:[%s2937 + $0x121] sm:$0xff]
      %v3417 = vld [vmem:[%s2937 + $0x129] sm:$0xff]
      %v3418 = vld [vmem:[%s2937 + $0x139] sm:$0xff]
      %v3419 = vld [vmem:[%s2937 + $0x141] sm:$0xff]
      %v3420 = vld [vmem:[%s2937 + $0x151] sm:$0xff]
      %v3421 = vld [vmem:[%s2937 + $0x159] sm:$0xff]
      %v3422 = vld [vmem:[%s2937 + $0x169] sm:$0xff]
      %v3423 = vld [vmem:[%s2937 + $0x171] sm:$0xff]
      %s3424 = scalar_lea.vmem %s1, 28
      %v3425 = vld [vmem:[%s3424] sm:$0xf]
      %v3427 = vsel %vm308, %v3392, 0
      %v3430 = vsel %vm308, %v3393, 0
      %v3433 = vsel %vm308, %v3394, 0
      %v3436 = vsel %vm308, %v3395, 0
      %v3439 = vsel %vm308, %v3396, 0
      %v3442 = vsel %vm308, %v3397, 0
      %v3445 = vsel %vm308, %v3398, 0
      %v3448 = vsel %vm308, %v3399, 0
      %v3451 = vsel %vm308, %v3400, 0
      %v3454 = vsel %vm308, %v3401, 0
      %v3457 = vsel %vm308, %v3402, 0
      %v3460 = vsel %vm308, %v3403, 0
      %v3463 = vsel %vm308, %v3404, 0
      %v3466 = vsel %vm308, %v3405, 0
      %v3469 = vsel %vm308, %v3406, 0
      %v3472 = vsel %vm308, %v3407, 0
      %v3475 = vsel %vm308, %v3408, 0
      %v3478 = vsel %vm308, %v3409, 0
      %v3481 = vsel %vm308, %v3410, 0
      %v3484 = vsel %vm308, %v3411, 0
      %v3487 = vsel %vm308, %v3412, 0
      %v3490 = vsel %vm308, %v3413, 0
      %v3493 = vsel %vm308, %v3414, 0
      %v3496 = vsel %vm308, %v3415, 0
      %v3499 = vsel %vm308, %v3416, 0
      %v3502 = vsel %vm308, %v3417, 0
      %v3505 = vsel %vm308, %v3418, 0
      %v3508 = vsel %vm308, %v3419, 0
      %v3511 = vsel %vm308, %v3420, 0
      %v3514 = vsel %vm308, %v3421, 0
      %v3517 = vsel %vm308, %v3422, 0
      %v3520 = vsel %vm308, %v3423, 0
      %v3523 = vsel %vm405, %v3425, 0
      %3525 = vmatprep.subr.mxu0 0.0
      %3526 = vmatpush1.msra.mxu0 %v3523
      %3527 = vmatprep.subr.mxu0 0.0
      %3528 = vmatpush1.msra.mxu0 0.0
      %3529 = vmatprep.subr.mxu0 0.0
      %3530 = vmatpush1.msra.mxu0 0.0
      %3531 = vmatprep.subr.mxu0 0.0
      %3532 = vmatpush1.msra.mxu0 0.0
      %3533 = vmatprep.subr.mxu0 0.0
      %3534 = vmatpush1.msra.mxu0 0.0
      %3535 = vmatprep.subr.mxu0 0.0
      %3536 = vmatpush1.msra.mxu0 0.0
      %3537 = vmatprep.subr.mxu0 0.0
      %3538 = vmatpush1.msra.mxu0 0.0
      %3539 = vmatprep.subr.mxu0 0.0
      %3540 = vmatpush1.msra.mxu0 0.0
      %3541 = vmatprep.subr.mxu0 0.0
      %3542 = vmatpush1.msra.mxu0 0.0
      %3543 = vmatprep.subr.mxu0 0.0
      %3544 = vmatpush1.msra.mxu0 0.0
      %3545 = vmatprep.subr.mxu0 0.0
      %3546 = vmatpush1.msra.mxu0 0.0
      %3547 = vmatprep.subr.mxu0 0.0
      %3548 = vmatpush1.msra.mxu0 0.0
      %3549 = vmatprep.subr.mxu0 0.0
      %3550 = vmatpush1.msra.mxu0 0.0
      %3551 = vmatprep.subr.mxu0 0.0
      %3552 = vmatpush1.msra.mxu0 0.0
      %3553 = vmatprep.subr.mxu0 0.0
      %3554 = vmatpush1.msra.mxu0 0.0
      %3555 = vmatprep.subr.mxu0 0.0
      %3556 = vmatpush1.msra.mxu0 0.0
      %3557 = vmatprep.subr.mxu0 0.0
      %3558 = vmatpush1.msra.mxu0 0.0
      %3559 = vmatprep.subr.mxu0 0.0
      %3560 = vmatpush1.msra.mxu0 0.0
      %3561 = vmatprep.subr.mxu0 0.0
      %3562 = vmatpush1.msra.mxu0 0.0
      %3563 = vmatprep.subr.mxu0 0.0
      %3564 = vmatpush1.msra.mxu0 0.0
      %3565 = vmatprep.subr.mxu0 0.0
      %3566 = vmatpush1.msra.mxu0 0.0
      %3567 = vmatprep.subr.mxu0 0.0
      %3568 = vmatpush1.msra.mxu0 0.0
      %3569 = vmatprep.subr.mxu0 0.0
      %3570 = vmatpush1.msra.mxu0 0.0
      %3571 = vmatprep.subr.mxu0 0.0
      %3572 = vmatpush1.msra.mxu0 0.0
      %3573 = vmatprep.subr.mxu0 0.0
      %3574 = vmatpush1.msra.mxu0 0.0
      %3575 = vmatprep.subr.mxu0 0.0
      %3576 = vmatpush1.msra.mxu0 0.0
      %3577 = vmatprep.subr.mxu0 0.0
      %3578 = vmatpush1.msra.mxu0 0.0
      %3579 = vmatprep.subr.mxu0 0.0
      %3580 = vmatpush1.msra.mxu0 0.0
      %3581 = vmatprep.subr.mxu0 0.0
      %3582 = vmatpush1.msra.mxu0 0.0
      %3583 = vmatprep.subr.mxu0 0.0
      %3584 = vmatpush1.msra.mxu0 0.0
      %3585 = vmatprep.subr.mxu0 0.0
      %3586 = vmatpush1.msra.mxu0 0.0
      %3587 = vmatprep.subr.mxu0 0.0
      %3588 = vmatpush1.msra.mxu0 0.0
      %3589 = vmatprep.mubr.f32.mxu0 0.0
      %3590 = vmatmul.mubr.f32.gmra.mrb[0].mxu0 %v3427
      %v3591 = vpop.f32.mrb[0].mxu0
      %v3592 = vadd.f32 0.0, %v3591
      %v3593 = vpop.f32.mrb[0].mxu0
      %3594 = vmatprep.mubr.f32.mxu0 0.0
      %3595 = vmatmul.mubr.f32.gmra.mrb[0].mxu0 %v3430
      %v3596 = vpop.f32.mrb[0].mxu0
      %v3597 = vadd.f32 0.0, %v3596
      %v3598 = vpop.f32.mrb[0].mxu0
      %3599 = vmatprep.mubr.f32.mxu0 0.0
      %3600 = vmatmul.mubr.f32.gmra.mrb[0].mxu0 %v3433
      %v3601 = vpop.f32.mrb[0].mxu0
      %v3602 = vadd.f32 0.0, %v3601
      %v3603 = vpop.f32.mrb[0].mxu0
      %3604 = vmatprep.mubr.f32.mxu0 0.0
      %3605 = vmatmul.mubr.f32.gmra.mrb[0].mxu0 %v3436
      %v3606 = vpop.f32.mrb[0].mxu0
      %v3607 = vadd.f32 0.0, %v3606
      %v3608 = vpop.f32.mrb[0].mxu0
      %3609 = vmatprep.mubr.f32.mxu0 0.0
      %3610 = vmatmul.mubr.f32.gmra.mrb[0].mxu0 %v3439
      %v3611 = vpop.f32.mrb[0].mxu0
      %v3612 = vadd.f32 0.0, %v3611
      %v3613 = vpop.f32.mrb[0].mxu0
      %3614 = vmatprep.mubr.f32.mxu0 0.0
      %3615 = vmatmul.mubr.f32.gmra.mrb[0].mxu0 %v3442
      %v3616 = vpop.f32.mrb[0].mxu0
      %v3617 = vadd.f32 0.0, %v3616
      %v3618 = vpop.f32.mrb[0].mxu0
      %3619 = vmatprep.mubr.f32.mxu0 0.0
      %3620 = vmatmul.mubr.f32.gmra.mrb[0].mxu0 %v3445
      %v3621 = vpop.f32.mrb[0].mxu0
      %v3622 = vadd.f32 0.0, %v3621
      %v3623 = vpop.f32.mrb[0].mxu0
      %3624 = vmatprep.mubr.f32.mxu0 0.0
      %3625 = vmatmul.mubr.f32.gmra.mrb[0].mxu0 %v3448
      %v3626 = vpop.f32.mrb[0].mxu0
      %v3627 = vadd.f32 0.0, %v3626
      %v3628 = vpop.f32.mrb[0].mxu0
      %3629 = vmatprep.mubr.f32.mxu0 0.0
      %3630 = vmatmul.mubr.f32.gmra.mrb[0].mxu0 %v3451
      %v3631 = vpop.f32.mrb[0].mxu0
      %v3632 = vadd.f32 0.0, %v3631
      %v3633 = vpop.f32.mrb[0].mxu0
      %3634 = vmatprep.mubr.f32.mxu0 0.0
      %3635 = vmatmul.mubr.f32.gmra.mrb[0].mxu0 %v3454
      %v3636 = vpop.f32.mrb[0].mxu0
      %v3637 = vadd.f32 0.0, %v3636
      %v3638 = vpop.f32.mrb[0].mxu0
      %3639 = vmatprep.mubr.f32.mxu0 0.0
      %3640 = vmatmul.mubr.f32.gmra.mrb[0].mxu0 %v3457
      %v3641 = vpop.f32.mrb[0].mxu0
      %v3642 = vadd.f32 0.0, %v3641
      %v3643 = vpop.f32.mrb[0].mxu0
      %3644 = vmatprep.mubr.f32.mxu0 0.0
      %3645 = vmatmul.mubr.f32.gmra.mrb[0].mxu0 %v3460
      %v3646 = vpop.f32.mrb[0].mxu0
      %v3647 = vadd.f32 0.0, %v3646
      %v3648 = vpop.f32.mrb[0].mxu0
      %3649 = vmatprep.mubr.f32.mxu0 0.0
      %3650 = vmatmul.mubr.f32.gmra.mrb[0].mxu0 %v3463
      %v3651 = vpop.f32.mrb[0].mxu0
      %v3652 = vadd.f32 0.0, %v3651
      %v3653 = vpop.f32.mrb[0].mxu0
      %3654 = vmatprep.mubr.f32.mxu0 0.0
      %3655 = vmatmul.mubr.f32.gmra.mrb[0].mxu0 %v3466
      %v3656 = vpop.f32.mrb[0].mxu0
      %v3657 = vadd.f32 0.0, %v3656
      %v3658 = vpop.f32.mrb[0].mxu0
      %3659 = vmatprep.mubr.f32.mxu0 0.0
      %3660 = vmatmul.mubr.f32.gmra.mrb[0].mxu0 %v3469
      %v3661 = vpop.f32.mrb[0].mxu0
      %v3662 = vadd.f32 0.0, %v3661
      %v3663 = vpop.f32.mrb[0].mxu0
      %3664 = vmatprep.mubr.f32.mxu0 0.0
      %3665 = vmatmul.mubr.f32.gmra.mrb[0].mxu0 %v3472
      %v3666 = vpop.f32.mrb[0].mxu0
      %v3667 = vadd.f32 0.0, %v3666
      %v3668 = vpop.f32.mrb[0].mxu0
      %3669 = vmatprep.mubr.f32.mxu0 0.0
      %3670 = vmatmul.mubr.f32.gmra.mrb[0].mxu0 %v3475
      %v3671 = vpop.f32.mrb[0].mxu0
      %v3672 = vadd.f32 0.0, %v3671
      %v3673 = vpop.f32.mrb[0].mxu0
      %3674 = vmatprep.mubr.f32.mxu0 0.0
      %3675 = vmatmul.mubr.f32.gmra.mrb[0].mxu0 %v3478
      %v3676 = vpop.f32.mrb[0].mxu0
      %v3677 = vadd.f32 0.0, %v3676
      %v3678 = vpop.f32.mrb[0].mxu0
      %3679 = vmatprep.mubr.f32.mxu0 0.0
      %3680 = vmatmul.mubr.f32.gmra.mrb[0].mxu0 %v3481
      %v3681 = vpop.f32.mrb[0].mxu0
      %v3682 = vadd.f32 0.0, %v3681
      %v3683 = vpop.f32.mrb[0].mxu0
      %3684 = vmatprep.mubr.f32.mxu0 0.0
      %3685 = vmatmul.mubr.f32.gmra.mrb[0].mxu0 %v3484
      %v3686 = vpop.f32.mrb[0].mxu0
      %v3687 = vadd.f32 0.0, %v3686
      %v3688 = vpop.f32.mrb[0].mxu0
      %3689 = vmatprep.mubr.f32.mxu0 0.0
      %3690 = vmatmul.mubr.f32.gmra.mrb[0].mxu0 %v3487
      %v3691 = vpop.f32.mrb[0].mxu0
      %v3692 = vadd.f32 0.0, %v3691
      %v3693 = vpop.f32.mrb[0].mxu0
      %3694 = vmatprep.mubr.f32.mxu0 0.0
      %3695 = vmatmul.mubr.f32.gmra.mrb[0].mxu0 %v3490
      %v3696 = vpop.f32.mrb[0].mxu0
      %v3697 = vadd.f32 0.0, %v3696
      %v3698 = vpop.f32.mrb[0].mxu0
      %3699 = vmatprep.mubr.f32.mxu0 0.0
      %3700 = vmatmul.mubr.f32.gmra.mrb[0].mxu0 %v3493
      %v3701 = vpop.f32.mrb[0].mxu0
      %v3702 = vadd.f32 0.0, %v3701
      %v3703 = vpop.f32.mrb[0].mxu0
      %3704 = vmatprep.mubr.f32.mxu0 0.0
      %3705 = vmatmul.mubr.f32.gmra.mrb[0].mxu0 %v3496
      %v3706 = vpop.f32.mrb[0].mxu0
      %v3707 = vadd.f32 0.0, %v3706
      %v3708 = vpop.f32.mrb[0].mxu0
      %3709 = vmatprep.mubr.f32.mxu0 0.0
      %3710 = vmatmul.mubr.f32.gmra.mrb[0].mxu0 %v3499
      %v3711 = vpop.f32.mrb[0].mxu0
      %v3712 = vadd.f32 0.0, %v3711
      %v3713 = vpop.f32.mrb[0].mxu0
      %3714 = vmatprep.mubr.f32.mxu0 0.0
      %3715 = vmatmul.mubr.f32.gmra.mrb[0].mxu0 %v3502
      %v3716 = vpop.f32.mrb[0].mxu0
      %v3717 = vadd.f32 0.0, %v3716
      %v3718 = vpop.f32.mrb[0].mxu0
      %3719 = vmatprep.mubr.f32.mxu0 0.0
      %3720 = vmatmul.mubr.f32.gmra.mrb[0].mxu0 %v3505
      %v3721 = vpop.f32.mrb[0].mxu0
      %v3722 = vadd.f32 0.0, %v3721
      %v3723 = vpop.f32.mrb[0].mxu0
      %3724 = vmatprep.mubr.f32.mxu0 0.0
      %3725 = vmatmul.mubr.f32.gmra.mrb[0].mxu0 %v3508
      %v3726 = vpop.f32.mrb[0].mxu0
      %v3727 = vadd.f32 0.0, %v3726
      %v3728 = vpop.f32.mrb[0].mxu0
      %3729 = vmatprep.mubr.f32.mxu0 0.0
      %3730 = vmatmul.mubr.f32.gmra.mrb[0].mxu0 %v3511
      %v3731 = vpop.f32.mrb[0].mxu0
      %v3732 = vadd.f32 0.0, %v3731
      %v3733 = vpop.f32.mrb[0].mxu0
      %3734 = vmatprep.mubr.f32.mxu0 0.0
      %3735 = vmatmul.mubr.f32.gmra.mrb[0].mxu0 %v3514
      %v3736 = vpop.f32.mrb[0].mxu0
      %v3737 = vadd.f32 0.0, %v3736
      %v3738 = vpop.f32.mrb[0].mxu0
      %3739 = vmatprep.mubr.f32.mxu0 0.0
      %3740 = vmatmul.mubr.f32.gmra.mrb[0].mxu0 %v3517
      %v3741 = vpop.f32.mrb[0].mxu0
      %v3742 = vadd.f32 0.0, %v3741
      %v3743 = vpop.f32.mrb[0].mxu0
      %3744 = vmatprep.mubr.f32.mxu0 0.0
      %3745 = vmatmul.mubr.f32.gmra.mrb[0].mxu0 %v3520
      %v3746 = vpop.f32.mrb[0].mxu0
      %v3747 = vadd.f32 0.0, %v3746
      %v3748 = vpop.f32.mrb[0].mxu0
      %3749 = vdwg.mxu0
      %v3750 = vld [vmem:[%s251] sm:$0xff]
      %v3751 = vld [vmem:[%s251 + $0x8] sm:$0xff]
      %v3752 = vld [vmem:[%s251 + $0x10] sm:$0xff]
      %v3753 = vld [vmem:[%s251 + $0x18] sm:$0xff]
      %v3754 = vld [vmem:[%s251 + $0x20] sm:$0xff]
      %v3755 = vld [vmem:[%s251 + $0x28] sm:$0xff]
      %v3756 = vld [vmem:[%s251 + $0x30] sm:$0xff]
      %v3757 = vld [vmem:[%s251 + $0x38] sm:$0xff]
      %v3758 = vld [vmem:[%s251 + $0x40] sm:$0xff]
      %v3759 = vld [vmem:[%s251 + $0x48] sm:$0xff]
      %v3760 = vld [vmem:[%s251 + $0x50] sm:$0xff]
      %v3761 = vld [vmem:[%s251 + $0x58] sm:$0xff]
      %v3762 = vld [vmem:[%s251 + $0x60] sm:$0xff]
      %v3763 = vld [vmem:[%s251 + $0x68] sm:$0xff]
      %v3764 = vld [vmem:[%s251 + $0x70] sm:$0xff]
      %v3765 = vld [vmem:[%s251 + $0x78] sm:$0xff]
      %v3766 = vld [vmem:[%s251 + $0x80] sm:$0xff]
      %v3767 = vld [vmem:[%s251 + $0x88] sm:$0xff]
      %v3768 = vld [vmem:[%s251 + $0x90] sm:$0xff]
      %v3769 = vld [vmem:[%s251 + $0x98] sm:$0xff]
      %v3770 = vld [vmem:[%s251 + $0xa0] sm:$0xff]
      %v3771 = vld [vmem:[%s251 + $0xa8] sm:$0xff]
      %v3772 = vld [vmem:[%s251 + $0xb0] sm:$0xff]
      %v3773 = vld [vmem:[%s251 + $0xb8] sm:$0xff]
      %v3774 = vld [vmem:[%s251 + $0xc0] sm:$0xff]
      %v3775 = vld [vmem:[%s251 + $0xc8] sm:$0xff]
      %v3776 = vld [vmem:[%s251 + $0xd0] sm:$0xff]
      %v3777 = vld [vmem:[%s251 + $0xd8] sm:$0xff]
      %v3778 = vld [vmem:[%s251 + $0xe0] sm:$0xff]
      %v3779 = vld [vmem:[%s251 + $0xe8] sm:$0xff]
      %v3780 = vld [vmem:[%s251 + $0xf0] sm:$0xff]
      %v3781 = vld [vmem:[%s251 + $0xf8] sm:$0xff]
      %v3782 = vadd.f32 %v3750, %v3592
      %v3783 = vadd.f32 %v3751, %v3597
      %v3784 = vadd.f32 %v3752, %v3602
      %v3785 = vadd.f32 %v3753, %v3607
      %v3786 = vadd.f32 %v3754, %v3612
      %v3787 = vadd.f32 %v3755, %v3617
      %v3788 = vadd.f32 %v3756, %v3622
      %v3789 = vadd.f32 %v3757, %v3627
      %v3790 = vadd.f32 %v3758, %v3632
      %v3791 = vadd.f32 %v3759, %v3637
      %v3792 = vadd.f32 %v3760, %v3642
      %v3793 = vadd.f32 %v3761, %v3647
      %v3794 = vadd.f32 %v3762, %v3652
      %v3795 = vadd.f32 %v3763, %v3657
      %v3796 = vadd.f32 %v3764, %v3662
      %v3797 = vadd.f32 %v3765, %v3667
      %v3798 = vadd.f32 %v3766, %v3672
      %v3799 = vadd.f32 %v3767, %v3677
      %v3800 = vadd.f32 %v3768, %v3682
      %v3801 = vadd.f32 %v3769, %v3687
      %v3802 = vadd.f32 %v3770, %v3692
      %v3803 = vadd.f32 %v3771, %v3697
      %v3804 = vadd.f32 %v3772, %v3702
      %v3805 = vadd.f32 %v3773, %v3707
      %v3806 = vadd.f32 %v3774, %v3712
      %v3807 = vadd.f32 %v3775, %v3717
      %v3808 = vadd.f32 %v3776, %v3722
      %v3809 = vadd.f32 %v3777, %v3727
      %v3810 = vadd.f32 %v3778, %v3732
      %v3811 = vadd.f32 %v3779, %v3737
      %v3812 = vadd.f32 %v3780, %v3742
      %v3813 = vadd.f32 %v3781, %v3747
      %3814 = vst [vmem:[%s251] sm:$0xff] %v3782
      %3815 = vst [vmem:[%s251 + $0x8] sm:$0xff] %v3783
      %3816 = vst [vmem:[%s251 + $0x10] sm:$0xff] %v3784
      %3817 = vst [vmem:[%s251 + $0x18] sm:$0xff] %v3785
      %3818 = vst [vmem:[%s251 + $0x20] sm:$0xff] %v3786
      %3819 = vst [vmem:[%s251 + $0x28] sm:$0xff] %v3787
      %3820 = vst [vmem:[%s251 + $0x30] sm:$0xff] %v3788
      %3821 = vst [vmem:[%s251 + $0x38] sm:$0xff] %v3789
      %3822 = vst [vmem:[%s251 + $0x40] sm:$0xff] %v3790
      %3823 = vst [vmem:[%s251 + $0x48] sm:$0xff] %v3791
      %3824 = vst [vmem:[%s251 + $0x50] sm:$0xff] %v3792
      %3825 = vst [vmem:[%s251 + $0x58] sm:$0xff] %v3793
      %3826 = vst [vmem:[%s251 + $0x60] sm:$0xff] %v3794
      %3827 = vst [vmem:[%s251 + $0x68] sm:$0xff] %v3795
      %3828 = vst [vmem:[%s251 + $0x70] sm:$0xff] %v3796
      %3829 = vst [vmem:[%s251 + $0x78] sm:$0xff] %v3797
      %3830 = vst [vmem:[%s251 + $0x80] sm:$0xff] %v3798
      %3831 = vst [vmem:[%s251 + $0x88] sm:$0xff] %v3799
      %3832 = vst [vmem:[%s251 + $0x90] sm:$0xff] %v3800
      %3833 = vst [vmem:[%s251 + $0x98] sm:$0xff] %v3801
      %3834 = vst [vmem:[%s251 + $0xa0] sm:$0xff] %v3802
      %3835 = vst [vmem:[%s251 + $0xa8] sm:$0xff] %v3803
      %3836 = vst [vmem:[%s251 + $0xb0] sm:$0xff] %v3804
      %3837 = vst [vmem:[%s251 + $0xb8] sm:$0xff] %v3805
      %3838 = vst [vmem:[%s251 + $0xc0] sm:$0xff] %v3806
      %3839 = vst [vmem:[%s251 + $0xc8] sm:$0xff] %v3807
      %3840 = vst [vmem:[%s251 + $0xd0] sm:$0xff] %v3808
      %3841 = vst [vmem:[%s251 + $0xd8] sm:$0xff] %v3809
      %3842 = vst [vmem:[%s251 + $0xe0] sm:$0xff] %v3810
      %3843 = vst [vmem:[%s251 + $0xe8] sm:$0xff] %v3811
      %3844 = vst [vmem:[%s251 + $0xf0] sm:$0xff] %v3812
      %3845 = vst [vmem:[%s251 + $0xf8] sm:$0xff] %v3813
      %v3846 = vld [vmem:[%s2937 + $0x2] sm:$0xff]
      %v3847 = vld [vmem:[%s2937 + $0xa] sm:$0xff]
      %v3848 = vld [vmem:[%s2937 + $0x1a] sm:$0xff]
      %v3849 = vld [vmem:[%s2937 + $0x22] sm:$0xff]
      %v3850 = vld [vmem:[%s2937 + $0x32] sm:$0xff]
      %v3851 = vld [vmem:[%s2937 + $0x3a] sm:$0xff]
      %v3852 = vld [vmem:[%s2937 + $0x4a] sm:$0xff]
      %v3853 = vld [vmem:[%s2937 + $0x52] sm:$0xff]
      %v3854 = vld [vmem:[%s2937 + $0x62] sm:$0xff]
      %v3855 = vld [vmem:[%s2937 + $0x6a] sm:$0xff]
      %v3856 = vld [vmem:[%s2937 + $0x7a] sm:$0xff]
      %v3857 = vld [vmem:[%s2937 + $0x82] sm:$0xff]
      %v3858 = vld [vmem:[%s2937 + $0x92] sm:$0xff]
      %v3859 = vld [vmem:[%s2937 + $0x9a] sm:$0xff]
      %v3860 = vld [vmem:[%s2937 + $0xaa] sm:$0xff]
      %v3861 = vld [vmem:[%s2937 + $0xb2] sm:$0xff]
      %v3862 = vld [vmem:[%s2937 + $0xc2] sm:$0xff]
      %v3863 = vld [vmem:[%s2937 + $0xca] sm:$0xff]
      %v3864 = vld [vmem:[%s2937 + $0xda] sm:$0xff]
      %v3865 = vld [vmem:[%s2937 + $0xe2] sm:$0xff]
      %v3866 = vld [vmem:[%s2937 + $0xf2] sm:$0xff]
      %v3867 = vld [vmem:[%s2937 + $0xfa] sm:$0xff]
      %v3868 = vld [vmem:[%s2937 + $0x10a] sm:$0xff]
      %v3869 = vld [vmem:[%s2937 + $0x112] sm:$0xff]
      %v3870 = vld [vmem:[%s2937 + $0x122] sm:$0xff]
      %v3871 = vld [vmem:[%s2937 + $0x12a] sm:$0xff]
      %v3872 = vld [vmem:[%s2937 + $0x13a] sm:$0xff]
      %v3873 = vld [vmem:[%s2937 + $0x142] sm:$0xff]
      %v3874 = vld [vmem:[%s2937 + $0x152] sm:$0xff]
      %v3875 = vld [vmem:[%s2937 + $0x15a] sm:$0xff]
      %v3876 = vld [vmem:[%s2937 + $0x16a] sm:$0xff]
      %v3877 = vld [vmem:[%s2937 + $0x172] sm:$0xff]
      %s3878 = scalar_lea.vmem %s1, 32
      %v3879 = vld [vmem:[%s3878] sm:$0xf]
      %v3881 = vsel %vm308, %v3846, 0
      %v3884 = vsel %vm308, %v3847, 0
      %v3887 = vsel %vm308, %v3848, 0
      %v3890 = vsel %vm308, %v3849, 0
      %v3893 = vsel %vm308, %v3850, 0
      %v3896 = vsel %vm308, %v3851, 0
      %v3899 = vsel %vm308, %v3852, 0
      %v3902 = vsel %vm308, %v3853, 0
      %v3905 = vsel %vm308, %v3854, 0
      %v3908 = vsel %vm308, %v3855, 0
      %v3911 = vsel %vm308, %v3856, 0
      %v3914 = vsel %vm308, %v3857, 0
      %v3917 = vsel %vm308, %v3858, 0
      %v3920 = vsel %vm308, %v3859, 0
      %v3923 = vsel %vm308, %v3860, 0
      %v3926 = vsel %vm308, %v3861, 0
      %v3929 = vsel %vm308, %v3862, 0
      %v3932 = vsel %vm308, %v3863, 0
      %v3935 = vsel %vm308, %v3864, 0
      %v3938 = vsel %vm308, %v3865, 0
      %v3941 = vsel %vm308, %v3866, 0
      %v3944 = vsel %vm308, %v3867, 0
      %v3947 = vsel %vm308, %v3868, 0
      %v3950 = vsel %vm308, %v3869, 0
      %v3953 = vsel %vm308, %v3870, 0
      %v3956 = vsel %vm308, %v3871, 0
      %v3959 = vsel %vm308, %v3872, 0
      %v3962 = vsel %vm308, %v3873, 0
      %v3965 = vsel %vm308, %v3874, 0
      %v3968 = vsel %vm308, %v3875, 0
      %v3971 = vsel %vm308, %v3876, 0
      %v3974 = vsel %vm308, %v3877, 0
      %v3977 = vsel %vm405, %v3879, 0
      %3979 = vmatprep.subr.mxu0 0.0
      %3980 = vmatpush1.msra.mxu0 %v3977
      %3981 = vmatprep.subr.mxu0 0.0
      %3982 = vmatpush1.msra.mxu0 0.0
      %3983 = vmatprep.subr.mxu0 0.0
      %3984 = vmatpush1.msra.mxu0 0.0
      %3985 = vmatprep.subr.mxu0 0.0
      %3986 = vmatpush1.msra.mxu0 0.0
      %3987 = vmatprep.subr.mxu0 0.0
      %3988 = vmatpush1.msra.mxu0 0.0
      %3989 = vmatprep.subr.mxu0 0.0
      %3990 = vmatpush1.msra.mxu0 0.0
      %3991 = vmatprep.subr.mxu0 0.0
      %3992 = vmatpush1.msra.mxu0 0.0
      %3993 = vmatprep.subr.mxu0 0.0
      %3994 = vmatpush1.msra.mxu0 0.0
      %3995 = vmatprep.subr.mxu0 0.0
      %3996 = vmatpush1.msra.mxu0 0.0
      %3997 = vmatprep.subr.mxu0 0.0
      %3998 = vmatpush1.msra.mxu0 0.0
      %3999 = vmatprep.subr.mxu0 0.0
      %4000 = vmatpush1.msra.mxu0 0.0
      %4001 = vmatprep.subr.mxu0 0.0
      %4002 = vmatpush1.msra.mxu0 0.0
      %4003 = vmatprep.subr.mxu0 0.0
      %4004 = vmatpush1.msra.mxu0 0.0
      %4005 = vmatprep.subr.mxu0 0.0
      %4006 = vmatpush1.msra.mxu0 0.0
      %4007 = vmatprep.subr.mxu0 0.0
      %4008 = vmatpush1.msra.mxu0 0.0
      %4009 = vmatprep.subr.mxu0 0.0
      %4010 = vmatpush1.msra.mxu0 0.0
      %4011 = vmatprep.subr.mxu0 0.0
      %4012 = vmatpush1.msra.mxu0 0.0
      %4013 = vmatprep.subr.mxu0 0.0
      %4014 = vmatpush1.msra.mxu0 0.0
      %4015 = vmatprep.subr.mxu0 0.0
      %4016 = vmatpush1.msra.mxu0 0.0
      %4017 = vmatprep.subr.mxu0 0.0
      %4018 = vmatpush1.msra.mxu0 0.0
      %4019 = vmatprep.subr.mxu0 0.0
      %4020 = vmatpush1.msra.mxu0 0.0
      %4021 = vmatprep.subr.mxu0 0.0
      %4022 = vmatpush1.msra.mxu0 0.0
      %4023 = vmatprep.subr.mxu0 0.0
      %4024 = vmatpush1.msra.mxu0 0.0
      %4025 = vmatprep.subr.mxu0 0.0
      %4026 = vmatpush1.msra.mxu0 0.0
      %4027 = vmatprep.subr.mxu0 0.0
      %4028 = vmatpush1.msra.mxu0 0.0
      %4029 = vmatprep.subr.mxu0 0.0
      %4030 = vmatpush1.msra.mxu0 0.0
      %4031 = vmatprep.subr.mxu0 0.0
      %4032 = vmatpush1.msra.mxu0 0.0
      %4033 = vmatprep.subr.mxu0 0.0
      %4034 = vmatpush1.msra.mxu0 0.0
      %4035 = vmatprep.subr.mxu0 0.0
      %4036 = vmatpush1.msra.mxu0 0.0
      %4037 = vmatprep.subr.mxu0 0.0
      %4038 = vmatpush1.msra.mxu0 0.0
      %4039 = vmatprep.subr.mxu0 0.0
      %4040 = vmatpush1.msra.mxu0 0.0
      %4041 = vmatprep.subr.mxu0 0.0
      %4042 = vmatpush1.msra.mxu0 0.0
      %4043 = vmatprep.mubr.f32.mxu0 0.0
      %4044 = vmatmul.mubr.f32.gmra.mrb[0].mxu0 %v3881
      %v4045 = vpop.f32.mrb[0].mxu0
      %v4046 = vadd.f32 0.0, %v4045
      %v4047 = vpop.f32.mrb[0].mxu0
      %4048 = vmatprep.mubr.f32.mxu0 0.0
      %4049 = vmatmul.mubr.f32.gmra.mrb[0].mxu0 %v3884
      %v4050 = vpop.f32.mrb[0].mxu0
      %v4051 = vadd.f32 0.0, %v4050
      %v4052 = vpop.f32.mrb[0].mxu0
      %4053 = vmatprep.mubr.f32.mxu0 0.0
      %4054 = vmatmul.mubr.f32.gmra.mrb[0].mxu0 %v3887
      %v4055 = vpop.f32.mrb[0].mxu0
      %v4056 = vadd.f32 0.0, %v4055
      %v4057 = vpop.f32.mrb[0].mxu0
      %4058 = vmatprep.mubr.f32.mxu0 0.0
      %4059 = vmatmul.mubr.f32.gmra.mrb[0].mxu0 %v3890
      %v4060 = vpop.f32.mrb[0].mxu0
      %v4061 = vadd.f32 0.0, %v4060
      %v4062 = vpop.f32.mrb[0].mxu0
      %4063 = vmatprep.mubr.f32.mxu0 0.0
      %4064 = vmatmul.mubr.f32.gmra.mrb[0].mxu0 %v3893
      %v4065 = vpop.f32.mrb[0].mxu0
      %v4066 = vadd.f32 0.0, %v4065
      %v4067 = vpop.f32.mrb[0].mxu0
      %4068 = vmatprep.mubr.f32.mxu0 0.0
      %4069 = vmatmul.mubr.f32.gmra.mrb[0].mxu0 %v3896
      %v4070 = vpop.f32.mrb[0].mxu0
      %v4071 = vadd.f32 0.0, %v4070
      %v4072 = vpop.f32.mrb[0].mxu0
      %4073 = vmatprep.mubr.f32.mxu0 0.0
      %4074 = vmatmul.mubr.f32.gmra.mrb[0].mxu0 %v3899
      %v4075 = vpop.f32.mrb[0].mxu0
      %v4076 = vadd.f32 0.0, %v4075
      %v4077 = vpop.f32.mrb[0].mxu0
      %4078 = vmatprep.mubr.f32.mxu0 0.0
      %4079 = vmatmul.mubr.f32.gmra.mrb[0].mxu0 %v3902
      %v4080 = vpop.f32.mrb[0].mxu0
      %v4081 = vadd.f32 0.0, %v4080
      %v4082 = vpop.f32.mrb[0].mxu0
      %4083 = vmatprep.mubr.f32.mxu0 0.0
      %4084 = vmatmul.mubr.f32.gmra.mrb[0].mxu0 %v3905
      %v4085 = vpop.f32.mrb[0].mxu0
      %v4086 = vadd.f32 0.0, %v4085
      %v4087 = vpop.f32.mrb[0].mxu0
      %4088 = vmatprep.mubr.f32.mxu0 0.0
      %4089 = vmatmul.mubr.f32.gmra.mrb[0].mxu0 %v3908
      %v4090 = vpop.f32.mrb[0].mxu0
      %v4091 = vadd.f32 0.0, %v4090
      %v4092 = vpop.f32.mrb[0].mxu0
      %4093 = vmatprep.mubr.f32.mxu0 0.0
      %4094 = vmatmul.mubr.f32.gmra.mrb[0].mxu0 %v3911
      %v4095 = vpop.f32.mrb[0].mxu0
      %v4096 = vadd.f32 0.0, %v4095
      %v4097 = vpop.f32.mrb[0].mxu0
      %4098 = vmatprep.mubr.f32.mxu0 0.0
      %4099 = vmatmul.mubr.f32.gmra.mrb[0].mxu0 %v3914
      %v4100 = vpop.f32.mrb[0].mxu0
      %v4101 = vadd.f32 0.0, %v4100
      %v4102 = vpop.f32.mrb[0].mxu0
      %4103 = vmatprep.mubr.f32.mxu0 0.0
      %4104 = vmatmul.mubr.f32.gmra.mrb[0].mxu0 %v3917
      %v4105 = vpop.f32.mrb[0].mxu0
      %v4106 = vadd.f32 0.0, %v4105
      %v4107 = vpop.f32.mrb[0].mxu0
      %4108 = vmatprep.mubr.f32.mxu0 0.0
      %4109 = vmatmul.mubr.f32.gmra.mrb[0].mxu0 %v3920
      %v4110 = vpop.f32.mrb[0].mxu0
      %v4111 = vadd.f32 0.0, %v4110
      %v4112 = vpop.f32.mrb[0].mxu0
      %4113 = vmatprep.mubr.f32.mxu0 0.0
      %4114 = vmatmul.mubr.f32.gmra.mrb[0].mxu0 %v3923
      %v4115 = vpop.f32.mrb[0].mxu0
      %v4116 = vadd.f32 0.0, %v4115
      %v4117 = vpop.f32.mrb[0].mxu0
      %4118 = vmatprep.mubr.f32.mxu0 0.0
      %4119 = vmatmul.mubr.f32.gmra.mrb[0].mxu0 %v3926
      %v4120 = vpop.f32.mrb[0].mxu0
      %v4121 = vadd.f32 0.0, %v4120
      %v4122 = vpop.f32.mrb[0].mxu0
      %4123 = vmatprep.mubr.f32.mxu0 0.0
      %4124 = vmatmul.mubr.f32.gmra.mrb[0].mxu0 %v3929
      %v4125 = vpop.f32.mrb[0].mxu0
      %v4126 = vadd.f32 0.0, %v4125
      %v4127 = vpop.f32.mrb[0].mxu0
      %4128 = vmatprep.mubr.f32.mxu0 0.0
      %4129 = vmatmul.mubr.f32.gmra.mrb[0].mxu0 %v3932
      %v4130 = vpop.f32.mrb[0].mxu0
      %v4131 = vadd.f32 0.0, %v4130
      %v4132 = vpop.f32.mrb[0].mxu0
      %4133 = vmatprep.mubr.f32.mxu0 0.0
      %4134 = vmatmul.mubr.f32.gmra.mrb[0].mxu0 %v3935
      %v4135 = vpop.f32.mrb[0].mxu0
      %v4136 = vadd.f32 0.0, %v4135
      %v4137 = vpop.f32.mrb[0].mxu0
      %4138 = vmatprep.mubr.f32.mxu0 0.0
      %4139 = vmatmul.mubr.f32.gmra.mrb[0].mxu0 %v3938
      %v4140 = vpop.f32.mrb[0].mxu0
      %v4141 = vadd.f32 0.0, %v4140
      %v4142 = vpop.f32.mrb[0].mxu0
      %4143 = vmatprep.mubr.f32.mxu0 0.0
      %4144 = vmatmul.mubr.f32.gmra.mrb[0].mxu0 %v3941
      %v4145 = vpop.f32.mrb[0].mxu0
      %v4146 = vadd.f32 0.0, %v4145
      %v4147 = vpop.f32.mrb[0].mxu0
      %4148 = vmatprep.mubr.f32.mxu0 0.0
      %4149 = vmatmul.mubr.f32.gmra.mrb[0].mxu0 %v3944
      %v4150 = vpop.f32.mrb[0].mxu0
      %v4151 = vadd.f32 0.0, %v4150
      %v4152 = vpop.f32.mrb[0].mxu0
      %4153 = vmatprep.mubr.f32.mxu0 0.0
      %4154 = vmatmul.mubr.f32.gmra.mrb[0].mxu0 %v3947
      %v4155 = vpop.f32.mrb[0].mxu0
      %v4156 = vadd.f32 0.0, %v4155
      %v4157 = vpop.f32.mrb[0].mxu0
      %4158 = vmatprep.mubr.f32.mxu0 0.0
      %4159 = vmatmul.mubr.f32.gmra.mrb[0].mxu0 %v3950
      %v4160 = vpop.f32.mrb[0].mxu0
      %v4161 = vadd.f32 0.0, %v4160
      %v4162 = vpop.f32.mrb[0].mxu0
      %4163 = vmatprep.mubr.f32.mxu0 0.0
      %4164 = vmatmul.mubr.f32.gmra.mrb[0].mxu0 %v3953
      %v4165 = vpop.f32.mrb[0].mxu0
      %v4166 = vadd.f32 0.0, %v4165
      %v4167 = vpop.f32.mrb[0].mxu0
      %4168 = vmatprep.mubr.f32.mxu0 0.0
      %4169 = vmatmul.mubr.f32.gmra.mrb[0].mxu0 %v3956
      %v4170 = vpop.f32.mrb[0].mxu0
      %v4171 = vadd.f32 0.0, %v4170
      %v4172 = vpop.f32.mrb[0].mxu0
      %4173 = vmatprep.mubr.f32.mxu0 0.0
      %4174 = vmatmul.mubr.f32.gmra.mrb[0].mxu0 %v3959
      %v4175 = vpop.f32.mrb[0].mxu0
      %v4176 = vadd.f32 0.0, %v4175
      %v4177 = vpop.f32.mrb[0].mxu0
      %4178 = vmatprep.mubr.f32.mxu0 0.0
      %4179 = vmatmul.mubr.f32.gmra.mrb[0].mxu0 %v3962
      %v4180 = vpop.f32.mrb[0].mxu0
      %v4181 = vadd.f32 0.0, %v4180
      %v4182 = vpop.f32.mrb[0].mxu0
      %4183 = vmatprep.mubr.f32.mxu0 0.0
      %4184 = vmatmul.mubr.f32.gmra.mrb[0].mxu0 %v3965
      %v4185 = vpop.f32.mrb[0].mxu0
      %v4186 = vadd.f32 0.0, %v4185
      %v4187 = vpop.f32.mrb[0].mxu0
      %4188 = vmatprep.mubr.f32.mxu0 0.0
      %4189 = vmatmul.mubr.f32.gmra.mrb[0].mxu0 %v3968
      %v4190 = vpop.f32.mrb[0].mxu0
      %v4191 = vadd.f32 0.0, %v4190
      %v4192 = vpop.f32.mrb[0].mxu0
      %4193 = vmatprep.mubr.f32.mxu0 0.0
      %4194 = vmatmul.mubr.f32.gmra.mrb[0].mxu0 %v3971
      %v4195 = vpop.f32.mrb[0].mxu0
      %v4196 = vadd.f32 0.0, %v4195
      %v4197 = vpop.f32.mrb[0].mxu0
      %4198 = vmatprep.mubr.f32.mxu0 0.0
      %4199 = vmatmul.mubr.f32.gmra.mrb[0].mxu0 %v3974
      %v4200 = vpop.f32.mrb[0].mxu0
      %v4201 = vadd.f32 0.0, %v4200
      %v4202 = vpop.f32.mrb[0].mxu0
      %4203 = vdwg.mxu0
      %v4204 = vld [vmem:[%s251] sm:$0xff]
      %v4205 = vld [vmem:[%s251 + $0x8] sm:$0xff]
      %v4206 = vld [vmem:[%s251 + $0x10] sm:$0xff]
      %v4207 = vld [vmem:[%s251 + $0x18] sm:$0xff]
      %v4208 = vld [vmem:[%s251 + $0x20] sm:$0xff]
      %v4209 = vld [vmem:[%s251 + $0x28] sm:$0xff]
      %v4210 = vld [vmem:[%s251 + $0x30] sm:$0xff]
      %v4211 = vld [vmem:[%s251 + $0x38] sm:$0xff]
      %v4212 = vld [vmem:[%s251 + $0x40] sm:$0xff]
      %v4213 = vld [vmem:[%s251 + $0x48] sm:$0xff]
      %v4214 = vld [vmem:[%s251 + $0x50] sm:$0xff]
      %v4215 = vld [vmem:[%s251 + $0x58] sm:$0xff]
      %v4216 = vld [vmem:[%s251 + $0x60] sm:$0xff]
      %v4217 = vld [vmem:[%s251 + $0x68] sm:$0xff]
      %v4218 = vld [vmem:[%s251 + $0x70] sm:$0xff]
      %v4219 = vld [vmem:[%s251 + $0x78] sm:$0xff]
      %v4220 = vld [vmem:[%s251 + $0x80] sm:$0xff]
      %v4221 = vld [vmem:[%s251 + $0x88] sm:$0xff]
      %v4222 = vld [vmem:[%s251 + $0x90] sm:$0xff]
      %v4223 = vld [vmem:[%s251 + $0x98] sm:$0xff]
      %v4224 = vld [vmem:[%s251 + $0xa0] sm:$0xff]
      %v4225 = vld [vmem:[%s251 + $0xa8] sm:$0xff]
      %v4226 = vld [vmem:[%s251 + $0xb0] sm:$0xff]
      %v4227 = vld [vmem:[%s251 + $0xb8] sm:$0xff]
      %v4228 = vld [vmem:[%s251 + $0xc0] sm:$0xff]
      %v4229 = vld [vmem:[%s251 + $0xc8] sm:$0xff]
      %v4230 = vld [vmem:[%s251 + $0xd0] sm:$0xff]
      %v4231 = vld [vmem:[%s251 + $0xd8] sm:$0xff]
      %v4232 = vld [vmem:[%s251 + $0xe0] sm:$0xff]
      %v4233 = vld [vmem:[%s251 + $0xe8] sm:$0xff]
      %v4234 = vld [vmem:[%s251 + $0xf0] sm:$0xff]
      %v4235 = vld [vmem:[%s251 + $0xf8] sm:$0xff]
      %v4236 = vadd.f32 %v4204, %v4046
      %v4237 = vadd.f32 %v4205, %v4051
      %v4238 = vadd.f32 %v4206, %v4056
      %v4239 = vadd.f32 %v4207, %v4061
      %v4240 = vadd.f32 %v4208, %v4066
      %v4241 = vadd.f32 %v4209, %v4071
      %v4242 = vadd.f32 %v4210, %v4076
      %v4243 = vadd.f32 %v4211, %v4081
      %v4244 = vadd.f32 %v4212, %v4086
      %v4245 = vadd.f32 %v4213, %v4091
      %v4246 = vadd.f32 %v4214, %v4096
      %v4247 = vadd.f32 %v4215, %v4101
      %v4248 = vadd.f32 %v4216, %v4106
      %v4249 = vadd.f32 %v4217, %v4111
      %v4250 = vadd.f32 %v4218, %v4116
      %v4251 = vadd.f32 %v4219, %v4121
      %v4252 = vadd.f32 %v4220, %v4126
      %v4253 = vadd.f32 %v4221, %v4131
      %v4254 = vadd.f32 %v4222, %v4136
      %v4255 = vadd.f32 %v4223, %v4141
      %v4256 = vadd.f32 %v4224, %v4146
      %v4257 = vadd.f32 %v4225, %v4151
      %v4258 = vadd.f32 %v4226, %v4156
      %v4259 = vadd.f32 %v4227, %v4161
      %v4260 = vadd.f32 %v4228, %v4166
      %v4261 = vadd.f32 %v4229, %v4171
      %v4262 = vadd.f32 %v4230, %v4176
      %v4263 = vadd.f32 %v4231, %v4181
      %v4264 = vadd.f32 %v4232, %v4186
      %v4265 = vadd.f32 %v4233, %v4191
      %v4266 = vadd.f32 %v4234, %v4196
      %v4267 = vadd.f32 %v4235, %v4201
      %4268 = vst [vmem:[%s251] sm:$0xff] %v4236
      %4269 = vst [vmem:[%s251 + $0x8] sm:$0xff] %v4237
      %4270 = vst [vmem:[%s251 + $0x10] sm:$0xff] %v4238
      %4271 = vst [vmem:[%s251 + $0x18] sm:$0xff] %v4239
      %4272 = vst [vmem:[%s251 + $0x20] sm:$0xff] %v4240
      %4273 = vst [vmem:[%s251 + $0x28] sm:$0xff] %v4241
      %4274 = vst [vmem:[%s251 + $0x30] sm:$0xff] %v4242
      %4275 = vst [vmem:[%s251 + $0x38] sm:$0xff] %v4243
      %4276 = vst [vmem:[%s251 + $0x40] sm:$0xff] %v4244
      %4277 = vst [vmem:[%s251 + $0x48] sm:$0xff] %v4245
      %4278 = vst [vmem:[%s251 + $0x50] sm:$0xff] %v4246
      %4279 = vst [vmem:[%s251 + $0x58] sm:$0xff] %v4247
      %4280 = vst [vmem:[%s251 + $0x60] sm:$0xff] %v4248
      %4281 = vst [vmem:[%s251 + $0x68] sm:$0xff] %v4249
      %4282 = vst [vmem:[%s251 + $0x70] sm:$0xff] %v4250
      %4283 = vst [vmem:[%s251 + $0x78] sm:$0xff] %v4251
      %4284 = vst [vmem:[%s251 + $0x80] sm:$0xff] %v4252
      %4285 = vst [vmem:[%s251 + $0x88] sm:$0xff] %v4253
      %4286 = vst [vmem:[%s251 + $0x90] sm:$0xff] %v4254
      %4287 = vst [vmem:[%s251 + $0x98] sm:$0xff] %v4255
      %4288 = vst [vmem:[%s251 + $0xa0] sm:$0xff] %v4256
      %4289 = vst [vmem:[%s251 + $0xa8] sm:$0xff] %v4257
      %4290 = vst [vmem:[%s251 + $0xb0] sm:$0xff] %v4258
      %4291 = vst [vmem:[%s251 + $0xb8] sm:$0xff] %v4259
      %4292 = vst [vmem:[%s251 + $0xc0] sm:$0xff] %v4260
      %4293 = vst [vmem:[%s251 + $0xc8] sm:$0xff] %v4261
      %4294 = vst [vmem:[%s251 + $0xd0] sm:$0xff] %v4262
      %4295 = vst [vmem:[%s251 + $0xd8] sm:$0xff] %v4263
      %4296 = vst [vmem:[%s251 + $0xe0] sm:$0xff] %v4264
      %4297 = vst [vmem:[%s251 + $0xe8] sm:$0xff] %v4265
      %4298 = vst [vmem:[%s251 + $0xf0] sm:$0xff] %v4266
      %4299 = vst [vmem:[%s251 + $0xf8] sm:$0xff] %v4267
      %v4300 = vld [vmem:[%s251] sm:$0xff]
      %v4301 = vld [vmem:[%s251 + $0x8] sm:$0xff]
      %v4302 = vld [vmem:[%s251 + $0x10] sm:$0xff]
      %v4303 = vld [vmem:[%s251 + $0x18] sm:$0xff]
      %v4304 = vld [vmem:[%s251 + $0x20] sm:$0xff]
      %v4305 = vld [vmem:[%s251 + $0x28] sm:$0xff]
      %v4306 = vld [vmem:[%s251 + $0x30] sm:$0xff]
      %v4307 = vld [vmem:[%s251 + $0x38] sm:$0xff]
      %v4308 = vld [vmem:[%s251 + $0x40] sm:$0xff]
      %v4309 = vld [vmem:[%s251 + $0x48] sm:$0xff]
      %v4310 = vld [vmem:[%s251 + $0x50] sm:$0xff]
      %v4311 = vld [vmem:[%s251 + $0x58] sm:$0xff]
      %v4312 = vld [vmem:[%s251 + $0x60] sm:$0xff]
      %v4313 = vld [vmem:[%s251 + $0x68] sm:$0xff]
      %v4314 = vld [vmem:[%s251 + $0x70] sm:$0xff]
      %v4315 = vld [vmem:[%s251 + $0x78] sm:$0xff]
      %v4316 = vld [vmem:[%s251 + $0x80] sm:$0xff]
      %v4317 = vld [vmem:[%s251 + $0x88] sm:$0xff]
      %v4318 = vld [vmem:[%s251 + $0x90] sm:$0xff]
      %v4319 = vld [vmem:[%s251 + $0x98] sm:$0xff]
      %v4320 = vld [vmem:[%s251 + $0xa0] sm:$0xff]
      %v4321 = vld [vmem:[%s251 + $0xa8] sm:$0xff]
      %v4322 = vld [vmem:[%s251 + $0xb0] sm:$0xff]
      %v4323 = vld [vmem:[%s251 + $0xb8] sm:$0xff]
      %v4324 = vld [vmem:[%s251 + $0xc0] sm:$0xff]
      %v4325 = vld [vmem:[%s251 + $0xc8] sm:$0xff]
      %v4326 = vld [vmem:[%s251 + $0xd0] sm:$0xff]
      %v4327 = vld [vmem:[%s251 + $0xd8] sm:$0xff]
      %v4328 = vld [vmem:[%s251 + $0xe0] sm:$0xff]
      %v4329 = vld [vmem:[%s251 + $0xe8] sm:$0xff]
      %v4330 = vld [vmem:[%s251 + $0xf0] sm:$0xff]
      %v4331 = vld [vmem:[%s251 + $0xf8] sm:$0xff]
      %v4333 = vlaneseq
      %v4334 = vshrl.u32 %v4333, 7
      %v4335 = vsub.s32 0, %v4334
      %v4336 = vrot.slane %v271, %v4335
      %v4338 = vmul.f32 %v4300, %v4336
      %v4339 = vmul.f32 %v4301, %v4336
      %v4340 = vmul.f32 %v4302, %v4336
      %v4341 = vmul.f32 %v4303, %v4336
      %v4342 = vmul.f32 %v4304, %v4336
      %v4343 = vmul.f32 %v4305, %v4336
      %v4344 = vmul.f32 %v4306, %v4336
      %v4345 = vmul.f32 %v4307, %v4336
      %v4346 = vmul.f32 %v4308, %v4336
      %v4347 = vmul.f32 %v4309, %v4336
      %v4348 = vmul.f32 %v4310, %v4336
      %v4349 = vmul.f32 %v4311, %v4336
      %v4350 = vmul.f32 %v4312, %v4336
      %v4351 = vmul.f32 %v4313, %v4336
      %v4352 = vmul.f32 %v4314, %v4336
      %v4353 = vmul.f32 %v4315, %v4336
      %v4354 = vmul.f32 %v4316, %v4336
      %v4355 = vmul.f32 %v4317, %v4336
      %v4356 = vmul.f32 %v4318, %v4336
      %v4357 = vmul.f32 %v4319, %v4336
      %v4358 = vmul.f32 %v4320, %v4336
      %v4359 = vmul.f32 %v4321, %v4336
      %v4360 = vmul.f32 %v4322, %v4336
      %v4361 = vmul.f32 %v4323, %v4336
      %v4362 = vmul.f32 %v4324, %v4336
      %v4363 = vmul.f32 %v4325, %v4336
      %v4364 = vmul.f32 %v4326, %v4336
      %v4365 = vmul.f32 %v4327, %v4336
      %v4366 = vmul.f32 %v4328, %v4336
      %v4367 = vmul.f32 %v4329, %v4336
      %v4368 = vmul.f32 %v4330, %v4336
      %v4369 = vmul.f32 %v4331, %v4336
      %v4371 = vlaneseq
      %v4372 = vshrl.u32 %v4371, 7
      %v4373 = vsub.s32 0, %v4372
      %v4374 = vrot.slane %v274, %v4373
      %v4376 = vadd.f32 %v4338, %v4374
      %v4377 = vadd.f32 %v4339, %v4374
      %v4378 = vadd.f32 %v4340, %v4374
      %v4379 = vadd.f32 %v4341, %v4374
      %v4380 = vadd.f32 %v4342, %v4374
      %v4381 = vadd.f32 %v4343, %v4374
      %v4382 = vadd.f32 %v4344, %v4374
      %v4383 = vadd.f32 %v4345, %v4374
      %v4384 = vadd.f32 %v4346, %v4374
      %v4385 = vadd.f32 %v4347, %v4374
      %v4386 = vadd.f32 %v4348, %v4374
      %v4387 = vadd.f32 %v4349, %v4374
      %v4388 = vadd.f32 %v4350, %v4374
      %v4389 = vadd.f32 %v4351, %v4374
      %v4390 = vadd.f32 %v4352, %v4374
      %v4391 = vadd.f32 %v4353, %v4374
      %v4392 = vadd.f32 %v4354, %v4374
      %v4393 = vadd.f32 %v4355, %v4374
      %v4394 = vadd.f32 %v4356, %v4374
      %v4395 = vadd.f32 %v4357, %v4374
      %v4396 = vadd.f32 %v4358, %v4374
      %v4397 = vadd.f32 %v4359, %v4374
      %v4398 = vadd.f32 %v4360, %v4374
      %v4399 = vadd.f32 %v4361, %v4374
      %v4400 = vadd.f32 %v4362, %v4374
      %v4401 = vadd.f32 %v4363, %v4374
      %v4402 = vadd.f32 %v4364, %v4374
      %v4403 = vadd.f32 %v4365, %v4374
      %v4404 = vadd.f32 %v4366, %v4374
      %v4405 = vadd.f32 %v4367, %v4374
      %v4406 = vadd.f32 %v4368, %v4374
      %v4407 = vadd.f32 %v4369, %v4374
      %v4408 = vmax.f32 %v4376, 0.0
      %v4409 = vmax.f32 %v4377, 0.0
      %v4410 = vmax.f32 %v4378, 0.0
      %v4411 = vmax.f32 %v4379, 0.0
      %v4412 = vmax.f32 %v4380, 0.0
      %v4413 = vmax.f32 %v4381, 0.0
      %v4414 = vmax.f32 %v4382, 0.0
      %v4415 = vmax.f32 %v4383, 0.0
      %v4416 = vmax.f32 %v4384, 0.0
      %v4417 = vmax.f32 %v4385, 0.0
      %v4418 = vmax.f32 %v4386, 0.0
      %v4419 = vmax.f32 %v4387, 0.0
      %v4420 = vmax.f32 %v4388, 0.0
      %v4421 = vmax.f32 %v4389, 0.0
      %v4422 = vmax.f32 %v4390, 0.0
      %v4423 = vmax.f32 %v4391, 0.0
      %v4424 = vmax.f32 %v4392, 0.0
      %v4425 = vmax.f32 %v4393, 0.0
      %v4426 = vmax.f32 %v4394, 0.0
      %v4427 = vmax.f32 %v4395, 0.0
      %v4428 = vmax.f32 %v4396, 0.0
      %v4429 = vmax.f32 %v4397, 0.0
      %v4430 = vmax.f32 %v4398, 0.0
      %v4431 = vmax.f32 %v4399, 0.0
      %v4432 = vmax.f32 %v4400, 0.0
      %v4433 = vmax.f32 %v4401, 0.0
      %v4434 = vmax.f32 %v4402, 0.0
      %v4435 = vmax.f32 %v4403, 0.0
      %v4436 = vmax.f32 %v4404, 0.0
      %v4437 = vmax.f32 %v4405, 0.0
      %v4438 = vmax.f32 %v4406, 0.0
      %v4439 = vmax.f32 %v4407, 0.0
      %4440 = vst [vmem:[%s251] sm:$0xff] %v4408
      %4441 = vst [vmem:[%s251 + $0x8] sm:$0xff] %v4409
      %4442 = vst [vmem:[%s251 + $0x10] sm:$0xff] %v4410
      %4443 = vst [vmem:[%s251 + $0x18] sm:$0xff] %v4411
      %4444 = vst [vmem:[%s251 + $0x20] sm:$0xff] %v4412
      %4445 = vst [vmem:[%s251 + $0x28] sm:$0xff] %v4413
      %4446 = vst [vmem:[%s251 + $0x30] sm:$0xff] %v4414
      %4447 = vst [vmem:[%s251 + $0x38] sm:$0xff] %v4415
      %4448 = vst [vmem:[%s251 + $0x40] sm:$0xff] %v4416
      %4449 = vst [vmem:[%s251 + $0x48] sm:$0xff] %v4417
      %4450 = vst [vmem:[%s251 + $0x50] sm:$0xff] %v4418
      %4451 = vst [vmem:[%s251 + $0x58] sm:$0xff] %v4419
      %4452 = vst [vmem:[%s251 + $0x60] sm:$0xff] %v4420
      %4453 = vst [vmem:[%s251 + $0x68] sm:$0xff] %v4421
      %4454 = vst [vmem:[%s251 + $0x70] sm:$0xff] %v4422
      %4455 = vst [vmem:[%s251 + $0x78] sm:$0xff] %v4423
      %4456 = vst [vmem:[%s251 + $0x80] sm:$0xff] %v4424
      %4457 = vst [vmem:[%s251 + $0x88] sm:$0xff] %v4425
      %4458 = vst [vmem:[%s251 + $0x90] sm:$0xff] %v4426
      %4459 = vst [vmem:[%s251 + $0x98] sm:$0xff] %v4427
      %4460 = vst [vmem:[%s251 + $0xa0] sm:$0xff] %v4428
      %4461 = vst [vmem:[%s251 + $0xa8] sm:$0xff] %v4429
      %4462 = vst [vmem:[%s251 + $0xb0] sm:$0xff] %v4430
      %4463 = vst [vmem:[%s251 + $0xb8] sm:$0xff] %v4431
      %4464 = vst [vmem:[%s251 + $0xc0] sm:$0xff] %v4432
      %4465 = vst [vmem:[%s251 + $0xc8] sm:$0xff] %v4433
      %4466 = vst [vmem:[%s251 + $0xd0] sm:$0xff] %v4434
      %4467 = vst [vmem:[%s251 + $0xd8] sm:$0xff] %v4435
      %4468 = vst [vmem:[%s251 + $0xe0] sm:$0xff] %v4436
      %4469 = vst [vmem:[%s251 + $0xe8] sm:$0xff] %v4437
      %4470 = vst [vmem:[%s251 + $0xf0] sm:$0xff] %v4438
      %4471 = vst [vmem:[%s251 + $0xf8] sm:$0xff] %v4439
      %p4472 = scmp.lt.s32.totalorder %s17, 1
      %s4473 = scalar_select %p4472, %s17, 1
      %s4474 = smul.addr %s4473, 32
      %s4475 = smul.addr %s4474, 8
      %s4476 = scalar_lea.vmem %s6, %s4475
      // Predicated region
      $region45: #{block_forward.3} parent=43 // pred_check
        %p4477 = pneg %p166
      $region46: #{block_forward.3} parent=43 // pred_check_branch
        %4479 = sbr.rel (%p4477) target = $region48
      $region47: #{block_forward.3} parent=43 // pred_region
        _
      $region48: #{block_forward.3} parent=43 // pred_fallthru
        _
    $region44: #{block_forward.3} parent=5 // pred_fallthru
      _
    %p4480 = scmp.le.s32.totalorder 2, %s12
    // Predicated region
    $region49: #{block_forward.3} parent=5 // pred_check
      %p4481 = pneg %p4480
    $region50: #{block_forward.3} parent=5 // pred_check_branch
      %4483 = sbr.rel (%p4481) target = $region52
    $region51: #{block_forward.3} parent=5 // pred_region
      %s4484 = ssub.s32 %s12, 2
      // Predicated region
      $region53: #{block_forward.3} parent=51 // pred_check
        %p4485 = pneg %p172
      $region54: #{block_forward.3} parent=51 // pred_check_branch
        %4487 = sbr.rel (%p4485) target = $region56
      $region55: #{block_forward.3} parent=51 // pred_region
        %p4488 = scmp.lt.s32.totalorder %s18, 1
        %s4489 = scalar_select %p4488, %s18, 1
        %s4490 = smul.addr %s4489, 32
        %s4491 = smul.addr %s4490, 8
        %s4492 = scalar_lea.vmem %s6, %s4491
      $region56: #{block_forward.3} parent=51 // pred_fallthru
        _
    $region52: #{block_forward.3} parent=5 // pred_fallthru
      _
  $region6: #{block_forward.3} parent=0 // loop_footer
    %s16 = sadd.s32 1, %s12
  $region7: #{block_forward.3} parent=0 // loop_footer_branch
    %11 = sbr.rel target = $region3
  $region8: #{block_forward.3} parent=0 // loop_exit
    _

// kernel: block_forward.2
$region0: #{block_forward.2}
  #allocation0 [shape = 'u32[]', space=smem, size = 0x4, offset = 0x4, fixed_abs, tag = 'smem constant byte address 0x4 - core index']
  #allocation1 [shape = 'u32[144,128]{1,0:T(1,128)}', space=vmem, size = 0x12000, scoped, tag = 'internal scratch']
  #allocation2 [shape = 'f32[1,16,16,128]{3,2,1,0:T(8,128)}', space=vmem, size = 0x20000, scoped, tag = 'scratch operand']
  %s0 = inlined_call_operand.vmem [shape: f32[2,18,18,4], index: 0, kind: input, shape index: {}]
  %s1 = inlined_call_operand.vmem [shape: f32[3,3,4,128], index: 1, kind: input, shape index: {}]
  %s2 = inlined_call_operand.vmem [shape: f32[2,1,128], index: 2, kind: output, shape index: {0}]
  %s3 = inlined_call_operand.vmem [shape: f32[2,1,128], index: 3, kind: output, shape index: {1}]
  %4 = xla_tuple %s2, %s3
  %s5 = sld [smem:[#allocation0]]
  $region49: #{block_forward.2} parent=0
    _
  %s7 = ssub.s32 1, %s5
  %s8 = scalar_select 0, %s7, %s5
  loop: start=0, step=1, limit=4
  $region2: #{block_forward.2} parent=0 // loop_pre_header
    _
  $region3: #{block_forward.2} parent=0 // loop_header
    %s10 = sphi 0, %s14
    %p11 = scmp.ge.s32.totalorder %s10, 4
    %s20 = sphi 0, %s22
    %s23 = sphi 0, %s20
    %s24 = sphi 0, %s23
    %s40 = sphi 0, %s24
    %s44 = sphi 0, %s44
    %s46 = sphi 0, %s44
    %s47 = sphi 0, %s46
    %s61 = sphi 0, %s47
    %s67 = sphi 0, %s69
    %s70 = sphi 0, %s67
    %s71 = sphi 0, %s70
    %s87 = sphi 0, %s71
    %s93 = sphi 0, %s95
    %s96 = sphi 0, %s93
    %s97 = sphi 0, %s96
    %s113 = sphi 0, %s97
  $region4: #{block_forward.2} parent=0 // loop_header_branch
    %13 = sbr.rel (%p11) target = $region8
  $region5: #{block_forward.2} parent=0 // loop_body
    %s15 = ssub.s32 %s10, 1
    %s16 = ssub.s32 %s10, 2
    %s17 = sadd.s32 %s10, 1
    %s18 = ssub.s32 %s10, %s17
    %p19 = scmp.eq.s32.totalorder %s18, 0
    %s21 = sadd.s32 %s20, 1
    %s22 = scalar_select %p19, %s20, %s21
    %p25 = pneg %p19
    %p26 = scmp.eq.s32.totalorder %s10, 1
    %p27 = por %p25, %p26
    %p28 = scmp.ne.s32.totalorder %s20, %s23
    %p29 = scmp.eq.s32.totalorder %s10, 0
    %p30 = por %p28, %p29
    %p31 = scmp.ne.s32.totalorder %s20, %s23
    %p32 = scmp.eq.s32.totalorder %s15, 1
    %p33 = por %p31, %p32
    %p34 = scmp.ne.s32.totalorder %s23, %s24
    %p35 = scmp.eq.s32.totalorder %s15, 0
    %p36 = por %p34, %p35
    %p37 = scmp.ne.s32.totalorder %s23, %s24
    %p38 = scmp.eq.s32.totalorder %s16, 1
    %p39 = por %p37, %p38
    %p41 = scmp.ne.s32.totalorder %s24, %s40
    %p42 = scmp.eq.s32.totalorder %s16, 0
    %p43 = por %p41, %p42
    %s45 = sadd.s32 %s44, 1
    %p48 = scmp.eq.s32.totalorder %s10, 1
    %p49 = scmp.ne.s32.totalorder %s44, %s46
    %p50 = scmp.eq.s32.totalorder %s10, 0
    %p51 = por %p49, %p50
    %p52 = scmp.ne.s32.totalorder %s44, %s46
    %p53 = scmp.eq.s32.totalorder %s15, 1
    %p54 = por %p52, %p53
    %p55 = scmp.ne.s32.totalorder %s46, %s47
    %p56 = scmp.eq.s32.totalorder %s15, 0
    %p57 = por %p55, %p56
    %p58 = scmp.ne.s32.totalorder %s46, %s47
    %p59 = scmp.eq.s32.totalorder %s16, 1
    %p60 = por %p58, %p59
    %p62 = scmp.ne.s32.totalorder %s47, %s61
    %p63 = scmp.eq.s32.totalorder %s16, 0
    %p64 = por %p62, %p63
    %s65 = ssub.s32 %s10, %s17
    %p66 = scmp.eq.s32.totalorder %s65, 0
    %s68 = sadd.s32 %s67, 1
    %s69 = scalar_select %p66, %s67, %s68
    %p72 = pneg %p66
    %p73 = scmp.eq.s32.totalorder %s10, 1
    %p74 = por %p72, %p73
    %p75 = scmp.ne.s32.totalorder %s67, %s70
    %p76 = scmp.eq.s32.totalorder %s10, 0
    %p77 = por %p75, %p76
    %p78 = scmp.ne.s32.totalorder %s67, %s70
    %p79 = scmp.eq.s32.totalorder %s15, 1
    %p80 = por %p78, %p79
    %p81 = scmp.ne.s32.totalorder %s70, %s71
    %p82 = scmp.eq.s32.totalorder %s15, 0
    %p83 = por %p81, %p82
    %p84 = scmp.ne.s32.totalorder %s70, %s71
    %p85 = scmp.eq.s32.totalorder %s16, 1
    %p86 = por %p84, %p85
    %p88 = scmp.ne.s32.totalorder %s71, %s87
    %p89 = scmp.eq.s32.totalorder %s16, 0
    %p90 = por %p88, %p89
    %s91 = ssub.s32 %s10, %s17
    %p92 = scmp.eq.s32.totalorder %s91, 0
    %s94 = sadd.s32 %s93, 1
    %s95 = scalar_select %p92, %s93, %s94
    %p98 = pneg %p92
    %p99 = scmp.eq.s32.totalorder %s10, 1
    %p100 = por %p98, %p99
    %p101 = scmp.ne.s32.totalorder %s93, %s96
    %p102 = scmp.eq.s32.totalorder %s10, 0
    %p103 = por %p101, %p102
    %p104 = scmp.ne.s32.totalorder %s93, %s96
    %p105 = scmp.eq.s32.totalorder %s15, 1
    %p106 = por %p104, %p105
    %p107 = scmp.ne.s32.totalorder %s96, %s97
    %p108 = scmp.eq.s32.totalorder %s15, 0
    %p109 = por %p107, %p108
    %p110 = scmp.ne.s32.totalorder %s96, %s97
    %p111 = scmp.eq.s32.totalorder %s16, 1
    %p112 = por %p110, %p111
    %p114 = scmp.ne.s32.totalorder %s97, %s113
    %p115 = scmp.eq.s32.totalorder %s16, 0
    %p116 = por %p114, %p115
    %p117 = scmp.le.s32.totalorder 1, %s10
    %p118 = scmp.lt.s32.totalorder %s10, 3
    %p119 = pnand %p117, %p118
    %p120 = pneg %p119
    // Predicated region
    $region9: #{block_forward.2} parent=5 // pred_check
      _
    $region10: #{block_forward.2} parent=5 // pred_check_branch
      %122 = sbr.rel (%p119) target = $region12
    $region11: #{block_forward.2} parent=5 // pred_region
      %s123 = ssub.s32 %s10, 1
      // Predicated region
      $region13: #{block_forward.2} parent=11 // pred_check
        %p124 = pneg %p57
      $region14: #{block_forward.2} parent=11 // pred_check_branch
        %126 = sbr.rel (%p124) target = $region16
      $region15: #{block_forward.2} parent=11 // pred_region
        _
      $region16: #{block_forward.2} parent=11 // pred_fallthru
        _
    $region12: #{block_forward.2} parent=5 // pred_fallthru
      _
    %p127 = scmp.lt.s32.totalorder %s10, 2
    // Predicated region
    $region17: #{block_forward.2} parent=5 // pred_check
      %p128 = pneg %p127
    $region18: #{block_forward.2} parent=5 // pred_check_branch
      %130 = sbr.rel (%p128) target = $region20
    $region19: #{block_forward.2} parent=5 // pred_region
      // Predicated region
      $region21: #{block_forward.2} parent=19 // pred_check
        %p131 = pneg %p30
      $region22: #{block_forward.2} parent=19 // pred_check_branch
        %133 = sbr.rel (%p131) target = $region24
      $region23: #{block_forward.2} parent=19 // pred_region
        %p134 = scmp.lt.s32.totalorder %s10, 1
        %s135 = scalar_select %p134, %s10, 1
        %s136 = smul.addr %s135, 54
        %s137 = smul.addr %s136, 8
        %s138 = scalar_lea.vmem %s0, %s137
      $region24: #{block_forward.2} parent=19 // pred_fallthru
        _
    $region20: #{block_forward.2} parent=5 // pred_fallthru
      _
    %p139 = scmp.le.s32.totalorder 1, %s10
    %p140 = scmp.lt.s32.totalorder %s10, 3
    %p141 = pnand %p139, %p140
    %p142 = pneg %p141
    // Predicated region
    $region25: #{block_forward.2} parent=5 // pred_check
      _
    $region26: #{block_forward.2} parent=5 // pred_check_branch
      %144 = sbr.rel (%p141) target = $region28
    $region27: #{block_forward.2} parent=5 // pred_region
      %s145 = ssub.s32 %s10, 1
      %p146 = scmp.lt.s32.totalorder %s15, 1
      %s147 = scalar_select %p146, %s15, 1
      %s148 = smul.addr %s147, 54
      %s149 = smul.addr %s148, 8
      %s150 = scalar_lea.vmem %s0, %s149
      %p151 = pneg %p36
      %p152 = pneg %p33
      %p153 = pneg %p57
      %p154 = pneg %p54
      %p155 = pneg %p83
      %p156 = pneg %p80
      %p157 = scmp.lt.s32.totalorder %s15, 1
      %s158 = scalar_select %p157, %s15, 1
      %s159 = scalar_lea.vmem %s2, %s158
      %p160 = pneg %p109
      %p161 = pneg %p106
      %p162 = scmp.lt.s32.totalorder %s15, 1
      %s163 = scalar_select %p162, %s15, 1
      %s164 = scalar_lea.vmem %s3, %s163
      %p165 = scmp.lt.s32.totalorder %s15, 1
      %s166 = scalar_select %p165, %s15, 1
      %s167 = smul.addr %s166, 54
      %s168 = smul.addr %s167, 8
      %s169 = scalar_lea.vmem %s0, %s168
      %p170 = scmp.lt.s32.totalorder %s15, 1
      %s171 = scalar_select %p170, %s15, 1
      %s172 = scalar_lea.vmem %s2, %s171
      %p173 = scmp.lt.s32.totalorder %s15, 1
      %s174 = scalar_select %p173, %s15, 1
      %s175 = scalar_lea.vmem %s3, %s174
      %v176 = vld [vmem:[%s169] sm:$0xff]
      %v177 = vld [vmem:[%s169 + $0x8] sm:$0xff]
      %v178 = vld [vmem:[%s169 + $0x18] sm:$0xff]
      %v179 = vld [vmem:[%s169 + $0x20] sm:$0xff]
      %v180 = vld [vmem:[%s169 + $0x30] sm:$0xff]
      %v181 = vld [vmem:[%s169 + $0x38] sm:$0xff]
      %v182 = vld [vmem:[%s169 + $0x48] sm:$0xff]
      %v183 = vld [vmem:[%s169 + $0x50] sm:$0xff]
      %v184 = vld [vmem:[%s169 + $0x60] sm:$0xff]
      %v185 = vld [vmem:[%s169 + $0x68] sm:$0xff]
      %v186 = vld [vmem:[%s169 + $0x78] sm:$0xff]
      %v187 = vld [vmem:[%s169 + $0x80] sm:$0xff]
      %v188 = vld [vmem:[%s169 + $0x90] sm:$0xff]
      %v189 = vld [vmem:[%s169 + $0x98] sm:$0xff]
      %v190 = vld [vmem:[%s169 + $0xa8] sm:$0xff]
      %v191 = vld [vmem:[%s169 + $0xb0] sm:$0xff]
      %v192 = vld [vmem:[%s169 + $0xc0] sm:$0xff]
      %v193 = vld [vmem:[%s169 + $0xc8] sm:$0xff]
      %v194 = vld [vmem:[%s169 + $0xd8] sm:$0xff]
      %v195 = vld [vmem:[%s169 + $0xe0] sm:$0xff]
      %v196 = vld [vmem:[%s169 + $0xf0] sm:$0xff]
      %v197 = vld [vmem:[%s169 + $0xf8] sm:$0xff]
      %v198 = vld [vmem:[%s169 + $0x108] sm:$0xff]
      %v199 = vld [vmem:[%s169 + $0x110] sm:$0xff]
      %v200 = vld [vmem:[%s169 + $0x120] sm:$0xff]
      %v201 = vld [vmem:[%s169 + $0x128] sm:$0xff]
      %v202 = vld [vmem:[%s169 + $0x138] sm:$0xff]
      %v203 = vld [vmem:[%s169 + $0x140] sm:$0xff]
      %v204 = vld [vmem:[%s169 + $0x150] sm:$0xff]
      %v205 = vld [vmem:[%s169 + $0x158] sm:$0xff]
      %v206 = vld [vmem:[%s169 + $0x168] sm:$0xff]
      %v207 = vld [vmem:[%s169 + $0x170] sm:$0xff]
      %v208 = vld [vmem:[%s1] sm:$0xf]
      %vm209 = vcmask 31744
      %v211 = vsel %vm209, %v176, 0
      %v214 = vsel %vm209, %v177, 0
      %v217 = vsel %vm209, %v178, 0
      %v220 = vsel %vm209, %v179, 0
      %v223 = vsel %vm209, %v180, 0
      %v226 = vsel %vm209, %v181, 0
      %v229 = vsel %vm209, %v182, 0
      %v232 = vsel %vm209, %v183, 0
      %v235 = vsel %vm209, %v184, 0
      %v238 = vsel %vm209, %v185, 0
      %v241 = vsel %vm209, %v186, 0
      %v244 = vsel %vm209, %v187, 0
      %v247 = vsel %vm209, %v188, 0
      %v250 = vsel %vm209, %v189, 0
      %v253 = vsel %vm209, %v190, 0
      %v256 = vsel %vm209, %v191, 0
      %v259 = vsel %vm209, %v192, 0
      %v262 = vsel %vm209, %v193, 0
      %v265 = vsel %vm209, %v194, 0
      %v268 = vsel %vm209, %v195, 0
      %v271 = vsel %vm209, %v196, 0
      %v274 = vsel %vm209, %v197, 0
      %v277 = vsel %vm209, %v198, 0
      %v280 = vsel %vm209, %v199, 0
      %v283 = vsel %vm209, %v200, 0
      %v286 = vsel %vm209, %v201, 0
      %v289 = vsel %vm209, %v202, 0
      %v292 = vsel %vm209, %v203, 0
      %v295 = vsel %vm209, %v204, 0
      %v298 = vsel %vm209, %v205, 0
      %v301 = vsel %vm209, %v206, 0
      %v304 = vsel %vm209, %v207, 0
      %vm306 = vcmask 1043456
      %v308 = vsel %vm306, %v208, 0
      %310 = vmatprep.subr.mxu0 0.0
      %311 = vmatpush1.msra.mxu0 %v308
      %312 = vmatprep.subr.mxu0 0.0
      %313 = vmatpush1.msra.mxu0 0.0
      %314 = vmatprep.subr.mxu0 0.0
      %315 = vmatpush1.msra.mxu0 0.0
      %316 = vmatprep.subr.mxu0 0.0
      %317 = vmatpush1.msra.mxu0 0.0
      %318 = vmatprep.subr.mxu0 0.0
      %319 = vmatpush1.msra.mxu0 0.0
      %320 = vmatprep.subr.mxu0 0.0
      %321 = vmatpush1.msra.mxu0 0.0
      %322 = vmatprep.subr.mxu0 0.0
      %323 = vmatpush1.msra.mxu0 0.0
      %324 = vmatprep.subr.mxu0 0.0
      %325 = vmatpush1.msra.mxu0 0.0
      %326 = vmatprep.subr.mxu0 0.0
      %327 = vmatpush1.msra.mxu0 0.0
      %328 = vmatprep.subr.mxu0 0.0
      %329 = vmatpush1.msra.mxu0 0.0
      %330 = vmatprep.subr.mxu0 0.0
      %331 = vmatpush1.msra.mxu0 0.0
      %332 = vmatprep.subr.mxu0 0.0
      %333 = vmatpush1.msra.mxu0 0.0
      %334 = vmatprep.subr.mxu0 0.0
      %335 = vmatpush1.msra.mxu0 0.0
      %336 = vmatprep.subr.mxu0 0.0
      %337 = vmatpush1.msra.mxu0 0.0
      %338 = vmatprep.subr.mxu0 0.0
      %339 = vmatpush1.msra.mxu0 0.0
      %340 = vmatprep.subr.mxu0 0.0
      %341 = vmatpush1.msra.mxu0 0.0
      %342 = vmatprep.subr.mxu0 0.0
      %343 = vmatpush1.msra.mxu0 0.0
      %344 = vmatprep.subr.mxu0 0.0
      %345 = vmatpush1.msra.mxu0 0.0
      %346 = vmatprep.subr.mxu0 0.0
      %347 = vmatpush1.msra.mxu0 0.0
      %348 = vmatprep.subr.mxu0 0.0
      %349 = vmatpush1.msra.mxu0 0.0
      %350 = vmatprep.subr.mxu0 0.0
      %351 = vmatpush1.msra.mxu0 0.0
      %352 = vmatprep.subr.mxu0 0.0
      %353 = vmatpush1.msra.mxu0 0.0
      %354 = vmatprep.subr.mxu0 0.0
      %355 = vmatpush1.msra.mxu0 0.0
      %356 = vmatprep.subr.mxu0 0.0
      %357 = vmatpush1.msra.mxu0 0.0
      %358 = vmatprep.subr.mxu0 0.0
      %359 = vmatpush1.msra.mxu0 0.0
      %360 = vmatprep.subr.mxu0 0.0
      %361 = vmatpush1.msra.mxu0 0.0
      %362 = vmatprep.subr.mxu0 0.0
      %363 = vmatpush1.msra.mxu0 0.0
      %364 = vmatprep.subr.mxu0 0.0
      %365 = vmatpush1.msra.mxu0 0.0
      %366 = vmatprep.subr.mxu0 0.0
      %367 = vmatpush1.msra.mxu0 0.0
      %368 = vmatprep.subr.mxu0 0.0
      %369 = vmatpush1.msra.mxu0 0.0
      %370 = vmatprep.subr.mxu0 0.0
      %371 = vmatpush1.msra.mxu0 0.0
      %372 = vmatprep.subr.mxu0 0.0
      %373 = vmatpush1.msra.mxu0 0.0
      %374 = vmatprep.mubr.f32.mxu0 0.0
      %375 = vmatmul.mubr.f32.gmra.mrb[0].mxu0 %v211
      %v376 = vpop.f32.mrb[0].mxu0
      %v377 = vadd.f32 0.0, %v376
      %v378 = vpop.f32.mrb[0].mxu0
      %379 = vmatprep.mubr.f32.mxu0 0.0
      %380 = vmatmul.mubr.f32.gmra.mrb[0].mxu0 %v214
      %v381 = vpop.f32.mrb[0].mxu0
      %v382 = vadd.f32 0.0, %v381
      %v383 = vpop.f32.mrb[0].mxu0
      %384 = vmatprep.mubr.f32.mxu0 0.0
      %385 = vmatmul.mubr.f32.gmra.mrb[0].mxu0 %v217
      %v386 = vpop.f32.mrb[0].mxu0
      %v387 = vadd.f32 0.0, %v386
      %v388 = vpop.f32.mrb[0].mxu0
      %389 = vmatprep.mubr.f32.mxu0 0.0
      %390 = vmatmul.mubr.f32.gmra.mrb[0].mxu0 %v220
      %v391 = vpop.f32.mrb[0].mxu0
      %v392 = vadd.f32 0.0, %v391
      %v393 = vpop.f32.mrb[0].mxu0
      %394 = vmatprep.mubr.f32.mxu0 0.0
      %395 = vmatmul.mubr.f32.gmra.mrb[0].mxu0 %v223
      %v396 = vpop.f32.mrb[0].mxu0
      %v397 = vadd.f32 0.0, %v396
      %v398 = vpop.f32.mrb[0].mxu0
      %399 = vmatprep.mubr.f32.mxu0 0.0
      %400 = vmatmul.mubr.f32.gmra.mrb[0].mxu0 %v226
      %v401 = vpop.f32.mrb[0].mxu0
      %v402 = vadd.f32 0.0, %v401
      %v403 = vpop.f32.mrb[0].mxu0
      %404 = vmatprep.mubr.f32.mxu0 0.0
      %405 = vmatmul.mubr.f32.gmra.mrb[0].mxu0 %v229
      %v406 = vpop.f32.mrb[0].mxu0
      %v407 = vadd.f32 0.0, %v406
      %v408 = vpop.f32.mrb[0].mxu0
      %409 = vmatprep.mubr.f32.mxu0 0.0
      %410 = vmatmul.mubr.f32.gmra.mrb[0].mxu0 %v232
      %v411 = vpop.f32.mrb[0].mxu0
      %v412 = vadd.f32 0.0, %v411
      %v413 = vpop.f32.mrb[0].mxu0
      %414 = vmatprep.mubr.f32.mxu0 0.0
      %415 = vmatmul.mubr.f32.gmra.mrb[0].mxu0 %v235
      %v416 = vpop.f32.mrb[0].mxu0
      %v417 = vadd.f32 0.0, %v416
      %v418 = vpop.f32.mrb[0].mxu0
      %419 = vmatprep.mubr.f32.mxu0 0.0
      %420 = vmatmul.mubr.f32.gmra.mrb[0].mxu0 %v238
      %v421 = vpop.f32.mrb[0].mxu0
      %v422 = vadd.f32 0.0, %v421
      %v423 = vpop.f32.mrb[0].mxu0
      %424 = vmatprep.mubr.f32.mxu0 0.0
      %425 = vmatmul.mubr.f32.gmra.mrb[0].mxu0 %v241
      %v426 = vpop.f32.mrb[0].mxu0
      %v427 = vadd.f32 0.0, %v426
      %v428 = vpop.f32.mrb[0].mxu0
      %429 = vmatprep.mubr.f32.mxu0 0.0
      %430 = vmatmul.mubr.f32.gmra.mrb[0].mxu0 %v244
      %v431 = vpop.f32.mrb[0].mxu0
      %v432 = vadd.f32 0.0, %v431
      %v433 = vpop.f32.mrb[0].mxu0
      %434 = vmatprep.mubr.f32.mxu0 0.0
      %435 = vmatmul.mubr.f32.gmra.mrb[0].mxu0 %v247
      %v436 = vpop.f32.mrb[0].mxu0
      %v437 = vadd.f32 0.0, %v436
      %v438 = vpop.f32.mrb[0].mxu0
      %439 = vmatprep.mubr.f32.mxu0 0.0
      %440 = vmatmul.mubr.f32.gmra.mrb[0].mxu0 %v250
      %v441 = vpop.f32.mrb[0].mxu0
      %v442 = vadd.f32 0.0, %v441
      %v443 = vpop.f32.mrb[0].mxu0
      %444 = vmatprep.mubr.f32.mxu0 0.0
      %445 = vmatmul.mubr.f32.gmra.mrb[0].mxu0 %v253
      %v446 = vpop.f32.mrb[0].mxu0
      %v447 = vadd.f32 0.0, %v446
      %v448 = vpop.f32.mrb[0].mxu0
      %449 = vmatprep.mubr.f32.mxu0 0.0
      %450 = vmatmul.mubr.f32.gmra.mrb[0].mxu0 %v256
      %v451 = vpop.f32.mrb[0].mxu0
      %v452 = vadd.f32 0.0, %v451
      %v453 = vpop.f32.mrb[0].mxu0
      %454 = vmatprep.mubr.f32.mxu0 0.0
      %455 = vmatmul.mubr.f32.gmra.mrb[0].mxu0 %v259
      %v456 = vpop.f32.mrb[0].mxu0
      %v457 = vadd.f32 0.0, %v456
      %v458 = vpop.f32.mrb[0].mxu0
      %459 = vmatprep.mubr.f32.mxu0 0.0
      %460 = vmatmul.mubr.f32.gmra.mrb[0].mxu0 %v262
      %v461 = vpop.f32.mrb[0].mxu0
      %v462 = vadd.f32 0.0, %v461
      %v463 = vpop.f32.mrb[0].mxu0
      %464 = vmatprep.mubr.f32.mxu0 0.0
      %465 = vmatmul.mubr.f32.gmra.mrb[0].mxu0 %v265
      %v466 = vpop.f32.mrb[0].mxu0
      %v467 = vadd.f32 0.0, %v466
      %v468 = vpop.f32.mrb[0].mxu0
      %469 = vmatprep.mubr.f32.mxu0 0.0
      %470 = vmatmul.mubr.f32.gmra.mrb[0].mxu0 %v268
      %v471 = vpop.f32.mrb[0].mxu0
      %v472 = vadd.f32 0.0, %v471
      %v473 = vpop.f32.mrb[0].mxu0
      %474 = vmatprep.mubr.f32.mxu0 0.0
      %475 = vmatmul.mubr.f32.gmra.mrb[0].mxu0 %v271
      %v476 = vpop.f32.mrb[0].mxu0
      %v477 = vadd.f32 0.0, %v476
      %v478 = vpop.f32.mrb[0].mxu0
      %479 = vmatprep.mubr.f32.mxu0 0.0
      %480 = vmatmul.mubr.f32.gmra.mrb[0].mxu0 %v274
      %v481 = vpop.f32.mrb[0].mxu0
      %v482 = vadd.f32 0.0, %v481
      %v483 = vpop.f32.mrb[0].mxu0
      %484 = vmatprep.mubr.f32.mxu0 0.0
      %485 = vmatmul.mubr.f32.gmra.mrb[0].mxu0 %v277
      %v486 = vpop.f32.mrb[0].mxu0
      %v487 = vadd.f32 0.0, %v486
      %v488 = vpop.f32.mrb[0].mxu0
      %489 = vmatprep.mubr.f32.mxu0 0.0
      %490 = vmatmul.mubr.f32.gmra.mrb[0].mxu0 %v280
      %v491 = vpop.f32.mrb[0].mxu0
      %v492 = vadd.f32 0.0, %v491
      %v493 = vpop.f32.mrb[0].mxu0
      %494 = vmatprep.mubr.f32.mxu0 0.0
      %495 = vmatmul.mubr.f32.gmra.mrb[0].mxu0 %v283
      %v496 = vpop.f32.mrb[0].mxu0
      %v497 = vadd.f32 0.0, %v496
      %v498 = vpop.f32.mrb[0].mxu0
      %499 = vmatprep.mubr.f32.mxu0 0.0
      %500 = vmatmul.mubr.f32.gmra.mrb[0].mxu0 %v286
      %v501 = vpop.f32.mrb[0].mxu0
      %v502 = vadd.f32 0.0, %v501
      %v503 = vpop.f32.mrb[0].mxu0
      %504 = vmatprep.mubr.f32.mxu0 0.0
      %505 = vmatmul.mubr.f32.gmra.mrb[0].mxu0 %v289
      %v506 = vpop.f32.mrb[0].mxu0
      %v507 = vadd.f32 0.0, %v506
      %v508 = vpop.f32.mrb[0].mxu0
      %509 = vmatprep.mubr.f32.mxu0 0.0
      %510 = vmatmul.mubr.f32.gmra.mrb[0].mxu0 %v292
      %v511 = vpop.f32.mrb[0].mxu0
      %v512 = vadd.f32 0.0, %v511
      %v513 = vpop.f32.mrb[0].mxu0
      %514 = vmatprep.mubr.f32.mxu0 0.0
      %515 = vmatmul.mubr.f32.gmra.mrb[0].mxu0 %v295
      %v516 = vpop.f32.mrb[0].mxu0
      %v517 = vadd.f32 0.0, %v516
      %v518 = vpop.f32.mrb[0].mxu0
      %519 = vmatprep.mubr.f32.mxu0 0.0
      %520 = vmatmul.mubr.f32.gmra.mrb[0].mxu0 %v298
      %v521 = vpop.f32.mrb[0].mxu0
      %v522 = vadd.f32 0.0, %v521
      %v523 = vpop.f32.mrb[0].mxu0
      %524 = vmatprep.mubr.f32.mxu0 0.0
      %525 = vmatmul.mubr.f32.gmra.mrb[0].mxu0 %v301
      %v526 = vpop.f32.mrb[0].mxu0
      %v527 = vadd.f32 0.0, %v526
      %v528 = vpop.f32.mrb[0].mxu0
      %529 = vmatprep.mubr.f32.mxu0 0.0
      %530 = vmatmul.mubr.f32.gmra.mrb[0].mxu0 %v304
      %v531 = vpop.f32.mrb[0].mxu0
      %v532 = vadd.f32 0.0, %v531
      %v533 = vpop.f32.mrb[0].mxu0
      %534 = vdwg.mxu0
      %535 = vst [vmem:[#allocation2] sm:$0xff] %v377
      %536 = vst [vmem:[#allocation2 + $0x8] sm:$0xff] %v382
      %537 = vst [vmem:[#allocation2 + $0x10] sm:$0xff] %v387
      %538 = vst [vmem:[#allocation2 + $0x18] sm:$0xff] %v392
      %539 = vst [vmem:[#allocation2 + $0x20] sm:$0xff] %v397
      %540 = vst [vmem:[#allocation2 + $0x28] sm:$0xff] %v402
      %541 = vst [vmem:[#allocation2 + $0x30] sm:$0xff] %v407
      %542 = vst [vmem:[#allocation2 + $0x38] sm:$0xff] %v412
      %543 = vst [vmem:[#allocation2 + $0x40] sm:$0xff] %v417
      %544 = vst [vmem:[#allocation2 + $0x48] sm:$0xff] %v422
      %545 = vst [vmem:[#allocation2 + $0x50] sm:$0xff] %v427
      %546 = vst [vmem:[#allocation2 + $0x58] sm:$0xff] %v432
      %547 = vst [vmem:[#allocation2 + $0x60] sm:$0xff] %v437
      %548 = vst [vmem:[#allocation2 + $0x68] sm:$0xff] %v442
      %549 = vst [vmem:[#allocation2 + $0x70] sm:$0xff] %v447
      %550 = vst [vmem:[#allocation2 + $0x78] sm:$0xff] %v452
      %551 = vst [vmem:[#allocation2 + $0x80] sm:$0xff] %v457
      %552 = vst [vmem:[#allocation2 + $0x88] sm:$0xff] %v462
      %553 = vst [vmem:[#allocation2 + $0x90] sm:$0xff] %v467
      %554 = vst [vmem:[#allocation2 + $0x98] sm:$0xff] %v472
      %555 = vst [vmem:[#allocation2 + $0xa0] sm:$0xff] %v477
      %556 = vst [vmem:[#allocation2 + $0xa8] sm:$0xff] %v482
      %557 = vst [vmem:[#allocation2 + $0xb0] sm:$0xff] %v487
      %558 = vst [vmem:[#allocation2 + $0xb8] sm:$0xff] %v492
      %559 = vst [vmem:[#allocation2 + $0xc0] sm:$0xff] %v497
      %560 = vst [vmem:[#allocation2 + $0xc8] sm:$0xff] %v502
      %561 = vst [vmem:[#allocation2 + $0xd0] sm:$0xff] %v507
      %562 = vst [vmem:[#allocation2 + $0xd8] sm:$0xff] %v512
      %563 = vst [vmem:[#allocation2 + $0xe0] sm:$0xff] %v517
      %564 = vst [vmem:[#allocation2 + $0xe8] sm:$0xff] %v522
      %565 = vst [vmem:[#allocation2 + $0xf0] sm:$0xff] %v527
      %566 = vst [vmem:[#allocation2 + $0xf8] sm:$0xff] %v532
      %v567 = vld [vmem:[%s169 + $0x1] sm:$0xff]
      %v568 = vld [vmem:[%s169 + $0x9] sm:$0xff]
      %v569 = vld [vmem:[%s169 + $0x19] sm:$0xff]
      %v570 = vld [vmem:[%s169 + $0x21] sm:$0xff]
      %v571 = vld [vmem:[%s169 + $0x31] sm:$0xff]
      %v572 = vld [vmem:[%s169 + $0x39] sm:$0xff]
      %v573 = vld [vmem:[%s169 + $0x49] sm:$0xff]
      %v574 = vld [vmem:[%s169 + $0x51] sm:$0xff]
      %v575 = vld [vmem:[%s169 + $0x61] sm:$0xff]
      %v576 = vld [vmem:[%s169 + $0x69] sm:$0xff]
      %v577 = vld [vmem:[%s169 + $0x79] sm:$0xff]
      %v578 = vld [vmem:[%s169 + $0x81] sm:$0xff]
      %v579 = vld [vmem:[%s169 + $0x91] sm:$0xff]
      %v580 = vld [vmem:[%s169 + $0x99] sm:$0xff]
      %v581 = vld [vmem:[%s169 + $0xa9] sm:$0xff]
      %v582 = vld [vmem:[%s169 + $0xb1] sm:$0xff]
      %v583 = vld [vmem:[%s169 + $0xc1] sm:$0xff]
      %v584 = vld [vmem:[%s169 + $0xc9] sm:$0xff]
      %v585 = vld [vmem:[%s169 + $0xd9] sm:$0xff]
      %v586 = vld [vmem:[%s169 + $0xe1] sm:$0xff]
      %v587 = vld [vmem:[%s169 + $0xf1] sm:$0xff]
      %v588 = vld [vmem:[%s169 + $0xf9] sm:$0xff]
      %v589 = vld [vmem:[%s169 + $0x109] sm:$0xff]
      %v590 = vld [vmem:[%s169 + $0x111] sm:$0xff]
      %v591 = vld [vmem:[%s169 + $0x121] sm:$0xff]
      %v592 = vld [vmem:[%s169 + $0x129] sm:$0xff]
      %v593 = vld [vmem:[%s169 + $0x139] sm:$0xff]
      %v594 = vld [vmem:[%s169 + $0x141] sm:$0xff]
      %v595 = vld [vmem:[%s169 + $0x151] sm:$0xff]
      %v596 = vld [vmem:[%s169 + $0x159] sm:$0xff]
      %v597 = vld [vmem:[%s169 + $0x169] sm:$0xff]
      %v598 = vld [vmem:[%s169 + $0x171] sm:$0xff]
      %s599 = scalar_lea.vmem %s1, 4
      %v600 = vld [vmem:[%s599] sm:$0xf]
      %v602 = vsel %vm209, %v567, 0
      %v605 = vsel %vm209, %v568, 0
      %v608 = vsel %vm209, %v569, 0
      %v611 = vsel %vm209, %v570, 0
      %v614 = vsel %vm209, %v571, 0
      %v617 = vsel %vm209, %v572, 0
      %v620 = vsel %vm209, %v573, 0
      %v623 = vsel %vm209, %v574, 0
      %v626 = vsel %vm209, %v575, 0
      %v629 = vsel %vm209, %v576, 0
      %v632 = vsel %vm209, %v577, 0
      %v635 = vsel %vm209, %v578, 0
      %v638 = vsel %vm209, %v579, 0
      %v641 = vsel %vm209, %v580, 0
      %v644 = vsel %vm209, %v581, 0
      %v647 = vsel %vm209, %v582, 0
      %v650 = vsel %vm209, %v583, 0
      %v653 = vsel %vm209, %v584, 0
      %v656 = vsel %vm209, %v585, 0
      %v659 = vsel %vm209, %v586, 0
      %v662 = vsel %vm209, %v587, 0
      %v665 = vsel %vm209, %v588, 0
      %v668 = vsel %vm209, %v589, 0
      %v671 = vsel %vm209, %v590, 0
      %v674 = vsel %vm209, %v591, 0
      %v677 = vsel %vm209, %v592, 0
      %v680 = vsel %vm209, %v593, 0
      %v683 = vsel %vm209, %v594, 0
      %v686 = vsel %vm209, %v595, 0
      %v689 = vsel %vm209, %v596, 0
      %v692 = vsel %vm209, %v597, 0
      %v695 = vsel %vm209, %v598, 0
      %v698 = vsel %vm306, %v600, 0
      %700 = vmatprep.subr.mxu0 0.0
      %701 = vmatpush1.msra.mxu0 %v698
      %702 = vmatprep.subr.mxu0 0.0
      %703 = vmatpush1.msra.mxu0 0.0
      %704 = vmatprep.subr.mxu0 0.0
      %705 = vmatpush1.msra.mxu0 0.0
      %706 = vmatprep.subr.mxu0 0.0
      %707 = vmatpush1.msra.mxu0 0.0
      %708 = vmatprep.subr.mxu0 0.0
      %709 = vmatpush1.msra.mxu0 0.0
      %710 = vmatprep.subr.mxu0 0.0
      %711 = vmatpush1.msra.mxu0 0.0
      %712 = vmatprep.subr.mxu0 0.0
      %713 = vmatpush1.msra.mxu0 0.0
      %714 = vmatprep.subr.mxu0 0.0
      %715 = vmatpush1.msra.mxu0 0.0
      %716 = vmatprep.subr.mxu0 0.0
      %717 = vmatpush1.msra.mxu0 0.0
      %718 = vmatprep.subr.mxu0 0.0
      %719 = vmatpush1.msra.mxu0 0.0
      %720 = vmatprep.subr.mxu0 0.0
      %721 = vmatpush1.msra.mxu0 0.0
      %722 = vmatprep.subr.mxu0 0.0
      %723 = vmatpush1.msra.mxu0 0.0
      %724 = vmatprep.subr.mxu0 0.0
      %725 = vmatpush1.msra.mxu0 0.0
      %726 = vmatprep.subr.mxu0 0.0
      %727 = vmatpush1.msra.mxu0 0.0
      %728 = vmatprep.subr.mxu0 0.0
      %729 = vmatpush1.msra.mxu0 0.0
      %730 = vmatprep.subr.mxu0 0.0
      %731 = vmatpush1.msra.mxu0 0.0
      %732 = vmatprep.subr.mxu0 0.0
      %733 = vmatpush1.msra.mxu0 0.0
      %734 = vmatprep.subr.mxu0 0.0
      %735 = vmatpush1.msra.mxu0 0.0
      %736 = vmatprep.subr.mxu0 0.0
      %737 = vmatpush1.msra.mxu0 0.0
      %738 = vmatprep.subr.mxu0 0.0
      %739 = vmatpush1.msra.mxu0 0.0
      %740 = vmatprep.subr.mxu0 0.0
      %741 = vmatpush1.msra.mxu0 0.0
      %742 = vmatprep.subr.mxu0 0.0
      %743 = vmatpush1.msra.mxu0 0.0
      %744 = vmatprep.subr.mxu0 0.0
      %745 = vmatpush1.msra.mxu0 0.0
      %746 = vmatprep.subr.mxu0 0.0
      %747 = vmatpush1.msra.mxu0 0.0
      %748 = vmatprep.subr.mxu0 0.0
      %749 = vmatpush1.msra.mxu0 0.0
      %750 = vmatprep.subr.mxu0 0.0
      %751 = vmatpush1.msra.mxu0 0.0
      %752 = vmatprep.subr.mxu0 0.0
      %753 = vmatpush1.msra.mxu0 0.0
      %754 = vmatprep.subr.mxu0 0.0
      %755 = vmatpush1.msra.mxu0 0.0
      %756 = vmatprep.subr.mxu0 0.0
      %757 = vmatpush1.msra.mxu0 0.0
      %758 = vmatprep.subr.mxu0 0.0
      %759 = vmatpush1.msra.mxu0 0.0
      %760 = vmatprep.subr.mxu0 0.0
      %761 = vmatpush1.msra.mxu0 0.0
      %762 = vmatprep.subr.mxu0 0.0
      %763 = vmatpush1.msra.mxu0 0.0
      %764 = vmatprep.mubr.f32.mxu0 0.0
      %765 = vmatmul.mubr.f32.gmra.mrb[0].mxu0 %v602
      %v766 = vpop.f32.mrb[0].mxu0
      %v767 = vadd.f32 0.0, %v766
      %v768 = vpop.f32.mrb[0].mxu0
      %769 = vmatprep.mubr.f32.mxu0 0.0
      %770 = vmatmul.mubr.f32.gmra.mrb[0].mxu0 %v605
      %v771 = vpop.f32.mrb[0].mxu0
      %v772 = vadd.f32 0.0, %v771
      %v773 = vpop.f32.mrb[0].mxu0
      %774 = vmatprep.mubr.f32.mxu0 0.0
      %775 = vmatmul.mubr.f32.gmra.mrb[0].mxu0 %v608
      %v776 = vpop.f32.mrb[0].mxu0
      %v777 = vadd.f32 0.0, %v776
      %v778 = vpop.f32.mrb[0].mxu0
      %779 = vmatprep.mubr.f32.mxu0 0.0
      %780 = vmatmul.mubr.f32.gmra.mrb[0].mxu0 %v611
      %v781 = vpop.f32.mrb[0].mxu0
      %v782 = vadd.f32 0.0, %v781
      %v783 = vpop.f32.mrb[0].mxu0
      %784 = vmatprep.mubr.f32.mxu0 0.0
      %785 = vmatmul.mubr.f32.gmra.mrb[0].mxu0 %v614
      %v786 = vpop.f32.mrb[0].mxu0
      %v787 = vadd.f32 0.0, %v786
      %v788 = vpop.f32.mrb[0].mxu0
      %789 = vmatprep.mubr.f32.mxu0 0.0
      %790 = vmatmul.mubr.f32.gmra.mrb[0].mxu0 %v617
      %v791 = vpop.f32.mrb[0].mxu0
      %v792 = vadd.f32 0.0, %v791
      %v793 = vpop.f32.mrb[0].mxu0
      %794 = vmatprep.mubr.f32.mxu0 0.0
      %795 = vmatmul.mubr.f32.gmra.mrb[0].mxu0 %v620
      %v796 = vpop.f32.mrb[0].mxu0
      %v797 = vadd.f32 0.0, %v796
      %v798 = vpop.f32.mrb[0].mxu0
      %799 = vmatprep.mubr.f32.mxu0 0.0
      %800 = vmatmul.mubr.f32.gmra.mrb[0].mxu0 %v623
      %v801 = vpop.f32.mrb[0].mxu0
      %v802 = vadd.f32 0.0, %v801
      %v803 = vpop.f32.mrb[0].mxu0
      %804 = vmatprep.mubr.f32.mxu0 0.0
      %805 = vmatmul.mubr.f32.gmra.mrb[0].mxu0 %v626
      %v806 = vpop.f32.mrb[0].mxu0
      %v807 = vadd.f32 0.0, %v806
      %v808 = vpop.f32.mrb[0].mxu0
      %809 = vmatprep.mubr.f32.mxu0 0.0
      %810 = vmatmul.mubr.f32.gmra.mrb[0].mxu0 %v629
      %v811 = vpop.f32.mrb[0].mxu0
      %v812 = vadd.f32 0.0, %v811
      %v813 = vpop.f32.mrb[0].mxu0
      %814 = vmatprep.mubr.f32.mxu0 0.0
      %815 = vmatmul.mubr.f32.gmra.mrb[0].mxu0 %v632
      %v816 = vpop.f32.mrb[0].mxu0
      %v817 = vadd.f32 0.0, %v816
      %v818 = vpop.f32.mrb[0].mxu0
      %819 = vmatprep.mubr.f32.mxu0 0.0
      %820 = vmatmul.mubr.f32.gmra.mrb[0].mxu0 %v635
      %v821 = vpop.f32.mrb[0].mxu0
      %v822 = vadd.f32 0.0, %v821
      %v823 = vpop.f32.mrb[0].mxu0
      %824 = vmatprep.mubr.f32.mxu0 0.0
      %825 = vmatmul.mubr.f32.gmra.mrb[0].mxu0 %v638
      %v826 = vpop.f32.mrb[0].mxu0
      %v827 = vadd.f32 0.0, %v826
      %v828 = vpop.f32.mrb[0].mxu0
      %829 = vmatprep.mubr.f32.mxu0 0.0
      %830 = vmatmul.mubr.f32.gmra.mrb[0].mxu0 %v641
      %v831 = vpop.f32.mrb[0].mxu0
      %v832 = vadd.f32 0.0, %v831
      %v833 = vpop.f32.mrb[0].mxu0
      %834 = vmatprep.mubr.f32.mxu0 0.0
      %835 = vmatmul.mubr.f32.gmra.mrb[0].mxu0 %v644
      %v836 = vpop.f32.mrb[0].mxu0
      %v837 = vadd.f32 0.0, %v836
      %v838 = vpop.f32.mrb[0].mxu0
      %839 = vmatprep.mubr.f32.mxu0 0.0
      %840 = vmatmul.mubr.f32.gmra.mrb[0].mxu0 %v647
      %v841 = vpop.f32.mrb[0].mxu0
      %v842 = vadd.f32 0.0, %v841
      %v843 = vpop.f32.mrb[0].mxu0
      %844 = vmatprep.mubr.f32.mxu0 0.0
      %845 = vmatmul.mubr.f32.gmra.mrb[0].mxu0 %v650
      %v846 = vpop.f32.mrb[0].mxu0
      %v847 = vadd.f32 0.0, %v846
      %v848 = vpop.f32.mrb[0].mxu0
      %849 = vmatprep.mubr.f32.mxu0 0.0
      %850 = vmatmul.mubr.f32.gmra.mrb[0].mxu0 %v653
      %v851 = vpop.f32.mrb[0].mxu0
      %v852 = vadd.f32 0.0, %v851
      %v853 = vpop.f32.mrb[0].mxu0
      %854 = vmatprep.mubr.f32.mxu0 0.0
      %855 = vmatmul.mubr.f32.gmra.mrb[0].mxu0 %v656
      %v856 = vpop.f32.mrb[0].mxu0
      %v857 = vadd.f32 0.0, %v856
      %v858 = vpop.f32.mrb[0].mxu0
      %859 = vmatprep.mubr.f32.mxu0 0.0
      %860 = vmatmul.mubr.f32.gmra.mrb[0].mxu0 %v659
      %v861 = vpop.f32.mrb[0].mxu0
      %v862 = vadd.f32 0.0, %v861
      %v863 = vpop.f32.mrb[0].mxu0
      %864 = vmatprep.mubr.f32.mxu0 0.0
      %865 = vmatmul.mubr.f32.gmra.mrb[0].mxu0 %v662
      %v866 = vpop.f32.mrb[0].mxu0
      %v867 = vadd.f32 0.0, %v866
      %v868 = vpop.f32.mrb[0].mxu0
      %869 = vmatprep.mubr.f32.mxu0 0.0
      %870 = vmatmul.mubr.f32.gmra.mrb[0].mxu0 %v665
      %v871 = vpop.f32.mrb[0].mxu0
      %v872 = vadd.f32 0.0, %v871
      %v873 = vpop.f32.mrb[0].mxu0
      %874 = vmatprep.mubr.f32.mxu0 0.0
      %875 = vmatmul.mubr.f32.gmra.mrb[0].mxu0 %v668
      %v876 = vpop.f32.mrb[0].mxu0
      %v877 = vadd.f32 0.0, %v876
      %v878 = vpop.f32.mrb[0].mxu0
      %879 = vmatprep.mubr.f32.mxu0 0.0
      %880 = vmatmul.mubr.f32.gmra.mrb[0].mxu0 %v671
      %v881 = vpop.f32.mrb[0].mxu0
      %v882 = vadd.f32 0.0, %v881
      %v883 = vpop.f32.mrb[0].mxu0
      %884 = vmatprep.mubr.f32.mxu0 0.0
      %885 = vmatmul.mubr.f32.gmra.mrb[0].mxu0 %v674
      %v886 = vpop.f32.mrb[0].mxu0
      %v887 = vadd.f32 0.0, %v886
      %v888 = vpop.f32.mrb[0].mxu0
      %889 = vmatprep.mubr.f32.mxu0 0.0
      %890 = vmatmul.mubr.f32.gmra.mrb[0].mxu0 %v677
      %v891 = vpop.f32.mrb[0].mxu0
      %v892 = vadd.f32 0.0, %v891
      %v893 = vpop.f32.mrb[0].mxu0
      %894 = vmatprep.mubr.f32.mxu0 0.0
      %895 = vmatmul.mubr.f32.gmra.mrb[0].mxu0 %v680
      %v896 = vpop.f32.mrb[0].mxu0
      %v897 = vadd.f32 0.0, %v896
      %v898 = vpop.f32.mrb[0].mxu0
      %899 = vmatprep.mubr.f32.mxu0 0.0
      %900 = vmatmul.mubr.f32.gmra.mrb[0].mxu0 %v683
      %v901 = vpop.f32.mrb[0].mxu0
      %v902 = vadd.f32 0.0, %v901
      %v903 = vpop.f32.mrb[0].mxu0
      %904 = vmatprep.mubr.f32.mxu0 0.0
      %905 = vmatmul.mubr.f32.gmra.mrb[0].mxu0 %v686
      %v906 = vpop.f32.mrb[0].mxu0
      %v907 = vadd.f32 0.0, %v906
      %v908 = vpop.f32.mrb[0].mxu0
      %909 = vmatprep.mubr.f32.mxu0 0.0
      %910 = vmatmul.mubr.f32.gmra.mrb[0].mxu0 %v689
      %v911 = vpop.f32.mrb[0].mxu0
      %v912 = vadd.f32 0.0, %v911
      %v913 = vpop.f32.mrb[0].mxu0
      %914 = vmatprep.mubr.f32.mxu0 0.0
      %915 = vmatmul.mubr.f32.gmra.mrb[0].mxu0 %v692
      %v916 = vpop.f32.mrb[0].mxu0
      %v917 = vadd.f32 0.0, %v916
      %v918 = vpop.f32.mrb[0].mxu0
      %919 = vmatprep.mubr.f32.mxu0 0.0
      %920 = vmatmul.mubr.f32.gmra.mrb[0].mxu0 %v695
      %v921 = vpop.f32.mrb[0].mxu0
      %v922 = vadd.f32 0.0, %v921
      %v923 = vpop.f32.mrb[0].mxu0
      %924 = vdwg.mxu0
      %v925 = vld [vmem:[#allocation2] sm:$0xff]
      %v926 = vld [vmem:[#allocation2 + $0x8] sm:$0xff]
      %v927 = vld [vmem:[#allocation2 + $0x10] sm:$0xff]
      %v928 = vld [vmem:[#allocation2 + $0x18] sm:$0xff]
      %v929 = vld [vmem:[#allocation2 + $0x20] sm:$0xff]
      %v930 = vld [vmem:[#allocation2 + $0x28] sm:$0xff]
      %v931 = vld [vmem:[#allocation2 + $0x30] sm:$0xff]
      %v932 = vld [vmem:[#allocation2 + $0x38] sm:$0xff]
      %v933 = vld [vmem:[#allocation2 + $0x40] sm:$0xff]
      %v934 = vld [vmem:[#allocation2 + $0x48] sm:$0xff]
      %v935 = vld [vmem:[#allocation2 + $0x50] sm:$0xff]
      %v936 = vld [vmem:[#allocation2 + $0x58] sm:$0xff]
      %v937 = vld [vmem:[#allocation2 + $0x60] sm:$0xff]
      %v938 = vld [vmem:[#allocation2 + $0x68] sm:$0xff]
      %v939 = vld [vmem:[#allocation2 + $0x70] sm:$0xff]
      %v940 = vld [vmem:[#allocation2 + $0x78] sm:$0xff]
      %v941 = vld [vmem:[#allocation2 + $0x80] sm:$0xff]
      %v942 = vld [vmem:[#allocation2 + $0x88] sm:$0xff]
      %v943 = vld [vmem:[#allocation2 + $0x90] sm:$0xff]
      %v944 = vld [vmem:[#allocation2 + $0x98] sm:$0xff]
      %v945 = vld [vmem:[#allocation2 + $0xa0] sm:$0xff]
      %v946 = vld [vmem:[#allocation2 + $0xa8] sm:$0xff]
      %v947 = vld [vmem:[#allocation2 + $0xb0] sm:$0xff]
      %v948 = vld [vmem:[#allocation2 + $0xb8] sm:$0xff]
      %v949 = vld [vmem:[#allocation2 + $0xc0] sm:$0xff]
      %v950 = vld [vmem:[#allocation2 + $0xc8] sm:$0xff]
      %v951 = vld [vmem:[#allocation2 + $0xd0] sm:$0xff]
      %v952 = vld [vmem:[#allocation2 + $0xd8] sm:$0xff]
      %v953 = vld [vmem:[#allocation2 + $0xe0] sm:$0xff]
      %v954 = vld [vmem:[#allocation2 + $0xe8] sm:$0xff]
      %v955 = vld [vmem:[#allocation2 + $0xf0] sm:$0xff]
      %v956 = vld [vmem:[#allocation2 + $0xf8] sm:$0xff]
      %v957 = vadd.f32 %v925, %v767
      %v958 = vadd.f32 %v926, %v772
      %v959 = vadd.f32 %v927, %v777
      %v960 = vadd.f32 %v928, %v782
      %v961 = vadd.f32 %v929, %v787
      %v962 = vadd.f32 %v930, %v792
      %v963 = vadd.f32 %v931, %v797
      %v964 = vadd.f32 %v932, %v802
      %v965 = vadd.f32 %v933, %v807
      %v966 = vadd.f32 %v934, %v812
      %v967 = vadd.f32 %v935, %v817
      %v968 = vadd.f32 %v936, %v822
      %v969 = vadd.f32 %v937, %v827
      %v970 = vadd.f32 %v938, %v832
      %v971 = vadd.f32 %v939, %v837
      %v972 = vadd.f32 %v940, %v842
      %v973 = vadd.f32 %v941, %v847
      %v974 = vadd.f32 %v942, %v852
      %v975 = vadd.f32 %v943, %v857
      %v976 = vadd.f32 %v944, %v862
      %v977 = vadd.f32 %v945, %v867
      %v978 = vadd.f32 %v946, %v872
      %v979 = vadd.f32 %v947, %v877
      %v980 = vadd.f32 %v948, %v882
      %v981 = vadd.f32 %v949, %v887
      %v982 = vadd.f32 %v950, %v892
      %v983 = vadd.f32 %v951, %v897
      %v984 = vadd.f32 %v952, %v902
      %v985 = vadd.f32 %v953, %v907
      %v986 = vadd.f32 %v954, %v912
      %v987 = vadd.f32 %v955, %v917
      %v988 = vadd.f32 %v956, %v922
      %989 = vst [vmem:[#allocation2] sm:$0xff] %v957
      %990 = vst [vmem:[#allocation2 + $0x8] sm:$0xff] %v958
      %991 = vst [vmem:[#allocation2 + $0x10] sm:$0xff] %v959
      %992 = vst [vmem:[#allocation2 + $0x18] sm:$0xff] %v960
      %993 = vst [vmem:[#allocation2 + $0x20] sm:$0xff] %v961
      %994 = vst [vmem:[#allocation2 + $0x28] sm:$0xff] %v962
      %995 = vst [vmem:[#allocation2 + $0x30] sm:$0xff] %v963
      %996 = vst [vmem:[#allocation2 + $0x38] sm:$0xff] %v964
      %997 = vst [vmem:[#allocation2 + $0x40] sm:$0xff] %v965
      %998 = vst [vmem:[#allocation2 + $0x48] sm:$0xff] %v966
      %999 = vst [vmem:[#allocation2 + $0x50] sm:$0xff] %v967
      %1000 = vst [vmem:[#allocation2 + $0x58] sm:$0xff] %v968
      %1001 = vst [vmem:[#allocation2 + $0x60] sm:$0xff] %v969
      %1002 = vst [vmem:[#allocation2 + $0x68] sm:$0xff] %v970
      %1003 = vst [vmem:[#allocation2 + $0x70] sm:$0xff] %v971
      %1004 = vst [vmem:[#allocation2 + $0x78] sm:$0xff] %v972
      %1005 = vst [vmem:[#allocation2 + $0x80] sm:$0xff] %v973
      %1006 = vst [vmem:[#allocation2 + $0x88] sm:$0xff] %v974
      %1007 = vst [vmem:[#allocation2 + $0x90] sm:$0xff] %v975
      %1008 = vst [vmem:[#allocation2 + $0x98] sm:$0xff] %v976
      %1009 = vst [vmem:[#allocation2 + $0xa0] sm:$0xff] %v977
      %1010 = vst [vmem:[#allocation2 + $0xa8] sm:$0xff] %v978
      %1011 = vst [vmem:[#allocation2 + $0xb0] sm:$0xff] %v979
      %1012 = vst [vmem:[#allocation2 + $0xb8] sm:$0xff] %v980
      %1013 = vst [vmem:[#allocation2 + $0xc0] sm:$0xff] %v981
      %1014 = vst [vmem:[#allocation2 + $0xc8] sm:$0xff] %v982
      %1015 = vst [vmem:[#allocation2 + $0xd0] sm:$0xff] %v983
      %1016 = vst [vmem:[#allocation2 + $0xd8] sm:$0xff] %v984
      %1017 = vst [vmem:[#allocation2 + $0xe0] sm:$0xff] %v985
      %1018 = vst [vmem:[#allocation2 + $0xe8] sm:$0xff] %v986
      %1019 = vst [vmem:[#allocation2 + $0xf0] sm:$0xff] %v987
      %1020 = vst [vmem:[#allocation2 + $0xf8] sm:$0xff] %v988
      %v1021 = vld [vmem:[%s169 + $0x2] sm:$0xff]
      %v1022 = vld [vmem:[%s169 + $0xa] sm:$0xff]
      %v1023 = vld [vmem:[%s169 + $0x1a] sm:$0xff]
      %v1024 = vld [vmem:[%s169 + $0x22] sm:$0xff]
      %v1025 = vld [vmem:[%s169 + $0x32] sm:$0xff]
      %v1026 = vld [vmem:[%s169 + $0x3a] sm:$0xff]
      %v1027 = vld [vmem:[%s169 + $0x4a] sm:$0xff]
      %v1028 = vld [vmem:[%s169 + $0x52] sm:$0xff]
      %v1029 = vld [vmem:[%s169 + $0x62] sm:$0xff]
      %v1030 = vld [vmem:[%s169 + $0x6a] sm:$0xff]
      %v1031 = vld [vmem:[%s169 + $0x7a] sm:$0xff]
      %v1032 = vld [vmem:[%s169 + $0x82] sm:$0xff]
      %v1033 = vld [vmem:[%s169 + $0x92] sm:$0xff]
      %v1034 = vld [vmem:[%s169 + $0x9a] sm:$0xff]
      %v1035 = vld [vmem:[%s169 + $0xaa] sm:$0xff]
      %v1036 = vld [vmem:[%s169 + $0xb2] sm:$0xff]
      %v1037 = vld [vmem:[%s169 + $0xc2] sm:$0xff]
      %v1038 = vld [vmem:[%s169 + $0xca] sm:$0xff]
      %v1039 = vld [vmem:[%s169 + $0xda] sm:$0xff]
      %v1040 = vld [vmem:[%s169 + $0xe2] sm:$0xff]
      %v1041 = vld [vmem:[%s169 + $0xf2] sm:$0xff]
      %v1042 = vld [vmem:[%s169 + $0xfa] sm:$0xff]
      %v1043 = vld [vmem:[%s169 + $0x10a] sm:$0xff]
      %v1044 = vld [vmem:[%s169 + $0x112] sm:$0xff]
      %v1045 = vld [vmem:[%s169 + $0x122] sm:$0xff]
      %v1046 = vld [vmem:[%s169 + $0x12a] sm:$0xff]
      %v1047 = vld [vmem:[%s169 + $0x13a] sm:$0xff]
      %v1048 = vld [vmem:[%s169 + $0x142] sm:$0xff]
      %v1049 = vld [vmem:[%s169 + $0x152] sm:$0xff]
      %v1050 = vld [vmem:[%s169 + $0x15a] sm:$0xff]
      %v1051 = vld [vmem:[%s169 + $0x16a] sm:$0xff]
      %v1052 = vld [vmem:[%s169 + $0x172] sm:$0xff]
      %s1053 = scalar_lea.vmem %s1, 8
      %v1054 = vld [vmem:[%s1053] sm:$0xf]
      %v1056 = vsel %vm209, %v1021, 0
      %v1059 = vsel %vm209, %v1022, 0
      %v1062 = vsel %vm209, %v1023, 0
      %v1065 = vsel %vm209, %v1024, 0
      %v1068 = vsel %vm209, %v1025, 0
      %v1071 = vsel %vm209, %v1026, 0
      %v1074 = vsel %vm209, %v1027, 0
      %v1077 = vsel %vm209, %v1028, 0
      %v1080 = vsel %vm209, %v1029, 0
      %v1083 = vsel %vm209, %v1030, 0
      %v1086 = vsel %vm209, %v1031, 0
      %v1089 = vsel %vm209, %v1032, 0
      %v1092 = vsel %vm209, %v1033, 0
      %v1095 = vsel %vm209, %v1034, 0
      %v1098 = vsel %vm209, %v1035, 0
      %v1101 = vsel %vm209, %v1036, 0
      %v1104 = vsel %vm209, %v1037, 0
      %v1107 = vsel %vm209, %v1038, 0
      %v1110 = vsel %vm209, %v1039, 0
      %v1113 = vsel %vm209, %v1040, 0
      %v1116 = vsel %vm209, %v1041, 0
      %v1119 = vsel %vm209, %v1042, 0
      %v1122 = vsel %vm209, %v1043, 0
      %v1125 = vsel %vm209, %v1044, 0
      %v1128 = vsel %vm209, %v1045, 0
      %v1131 = vsel %vm209, %v1046, 0
      %v1134 = vsel %vm209, %v1047, 0
      %v1137 = vsel %vm209, %v1048, 0
      %v1140 = vsel %vm209, %v1049, 0
      %v1143 = vsel %vm209, %v1050, 0
      %v1146 = vsel %vm209, %v1051, 0
      %v1149 = vsel %vm209, %v1052, 0
      %v1152 = vsel %vm306, %v1054, 0
      %1154 = vmatprep.subr.mxu0 0.0
      %1155 = vmatpush1.msra.mxu0 %v1152
      %1156 = vmatprep.subr.mxu0 0.0
      %1157 = vmatpush1.msra.mxu0 0.0
      %1158 = vmatprep.subr.mxu0 0.0
      %1159 = vmatpush1.msra.mxu0 0.0
      %1160 = vmatprep.subr.mxu0 0.0
      %1161 = vmatpush1.msra.mxu0 0.0
      %1162 = vmatprep.subr.mxu0 0.0
      %1163 = vmatpush1.msra.mxu0 0.0
      %1164 = vmatprep.subr.mxu0 0.0
      %1165 = vmatpush1.msra.mxu0 0.0
      %1166 = vmatprep.subr.mxu0 0.0
      %1167 = vmatpush1.msra.mxu0 0.0
      %1168 = vmatprep.subr.mxu0 0.0
      %1169 = vmatpush1.msra.mxu0 0.0
      %1170 = vmatprep.subr.mxu0 0.0
      %1171 = vmatpush1.msra.mxu0 0.0
      %1172 = vmatprep.subr.mxu0 0.0
      %1173 = vmatpush1.msra.mxu0 0.0
      %1174 = vmatprep.subr.mxu0 0.0
      %1175 = vmatpush1.msra.mxu0 0.0
      %1176 = vmatprep.subr.mxu0 0.0
      %1177 = vmatpush1.msra.mxu0 0.0
      %1178 = vmatprep.subr.mxu0 0.0
      %1179 = vmatpush1.msra.mxu0 0.0
      %1180 = vmatprep.subr.mxu0 0.0
      %1181 = vmatpush1.msra.mxu0 0.0
      %1182 = vmatprep.subr.mxu0 0.0
      %1183 = vmatpush1.msra.mxu0 0.0
      %1184 = vmatprep.subr.mxu0 0.0
      %1185 = vmatpush1.msra.mxu0 0.0
      %1186 = vmatprep.subr.mxu0 0.0
      %1187 = vmatpush1.msra.mxu0 0.0
      %1188 = vmatprep.subr.mxu0 0.0
      %1189 = vmatpush1.msra.mxu0 0.0
      %1190 = vmatprep.subr.mxu0 0.0
      %1191 = vmatpush1.msra.mxu0 0.0
      %1192 = vmatprep.subr.mxu0 0.0
      %1193 = vmatpush1.msra.mxu0 0.0
      %1194 = vmatprep.subr.mxu0 0.0
      %1195 = vmatpush1.msra.mxu0 0.0
      %1196 = vmatprep.subr.mxu0 0.0
      %1197 = vmatpush1.msra.mxu0 0.0
      %1198 = vmatprep.subr.mxu0 0.0
      %1199 = vmatpush1.msra.mxu0 0.0
      %1200 = vmatprep.subr.mxu0 0.0
      %1201 = vmatpush1.msra.mxu0 0.0
      %1202 = vmatprep.subr.mxu0 0.0
      %1203 = vmatpush1.msra.mxu0 0.0
      %1204 = vmatprep.subr.mxu0 0.0
      %1205 = vmatpush1.msra.mxu0 0.0
      %1206 = vmatprep.subr.mxu0 0.0
      %1207 = vmatpush1.msra.mxu0 0.0
      %1208 = vmatprep.subr.mxu0 0.0
      %1209 = vmatpush1.msra.mxu0 0.0
      %1210 = vmatprep.subr.mxu0 0.0
      %1211 = vmatpush1.msra.mxu0 0.0
      %1212 = vmatprep.subr.mxu0 0.0
      %1213 = vmatpush1.msra.mxu0 0.0
      %1214 = vmatprep.subr.mxu0 0.0
      %1215 = vmatpush1.msra.mxu0 0.0
      %1216 = vmatprep.subr.mxu0 0.0
      %1217 = vmatpush1.msra.mxu0 0.0
      %1218 = vmatprep.mubr.f32.mxu0 0.0
      %1219 = vmatmul.mubr.f32.gmra.mrb[0].mxu0 %v1056
      %v1220 = vpop.f32.mrb[0].mxu0
      %v1221 = vadd.f32 0.0, %v1220
      %v1222 = vpop.f32.mrb[0].mxu0
      %1223 = vmatprep.mubr.f32.mxu0 0.0
      %1224 = vmatmul.mubr.f32.gmra.mrb[0].mxu0 %v1059
      %v1225 = vpop.f32.mrb[0].mxu0
      %v1226 = vadd.f32 0.0, %v1225
      %v1227 = vpop.f32.mrb[0].mxu0
      %1228 = vmatprep.mubr.f32.mxu0 0.0
      %1229 = vmatmul.mubr.f32.gmra.mrb[0].mxu0 %v1062
      %v1230 = vpop.f32.mrb[0].mxu0
      %v1231 = vadd.f32 0.0, %v1230
      %v1232 = vpop.f32.mrb[0].mxu0
      %1233 = vmatprep.mubr.f32.mxu0 0.0
      %1234 = vmatmul.mubr.f32.gmra.mrb[0].mxu0 %v1065
      %v1235 = vpop.f32.mrb[0].mxu0
      %v1236 = vadd.f32 0.0, %v1235
      %v1237 = vpop.f32.mrb[0].mxu0
      %1238 = vmatprep.mubr.f32.mxu0 0.0
      %1239 = vmatmul.mubr.f32.gmra.mrb[0].mxu0 %v1068
      %v1240 = vpop.f32.mrb[0].mxu0
      %v1241 = vadd.f32 0.0, %v1240
      %v1242 = vpop.f32.mrb[0].mxu0
      %1243 = vmatprep.mubr.f32.mxu0 0.0
      %1244 = vmatmul.mubr.f32.gmra.mrb[0].mxu0 %v1071
      %v1245 = vpop.f32.mrb[0].mxu0
      %v1246 = vadd.f32 0.0, %v1245
      %v1247 = vpop.f32.mrb[0].mxu0
      %1248 = vmatprep.mubr.f32.mxu0 0.0
      %1249 = vmatmul.mubr.f32.gmra.mrb[0].mxu0 %v1074
      %v1250 = vpop.f32.mrb[0].mxu0
      %v1251 = vadd.f32 0.0, %v1250
      %v1252 = vpop.f32.mrb[0].mxu0
      %1253 = vmatprep.mubr.f32.mxu0 0.0
      %1254 = vmatmul.mubr.f32.gmra.mrb[0].mxu0 %v1077
      %v1255 = vpop.f32.mrb[0].mxu0
      %v1256 = vadd.f32 0.0, %v1255
      %v1257 = vpop.f32.mrb[0].mxu0
      %1258 = vmatprep.mubr.f32.mxu0 0.0
      %1259 = vmatmul.mubr.f32.gmra.mrb[0].mxu0 %v1080
      %v1260 = vpop.f32.mrb[0].mxu0
      %v1261 = vadd.f32 0.0, %v1260
      %v1262 = vpop.f32.mrb[0].mxu0
      %1263 = vmatprep.mubr.f32.mxu0 0.0
      %1264 = vmatmul.mubr.f32.gmra.mrb[0].mxu0 %v1083
      %v1265 = vpop.f32.mrb[0].mxu0
      %v1266 = vadd.f32 0.0, %v1265
      %v1267 = vpop.f32.mrb[0].mxu0
      %1268 = vmatprep.mubr.f32.mxu0 0.0
      %1269 = vmatmul.mubr.f32.gmra.mrb[0].mxu0 %v1086
      %v1270 = vpop.f32.mrb[0].mxu0
      %v1271 = vadd.f32 0.0, %v1270
      %v1272 = vpop.f32.mrb[0].mxu0
      %1273 = vmatprep.mubr.f32.mxu0 0.0
      %1274 = vmatmul.mubr.f32.gmra.mrb[0].mxu0 %v1089
      %v1275 = vpop.f32.mrb[0].mxu0
      %v1276 = vadd.f32 0.0, %v1275
      %v1277 = vpop.f32.mrb[0].mxu0
      %1278 = vmatprep.mubr.f32.mxu0 0.0
      %1279 = vmatmul.mubr.f32.gmra.mrb[0].mxu0 %v1092
      %v1280 = vpop.f32.mrb[0].mxu0
      %v1281 = vadd.f32 0.0, %v1280
      %v1282 = vpop.f32.mrb[0].mxu0
      %1283 = vmatprep.mubr.f32.mxu0 0.0
      %1284 = vmatmul.mubr.f32.gmra.mrb[0].mxu0 %v1095
      %v1285 = vpop.f32.mrb[0].mxu0
      %v1286 = vadd.f32 0.0, %v1285
      %v1287 = vpop.f32.mrb[0].mxu0
      %1288 = vmatprep.mubr.f32.mxu0 0.0
      %1289 = vmatmul.mubr.f32.gmra.mrb[0].mxu0 %v1098
      %v1290 = vpop.f32.mrb[0].mxu0
      %v1291 = vadd.f32 0.0, %v1290
      %v1292 = vpop.f32.mrb[0].mxu0
      %1293 = vmatprep.mubr.f32.mxu0 0.0
      %1294 = vmatmul.mubr.f32.gmra.mrb[0].mxu0 %v1101
      %v1295 = vpop.f32.mrb[0].mxu0
      %v1296 = vadd.f32 0.0, %v1295
      %v1297 = vpop.f32.mrb[0].mxu0
      %1298 = vmatprep.mubr.f32.mxu0 0.0
      %1299 = vmatmul.mubr.f32.gmra.mrb[0].mxu0 %v1104
      %v1300 = vpop.f32.mrb[0].mxu0
      %v1301 = vadd.f32 0.0, %v1300
      %v1302 = vpop.f32.mrb[0].mxu0
      %1303 = vmatprep.mubr.f32.mxu0 0.0
      %1304 = vmatmul.mubr.f32.gmra.mrb[0].mxu0 %v1107
      %v1305 = vpop.f32.mrb[0].mxu0
      %v1306 = vadd.f32 0.0, %v1305
      %v1307 = vpop.f32.mrb[0].mxu0
      %1308 = vmatprep.mubr.f32.mxu0 0.0
      %1309 = vmatmul.mubr.f32.gmra.mrb[0].mxu0 %v1110
      %v1310 = vpop.f32.mrb[0].mxu0
      %v1311 = vadd.f32 0.0, %v1310
      %v1312 = vpop.f32.mrb[0].mxu0
      %1313 = vmatprep.mubr.f32.mxu0 0.0
      %1314 = vmatmul.mubr.f32.gmra.mrb[0].mxu0 %v1113
      %v1315 = vpop.f32.mrb[0].mxu0
      %v1316 = vadd.f32 0.0, %v1315
      %v1317 = vpop.f32.mrb[0].mxu0
      %1318 = vmatprep.mubr.f32.mxu0 0.0
      %1319 = vmatmul.mubr.f32.gmra.mrb[0].mxu0 %v1116
      %v1320 = vpop.f32.mrb[0].mxu0
      %v1321 = vadd.f32 0.0, %v1320
      %v1322 = vpop.f32.mrb[0].mxu0
      %1323 = vmatprep.mubr.f32.mxu0 0.0
      %1324 = vmatmul.mubr.f32.gmra.mrb[0].mxu0 %v1119
      %v1325 = vpop.f32.mrb[0].mxu0
      %v1326 = vadd.f32 0.0, %v1325
      %v1327 = vpop.f32.mrb[0].mxu0
      %1328 = vmatprep.mubr.f32.mxu0 0.0
      %1329 = vmatmul.mubr.f32.gmra.mrb[0].mxu0 %v1122
      %v1330 = vpop.f32.mrb[0].mxu0
      %v1331 = vadd.f32 0.0, %v1330
      %v1332 = vpop.f32.mrb[0].mxu0
      %1333 = vmatprep.mubr.f32.mxu0 0.0
      %1334 = vmatmul.mubr.f32.gmra.mrb[0].mxu0 %v1125
      %v1335 = vpop.f32.mrb[0].mxu0
      %v1336 = vadd.f32 0.0, %v1335
      %v1337 = vpop.f32.mrb[0].mxu0
      %1338 = vmatprep.mubr.f32.mxu0 0.0
      %1339 = vmatmul.mubr.f32.gmra.mrb[0].mxu0 %v1128
      %v1340 = vpop.f32.mrb[0].mxu0
      %v1341 = vadd.f32 0.0, %v1340
      %v1342 = vpop.f32.mrb[0].mxu0
      %1343 = vmatprep.mubr.f32.mxu0 0.0
      %1344 = vmatmul.mubr.f32.gmra.mrb[0].mxu0 %v1131
      %v1345 = vpop.f32.mrb[0].mxu0
      %v1346 = vadd.f32 0.0, %v1345
      %v1347 = vpop.f32.mrb[0].mxu0
      %1348 = vmatprep.mubr.f32.mxu0 0.0
      %1349 = vmatmul.mubr.f32.gmra.mrb[0].mxu0 %v1134
      %v1350 = vpop.f32.mrb[0].mxu0
      %v1351 = vadd.f32 0.0, %v1350
      %v1352 = vpop.f32.mrb[0].mxu0
      %1353 = vmatprep.mubr.f32.mxu0 0.0
      %1354 = vmatmul.mubr.f32.gmra.mrb[0].mxu0 %v1137
      %v1355 = vpop.f32.mrb[0].mxu0
      %v1356 = vadd.f32 0.0, %v1355
      %v1357 = vpop.f32.mrb[0].mxu0
      %1358 = vmatprep.mubr.f32.mxu0 0.0
      %1359 = vmatmul.mubr.f32.gmra.mrb[0].mxu0 %v1140
      %v1360 = vpop.f32.mrb[0].mxu0
      %v1361 = vadd.f32 0.0, %v1360
      %v1362 = vpop.f32.mrb[0].mxu0
      %1363 = vmatprep.mubr.f32.mxu0 0.0
      %1364 = vmatmul.mubr.f32.gmra.mrb[0].mxu0 %v1143
      %v1365 = vpop.f32.mrb[0].mxu0
      %v1366 = vadd.f32 0.0, %v1365
      %v1367 = vpop.f32.mrb[0].mxu0
      %1368 = vmatprep.mubr.f32.mxu0 0.0
      %1369 = vmatmul.mubr.f32.gmra.mrb[0].mxu0 %v1146
      %v1370 = vpop.f32.mrb[0].mxu0
      %v1371 = vadd.f32 0.0, %v1370
      %v1372 = vpop.f32.mrb[0].mxu0
      %1373 = vmatprep.mubr.f32.mxu0 0.0
      %1374 = vmatmul.mubr.f32.gmra.mrb[0].mxu0 %v1149
      %v1375 = vpop.f32.mrb[0].mxu0
      %v1376 = vadd.f32 0.0, %v1375
      %v1377 = vpop.f32.mrb[0].mxu0
      %1378 = vdwg.mxu0
      %v1379 = vld [vmem:[#allocation2] sm:$0xff]
      %v1380 = vld [vmem:[#allocation2 + $0x8] sm:$0xff]
      %v1381 = vld [vmem:[#allocation2 + $0x10] sm:$0xff]
      %v1382 = vld [vmem:[#allocation2 + $0x18] sm:$0xff]
      %v1383 = vld [vmem:[#allocation2 + $0x20] sm:$0xff]
      %v1384 = vld [vmem:[#allocation2 + $0x28] sm:$0xff]
      %v1385 = vld [vmem:[#allocation2 + $0x30] sm:$0xff]
      %v1386 = vld [vmem:[#allocation2 + $0x38] sm:$0xff]
      %v1387 = vld [vmem:[#allocation2 + $0x40] sm:$0xff]
      %v1388 = vld [vmem:[#allocation2 + $0x48] sm:$0xff]
      %v1389 = vld [vmem:[#allocation2 + $0x50] sm:$0xff]
      %v1390 = vld [vmem:[#allocation2 + $0x58] sm:$0xff]
      %v1391 = vld [vmem:[#allocation2 + $0x60] sm:$0xff]
      %v1392 = vld [vmem:[#allocation2 + $0x68] sm:$0xff]
      %v1393 = vld [vmem:[#allocation2 + $0x70] sm:$0xff]
      %v1394 = vld [vmem:[#allocation2 + $0x78] sm:$0xff]
      %v1395 = vld [vmem:[#allocation2 + $0x80] sm:$0xff]
      %v1396 = vld [vmem:[#allocation2 + $0x88] sm:$0xff]
      %v1397 = vld [vmem:[#allocation2 + $0x90] sm:$0xff]
      %v1398 = vld [vmem:[#allocation2 + $0x98] sm:$0xff]
      %v1399 = vld [vmem:[#allocation2 + $0xa0] sm:$0xff]
      %v1400 = vld [vmem:[#allocation2 + $0xa8] sm:$0xff]
      %v1401 = vld [vmem:[#allocation2 + $0xb0] sm:$0xff]
      %v1402 = vld [vmem:[#allocation2 + $0xb8] sm:$0xff]
      %v1403 = vld [vmem:[#allocation2 + $0xc0] sm:$0xff]
      %v1404 = vld [vmem:[#allocation2 + $0xc8] sm:$0xff]
      %v1405 = vld [vmem:[#allocation2 + $0xd0] sm:$0xff]
      %v1406 = vld [vmem:[#allocation2 + $0xd8] sm:$0xff]
      %v1407 = vld [vmem:[#allocation2 + $0xe0] sm:$0xff]
      %v1408 = vld [vmem:[#allocation2 + $0xe8] sm:$0xff]
      %v1409 = vld [vmem:[#allocation2 + $0xf0] sm:$0xff]
      %v1410 = vld [vmem:[#allocation2 + $0xf8] sm:$0xff]
      %v1411 = vadd.f32 %v1379, %v1221
      %v1412 = vadd.f32 %v1380, %v1226
      %v1413 = vadd.f32 %v1381, %v1231
      %v1414 = vadd.f32 %v1382, %v1236
      %v1415 = vadd.f32 %v1383, %v1241
      %v1416 = vadd.f32 %v1384, %v1246
      %v1417 = vadd.f32 %v1385, %v1251
      %v1418 = vadd.f32 %v1386, %v1256
      %v1419 = vadd.f32 %v1387, %v1261
      %v1420 = vadd.f32 %v1388, %v1266
      %v1421 = vadd.f32 %v1389, %v1271
      %v1422 = vadd.f32 %v1390, %v1276
      %v1423 = vadd.f32 %v1391, %v1281
      %v1424 = vadd.f32 %v1392, %v1286
      %v1425 = vadd.f32 %v1393, %v1291
      %v1426 = vadd.f32 %v1394, %v1296
      %v1427 = vadd.f32 %v1395, %v1301
      %v1428 = vadd.f32 %v1396, %v1306
      %v1429 = vadd.f32 %v1397, %v1311
      %v1430 = vadd.f32 %v1398, %v1316
      %v1431 = vadd.f32 %v1399, %v1321
      %v1432 = vadd.f32 %v1400, %v1326
      %v1433 = vadd.f32 %v1401, %v1331
      %v1434 = vadd.f32 %v1402, %v1336
      %v1435 = vadd.f32 %v1403, %v1341
      %v1436 = vadd.f32 %v1404, %v1346
      %v1437 = vadd.f32 %v1405, %v1351
      %v1438 = vadd.f32 %v1406, %v1356
      %v1439 = vadd.f32 %v1407, %v1361
      %v1440 = vadd.f32 %v1408, %v1366
      %v1441 = vadd.f32 %v1409, %v1371
      %v1442 = vadd.f32 %v1410, %v1376
      %1443 = vst [vmem:[#allocation2] sm:$0xff] %v1411
      %1444 = vst [vmem:[#allocation2 + $0x8] sm:$0xff] %v1412
      %1445 = vst [vmem:[#allocation2 + $0x10] sm:$0xff] %v1413
      %1446 = vst [vmem:[#allocation2 + $0x18] sm:$0xff] %v1414
      %1447 = vst [vmem:[#allocation2 + $0x20] sm:$0xff] %v1415
      %1448 = vst [vmem:[#allocation2 + $0x28] sm:$0xff] %v1416
      %1449 = vst [vmem:[#allocation2 + $0x30] sm:$0xff] %v1417
      %1450 = vst [vmem:[#allocation2 + $0x38] sm:$0xff] %v1418
      %1451 = vst [vmem:[#allocation2 + $0x40] sm:$0xff] %v1419
      %1452 = vst [vmem:[#allocation2 + $0x48] sm:$0xff] %v1420
      %1453 = vst [vmem:[#allocation2 + $0x50] sm:$0xff] %v1421
      %1454 = vst [vmem:[#allocation2 + $0x58] sm:$0xff] %v1422
      %1455 = vst [vmem:[#allocation2 + $0x60] sm:$0xff] %v1423
      %1456 = vst [vmem:[#allocation2 + $0x68] sm:$0xff] %v1424
      %1457 = vst [vmem:[#allocation2 + $0x70] sm:$0xff] %v1425
      %1458 = vst [vmem:[#allocation2 + $0x78] sm:$0xff] %v1426
      %1459 = vst [vmem:[#allocation2 + $0x80] sm:$0xff] %v1427
      %1460 = vst [vmem:[#allocation2 + $0x88] sm:$0xff] %v1428
      %1461 = vst [vmem:[#allocation2 + $0x90] sm:$0xff] %v1429
      %1462 = vst [vmem:[#allocation2 + $0x98] sm:$0xff] %v1430
      %1463 = vst [vmem:[#allocation2 + $0xa0] sm:$0xff] %v1431
      %1464 = vst [vmem:[#allocation2 + $0xa8] sm:$0xff] %v1432
      %1465 = vst [vmem:[#allocation2 + $0xb0] sm:$0xff] %v1433
      %1466 = vst [vmem:[#allocation2 + $0xb8] sm:$0xff] %v1434
      %1467 = vst [vmem:[#allocation2 + $0xc0] sm:$0xff] %v1435
      %1468 = vst [vmem:[#allocation2 + $0xc8] sm:$0xff] %v1436
      %1469 = vst [vmem:[#allocation2 + $0xd0] sm:$0xff] %v1437
      %1470 = vst [vmem:[#allocation2 + $0xd8] sm:$0xff] %v1438
      %1471 = vst [vmem:[#allocation2 + $0xe0] sm:$0xff] %v1439
      %1472 = vst [vmem:[#allocation2 + $0xe8] sm:$0xff] %v1440
      %1473 = vst [vmem:[#allocation2 + $0xf0] sm:$0xff] %v1441
      %1474 = vst [vmem:[#allocation2 + $0xf8] sm:$0xff] %v1442
      %s1475 = scalar_lea.vmem %s169, 24
      %v1476 = vld [vmem:[%s1475] sm:$0xff]
      %v1477 = vld [vmem:[%s1475 + $0x8] sm:$0xff]
      %v1478 = vld [vmem:[%s1475 + $0x18] sm:$0xff]
      %v1479 = vld [vmem:[%s1475 + $0x20] sm:$0xff]
      %v1480 = vld [vmem:[%s1475 + $0x30] sm:$0xff]
      %v1481 = vld [vmem:[%s1475 + $0x38] sm:$0xff]
      %v1482 = vld [vmem:[%s1475 + $0x48] sm:$0xff]
      %v1483 = vld [vmem:[%s1475 + $0x50] sm:$0xff]
      %v1484 = vld [vmem:[%s1475 + $0x60] sm:$0xff]
      %v1485 = vld [vmem:[%s1475 + $0x68] sm:$0xff]
      %v1486 = vld [vmem:[%s1475 + $0x78] sm:$0xff]
      %v1487 = vld [vmem:[%s1475 + $0x80] sm:$0xff]
      %v1488 = vld [vmem:[%s1475 + $0x90] sm:$0xff]
      %v1489 = vld [vmem:[%s1475 + $0x98] sm:$0xff]
      %v1490 = vld [vmem:[%s1475 + $0xa8] sm:$0xff]
      %v1491 = vld [vmem:[%s1475 + $0xb0] sm:$0xff]
      %v1492 = vld [vmem:[%s1475 + $0xc0] sm:$0xff]
      %v1493 = vld [vmem:[%s1475 + $0xc8] sm:$0xff]
      %v1494 = vld [vmem:[%s1475 + $0xd8] sm:$0xff]
      %v1495 = vld [vmem:[%s1475 + $0xe0] sm:$0xff]
      %v1496 = vld [vmem:[%s1475 + $0xf0] sm:$0xff]
      %v1497 = vld [vmem:[%s1475 + $0xf8] sm:$0xff]
      %v1498 = vld [vmem:[%s1475 + $0x108] sm:$0xff]
      %v1499 = vld [vmem:[%s1475 + $0x110] sm:$0xff]
      %v1500 = vld [vmem:[%s1475 + $0x120] sm:$0xff]
      %v1501 = vld [vmem:[%s1475 + $0x128] sm:$0xff]
      %v1502 = vld [vmem:[%s1475 + $0x138] sm:$0xff]
      %v1503 = vld [vmem:[%s1475 + $0x140] sm:$0xff]
      %v1504 = vld [vmem:[%s1475 + $0x150] sm:$0xff]
      %v1505 = vld [vmem:[%s1475 + $0x158] sm:$0xff]
      %v1506 = vld [vmem:[%s1475 + $0x168] sm:$0xff]
      %v1507 = vld [vmem:[%s1475 + $0x170] sm:$0xff]
      %s1508 = scalar_lea.vmem %s1, 12
      %v1509 = vld [vmem:[%s1508] sm:$0xf]
      %v1511 = vsel %vm209, %v1476, 0
      %v1514 = vsel %vm209, %v1477, 0
      %v1517 = vsel %vm209, %v1478, 0
      %v1520 = vsel %vm209, %v1479, 0
      %v1523 = vsel %vm209, %v1480, 0
      %v1526 = vsel %vm209, %v1481, 0
      %v1529 = vsel %vm209, %v1482, 0
      %v1532 = vsel %vm209, %v1483, 0
      %v1535 = vsel %vm209, %v1484, 0
      %v1538 = vsel %vm209, %v1485, 0
      %v1541 = vsel %vm209, %v1486, 0
      %v1544 = vsel %vm209, %v1487, 0
      %v1547 = vsel %vm209, %v1488, 0
      %v1550 = vsel %vm209, %v1489, 0
      %v1553 = vsel %vm209, %v1490, 0
      %v1556 = vsel %vm209, %v1491, 0
      %v1559 = vsel %vm209, %v1492, 0
      %v1562 = vsel %vm209, %v1493, 0
      %v1565 = vsel %vm209, %v1494, 0
      %v1568 = vsel %vm209, %v1495, 0
      %v1571 = vsel %vm209, %v1496, 0
      %v1574 = vsel %vm209, %v1497, 0
      %v1577 = vsel %vm209, %v1498, 0
      %v1580 = vsel %vm209, %v1499, 0
      %v1583 = vsel %vm209, %v1500, 0
      %v1586 = vsel %vm209, %v1501, 0
      %v1589 = vsel %vm209, %v1502, 0
      %v1592 = vsel %vm209, %v1503, 0
      %v1595 = vsel %vm209, %v1504, 0
      %v1598 = vsel %vm209, %v1505, 0
      %v1601 = vsel %vm209, %v1506, 0
      %v1604 = vsel %vm209, %v1507, 0
      %v1607 = vsel %vm306, %v1509, 0
      %1609 = vmatprep.subr.mxu0 0.0
      %1610 = vmatpush1.msra.mxu0 %v1607
      %1611 = vmatprep.subr.mxu0 0.0
      %1612 = vmatpush1.msra.mxu0 0.0
      %1613 = vmatprep.subr.mxu0 0.0
      %1614 = vmatpush1.msra.mxu0 0.0
      %1615 = vmatprep.subr.mxu0 0.0
      %1616 = vmatpush1.msra.mxu0 0.0
      %1617 = vmatprep.subr.mxu0 0.0
      %1618 = vmatpush1.msra.mxu0 0.0
      %1619 = vmatprep.subr.mxu0 0.0
      %1620 = vmatpush1.msra.mxu0 0.0
      %1621 = vmatprep.subr.mxu0 0.0
      %1622 = vmatpush1.msra.mxu0 0.0
      %1623 = vmatprep.subr.mxu0 0.0
      %1624 = vmatpush1.msra.mxu0 0.0
      %1625 = vmatprep.subr.mxu0 0.0
      %1626 = vmatpush1.msra.mxu0 0.0
      %1627 = vmatprep.subr.mxu0 0.0
      %1628 = vmatpush1.msra.mxu0 0.0
      %1629 = vmatprep.subr.mxu0 0.0
      %1630 = vmatpush1.msra.mxu0 0.0
      %1631 = vmatprep.subr.mxu0 0.0
      %1632 = vmatpush1.msra.mxu0 0.0
      %1633 = vmatprep.subr.mxu0 0.0
      %1634 = vmatpush1.msra.mxu0 0.0
      %1635 = vmatprep.subr.mxu0 0.0
      %1636 = vmatpush1.msra.mxu0 0.0
      %1637 = vmatprep.subr.mxu0 0.0
      %1638 = vmatpush1.msra.mxu0 0.0
      %1639 = vmatprep.subr.mxu0 0.0
      %1640 = vmatpush1.msra.mxu0 0.0
      %1641 = vmatprep.subr.mxu0 0.0
      %1642 = vmatpush1.msra.mxu0 0.0
      %1643 = vmatprep.subr.mxu0 0.0
      %1644 = vmatpush1.msra.mxu0 0.0
      %1645 = vmatprep.subr.mxu0 0.0
      %1646 = vmatpush1.msra.mxu0 0.0
      %1647 = vmatprep.subr.mxu0 0.0
      %1648 = vmatpush1.msra.mxu0 0.0
      %1649 = vmatprep.subr.mxu0 0.0
      %1650 = vmatpush1.msra.mxu0 0.0
      %1651 = vmatprep.subr.mxu0 0.0
      %1652 = vmatpush1.msra.mxu0 0.0
      %1653 = vmatprep.subr.mxu0 0.0
      %1654 = vmatpush1.msra.mxu0 0.0
      %1655 = vmatprep.subr.mxu0 0.0
      %1656 = vmatpush1.msra.mxu0 0.0
      %1657 = vmatprep.subr.mxu0 0.0
      %1658 = vmatpush1.msra.mxu0 0.0
      %1659 = vmatprep.subr.mxu0 0.0
      %1660 = vmatpush1.msra.mxu0 0.0
      %1661 = vmatprep.subr.mxu0 0.0
      %1662 = vmatpush1.msra.mxu0 0.0
      %1663 = vmatprep.subr.mxu0 0.0
      %1664 = vmatpush1.msra.mxu0 0.0
      %1665 = vmatprep.subr.mxu0 0.0
      %1666 = vmatpush1.msra.mxu0 0.0
      %1667 = vmatprep.subr.mxu0 0.0
      %1668 = vmatpush1.msra.mxu0 0.0
      %1669 = vmatprep.subr.mxu0 0.0
      %1670 = vmatpush1.msra.mxu0 0.0
      %1671 = vmatprep.subr.mxu0 0.0
      %1672 = vmatpush1.msra.mxu0 0.0
      %1673 = vmatprep.mubr.f32.mxu0 0.0
      %1674 = vmatmul.mubr.f32.gmra.mrb[0].mxu0 %v1511
      %v1675 = vpop.f32.mrb[0].mxu0
      %v1676 = vadd.f32 0.0, %v1675
      %v1677 = vpop.f32.mrb[0].mxu0
      %1678 = vmatprep.mubr.f32.mxu0 0.0
      %1679 = vmatmul.mubr.f32.gmra.mrb[0].mxu0 %v1514
      %v1680 = vpop.f32.mrb[0].mxu0
      %v1681 = vadd.f32 0.0, %v1680
      %v1682 = vpop.f32.mrb[0].mxu0
      %1683 = vmatprep.mubr.f32.mxu0 0.0
      %1684 = vmatmul.mubr.f32.gmra.mrb[0].mxu0 %v1517
      %v1685 = vpop.f32.mrb[0].mxu0
      %v1686 = vadd.f32 0.0, %v1685
      %v1687 = vpop.f32.mrb[0].mxu0
      %1688 = vmatprep.mubr.f32.mxu0 0.0
      %1689 = vmatmul.mubr.f32.gmra.mrb[0].mxu0 %v1520
      %v1690 = vpop.f32.mrb[0].mxu0
      %v1691 = vadd.f32 0.0, %v1690
      %v1692 = vpop.f32.mrb[0].mxu0
      %1693 = vmatprep.mubr.f32.mxu0 0.0
      %1694 = vmatmul.mubr.f32.gmra.mrb[0].mxu0 %v1523
      %v1695 = vpop.f32.mrb[0].mxu0
      %v1696 = vadd.f32 0.0, %v1695
      %v1697 = vpop.f32.mrb[0].mxu0
      %1698 = vmatprep.mubr.f32.mxu0 0.0
      %1699 = vmatmul.mubr.f32.gmra.mrb[0].mxu0 %v1526
      %v1700 = vpop.f32.mrb[0].mxu0
      %v1701 = vadd.f32 0.0, %v1700
      %v1702 = vpop.f32.mrb[0].mxu0
      %1703 = vmatprep.mubr.f32.mxu0 0.0
      %1704 = vmatmul.mubr.f32.gmra.mrb[0].mxu0 %v1529
      %v1705 = vpop.f32.mrb[0].mxu0
      %v1706 = vadd.f32 0.0, %v1705
      %v1707 = vpop.f32.mrb[0].mxu0
      %1708 = vmatprep.mubr.f32.mxu0 0.0
      %1709 = vmatmul.mubr.f32.gmra.mrb[0].mxu0 %v1532
      %v1710 = vpop.f32.mrb[0].mxu0
      %v1711 = vadd.f32 0.0, %v1710
      %v1712 = vpop.f32.mrb[0].mxu0
      %1713 = vmatprep.mubr.f32.mxu0 0.0
      %1714 = vmatmul.mubr.f32.gmra.mrb[0].mxu0 %v1535
      %v1715 = vpop.f32.mrb[0].mxu0
      %v1716 = vadd.f32 0.0, %v1715
      %v1717 = vpop.f32.mrb[0].mxu0
      %1718 = vmatprep.mubr.f32.mxu0 0.0
      %1719 = vmatmul.mubr.f32.gmra.mrb[0].mxu0 %v1538
      %v1720 = vpop.f32.mrb[0].mxu0
      %v1721 = vadd.f32 0.0, %v1720
      %v1722 = vpop.f32.mrb[0].mxu0
      %1723 = vmatprep.mubr.f32.mxu0 0.0
      %1724 = vmatmul.mubr.f32.gmra.mrb[0].mxu0 %v1541
      %v1725 = vpop.f32.mrb[0].mxu0
      %v1726 = vadd.f32 0.0, %v1725
      %v1727 = vpop.f32.mrb[0].mxu0
      %1728 = vmatprep.mubr.f32.mxu0 0.0
      %1729 = vmatmul.mubr.f32.gmra.mrb[0].mxu0 %v1544
      %v1730 = vpop.f32.mrb[0].mxu0
      %v1731 = vadd.f32 0.0, %v1730
      %v1732 = vpop.f32.mrb[0].mxu0
      %1733 = vmatprep.mubr.f32.mxu0 0.0
      %1734 = vmatmul.mubr.f32.gmra.mrb[0].mxu0 %v1547
      %v1735 = vpop.f32.mrb[0].mxu0
      %v1736 = vadd.f32 0.0, %v1735
      %v1737 = vpop.f32.mrb[0].mxu0
      %1738 = vmatprep.mubr.f32.mxu0 0.0
      %1739 = vmatmul.mubr.f32.gmra.mrb[0].mxu0 %v1550
      %v1740 = vpop.f32.mrb[0].mxu0
      %v1741 = vadd.f32 0.0, %v1740
      %v1742 = vpop.f32.mrb[0].mxu0
      %1743 = vmatprep.mubr.f32.mxu0 0.0
      %1744 = vmatmul.mubr.f32.gmra.mrb[0].mxu0 %v1553
      %v1745 = vpop.f32.mrb[0].mxu0
      %v1746 = vadd.f32 0.0, %v1745
      %v1747 = vpop.f32.mrb[0].mxu0
      %1748 = vmatprep.mubr.f32.mxu0 0.0
      %1749 = vmatmul.mubr.f32.gmra.mrb[0].mxu0 %v1556
      %v1750 = vpop.f32.mrb[0].mxu0
      %v1751 = vadd.f32 0.0, %v1750
      %v1752 = vpop.f32.mrb[0].mxu0
      %1753 = vmatprep.mubr.f32.mxu0 0.0
      %1754 = vmatmul.mubr.f32.gmra.mrb[0].mxu0 %v1559
      %v1755 = vpop.f32.mrb[0].mxu0
      %v1756 = vadd.f32 0.0, %v1755
      %v1757 = vpop.f32.mrb[0].mxu0
      %1758 = vmatprep.mubr.f32.mxu0 0.0
      %1759 = vmatmul.mubr.f32.gmra.mrb[0].mxu0 %v1562
      %v1760 = vpop.f32.mrb[0].mxu0
      %v1761 = vadd.f32 0.0, %v1760
      %v1762 = vpop.f32.mrb[0].mxu0
      %1763 = vmatprep.mubr.f32.mxu0 0.0
      %1764 = vmatmul.mubr.f32.gmra.mrb[0].mxu0 %v1565
      %v1765 = vpop.f32.mrb[0].mxu0
      %v1766 = vadd.f32 0.0, %v1765
      %v1767 = vpop.f32.mrb[0].mxu0
      %1768 = vmatprep.mubr.f32.mxu0 0.0
      %1769 = vmatmul.mubr.f32.gmra.mrb[0].mxu0 %v1568
      %v1770 = vpop.f32.mrb[0].mxu0
      %v1771 = vadd.f32 0.0, %v1770
      %v1772 = vpop.f32.mrb[0].mxu0
      %1773 = vmatprep.mubr.f32.mxu0 0.0
      %1774 = vmatmul.mubr.f32.gmra.mrb[0].mxu0 %v1571
      %v1775 = vpop.f32.mrb[0].mxu0
      %v1776 = vadd.f32 0.0, %v1775
      %v1777 = vpop.f32.mrb[0].mxu0
      %1778 = vmatprep.mubr.f32.mxu0 0.0
      %1779 = vmatmul.mubr.f32.gmra.mrb[0].mxu0 %v1574
      %v1780 = vpop.f32.mrb[0].mxu0
      %v1781 = vadd.f32 0.0, %v1780
      %v1782 = vpop.f32.mrb[0].mxu0
      %1783 = vmatprep.mubr.f32.mxu0 0.0
      %1784 = vmatmul.mubr.f32.gmra.mrb[0].mxu0 %v1577
      %v1785 = vpop.f32.mrb[0].mxu0
      %v1786 = vadd.f32 0.0, %v1785
      %v1787 = vpop.f32.mrb[0].mxu0
      %1788 = vmatprep.mubr.f32.mxu0 0.0
      %1789 = vmatmul.mubr.f32.gmra.mrb[0].mxu0 %v1580
      %v1790 = vpop.f32.mrb[0].mxu0
      %v1791 = vadd.f32 0.0, %v1790
      %v1792 = vpop.f32.mrb[0].mxu0
      %1793 = vmatprep.mubr.f32.mxu0 0.0
      %1794 = vmatmul.mubr.f32.gmra.mrb[0].mxu0 %v1583
      %v1795 = vpop.f32.mrb[0].mxu0
      %v1796 = vadd.f32 0.0, %v1795
      %v1797 = vpop.f32.mrb[0].mxu0
      %1798 = vmatprep.mubr.f32.mxu0 0.0
      %1799 = vmatmul.mubr.f32.gmra.mrb[0].mxu0 %v1586
      %v1800 = vpop.f32.mrb[0].mxu0
      %v1801 = vadd.f32 0.0, %v1800
      %v1802 = vpop.f32.mrb[0].mxu0
      %1803 = vmatprep.mubr.f32.mxu0 0.0
      %1804 = vmatmul.mubr.f32.gmra.mrb[0].mxu0 %v1589
      %v1805 = vpop.f32.mrb[0].mxu0
      %v1806 = vadd.f32 0.0, %v1805
      %v1807 = vpop.f32.mrb[0].mxu0
      %1808 = vmatprep.mubr.f32.mxu0 0.0
      %1809 = vmatmul.mubr.f32.gmra.mrb[0].mxu0 %v1592
      %v1810 = vpop.f32.mrb[0].mxu0
      %v1811 = vadd.f32 0.0, %v1810
      %v1812 = vpop.f32.mrb[0].mxu0
      %1813 = vmatprep.mubr.f32.mxu0 0.0
      %1814 = vmatmul.mubr.f32.gmra.mrb[0].mxu0 %v1595
      %v1815 = vpop.f32.mrb[0].mxu0
      %v1816 = vadd.f32 0.0, %v1815
      %v1817 = vpop.f32.mrb[0].mxu0
      %1818 = vmatprep.mubr.f32.mxu0 0.0
      %1819 = vmatmul.mubr.f32.gmra.mrb[0].mxu0 %v1598
      %v1820 = vpop.f32.mrb[0].mxu0
      %v1821 = vadd.f32 0.0, %v1820
      %v1822 = vpop.f32.mrb[0].mxu0
      %1823 = vmatprep.mubr.f32.mxu0 0.0
      %1824 = vmatmul.mubr.f32.gmra.mrb[0].mxu0 %v1601
      %v1825 = vpop.f32.mrb[0].mxu0
      %v1826 = vadd.f32 0.0, %v1825
      %v1827 = vpop.f32.mrb[0].mxu0
      %1828 = vmatprep.mubr.f32.mxu0 0.0
      %1829 = vmatmul.mubr.f32.gmra.mrb[0].mxu0 %v1604
      %v1830 = vpop.f32.mrb[0].mxu0
      %v1831 = vadd.f32 0.0, %v1830
      %v1832 = vpop.f32.mrb[0].mxu0
      %1833 = vdwg.mxu0
      %v1834 = vld [vmem:[#allocation2] sm:$0xff]
      %v1835 = vld [vmem:[#allocation2 + $0x8] sm:$0xff]
      %v1836 = vld [vmem:[#allocation2 + $0x10] sm:$0xff]
      %v1837 = vld [vmem:[#allocation2 + $0x18] sm:$0xff]
      %v1838 = vld [vmem:[#allocation2 + $0x20] sm:$0xff]
      %v1839 = vld [vmem:[#allocation2 + $0x28] sm:$0xff]
      %v1840 = vld [vmem:[#allocation2 + $0x30] sm:$0xff]
      %v1841 = vld [vmem:[#allocation2 + $0x38] sm:$0xff]
      %v1842 = vld [vmem:[#allocation2 + $0x40] sm:$0xff]
      %v1843 = vld [vmem:[#allocation2 + $0x48] sm:$0xff]
      %v1844 = vld [vmem:[#allocation2 + $0x50] sm:$0xff]
      %v1845 = vld [vmem:[#allocation2 + $0x58] sm:$0xff]
      %v1846 = vld [vmem:[#allocation2 + $0x60] sm:$0xff]
      %v1847 = vld [vmem:[#allocation2 + $0x68] sm:$0xff]
      %v1848 = vld [vmem:[#allocation2 + $0x70] sm:$0xff]
      %v1849 = vld [vmem:[#allocation2 + $0x78] sm:$0xff]
      %v1850 = vld [vmem:[#allocation2 + $0x80] sm:$0xff]
      %v1851 = vld [vmem:[#allocation2 + $0x88] sm:$0xff]
      %v1852 = vld [vmem:[#allocation2 + $0x90] sm:$0xff]
      %v1853 = vld [vmem:[#allocation2 + $0x98] sm:$0xff]
      %v1854 = vld [vmem:[#allocation2 + $0xa0] sm:$0xff]
      %v1855 = vld [vmem:[#allocation2 + $0xa8] sm:$0xff]
      %v1856 = vld [vmem:[#allocation2 + $0xb0] sm:$0xff]
      %v1857 = vld [vmem:[#allocation2 + $0xb8] sm:$0xff]
      %v1858 = vld [vmem:[#allocation2 + $0xc0] sm:$0xff]
      %v1859 = vld [vmem:[#allocation2 + $0xc8] sm:$0xff]
      %v1860 = vld [vmem:[#allocation2 + $0xd0] sm:$0xff]
      %v1861 = vld [vmem:[#allocation2 + $0xd8] sm:$0xff]
      %v1862 = vld [vmem:[#allocation2 + $0xe0] sm:$0xff]
      %v1863 = vld [vmem:[#allocation2 + $0xe8] sm:$0xff]
      %v1864 = vld [vmem:[#allocation2 + $0xf0] sm:$0xff]
      %v1865 = vld [vmem:[#allocation2 + $0xf8] sm:$0xff]
      %v1866 = vadd.f32 %v1834, %v1676
      %v1867 = vadd.f32 %v1835, %v1681
      %v1868 = vadd.f32 %v1836, %v1686
      %v1869 = vadd.f32 %v1837, %v1691
      %v1870 = vadd.f32 %v1838, %v1696
      %v1871 = vadd.f32 %v1839, %v1701
      %v1872 = vadd.f32 %v1840, %v1706
      %v1873 = vadd.f32 %v1841, %v1711
      %v1874 = vadd.f32 %v1842, %v1716
      %v1875 = vadd.f32 %v1843, %v1721
      %v1876 = vadd.f32 %v1844, %v1726
      %v1877 = vadd.f32 %v1845, %v1731
      %v1878 = vadd.f32 %v1846, %v1736
      %v1879 = vadd.f32 %v1847, %v1741
      %v1880 = vadd.f32 %v1848, %v1746
      %v1881 = vadd.f32 %v1849, %v1751
      %v1882 = vadd.f32 %v1850, %v1756
      %v1883 = vadd.f32 %v1851, %v1761
      %v1884 = vadd.f32 %v1852, %v1766
      %v1885 = vadd.f32 %v1853, %v1771
      %v1886 = vadd.f32 %v1854, %v1776
      %v1887 = vadd.f32 %v1855, %v1781
      %v1888 = vadd.f32 %v1856, %v1786
      %v1889 = vadd.f32 %v1857, %v1791
      %v1890 = vadd.f32 %v1858, %v1796
      %v1891 = vadd.f32 %v1859, %v1801
      %v1892 = vadd.f32 %v1860, %v1806
      %v1893 = vadd.f32 %v1861, %v1811
      %v1894 = vadd.f32 %v1862, %v1816
      %v1895 = vadd.f32 %v1863, %v1821
      %v1896 = vadd.f32 %v1864, %v1826
      %v1897 = vadd.f32 %v1865, %v1831
      %1898 = vst [vmem:[#allocation2] sm:$0xff] %v1866
      %1899 = vst [vmem:[#allocation2 + $0x8] sm:$0xff] %v1867
      %1900 = vst [vmem:[#allocation2 + $0x10] sm:$0xff] %v1868
      %1901 = vst [vmem:[#allocation2 + $0x18] sm:$0xff] %v1869
      %1902 = vst [vmem:[#allocation2 + $0x20] sm:$0xff] %v1870
      %1903 = vst [vmem:[#allocation2 + $0x28] sm:$0xff] %v1871
      %1904 = vst [vmem:[#allocation2 + $0x30] sm:$0xff] %v1872
      %1905 = vst [vmem:[#allocation2 + $0x38] sm:$0xff] %v1873
      %1906 = vst [vmem:[#allocation2 + $0x40] sm:$0xff] %v1874
      %1907 = vst [vmem:[#allocation2 + $0x48] sm:$0xff] %v1875
      %1908 = vst [vmem:[#allocation2 + $0x50] sm:$0xff] %v1876
      %1909 = vst [vmem:[#allocation2 + $0x58] sm:$0xff] %v1877
      %1910 = vst [vmem:[#allocation2 + $0x60] sm:$0xff] %v1878
      %1911 = vst [vmem:[#allocation2 + $0x68] sm:$0xff] %v1879
      %1912 = vst [vmem:[#allocation2 + $0x70] sm:$0xff] %v1880
      %1913 = vst [vmem:[#allocation2 + $0x78] sm:$0xff] %v1881
      %1914 = vst [vmem:[#allocation2 + $0x80] sm:$0xff] %v1882
      %1915 = vst [vmem:[#allocation2 + $0x88] sm:$0xff] %v1883
      %1916 = vst [vmem:[#allocation2 + $0x90] sm:$0xff] %v1884
      %1917 = vst [vmem:[#allocation2 + $0x98] sm:$0xff] %v1885
      %1918 = vst [vmem:[#allocation2 + $0xa0] sm:$0xff] %v1886
      %1919 = vst [vmem:[#allocation2 + $0xa8] sm:$0xff] %v1887
      %1920 = vst [vmem:[#allocation2 + $0xb0] sm:$0xff] %v1888
      %1921 = vst [vmem:[#allocation2 + $0xb8] sm:$0xff] %v1889
      %1922 = vst [vmem:[#allocation2 + $0xc0] sm:$0xff] %v1890
      %1923 = vst [vmem:[#allocation2 + $0xc8] sm:$0xff] %v1891
      %1924 = vst [vmem:[#allocation2 + $0xd0] sm:$0xff] %v1892
      %1925 = vst [vmem:[#allocation2 + $0xd8] sm:$0xff] %v1893
      %1926 = vst [vmem:[#allocation2 + $0xe0] sm:$0xff] %v1894
      %1927 = vst [vmem:[#allocation2 + $0xe8] sm:$0xff] %v1895
      %1928 = vst [vmem:[#allocation2 + $0xf0] sm:$0xff] %v1896
      %1929 = vst [vmem:[#allocation2 + $0xf8] sm:$0xff] %v1897
      %v1930 = vld [vmem:[%s1475 + $0x1] sm:$0xff]
      %v1931 = vld [vmem:[%s1475 + $0x9] sm:$0xff]
      %v1932 = vld [vmem:[%s1475 + $0x19] sm:$0xff]
      %v1933 = vld [vmem:[%s1475 + $0x21] sm:$0xff]
      %v1934 = vld [vmem:[%s1475 + $0x31] sm:$0xff]
      %v1935 = vld [vmem:[%s1475 + $0x39] sm:$0xff]
      %v1936 = vld [vmem:[%s1475 + $0x49] sm:$0xff]
      %v1937 = vld [vmem:[%s1475 + $0x51] sm:$0xff]
      %v1938 = vld [vmem:[%s1475 + $0x61] sm:$0xff]
      %v1939 = vld [vmem:[%s1475 + $0x69] sm:$0xff]
      %v1940 = vld [vmem:[%s1475 + $0x79] sm:$0xff]
      %v1941 = vld [vmem:[%s1475 + $0x81] sm:$0xff]
      %v1942 = vld [vmem:[%s1475 + $0x91] sm:$0xff]
      %v1943 = vld [vmem:[%s1475 + $0x99] sm:$0xff]
      %v1944 = vld [vmem:[%s1475 + $0xa9] sm:$0xff]
      %v1945 = vld [vmem:[%s1475 + $0xb1] sm:$0xff]
      %v1946 = vld [vmem:[%s1475 + $0xc1] sm:$0xff]
      %v1947 = vld [vmem:[%s1475 + $0xc9] sm:$0xff]
      %v1948 = vld [vmem:[%s1475 + $0xd9] sm:$0xff]
      %v1949 = vld [vmem:[%s1475 + $0xe1] sm:$0xff]
      %v1950 = vld [vmem:[%s1475 + $0xf1] sm:$0xff]
      %v1951 = vld [vmem:[%s1475 + $0xf9] sm:$0xff]
      %v1952 = vld [vmem:[%s1475 + $0x109] sm:$0xff]
      %v1953 = vld [vmem:[%s1475 + $0x111] sm:$0xff]
      %v1954 = vld [vmem:[%s1475 + $0x121] sm:$0xff]
      %v1955 = vld [vmem:[%s1475 + $0x129] sm:$0xff]
      %v1956 = vld [vmem:[%s1475 + $0x139] sm:$0xff]
      %v1957 = vld [vmem:[%s1475 + $0x141] sm:$0xff]
      %v1958 = vld [vmem:[%s1475 + $0x151] sm:$0xff]
      %v1959 = vld [vmem:[%s1475 + $0x159] sm:$0xff]
      %v1960 = vld [vmem:[%s1475 + $0x169] sm:$0xff]
      %v1961 = vld [vmem:[%s1475 + $0x171] sm:$0xff]
      %s1962 = scalar_lea.vmem %s1, 16
      %v1963 = vld [vmem:[%s1962] sm:$0xf]
      %v1965 = vsel %vm209, %v1930, 0
      %v1968 = vsel %vm209, %v1931, 0
      %v1971 = vsel %vm209, %v1932, 0
      %v1974 = vsel %vm209, %v1933, 0
      %v1977 = vsel %vm209, %v1934, 0
      %v1980 = vsel %vm209, %v1935, 0
      %v1983 = vsel %vm209, %v1936, 0
      %v1986 = vsel %vm209, %v1937, 0
      %v1989 = vsel %vm209, %v1938, 0
      %v1992 = vsel %vm209, %v1939, 0
      %v1995 = vsel %vm209, %v1940, 0
      %v1998 = vsel %vm209, %v1941, 0
      %v2001 = vsel %vm209, %v1942, 0
      %v2004 = vsel %vm209, %v1943, 0
      %v2007 = vsel %vm209, %v1944, 0
      %v2010 = vsel %vm209, %v1945, 0
      %v2013 = vsel %vm209, %v1946, 0
      %v2016 = vsel %vm209, %v1947, 0
      %v2019 = vsel %vm209, %v1948, 0
      %v2022 = vsel %vm209, %v1949, 0
      %v2025 = vsel %vm209, %v1950, 0
      %v2028 = vsel %vm209, %v1951, 0
      %v2031 = vsel %vm209, %v1952, 0
      %v2034 = vsel %vm209, %v1953, 0
      %v2037 = vsel %vm209, %v1954, 0
      %v2040 = vsel %vm209, %v1955, 0
      %v2043 = vsel %vm209, %v1956, 0
      %v2046 = vsel %vm209, %v1957, 0
      %v2049 = vsel %vm209, %v1958, 0
      %v2052 = vsel %vm209, %v1959, 0
      %v2055 = vsel %vm209, %v1960, 0
      %v2058 = vsel %vm209, %v1961, 0
      %v2061 = vsel %vm306, %v1963, 0
      %2063 = vmatprep.subr.mxu0 0.0
      %2064 = vmatpush1.msra.mxu0 %v2061
      %2065 = vmatprep.subr.mxu0 0.0
      %2066 = vmatpush1.msra.mxu0 0.0
      %2067 = vmatprep.subr.mxu0 0.0
      %2068 = vmatpush1.msra.mxu0 0.0
      %2069 = vmatprep.subr.mxu0 0.0
      %2070 = vmatpush1.msra.mxu0 0.0
      %2071 = vmatprep.subr.mxu0 0.0
      %2072 = vmatpush1.msra.mxu0 0.0
      %2073 = vmatprep.subr.mxu0 0.0
      %2074 = vmatpush1.msra.mxu0 0.0
      %2075 = vmatprep.subr.mxu0 0.0
      %2076 = vmatpush1.msra.mxu0 0.0
      %2077 = vmatprep.subr.mxu0 0.0
      %2078 = vmatpush1.msra.mxu0 0.0
      %2079 = vmatprep.subr.mxu0 0.0
      %2080 = vmatpush1.msra.mxu0 0.0
      %2081 = vmatprep.subr.mxu0 0.0
      %2082 = vmatpush1.msra.mxu0 0.0
      %2083 = vmatprep.subr.mxu0 0.0
      %2084 = vmatpush1.msra.mxu0 0.0
      %2085 = vmatprep.subr.mxu0 0.0
      %2086 = vmatpush1.msra.mxu0 0.0
      %2087 = vmatprep.subr.mxu0 0.0
      %2088 = vmatpush1.msra.mxu0 0.0
      %2089 = vmatprep.subr.mxu0 0.0
      %2090 = vmatpush1.msra.mxu0 0.0
      %2091 = vmatprep.subr.mxu0 0.0
      %2092 = vmatpush1.msra.mxu0 0.0
      %2093 = vmatprep.subr.mxu0 0.0
      %2094 = vmatpush1.msra.mxu0 0.0
      %2095 = vmatprep.subr.mxu0 0.0
      %2096 = vmatpush1.msra.mxu0 0.0
      %2097 = vmatprep.subr.mxu0 0.0
      %2098 = vmatpush1.msra.mxu0 0.0
      %2099 = vmatprep.subr.mxu0 0.0
      %2100 = vmatpush1.msra.mxu0 0.0
      %2101 = vmatprep.subr.mxu0 0.0
      %2102 = vmatpush1.msra.mxu0 0.0
      %2103 = vmatprep.subr.mxu0 0.0
      %2104 = vmatpush1.msra.mxu0 0.0
      %2105 = vmatprep.subr.mxu0 0.0
      %2106 = vmatpush1.msra.mxu0 0.0
      %2107 = vmatprep.subr.mxu0 0.0
      %2108 = vmatpush1.msra.mxu0 0.0
      %2109 = vmatprep.subr.mxu0 0.0
      %2110 = vmatpush1.msra.mxu0 0.0
      %2111 = vmatprep.subr.mxu0 0.0
      %2112 = vmatpush1.msra.mxu0 0.0
      %2113 = vmatprep.subr.mxu0 0.0
      %2114 = vmatpush1.msra.mxu0 0.0
      %2115 = vmatprep.subr.mxu0 0.0
      %2116 = vmatpush1.msra.mxu0 0.0
      %2117 = vmatprep.subr.mxu0 0.0
      %2118 = vmatpush1.msra.mxu0 0.0
      %2119 = vmatprep.subr.mxu0 0.0
      %2120 = vmatpush1.msra.mxu0 0.0
      %2121 = vmatprep.subr.mxu0 0.0
      %2122 = vmatpush1.msra.mxu0 0.0
      %2123 = vmatprep.subr.mxu0 0.0
      %2124 = vmatpush1.msra.mxu0 0.0
      %2125 = vmatprep.subr.mxu0 0.0
      %2126 = vmatpush1.msra.mxu0 0.0
      %2127 = vmatprep.mubr.f32.mxu0 0.0
      %2128 = vmatmul.mubr.f32.gmra.mrb[0].mxu0 %v1965
      %v2129 = vpop.f32.mrb[0].mxu0
      %v2130 = vadd.f32 0.0, %v2129
      %v2131 = vpop.f32.mrb[0].mxu0
      %2132 = vmatprep.mubr.f32.mxu0 0.0
      %2133 = vmatmul.mubr.f32.gmra.mrb[0].mxu0 %v1968
      %v2134 = vpop.f32.mrb[0].mxu0
      %v2135 = vadd.f32 0.0, %v2134
      %v2136 = vpop.f32.mrb[0].mxu0
      %2137 = vmatprep.mubr.f32.mxu0 0.0
      %2138 = vmatmul.mubr.f32.gmra.mrb[0].mxu0 %v1971
      %v2139 = vpop.f32.mrb[0].mxu0
      %v2140 = vadd.f32 0.0, %v2139
      %v2141 = vpop.f32.mrb[0].mxu0
      %2142 = vmatprep.mubr.f32.mxu0 0.0
      %2143 = vmatmul.mubr.f32.gmra.mrb[0].mxu0 %v1974
      %v2144 = vpop.f32.mrb[0].mxu0
      %v2145 = vadd.f32 0.0, %v2144
      %v2146 = vpop.f32.mrb[0].mxu0
      %2147 = vmatprep.mubr.f32.mxu0 0.0
      %2148 = vmatmul.mubr.f32.gmra.mrb[0].mxu0 %v1977
      %v2149 = vpop.f32.mrb[0].mxu0
      %v2150 = vadd.f32 0.0, %v2149
      %v2151 = vpop.f32.mrb[0].mxu0
      %2152 = vmatprep.mubr.f32.mxu0 0.0
      %2153 = vmatmul.mubr.f32.gmra.mrb[0].mxu0 %v1980
      %v2154 = vpop.f32.mrb[0].mxu0
      %v2155 = vadd.f32 0.0, %v2154
      %v2156 = vpop.f32.mrb[0].mxu0
      %2157 = vmatprep.mubr.f32.mxu0 0.0
      %2158 = vmatmul.mubr.f32.gmra.mrb[0].mxu0 %v1983
      %v2159 = vpop.f32.mrb[0].mxu0
      %v2160 = vadd.f32 0.0, %v2159
      %v2161 = vpop.f32.mrb[0].mxu0
      %2162 = vmatprep.mubr.f32.mxu0 0.0
      %2163 = vmatmul.mubr.f32.gmra.mrb[0].mxu0 %v1986
      %v2164 = vpop.f32.mrb[0].mxu0
      %v2165 = vadd.f32 0.0, %v2164
      %v2166 = vpop.f32.mrb[0].mxu0
      %2167 = vmatprep.mubr.f32.mxu0 0.0
      %2168 = vmatmul.mubr.f32.gmra.mrb[0].mxu0 %v1989
      %v2169 = vpop.f32.mrb[0].mxu0
      %v2170 = vadd.f32 0.0, %v2169
      %v2171 = vpop.f32.mrb[0].mxu0
      %2172 = vmatprep.mubr.f32.mxu0 0.0
      %2173 = vmatmul.mubr.f32.gmra.mrb[0].mxu0 %v1992
      %v2174 = vpop.f32.mrb[0].mxu0
      %v2175 = vadd.f32 0.0, %v2174
      %v2176 = vpop.f32.mrb[0].mxu0
      %2177 = vmatprep.mubr.f32.mxu0 0.0
      %2178 = vmatmul.mubr.f32.gmra.mrb[0].mxu0 %v1995
      %v2179 = vpop.f32.mrb[0].mxu0
      %v2180 = vadd.f32 0.0, %v2179
      %v2181 = vpop.f32.mrb[0].mxu0
      %2182 = vmatprep.mubr.f32.mxu0 0.0
      %2183 = vmatmul.mubr.f32.gmra.mrb[0].mxu0 %v1998
      %v2184 = vpop.f32.mrb[0].mxu0
      %v2185 = vadd.f32 0.0, %v2184
      %v2186 = vpop.f32.mrb[0].mxu0
      %2187 = vmatprep.mubr.f32.mxu0 0.0
      %2188 = vmatmul.mubr.f32.gmra.mrb[0].mxu0 %v2001
      %v2189 = vpop.f32.mrb[0].mxu0
      %v2190 = vadd.f32 0.0, %v2189
      %v2191 = vpop.f32.mrb[0].mxu0
      %2192 = vmatprep.mubr.f32.mxu0 0.0
      %2193 = vmatmul.mubr.f32.gmra.mrb[0].mxu0 %v2004
      %v2194 = vpop.f32.mrb[0].mxu0
      %v2195 = vadd.f32 0.0, %v2194
      %v2196 = vpop.f32.mrb[0].mxu0
      %2197 = vmatprep.mubr.f32.mxu0 0.0
      %2198 = vmatmul.mubr.f32.gmra.mrb[0].mxu0 %v2007
      %v2199 = vpop.f32.mrb[0].mxu0
      %v2200 = vadd.f32 0.0, %v2199
      %v2201 = vpop.f32.mrb[0].mxu0
      %2202 = vmatprep.mubr.f32.mxu0 0.0
      %2203 = vmatmul.mubr.f32.gmra.mrb[0].mxu0 %v2010
      %v2204 = vpop.f32.mrb[0].mxu0
      %v2205 = vadd.f32 0.0, %v2204
      %v2206 = vpop.f32.mrb[0].mxu0
      %2207 = vmatprep.mubr.f32.mxu0 0.0
      %2208 = vmatmul.mubr.f32.gmra.mrb[0].mxu0 %v2013
      %v2209 = vpop.f32.mrb[0].mxu0
      %v2210 = vadd.f32 0.0, %v2209
      %v2211 = vpop.f32.mrb[0].mxu0
      %2212 = vmatprep.mubr.f32.mxu0 0.0
      %2213 = vmatmul.mubr.f32.gmra.mrb[0].mxu0 %v2016
      %v2214 = vpop.f32.mrb[0].mxu0
      %v2215 = vadd.f32 0.0, %v2214
      %v2216 = vpop.f32.mrb[0].mxu0
      %2217 = vmatprep.mubr.f32.mxu0 0.0
      %2218 = vmatmul.mubr.f32.gmra.mrb[0].mxu0 %v2019
      %v2219 = vpop.f32.mrb[0].mxu0
      %v2220 = vadd.f32 0.0, %v2219
      %v2221 = vpop.f32.mrb[0].mxu0
      %2222 = vmatprep.mubr.f32.mxu0 0.0
      %2223 = vmatmul.mubr.f32.gmra.mrb[0].mxu0 %v2022
      %v2224 = vpop.f32.mrb[0].mxu0
      %v2225 = vadd.f32 0.0, %v2224
      %v2226 = vpop.f32.mrb[0].mxu0
      %2227 = vmatprep.mubr.f32.mxu0 0.0
      %2228 = vmatmul.mubr.f32.gmra.mrb[0].mxu0 %v2025
      %v2229 = vpop.f32.mrb[0].mxu0
      %v2230 = vadd.f32 0.0, %v2229
      %v2231 = vpop.f32.mrb[0].mxu0
      %2232 = vmatprep.mubr.f32.mxu0 0.0
      %2233 = vmatmul.mubr.f32.gmra.mrb[0].mxu0 %v2028
      %v2234 = vpop.f32.mrb[0].mxu0
      %v2235 = vadd.f32 0.0, %v2234
      %v2236 = vpop.f32.mrb[0].mxu0
      %2237 = vmatprep.mubr.f32.mxu0 0.0
      %2238 = vmatmul.mubr.f32.gmra.mrb[0].mxu0 %v2031
      %v2239 = vpop.f32.mrb[0].mxu0
      %v2240 = vadd.f32 0.0, %v2239
      %v2241 = vpop.f32.mrb[0].mxu0
      %2242 = vmatprep.mubr.f32.mxu0 0.0
      %2243 = vmatmul.mubr.f32.gmra.mrb[0].mxu0 %v2034
      %v2244 = vpop.f32.mrb[0].mxu0
      %v2245 = vadd.f32 0.0, %v2244
      %v2246 = vpop.f32.mrb[0].mxu0
      %2247 = vmatprep.mubr.f32.mxu0 0.0
      %2248 = vmatmul.mubr.f32.gmra.mrb[0].mxu0 %v2037
      %v2249 = vpop.f32.mrb[0].mxu0
      %v2250 = vadd.f32 0.0, %v2249
      %v2251 = vpop.f32.mrb[0].mxu0
      %2252 = vmatprep.mubr.f32.mxu0 0.0
      %2253 = vmatmul.mubr.f32.gmra.mrb[0].mxu0 %v2040
      %v2254 = vpop.f32.mrb[0].mxu0
      %v2255 = vadd.f32 0.0, %v2254
      %v2256 = vpop.f32.mrb[0].mxu0
      %2257 = vmatprep.mubr.f32.mxu0 0.0
      %2258 = vmatmul.mubr.f32.gmra.mrb[0].mxu0 %v2043
      %v2259 = vpop.f32.mrb[0].mxu0
      %v2260 = vadd.f32 0.0, %v2259
      %v2261 = vpop.f32.mrb[0].mxu0
      %2262 = vmatprep.mubr.f32.mxu0 0.0
      %2263 = vmatmul.mubr.f32.gmra.mrb[0].mxu0 %v2046
      %v2264 = vpop.f32.mrb[0].mxu0
      %v2265 = vadd.f32 0.0, %v2264
      %v2266 = vpop.f32.mrb[0].mxu0
      %2267 = vmatprep.mubr.f32.mxu0 0.0
      %2268 = vmatmul.mubr.f32.gmra.mrb[0].mxu0 %v2049
      %v2269 = vpop.f32.mrb[0].mxu0
      %v2270 = vadd.f32 0.0, %v2269
      %v2271 = vpop.f32.mrb[0].mxu0
      %2272 = vmatprep.mubr.f32.mxu0 0.0
      %2273 = vmatmul.mubr.f32.gmra.mrb[0].mxu0 %v2052
      %v2274 = vpop.f32.mrb[0].mxu0
      %v2275 = vadd.f32 0.0, %v2274
      %v2276 = vpop.f32.mrb[0].mxu0
      %2277 = vmatprep.mubr.f32.mxu0 0.0
      %2278 = vmatmul.mubr.f32.gmra.mrb[0].mxu0 %v2055
      %v2279 = vpop.f32.mrb[0].mxu0
      %v2280 = vadd.f32 0.0, %v2279
      %v2281 = vpop.f32.mrb[0].mxu0
      %2282 = vmatprep.mubr.f32.mxu0 0.0
      %2283 = vmatmul.mubr.f32.gmra.mrb[0].mxu0 %v2058
      %v2284 = vpop.f32.mrb[0].mxu0
      %v2285 = vadd.f32 0.0, %v2284
      %v2286 = vpop.f32.mrb[0].mxu0
      %2287 = vdwg.mxu0
      %v2288 = vld [vmem:[#allocation2] sm:$0xff]
      %v2289 = vld [vmem:[#allocation2 + $0x8] sm:$0xff]
      %v2290 = vld [vmem:[#allocation2 + $0x10] sm:$0xff]
      %v2291 = vld [vmem:[#allocation2 + $0x18] sm:$0xff]
      %v2292 = vld [vmem:[#allocation2 + $0x20] sm:$0xff]
      %v2293 = vld [vmem:[#allocation2 + $0x28] sm:$0xff]
      %v2294 = vld [vmem:[#allocation2 + $0x30] sm:$0xff]
      %v2295 = vld [vmem:[#allocation2 + $0x38] sm:$0xff]
      %v2296 = vld [vmem:[#allocation2 + $0x40] sm:$0xff]
      %v2297 = vld [vmem:[#allocation2 + $0x48] sm:$0xff]
      %v2298 = vld [vmem:[#allocation2 + $0x50] sm:$0xff]
      %v2299 = vld [vmem:[#allocation2 + $0x58] sm:$0xff]
      %v2300 = vld [vmem:[#allocation2 + $0x60] sm:$0xff]
      %v2301 = vld [vmem:[#allocation2 + $0x68] sm:$0xff]
      %v2302 = vld [vmem:[#allocation2 + $0x70] sm:$0xff]
      %v2303 = vld [vmem:[#allocation2 + $0x78] sm:$0xff]
      %v2304 = vld [vmem:[#allocation2 + $0x80] sm:$0xff]
      %v2305 = vld [vmem:[#allocation2 + $0x88] sm:$0xff]
      %v2306 = vld [vmem:[#allocation2 + $0x90] sm:$0xff]
      %v2307 = vld [vmem:[#allocation2 + $0x98] sm:$0xff]
      %v2308 = vld [vmem:[#allocation2 + $0xa0] sm:$0xff]
      %v2309 = vld [vmem:[#allocation2 + $0xa8] sm:$0xff]
      %v2310 = vld [vmem:[#allocation2 + $0xb0] sm:$0xff]
      %v2311 = vld [vmem:[#allocation2 + $0xb8] sm:$0xff]
      %v2312 = vld [vmem:[#allocation2 + $0xc0] sm:$0xff]
      %v2313 = vld [vmem:[#allocation2 + $0xc8] sm:$0xff]
      %v2314 = vld [vmem:[#allocation2 + $0xd0] sm:$0xff]
      %v2315 = vld [vmem:[#allocation2 + $0xd8] sm:$0xff]
      %v2316 = vld [vmem:[#allocation2 + $0xe0] sm:$0xff]
      %v2317 = vld [vmem:[#allocation2 + $0xe8] sm:$0xff]
      %v2318 = vld [vmem:[#allocation2 + $0xf0] sm:$0xff]
      %v2319 = vld [vmem:[#allocation2 + $0xf8] sm:$0xff]
      %v2320 = vadd.f32 %v2288, %v2130
      %v2321 = vadd.f32 %v2289, %v2135
      %v2322 = vadd.f32 %v2290, %v2140
      %v2323 = vadd.f32 %v2291, %v2145
      %v2324 = vadd.f32 %v2292, %v2150
      %v2325 = vadd.f32 %v2293, %v2155
      %v2326 = vadd.f32 %v2294, %v2160
      %v2327 = vadd.f32 %v2295, %v2165
      %v2328 = vadd.f32 %v2296, %v2170
      %v2329 = vadd.f32 %v2297, %v2175
      %v2330 = vadd.f32 %v2298, %v2180
      %v2331 = vadd.f32 %v2299, %v2185
      %v2332 = vadd.f32 %v2300, %v2190
      %v2333 = vadd.f32 %v2301, %v2195
      %v2334 = vadd.f32 %v2302, %v2200
      %v2335 = vadd.f32 %v2303, %v2205
      %v2336 = vadd.f32 %v2304, %v2210
      %v2337 = vadd.f32 %v2305, %v2215
      %v2338 = vadd.f32 %v2306, %v2220
      %v2339 = vadd.f32 %v2307, %v2225
      %v2340 = vadd.f32 %v2308, %v2230
      %v2341 = vadd.f32 %v2309, %v2235
      %v2342 = vadd.f32 %v2310, %v2240
      %v2343 = vadd.f32 %v2311, %v2245
      %v2344 = vadd.f32 %v2312, %v2250
      %v2345 = vadd.f32 %v2313, %v2255
      %v2346 = vadd.f32 %v2314, %v2260
      %v2347 = vadd.f32 %v2315, %v2265
      %v2348 = vadd.f32 %v2316, %v2270
      %v2349 = vadd.f32 %v2317, %v2275
      %v2350 = vadd.f32 %v2318, %v2280
      %v2351 = vadd.f32 %v2319, %v2285
      %2352 = vst [vmem:[#allocation2] sm:$0xff] %v2320
      %2353 = vst [vmem:[#allocation2 + $0x8] sm:$0xff] %v2321
      %2354 = vst [vmem:[#allocation2 + $0x10] sm:$0xff] %v2322
      %2355 = vst [vmem:[#allocation2 + $0x18] sm:$0xff] %v2323
      %2356 = vst [vmem:[#allocation2 + $0x20] sm:$0xff] %v2324
      %2357 = vst [vmem:[#allocation2 + $0x28] sm:$0xff] %v2325
      %2358 = vst [vmem:[#allocation2 + $0x30] sm:$0xff] %v2326
      %2359 = vst [vmem:[#allocation2 + $0x38] sm:$0xff] %v2327
      %2360 = vst [vmem:[#allocation2 + $0x40] sm:$0xff] %v2328
      %2361 = vst [vmem:[#allocation2 + $0x48] sm:$0xff] %v2329
      %2362 = vst [vmem:[#allocation2 + $0x50] sm:$0xff] %v2330
      %2363 = vst [vmem:[#allocation2 + $0x58] sm:$0xff] %v2331
      %2364 = vst [vmem:[#allocation2 + $0x60] sm:$0xff] %v2332
      %2365 = vst [vmem:[#allocation2 + $0x68] sm:$0xff] %v2333
      %2366 = vst [vmem:[#allocation2 + $0x70] sm:$0xff] %v2334
      %2367 = vst [vmem:[#allocation2 + $0x78] sm:$0xff] %v2335
      %2368 = vst [vmem:[#allocation2 + $0x80] sm:$0xff] %v2336
      %2369 = vst [vmem:[#allocation2 + $0x88] sm:$0xff] %v2337
      %2370 = vst [vmem:[#allocation2 + $0x90] sm:$0xff] %v2338
      %2371 = vst [vmem:[#allocation2 + $0x98] sm:$0xff] %v2339
      %2372 = vst [vmem:[#allocation2 + $0xa0] sm:$0xff] %v2340
      %2373 = vst [vmem:[#allocation2 + $0xa8] sm:$0xff] %v2341
      %2374 = vst [vmem:[#allocation2 + $0xb0] sm:$0xff] %v2342
      %2375 = vst [vmem:[#allocation2 + $0xb8] sm:$0xff] %v2343
      %2376 = vst [vmem:[#allocation2 + $0xc0] sm:$0xff] %v2344
      %2377 = vst [vmem:[#allocation2 + $0xc8] sm:$0xff] %v2345
      %2378 = vst [vmem:[#allocation2 + $0xd0] sm:$0xff] %v2346
      %2379 = vst [vmem:[#allocation2 + $0xd8] sm:$0xff] %v2347
      %2380 = vst [vmem:[#allocation2 + $0xe0] sm:$0xff] %v2348
      %2381 = vst [vmem:[#allocation2 + $0xe8] sm:$0xff] %v2349
      %2382 = vst [vmem:[#allocation2 + $0xf0] sm:$0xff] %v2350
      %2383 = vst [vmem:[#allocation2 + $0xf8] sm:$0xff] %v2351
      %v2384 = vld [vmem:[%s1475 + $0x2] sm:$0xff]
      %v2385 = vld [vmem:[%s1475 + $0xa] sm:$0xff]
      %v2386 = vld [vmem:[%s1475 + $0x1a] sm:$0xff]
      %v2387 = vld [vmem:[%s1475 + $0x22] sm:$0xff]
      %v2388 = vld [vmem:[%s1475 + $0x32] sm:$0xff]
      %v2389 = vld [vmem:[%s1475 + $0x3a] sm:$0xff]
      %v2390 = vld [vmem:[%s1475 + $0x4a] sm:$0xff]
      %v2391 = vld [vmem:[%s1475 + $0x52] sm:$0xff]
      %v2392 = vld [vmem:[%s1475 + $0x62] sm:$0xff]
      %v2393 = vld [vmem:[%s1475 + $0x6a] sm:$0xff]
      %v2394 = vld [vmem:[%s1475 + $0x7a] sm:$0xff]
      %v2395 = vld [vmem:[%s1475 + $0x82] sm:$0xff]
      %v2396 = vld [vmem:[%s1475 + $0x92] sm:$0xff]
      %v2397 = vld [vmem:[%s1475 + $0x9a] sm:$0xff]
      %v2398 = vld [vmem:[%s1475 + $0xaa] sm:$0xff]
      %v2399 = vld [vmem:[%s1475 + $0xb2] sm:$0xff]
      %v2400 = vld [vmem:[%s1475 + $0xc2] sm:$0xff]
      %v2401 = vld [vmem:[%s1475 + $0xca] sm:$0xff]
      %v2402 = vld [vmem:[%s1475 + $0xda] sm:$0xff]
      %v2403 = vld [vmem:[%s1475 + $0xe2] sm:$0xff]
      %v2404 = vld [vmem:[%s1475 + $0xf2] sm:$0xff]
      %v2405 = vld [vmem:[%s1475 + $0xfa] sm:$0xff]
      %v2406 = vld [vmem:[%s1475 + $0x10a] sm:$0xff]
      %v2407 = vld [vmem:[%s1475 + $0x112] sm:$0xff]
      %v2408 = vld [vmem:[%s1475 + $0x122] sm:$0xff]
      %v2409 = vld [vmem:[%s1475 + $0x12a] sm:$0xff]
      %v2410 = vld [vmem:[%s1475 + $0x13a] sm:$0xff]
      %v2411 = vld [vmem:[%s1475 + $0x142] sm:$0xff]
      %v2412 = vld [vmem:[%s1475 + $0x152] sm:$0xff]
      %v2413 = vld [vmem:[%s1475 + $0x15a] sm:$0xff]
      %v2414 = vld [vmem:[%s1475 + $0x16a] sm:$0xff]
      %v2415 = vld [vmem:[%s1475 + $0x172] sm:$0xff]
      %s2416 = scalar_lea.vmem %s1, 20
      %v2417 = vld [vmem:[%s2416] sm:$0xf]
      %v2419 = vsel %vm209, %v2384, 0
      %v2422 = vsel %vm209, %v2385, 0
      %v2425 = vsel %vm209, %v2386, 0
      %v2428 = vsel %vm209, %v2387, 0
      %v2431 = vsel %vm209, %v2388, 0
      %v2434 = vsel %vm209, %v2389, 0
      %v2437 = vsel %vm209, %v2390, 0
      %v2440 = vsel %vm209, %v2391, 0
      %v2443 = vsel %vm209, %v2392, 0
      %v2446 = vsel %vm209, %v2393, 0
      %v2449 = vsel %vm209, %v2394, 0
      %v2452 = vsel %vm209, %v2395, 0
      %v2455 = vsel %vm209, %v2396, 0
      %v2458 = vsel %vm209, %v2397, 0
      %v2461 = vsel %vm209, %v2398, 0
      %v2464 = vsel %vm209, %v2399, 0
      %v2467 = vsel %vm209, %v2400, 0
      %v2470 = vsel %vm209, %v2401, 0
      %v2473 = vsel %vm209, %v2402, 0
      %v2476 = vsel %vm209, %v2403, 0
      %v2479 = vsel %vm209, %v2404, 0
      %v2482 = vsel %vm209, %v2405, 0
      %v2485 = vsel %vm209, %v2406, 0
      %v2488 = vsel %vm209, %v2407, 0
      %v2491 = vsel %vm209, %v2408, 0
      %v2494 = vsel %vm209, %v2409, 0
      %v2497 = vsel %vm209, %v2410, 0
      %v2500 = vsel %vm209, %v2411, 0
      %v2503 = vsel %vm209, %v2412, 0
      %v2506 = vsel %vm209, %v2413, 0
      %v2509 = vsel %vm209, %v2414, 0
      %v2512 = vsel %vm209, %v2415, 0
      %v2515 = vsel %vm306, %v2417, 0
      %2517 = vmatprep.subr.mxu0 0.0
      %2518 = vmatpush1.msra.mxu0 %v2515
      %2519 = vmatprep.subr.mxu0 0.0
      %2520 = vmatpush1.msra.mxu0 0.0
      %2521 = vmatprep.subr.mxu0 0.0
      %2522 = vmatpush1.msra.mxu0 0.0
      %2523 = vmatprep.subr.mxu0 0.0
      %2524 = vmatpush1.msra.mxu0 0.0
      %2525 = vmatprep.subr.mxu0 0.0
      %2526 = vmatpush1.msra.mxu0 0.0
      %2527 = vmatprep.subr.mxu0 0.0
      %2528 = vmatpush1.msra.mxu0 0.0
      %2529 = vmatprep.subr.mxu0 0.0
      %2530 = vmatpush1.msra.mxu0 0.0
      %2531 = vmatprep.subr.mxu0 0.0
      %2532 = vmatpush1.msra.mxu0 0.0
      %2533 = vmatprep.subr.mxu0 0.0
      %2534 = vmatpush1.msra.mxu0 0.0
      %2535 = vmatprep.subr.mxu0 0.0
      %2536 = vmatpush1.msra.mxu0 0.0
      %2537 = vmatprep.subr.mxu0 0.0
      %2538 = vmatpush1.msra.mxu0 0.0
      %2539 = vmatprep.subr.mxu0 0.0
      %2540 = vmatpush1.msra.mxu0 0.0
      %2541 = vmatprep.subr.mxu0 0.0
      %2542 = vmatpush1.msra.mxu0 0.0
      %2543 = vmatprep.subr.mxu0 0.0
      %2544 = vmatpush1.msra.mxu0 0.0
      %2545 = vmatprep.subr.mxu0 0.0
      %2546 = vmatpush1.msra.mxu0 0.0
      %2547 = vmatprep.subr.mxu0 0.0
      %2548 = vmatpush1.msra.mxu0 0.0
      %2549 = vmatprep.subr.mxu0 0.0
      %2550 = vmatpush1.msra.mxu0 0.0
      %2551 = vmatprep.subr.mxu0 0.0
      %2552 = vmatpush1.msra.mxu0 0.0
      %2553 = vmatprep.subr.mxu0 0.0
      %2554 = vmatpush1.msra.mxu0 0.0
      %2555 = vmatprep.subr.mxu0 0.0
      %2556 = vmatpush1.msra.mxu0 0.0
      %2557 = vmatprep.subr.mxu0 0.0
      %2558 = vmatpush1.msra.mxu0 0.0
      %2559 = vmatprep.subr.mxu0 0.0
      %2560 = vmatpush1.msra.mxu0 0.0
      %2561 = vmatprep.subr.mxu0 0.0
      %2562 = vmatpush1.msra.mxu0 0.0
      %2563 = vmatprep.subr.mxu0 0.0
      %2564 = vmatpush1.msra.mxu0 0.0
      %2565 = vmatprep.subr.mxu0 0.0
      %2566 = vmatpush1.msra.mxu0 0.0
      %2567 = vmatprep.subr.mxu0 0.0
      %2568 = vmatpush1.msra.mxu0 0.0
      %2569 = vmatprep.subr.mxu0 0.0
      %2570 = vmatpush1.msra.mxu0 0.0
      %2571 = vmatprep.subr.mxu0 0.0
      %2572 = vmatpush1.msra.mxu0 0.0
      %2573 = vmatprep.subr.mxu0 0.0
      %2574 = vmatpush1.msra.mxu0 0.0
      %2575 = vmatprep.subr.mxu0 0.0
      %2576 = vmatpush1.msra.mxu0 0.0
      %2577 = vmatprep.subr.mxu0 0.0
      %2578 = vmatpush1.msra.mxu0 0.0
      %2579 = vmatprep.subr.mxu0 0.0
      %2580 = vmatpush1.msra.mxu0 0.0
      %2581 = vmatprep.mubr.f32.mxu0 0.0
      %2582 = vmatmul.mubr.f32.gmra.mrb[0].mxu0 %v2419
      %v2583 = vpop.f32.mrb[0].mxu0
      %v2584 = vadd.f32 0.0, %v2583
      %v2585 = vpop.f32.mrb[0].mxu0
      %2586 = vmatprep.mubr.f32.mxu0 0.0
      %2587 = vmatmul.mubr.f32.gmra.mrb[0].mxu0 %v2422
      %v2588 = vpop.f32.mrb[0].mxu0
      %v2589 = vadd.f32 0.0, %v2588
      %v2590 = vpop.f32.mrb[0].mxu0
      %2591 = vmatprep.mubr.f32.mxu0 0.0
      %2592 = vmatmul.mubr.f32.gmra.mrb[0].mxu0 %v2425
      %v2593 = vpop.f32.mrb[0].mxu0
      %v2594 = vadd.f32 0.0, %v2593
      %v2595 = vpop.f32.mrb[0].mxu0
      %2596 = vmatprep.mubr.f32.mxu0 0.0
      %2597 = vmatmul.mubr.f32.gmra.mrb[0].mxu0 %v2428
      %v2598 = vpop.f32.mrb[0].mxu0
      %v2599 = vadd.f32 0.0, %v2598
      %v2600 = vpop.f32.mrb[0].mxu0
      %2601 = vmatprep.mubr.f32.mxu0 0.0
      %2602 = vmatmul.mubr.f32.gmra.mrb[0].mxu0 %v2431
      %v2603 = vpop.f32.mrb[0].mxu0
      %v2604 = vadd.f32 0.0, %v2603
      %v2605 = vpop.f32.mrb[0].mxu0
      %2606 = vmatprep.mubr.f32.mxu0 0.0
      %2607 = vmatmul.mubr.f32.gmra.mrb[0].mxu0 %v2434
      %v2608 = vpop.f32.mrb[0].mxu0
      %v2609 = vadd.f32 0.0, %v2608
      %v2610 = vpop.f32.mrb[0].mxu0
      %2611 = vmatprep.mubr.f32.mxu0 0.0
      %2612 = vmatmul.mubr.f32.gmra.mrb[0].mxu0 %v2437
      %v2613 = vpop.f32.mrb[0].mxu0
      %v2614 = vadd.f32 0.0, %v2613
      %v2615 = vpop.f32.mrb[0].mxu0
      %2616 = vmatprep.mubr.f32.mxu0 0.0
      %2617 = vmatmul.mubr.f32.gmra.mrb[0].mxu0 %v2440
      %v2618 = vpop.f32.mrb[0].mxu0
      %v2619 = vadd.f32 0.0, %v2618
      %v2620 = vpop.f32.mrb[0].mxu0
      %2621 = vmatprep.mubr.f32.mxu0 0.0
      %2622 = vmatmul.mubr.f32.gmra.mrb[0].mxu0 %v2443
      %v2623 = vpop.f32.mrb[0].mxu0
      %v2624 = vadd.f32 0.0, %v2623
      %v2625 = vpop.f32.mrb[0].mxu0
      %2626 = vmatprep.mubr.f32.mxu0 0.0
      %2627 = vmatmul.mubr.f32.gmra.mrb[0].mxu0 %v2446
      %v2628 = vpop.f32.mrb[0].mxu0
      %v2629 = vadd.f32 0.0, %v2628
      %v2630 = vpop.f32.mrb[0].mxu0
      %2631 = vmatprep.mubr.f32.mxu0 0.0
      %2632 = vmatmul.mubr.f32.gmra.mrb[0].mxu0 %v2449
      %v2633 = vpop.f32.mrb[0].mxu0
      %v2634 = vadd.f32 0.0, %v2633
      %v2635 = vpop.f32.mrb[0].mxu0
      %2636 = vmatprep.mubr.f32.mxu0 0.0
      %2637 = vmatmul.mubr.f32.gmra.mrb[0].mxu0 %v2452
      %v2638 = vpop.f32.mrb[0].mxu0
      %v2639 = vadd.f32 0.0, %v2638
      %v2640 = vpop.f32.mrb[0].mxu0
      %2641 = vmatprep.mubr.f32.mxu0 0.0
      %2642 = vmatmul.mubr.f32.gmra.mrb[0].mxu0 %v2455
      %v2643 = vpop.f32.mrb[0].mxu0
      %v2644 = vadd.f32 0.0, %v2643
      %v2645 = vpop.f32.mrb[0].mxu0
      %2646 = vmatprep.mubr.f32.mxu0 0.0
      %2647 = vmatmul.mubr.f32.gmra.mrb[0].mxu0 %v2458
      %v2648 = vpop.f32.mrb[0].mxu0
      %v2649 = vadd.f32 0.0, %v2648
      %v2650 = vpop.f32.mrb[0].mxu0
      %2651 = vmatprep.mubr.f32.mxu0 0.0
      %2652 = vmatmul.mubr.f32.gmra.mrb[0].mxu0 %v2461
      %v2653 = vpop.f32.mrb[0].mxu0
      %v2654 = vadd.f32 0.0, %v2653
      %v2655 = vpop.f32.mrb[0].mxu0
      %2656 = vmatprep.mubr.f32.mxu0 0.0
      %2657 = vmatmul.mubr.f32.gmra.mrb[0].mxu0 %v2464
      %v2658 = vpop.f32.mrb[0].mxu0
      %v2659 = vadd.f32 0.0, %v2658
      %v2660 = vpop.f32.mrb[0].mxu0
      %2661 = vmatprep.mubr.f32.mxu0 0.0
      %2662 = vmatmul.mubr.f32.gmra.mrb[0].mxu0 %v2467
      %v2663 = vpop.f32.mrb[0].mxu0
      %v2664 = vadd.f32 0.0, %v2663
      %v2665 = vpop.f32.mrb[0].mxu0
      %2666 = vmatprep.mubr.f32.mxu0 0.0
      %2667 = vmatmul.mubr.f32.gmra.mrb[0].mxu0 %v2470
      %v2668 = vpop.f32.mrb[0].mxu0
      %v2669 = vadd.f32 0.0, %v2668
      %v2670 = vpop.f32.mrb[0].mxu0
      %2671 = vmatprep.mubr.f32.mxu0 0.0
      %2672 = vmatmul.mubr.f32.gmra.mrb[0].mxu0 %v2473
      %v2673 = vpop.f32.mrb[0].mxu0
      %v2674 = vadd.f32 0.0, %v2673
      %v2675 = vpop.f32.mrb[0].mxu0
      %2676 = vmatprep.mubr.f32.mxu0 0.0
      %2677 = vmatmul.mubr.f32.gmra.mrb[0].mxu0 %v2476
      %v2678 = vpop.f32.mrb[0].mxu0
      %v2679 = vadd.f32 0.0, %v2678
      %v2680 = vpop.f32.mrb[0].mxu0
      %2681 = vmatprep.mubr.f32.mxu0 0.0
      %2682 = vmatmul.mubr.f32.gmra.mrb[0].mxu0 %v2479
      %v2683 = vpop.f32.mrb[0].mxu0
      %v2684 = vadd.f32 0.0, %v2683
      %v2685 = vpop.f32.mrb[0].mxu0
      %2686 = vmatprep.mubr.f32.mxu0 0.0
      %2687 = vmatmul.mubr.f32.gmra.mrb[0].mxu0 %v2482
      %v2688 = vpop.f32.mrb[0].mxu0
      %v2689 = vadd.f32 0.0, %v2688
      %v2690 = vpop.f32.mrb[0].mxu0
      %2691 = vmatprep.mubr.f32.mxu0 0.0
      %2692 = vmatmul.mubr.f32.gmra.mrb[0].mxu0 %v2485
      %v2693 = vpop.f32.mrb[0].mxu0
      %v2694 = vadd.f32 0.0, %v2693
      %v2695 = vpop.f32.mrb[0].mxu0
      %2696 = vmatprep.mubr.f32.mxu0 0.0
      %2697 = vmatmul.mubr.f32.gmra.mrb[0].mxu0 %v2488
      %v2698 = vpop.f32.mrb[0].mxu0
      %v2699 = vadd.f32 0.0, %v2698
      %v2700 = vpop.f32.mrb[0].mxu0
      %2701 = vmatprep.mubr.f32.mxu0 0.0
      %2702 = vmatmul.mubr.f32.gmra.mrb[0].mxu0 %v2491
      %v2703 = vpop.f32.mrb[0].mxu0
      %v2704 = vadd.f32 0.0, %v2703
      %v2705 = vpop.f32.mrb[0].mxu0
      %2706 = vmatprep.mubr.f32.mxu0 0.0
      %2707 = vmatmul.mubr.f32.gmra.mrb[0].mxu0 %v2494
      %v2708 = vpop.f32.mrb[0].mxu0
      %v2709 = vadd.f32 0.0, %v2708
      %v2710 = vpop.f32.mrb[0].mxu0
      %2711 = vmatprep.mubr.f32.mxu0 0.0
      %2712 = vmatmul.mubr.f32.gmra.mrb[0].mxu0 %v2497
      %v2713 = vpop.f32.mrb[0].mxu0
      %v2714 = vadd.f32 0.0, %v2713
      %v2715 = vpop.f32.mrb[0].mxu0
      %2716 = vmatprep.mubr.f32.mxu0 0.0
      %2717 = vmatmul.mubr.f32.gmra.mrb[0].mxu0 %v2500
      %v2718 = vpop.f32.mrb[0].mxu0
      %v2719 = vadd.f32 0.0, %v2718
      %v2720 = vpop.f32.mrb[0].mxu0
      %2721 = vmatprep.mubr.f32.mxu0 0.0
      %2722 = vmatmul.mubr.f32.gmra.mrb[0].mxu0 %v2503
      %v2723 = vpop.f32.mrb[0].mxu0
      %v2724 = vadd.f32 0.0, %v2723
      %v2725 = vpop.f32.mrb[0].mxu0
      %2726 = vmatprep.mubr.f32.mxu0 0.0
      %2727 = vmatmul.mubr.f32.gmra.mrb[0].mxu0 %v2506
      %v2728 = vpop.f32.mrb[0].mxu0
      %v2729 = vadd.f32 0.0, %v2728
      %v2730 = vpop.f32.mrb[0].mxu0
      %2731 = vmatprep.mubr.f32.mxu0 0.0
      %2732 = vmatmul.mubr.f32.gmra.mrb[0].mxu0 %v2509
      %v2733 = vpop.f32.mrb[0].mxu0
      %v2734 = vadd.f32 0.0, %v2733
      %v2735 = vpop.f32.mrb[0].mxu0
      %2736 = vmatprep.mubr.f32.mxu0 0.0
      %2737 = vmatmul.mubr.f32.gmra.mrb[0].mxu0 %v2512
      %v2738 = vpop.f32.mrb[0].mxu0
      %v2739 = vadd.f32 0.0, %v2738
      %v2740 = vpop.f32.mrb[0].mxu0
      %2741 = vdwg.mxu0
      %v2742 = vld [vmem:[#allocation2] sm:$0xff]
      %v2743 = vld [vmem:[#allocation2 + $0x8] sm:$0xff]
      %v2744 = vld [vmem:[#allocation2 + $0x10] sm:$0xff]
      %v2745 = vld [vmem:[#allocation2 + $0x18] sm:$0xff]
      %v2746 = vld [vmem:[#allocation2 + $0x20] sm:$0xff]
      %v2747 = vld [vmem:[#allocation2 + $0x28] sm:$0xff]
      %v2748 = vld [vmem:[#allocation2 + $0x30] sm:$0xff]
      %v2749 = vld [vmem:[#allocation2 + $0x38] sm:$0xff]
      %v2750 = vld [vmem:[#allocation2 + $0x40] sm:$0xff]
      %v2751 = vld [vmem:[#allocation2 + $0x48] sm:$0xff]
      %v2752 = vld [vmem:[#allocation2 + $0x50] sm:$0xff]
      %v2753 = vld [vmem:[#allocation2 + $0x58] sm:$0xff]
      %v2754 = vld [vmem:[#allocation2 + $0x60] sm:$0xff]
      %v2755 = vld [vmem:[#allocation2 + $0x68] sm:$0xff]
      %v2756 = vld [vmem:[#allocation2 + $0x70] sm:$0xff]
      %v2757 = vld [vmem:[#allocation2 + $0x78] sm:$0xff]
      %v2758 = vld [vmem:[#allocation2 + $0x80] sm:$0xff]
      %v2759 = vld [vmem:[#allocation2 + $0x88] sm:$0xff]
      %v2760 = vld [vmem:[#allocation2 + $0x90] sm:$0xff]
      %v2761 = vld [vmem:[#allocation2 + $0x98] sm:$0xff]
      %v2762 = vld [vmem:[#allocation2 + $0xa0] sm:$0xff]
      %v2763 = vld [vmem:[#allocation2 + $0xa8] sm:$0xff]
      %v2764 = vld [vmem:[#allocation2 + $0xb0] sm:$0xff]
      %v2765 = vld [vmem:[#allocation2 + $0xb8] sm:$0xff]
      %v2766 = vld [vmem:[#allocation2 + $0xc0] sm:$0xff]
      %v2767 = vld [vmem:[#allocation2 + $0xc8] sm:$0xff]
      %v2768 = vld [vmem:[#allocation2 + $0xd0] sm:$0xff]
      %v2769 = vld [vmem:[#allocation2 + $0xd8] sm:$0xff]
      %v2770 = vld [vmem:[#allocation2 + $0xe0] sm:$0xff]
      %v2771 = vld [vmem:[#allocation2 + $0xe8] sm:$0xff]
      %v2772 = vld [vmem:[#allocation2 + $0xf0] sm:$0xff]
      %v2773 = vld [vmem:[#allocation2 + $0xf8] sm:$0xff]
      %v2774 = vadd.f32 %v2742, %v2584
      %v2775 = vadd.f32 %v2743, %v2589
      %v2776 = vadd.f32 %v2744, %v2594
      %v2777 = vadd.f32 %v2745, %v2599
      %v2778 = vadd.f32 %v2746, %v2604
      %v2779 = vadd.f32 %v2747, %v2609
      %v2780 = vadd.f32 %v2748, %v2614
      %v2781 = vadd.f32 %v2749, %v2619
      %v2782 = vadd.f32 %v2750, %v2624
      %v2783 = vadd.f32 %v2751, %v2629
      %v2784 = vadd.f32 %v2752, %v2634
      %v2785 = vadd.f32 %v2753, %v2639
      %v2786 = vadd.f32 %v2754, %v2644
      %v2787 = vadd.f32 %v2755, %v2649
      %v2788 = vadd.f32 %v2756, %v2654
      %v2789 = vadd.f32 %v2757, %v2659
      %v2790 = vadd.f32 %v2758, %v2664
      %v2791 = vadd.f32 %v2759, %v2669
      %v2792 = vadd.f32 %v2760, %v2674
      %v2793 = vadd.f32 %v2761, %v2679
      %v2794 = vadd.f32 %v2762, %v2684
      %v2795 = vadd.f32 %v2763, %v2689
      %v2796 = vadd.f32 %v2764, %v2694
      %v2797 = vadd.f32 %v2765, %v2699
      %v2798 = vadd.f32 %v2766, %v2704
      %v2799 = vadd.f32 %v2767, %v2709
      %v2800 = vadd.f32 %v2768, %v2714
      %v2801 = vadd.f32 %v2769, %v2719
      %v2802 = vadd.f32 %v2770, %v2724
      %v2803 = vadd.f32 %v2771, %v2729
      %v2804 = vadd.f32 %v2772, %v2734
      %v2805 = vadd.f32 %v2773, %v2739
      %2806 = vst [vmem:[#allocation2] sm:$0xff] %v2774
      %2807 = vst [vmem:[#allocation2 + $0x8] sm:$0xff] %v2775
      %2808 = vst [vmem:[#allocation2 + $0x10] sm:$0xff] %v2776
      %2809 = vst [vmem:[#allocation2 + $0x18] sm:$0xff] %v2777
      %2810 = vst [vmem:[#allocation2 + $0x20] sm:$0xff] %v2778
      %2811 = vst [vmem:[#allocation2 + $0x28] sm:$0xff] %v2779
      %2812 = vst [vmem:[#allocation2 + $0x30] sm:$0xff] %v2780
      %2813 = vst [vmem:[#allocation2 + $0x38] sm:$0xff] %v2781
      %2814 = vst [vmem:[#allocation2 + $0x40] sm:$0xff] %v2782
      %2815 = vst [vmem:[#allocation2 + $0x48] sm:$0xff] %v2783
      %2816 = vst [vmem:[#allocation2 + $0x50] sm:$0xff] %v2784
      %2817 = vst [vmem:[#allocation2 + $0x58] sm:$0xff] %v2785
      %2818 = vst [vmem:[#allocation2 + $0x60] sm:$0xff] %v2786
      %2819 = vst [vmem:[#allocation2 + $0x68] sm:$0xff] %v2787
      %2820 = vst [vmem:[#allocation2 + $0x70] sm:$0xff] %v2788
      %2821 = vst [vmem:[#allocation2 + $0x78] sm:$0xff] %v2789
      %2822 = vst [vmem:[#allocation2 + $0x80] sm:$0xff] %v2790
      %2823 = vst [vmem:[#allocation2 + $0x88] sm:$0xff] %v2791
      %2824 = vst [vmem:[#allocation2 + $0x90] sm:$0xff] %v2792
      %2825 = vst [vmem:[#allocation2 + $0x98] sm:$0xff] %v2793
      %2826 = vst [vmem:[#allocation2 + $0xa0] sm:$0xff] %v2794
      %2827 = vst [vmem:[#allocation2 + $0xa8] sm:$0xff] %v2795
      %2828 = vst [vmem:[#allocation2 + $0xb0] sm:$0xff] %v2796
      %2829 = vst [vmem:[#allocation2 + $0xb8] sm:$0xff] %v2797
      %2830 = vst [vmem:[#allocation2 + $0xc0] sm:$0xff] %v2798
      %2831 = vst [vmem:[#allocation2 + $0xc8] sm:$0xff] %v2799
      %2832 = vst [vmem:[#allocation2 + $0xd0] sm:$0xff] %v2800
      %2833 = vst [vmem:[#allocation2 + $0xd8] sm:$0xff] %v2801
      %2834 = vst [vmem:[#allocation2 + $0xe0] sm:$0xff] %v2802
      %2835 = vst [vmem:[#allocation2 + $0xe8] sm:$0xff] %v2803
      %2836 = vst [vmem:[#allocation2 + $0xf0] sm:$0xff] %v2804
      %2837 = vst [vmem:[#allocation2 + $0xf8] sm:$0xff] %v2805
      %s2838 = scalar_lea.vmem %s169, 48
      %v2839 = vld [vmem:[%s2838] sm:$0xff]
      %v2840 = vld [vmem:[%s2838 + $0x8] sm:$0xff]
      %v2841 = vld [vmem:[%s2838 + $0x18] sm:$0xff]
      %v2842 = vld [vmem:[%s2838 + $0x20] sm:$0xff]
      %v2843 = vld [vmem:[%s2838 + $0x30] sm:$0xff]
      %v2844 = vld [vmem:[%s2838 + $0x38] sm:$0xff]
      %v2845 = vld [vmem:[%s2838 + $0x48] sm:$0xff]
      %v2846 = vld [vmem:[%s2838 + $0x50] sm:$0xff]
      %v2847 = vld [vmem:[%s2838 + $0x60] sm:$0xff]
      %v2848 = vld [vmem:[%s2838 + $0x68] sm:$0xff]
      %v2849 = vld [vmem:[%s2838 + $0x78] sm:$0xff]
      %v2850 = vld [vmem:[%s2838 + $0x80] sm:$0xff]
      %v2851 = vld [vmem:[%s2838 + $0x90] sm:$0xff]
      %v2852 = vld [vmem:[%s2838 + $0x98] sm:$0xff]
      %v2853 = vld [vmem:[%s2838 + $0xa8] sm:$0xff]
      %v2854 = vld [vmem:[%s2838 + $0xb0] sm:$0xff]
      %v2855 = vld [vmem:[%s2838 + $0xc0] sm:$0xff]
      %v2856 = vld [vmem:[%s2838 + $0xc8] sm:$0xff]
      %v2857 = vld [vmem:[%s2838 + $0xd8] sm:$0xff]
      %v2858 = vld [vmem:[%s2838 + $0xe0] sm:$0xff]
      %v2859 = vld [vmem:[%s2838 + $0xf0] sm:$0xff]
      %v2860 = vld [vmem:[%s2838 + $0xf8] sm:$0xff]
      %v2861 = vld [vmem:[%s2838 + $0x108] sm:$0xff]
      %v2862 = vld [vmem:[%s2838 + $0x110] sm:$0xff]
      %v2863 = vld [vmem:[%s2838 + $0x120] sm:$0xff]
      %v2864 = vld [vmem:[%s2838 + $0x128] sm:$0xff]
      %v2865 = vld [vmem:[%s2838 + $0x138] sm:$0xff]
      %v2866 = vld [vmem:[%s2838 + $0x140] sm:$0xff]
      %v2867 = vld [vmem:[%s2838 + $0x150] sm:$0xff]
      %v2868 = vld [vmem:[%s2838 + $0x158] sm:$0xff]
      %v2869 = vld [vmem:[%s2838 + $0x168] sm:$0xff]
      %v2870 = vld [vmem:[%s2838 + $0x170] sm:$0xff]
      %s2871 = scalar_lea.vmem %s1, 24
      %v2872 = vld [vmem:[%s2871] sm:$0xf]
      %v2874 = vsel %vm209, %v2839, 0
      %v2877 = vsel %vm209, %v2840, 0
      %v2880 = vsel %vm209, %v2841, 0
      %v2883 = vsel %vm209, %v2842, 0
      %v2886 = vsel %vm209, %v2843, 0
      %v2889 = vsel %vm209, %v2844, 0
      %v2892 = vsel %vm209, %v2845, 0
      %v2895 = vsel %vm209, %v2846, 0
      %v2898 = vsel %vm209, %v2847, 0
      %v2901 = vsel %vm209, %v2848, 0
      %v2904 = vsel %vm209, %v2849, 0
      %v2907 = vsel %vm209, %v2850, 0
      %v2910 = vsel %vm209, %v2851, 0
      %v2913 = vsel %vm209, %v2852, 0
      %v2916 = vsel %vm209, %v2853, 0
      %v2919 = vsel %vm209, %v2854, 0
      %v2922 = vsel %vm209, %v2855, 0
      %v2925 = vsel %vm209, %v2856, 0
      %v2928 = vsel %vm209, %v2857, 0
      %v2931 = vsel %vm209, %v2858, 0
      %v2934 = vsel %vm209, %v2859, 0
      %v2937 = vsel %vm209, %v2860, 0
      %v2940 = vsel %vm209, %v2861, 0
      %v2943 = vsel %vm209, %v2862, 0
      %v2946 = vsel %vm209, %v2863, 0
      %v2949 = vsel %vm209, %v2864, 0
      %v2952 = vsel %vm209, %v2865, 0
      %v2955 = vsel %vm209, %v2866, 0
      %v2958 = vsel %vm209, %v2867, 0
      %v2961 = vsel %vm209, %v2868, 0
      %v2964 = vsel %vm209, %v2869, 0
      %v2967 = vsel %vm209, %v2870, 0
      %v2970 = vsel %vm306, %v2872, 0
      %2972 = vmatprep.subr.mxu0 0.0
      %2973 = vmatpush1.msra.mxu0 %v2970
      %2974 = vmatprep.subr.mxu0 0.0
      %2975 = vmatpush1.msra.mxu0 0.0
      %2976 = vmatprep.subr.mxu0 0.0
      %2977 = vmatpush1.msra.mxu0 0.0
      %2978 = vmatprep.subr.mxu0 0.0
      %2979 = vmatpush1.msra.mxu0 0.0
      %2980 = vmatprep.subr.mxu0 0.0
      %2981 = vmatpush1.msra.mxu0 0.0
      %2982 = vmatprep.subr.mxu0 0.0
      %2983 = vmatpush1.msra.mxu0 0.0
      %2984 = vmatprep.subr.mxu0 0.0
      %2985 = vmatpush1.msra.mxu0 0.0
      %2986 = vmatprep.subr.mxu0 0.0
      %2987 = vmatpush1.msra.mxu0 0.0
      %2988 = vmatprep.subr.mxu0 0.0
      %2989 = vmatpush1.msra.mxu0 0.0
      %2990 = vmatprep.subr.mxu0 0.0
      %2991 = vmatpush1.msra.mxu0 0.0
      %2992 = vmatprep.subr.mxu0 0.0
      %2993 = vmatpush1.msra.mxu0 0.0
      %2994 = vmatprep.subr.mxu0 0.0
      %2995 = vmatpush1.msra.mxu0 0.0
      %2996 = vmatprep.subr.mxu0 0.0
      %2997 = vmatpush1.msra.mxu0 0.0
      %2998 = vmatprep.subr.mxu0 0.0
      %2999 = vmatpush1.msra.mxu0 0.0
      %3000 = vmatprep.subr.mxu0 0.0
      %3001 = vmatpush1.msra.mxu0 0.0
      %3002 = vmatprep.subr.mxu0 0.0
      %3003 = vmatpush1.msra.mxu0 0.0
      %3004 = vmatprep.subr.mxu0 0.0
      %3005 = vmatpush1.msra.mxu0 0.0
      %3006 = vmatprep.subr.mxu0 0.0
      %3007 = vmatpush1.msra.mxu0 0.0
      %3008 = vmatprep.subr.mxu0 0.0
      %3009 = vmatpush1.msra.mxu0 0.0
      %3010 = vmatprep.subr.mxu0 0.0
      %3011 = vmatpush1.msra.mxu0 0.0
      %3012 = vmatprep.subr.mxu0 0.0
      %3013 = vmatpush1.msra.mxu0 0.0
      %3014 = vmatprep.subr.mxu0 0.0
      %3015 = vmatpush1.msra.mxu0 0.0
      %3016 = vmatprep.subr.mxu0 0.0
      %3017 = vmatpush1.msra.mxu0 0.0
      %3018 = vmatprep.subr.mxu0 0.0
      %3019 = vmatpush1.msra.mxu0 0.0
      %3020 = vmatprep.subr.mxu0 0.0
      %3021 = vmatpush1.msra.mxu0 0.0
      %3022 = vmatprep.subr.mxu0 0.0
      %3023 = vmatpush1.msra.mxu0 0.0
      %3024 = vmatprep.subr.mxu0 0.0
      %3025 = vmatpush1.msra.mxu0 0.0
      %3026 = vmatprep.subr.mxu0 0.0
      %3027 = vmatpush1.msra.mxu0 0.0
      %3028 = vmatprep.subr.mxu0 0.0
      %3029 = vmatpush1.msra.mxu0 0.0
      %3030 = vmatprep.subr.mxu0 0.0
      %3031 = vmatpush1.msra.mxu0 0.0
      %3032 = vmatprep.subr.mxu0 0.0
      %3033 = vmatpush1.msra.mxu0 0.0
      %3034 = vmatprep.subr.mxu0 0.0
      %3035 = vmatpush1.msra.mxu0 0.0
      %3036 = vmatprep.mubr.f32.mxu0 0.0
      %3037 = vmatmul.mubr.f32.gmra.mrb[0].mxu0 %v2874
      %v3038 = vpop.f32.mrb[0].mxu0
      %v3039 = vadd.f32 0.0, %v3038
      %v3040 = vpop.f32.mrb[0].mxu0
      %3041 = vmatprep.mubr.f32.mxu0 0.0
      %3042 = vmatmul.mubr.f32.gmra.mrb[0].mxu0 %v2877
      %v3043 = vpop.f32.mrb[0].mxu0
      %v3044 = vadd.f32 0.0, %v3043
      %v3045 = vpop.f32.mrb[0].mxu0
      %3046 = vmatprep.mubr.f32.mxu0 0.0
      %3047 = vmatmul.mubr.f32.gmra.mrb[0].mxu0 %v2880
      %v3048 = vpop.f32.mrb[0].mxu0
      %v3049 = vadd.f32 0.0, %v3048
      %v3050 = vpop.f32.mrb[0].mxu0
      %3051 = vmatprep.mubr.f32.mxu0 0.0
      %3052 = vmatmul.mubr.f32.gmra.mrb[0].mxu0 %v2883
      %v3053 = vpop.f32.mrb[0].mxu0
      %v3054 = vadd.f32 0.0, %v3053
      %v3055 = vpop.f32.mrb[0].mxu0
      %3056 = vmatprep.mubr.f32.mxu0 0.0
      %3057 = vmatmul.mubr.f32.gmra.mrb[0].mxu0 %v2886
      %v3058 = vpop.f32.mrb[0].mxu0
      %v3059 = vadd.f32 0.0, %v3058
      %v3060 = vpop.f32.mrb[0].mxu0
      %3061 = vmatprep.mubr.f32.mxu0 0.0
      %3062 = vmatmul.mubr.f32.gmra.mrb[0].mxu0 %v2889
      %v3063 = vpop.f32.mrb[0].mxu0
      %v3064 = vadd.f32 0.0, %v3063
      %v3065 = vpop.f32.mrb[0].mxu0
      %3066 = vmatprep.mubr.f32.mxu0 0.0
      %3067 = vmatmul.mubr.f32.gmra.mrb[0].mxu0 %v2892
      %v3068 = vpop.f32.mrb[0].mxu0
      %v3069 = vadd.f32 0.0, %v3068
      %v3070 = vpop.f32.mrb[0].mxu0
      %3071 = vmatprep.mubr.f32.mxu0 0.0
      %3072 = vmatmul.mubr.f32.gmra.mrb[0].mxu0 %v2895
      %v3073 = vpop.f32.mrb[0].mxu0
      %v3074 = vadd.f32 0.0, %v3073
      %v3075 = vpop.f32.mrb[0].mxu0
      %3076 = vmatprep.mubr.f32.mxu0 0.0
      %3077 = vmatmul.mubr.f32.gmra.mrb[0].mxu0 %v2898
      %v3078 = vpop.f32.mrb[0].mxu0
      %v3079 = vadd.f32 0.0, %v3078
      %v3080 = vpop.f32.mrb[0].mxu0
      %3081 = vmatprep.mubr.f32.mxu0 0.0
      %3082 = vmatmul.mubr.f32.gmra.mrb[0].mxu0 %v2901
      %v3083 = vpop.f32.mrb[0].mxu0
      %v3084 = vadd.f32 0.0, %v3083
      %v3085 = vpop.f32.mrb[0].mxu0
      %3086 = vmatprep.mubr.f32.mxu0 0.0
      %3087 = vmatmul.mubr.f32.gmra.mrb[0].mxu0 %v2904
      %v3088 = vpop.f32.mrb[0].mxu0
      %v3089 = vadd.f32 0.0, %v3088
      %v3090 = vpop.f32.mrb[0].mxu0
      %3091 = vmatprep.mubr.f32.mxu0 0.0
      %3092 = vmatmul.mubr.f32.gmra.mrb[0].mxu0 %v2907
      %v3093 = vpop.f32.mrb[0].mxu0
      %v3094 = vadd.f32 0.0, %v3093
      %v3095 = vpop.f32.mrb[0].mxu0
      %3096 = vmatprep.mubr.f32.mxu0 0.0
      %3097 = vmatmul.mubr.f32.gmra.mrb[0].mxu0 %v2910
      %v3098 = vpop.f32.mrb[0].mxu0
      %v3099 = vadd.f32 0.0, %v3098
      %v3100 = vpop.f32.mrb[0].mxu0
      %3101 = vmatprep.mubr.f32.mxu0 0.0
      %3102 = vmatmul.mubr.f32.gmra.mrb[0].mxu0 %v2913
      %v3103 = vpop.f32.mrb[0].mxu0
      %v3104 = vadd.f32 0.0, %v3103
      %v3105 = vpop.f32.mrb[0].mxu0
      %3106 = vmatprep.mubr.f32.mxu0 0.0
      %3107 = vmatmul.mubr.f32.gmra.mrb[0].mxu0 %v2916
      %v3108 = vpop.f32.mrb[0].mxu0
      %v3109 = vadd.f32 0.0, %v3108
      %v3110 = vpop.f32.mrb[0].mxu0
      %3111 = vmatprep.mubr.f32.mxu0 0.0
      %3112 = vmatmul.mubr.f32.gmra.mrb[0].mxu0 %v2919
      %v3113 = vpop.f32.mrb[0].mxu0
      %v3114 = vadd.f32 0.0, %v3113
      %v3115 = vpop.f32.mrb[0].mxu0
      %3116 = vmatprep.mubr.f32.mxu0 0.0
      %3117 = vmatmul.mubr.f32.gmra.mrb[0].mxu0 %v2922
      %v3118 = vpop.f32.mrb[0].mxu0
      %v3119 = vadd.f32 0.0, %v3118
      %v3120 = vpop.f32.mrb[0].mxu0
      %3121 = vmatprep.mubr.f32.mxu0 0.0
      %3122 = vmatmul.mubr.f32.gmra.mrb[0].mxu0 %v2925
      %v3123 = vpop.f32.mrb[0].mxu0
      %v3124 = vadd.f32 0.0, %v3123
      %v3125 = vpop.f32.mrb[0].mxu0
      %3126 = vmatprep.mubr.f32.mxu0 0.0
      %3127 = vmatmul.mubr.f32.gmra.mrb[0].mxu0 %v2928
      %v3128 = vpop.f32.mrb[0].mxu0
      %v3129 = vadd.f32 0.0, %v3128
      %v3130 = vpop.f32.mrb[0].mxu0
      %3131 = vmatprep.mubr.f32.mxu0 0.0
      %3132 = vmatmul.mubr.f32.gmra.mrb[0].mxu0 %v2931
      %v3133 = vpop.f32.mrb[0].mxu0
      %v3134 = vadd.f32 0.0, %v3133
      %v3135 = vpop.f32.mrb[0].mxu0
      %3136 = vmatprep.mubr.f32.mxu0 0.0
      %3137 = vmatmul.mubr.f32.gmra.mrb[0].mxu0 %v2934
      %v3138 = vpop.f32.mrb[0].mxu0
      %v3139 = vadd.f32 0.0, %v3138
      %v3140 = vpop.f32.mrb[0].mxu0
      %3141 = vmatprep.mubr.f32.mxu0 0.0
      %3142 = vmatmul.mubr.f32.gmra.mrb[0].mxu0 %v2937
      %v3143 = vpop.f32.mrb[0].mxu0
      %v3144 = vadd.f32 0.0, %v3143
      %v3145 = vpop.f32.mrb[0].mxu0
      %3146 = vmatprep.mubr.f32.mxu0 0.0
      %3147 = vmatmul.mubr.f32.gmra.mrb[0].mxu0 %v2940
      %v3148 = vpop.f32.mrb[0].mxu0
      %v3149 = vadd.f32 0.0, %v3148
      %v3150 = vpop.f32.mrb[0].mxu0
      %3151 = vmatprep.mubr.f32.mxu0 0.0
      %3152 = vmatmul.mubr.f32.gmra.mrb[0].mxu0 %v2943
      %v3153 = vpop.f32.mrb[0].mxu0
      %v3154 = vadd.f32 0.0, %v3153
      %v3155 = vpop.f32.mrb[0].mxu0
      %3156 = vmatprep.mubr.f32.mxu0 0.0
      %3157 = vmatmul.mubr.f32.gmra.mrb[0].mxu0 %v2946
      %v3158 = vpop.f32.mrb[0].mxu0
      %v3159 = vadd.f32 0.0, %v3158
      %v3160 = vpop.f32.mrb[0].mxu0
      %3161 = vmatprep.mubr.f32.mxu0 0.0
      %3162 = vmatmul.mubr.f32.gmra.mrb[0].mxu0 %v2949
      %v3163 = vpop.f32.mrb[0].mxu0
      %v3164 = vadd.f32 0.0, %v3163
      %v3165 = vpop.f32.mrb[0].mxu0
      %3166 = vmatprep.mubr.f32.mxu0 0.0
      %3167 = vmatmul.mubr.f32.gmra.mrb[0].mxu0 %v2952
      %v3168 = vpop.f32.mrb[0].mxu0
      %v3169 = vadd.f32 0.0, %v3168
      %v3170 = vpop.f32.mrb[0].mxu0
      %3171 = vmatprep.mubr.f32.mxu0 0.0
      %3172 = vmatmul.mubr.f32.gmra.mrb[0].mxu0 %v2955
      %v3173 = vpop.f32.mrb[0].mxu0
      %v3174 = vadd.f32 0.0, %v3173
      %v3175 = vpop.f32.mrb[0].mxu0
      %3176 = vmatprep.mubr.f32.mxu0 0.0
      %3177 = vmatmul.mubr.f32.gmra.mrb[0].mxu0 %v2958
      %v3178 = vpop.f32.mrb[0].mxu0
      %v3179 = vadd.f32 0.0, %v3178
      %v3180 = vpop.f32.mrb[0].mxu0
      %3181 = vmatprep.mubr.f32.mxu0 0.0
      %3182 = vmatmul.mubr.f32.gmra.mrb[0].mxu0 %v2961
      %v3183 = vpop.f32.mrb[0].mxu0
      %v3184 = vadd.f32 0.0, %v3183
      %v3185 = vpop.f32.mrb[0].mxu0
      %3186 = vmatprep.mubr.f32.mxu0 0.0
      %3187 = vmatmul.mubr.f32.gmra.mrb[0].mxu0 %v2964
      %v3188 = vpop.f32.mrb[0].mxu0
      %v3189 = vadd.f32 0.0, %v3188
      %v3190 = vpop.f32.mrb[0].mxu0
      %3191 = vmatprep.mubr.f32.mxu0 0.0
      %3192 = vmatmul.mubr.f32.gmra.mrb[0].mxu0 %v2967
      %v3193 = vpop.f32.mrb[0].mxu0
      %v3194 = vadd.f32 0.0, %v3193
      %v3195 = vpop.f32.mrb[0].mxu0
      %3196 = vdwg.mxu0
      %v3197 = vld [vmem:[#allocation2] sm:$0xff]
      %v3198 = vld [vmem:[#allocation2 + $0x8] sm:$0xff]
      %v3199 = vld [vmem:[#allocation2 + $0x10] sm:$0xff]
      %v3200 = vld [vmem:[#allocation2 + $0x18] sm:$0xff]
      %v3201 = vld [vmem:[#allocation2 + $0x20] sm:$0xff]
      %v3202 = vld [vmem:[#allocation2 + $0x28] sm:$0xff]
      %v3203 = vld [vmem:[#allocation2 + $0x30] sm:$0xff]
      %v3204 = vld [vmem:[#allocation2 + $0x38] sm:$0xff]
      %v3205 = vld [vmem:[#allocation2 + $0x40] sm:$0xff]
      %v3206 = vld [vmem:[#allocation2 + $0x48] sm:$0xff]
      %v3207 = vld [vmem:[#allocation2 + $0x50] sm:$0xff]
      %v3208 = vld [vmem:[#allocation2 + $0x58] sm:$0xff]
      %v3209 = vld [vmem:[#allocation2 + $0x60] sm:$0xff]
      %v3210 = vld [vmem:[#allocation2 + $0x68] sm:$0xff]
      %v3211 = vld [vmem:[#allocation2 + $0x70] sm:$0xff]
      %v3212 = vld [vmem:[#allocation2 + $0x78] sm:$0xff]
      %v3213 = vld [vmem:[#allocation2 + $0x80] sm:$0xff]
      %v3214 = vld [vmem:[#allocation2 + $0x88] sm:$0xff]
      %v3215 = vld [vmem:[#allocation2 + $0x90] sm:$0xff]
      %v3216 = vld [vmem:[#allocation2 + $0x98] sm:$0xff]
      %v3217 = vld [vmem:[#allocation2 + $0xa0] sm:$0xff]
      %v3218 = vld [vmem:[#allocation2 + $0xa8] sm:$0xff]
      %v3219 = vld [vmem:[#allocation2 + $0xb0] sm:$0xff]
      %v3220 = vld [vmem:[#allocation2 + $0xb8] sm:$0xff]
      %v3221 = vld [vmem:[#allocation2 + $0xc0] sm:$0xff]
      %v3222 = vld [vmem:[#allocation2 + $0xc8] sm:$0xff]
      %v3223 = vld [vmem:[#allocation2 + $0xd0] sm:$0xff]
      %v3224 = vld [vmem:[#allocation2 + $0xd8] sm:$0xff]
      %v3225 = vld [vmem:[#allocation2 + $0xe0] sm:$0xff]
      %v3226 = vld [vmem:[#allocation2 + $0xe8] sm:$0xff]
      %v3227 = vld [vmem:[#allocation2 + $0xf0] sm:$0xff]
      %v3228 = vld [vmem:[#allocation2 + $0xf8] sm:$0xff]
      %v3229 = vadd.f32 %v3197, %v3039
      %v3230 = vadd.f32 %v3198, %v3044
      %v3231 = vadd.f32 %v3199, %v3049
      %v3232 = vadd.f32 %v3200, %v3054
      %v3233 = vadd.f32 %v3201, %v3059
      %v3234 = vadd.f32 %v3202, %v3064
      %v3235 = vadd.f32 %v3203, %v3069
      %v3236 = vadd.f32 %v3204, %v3074
      %v3237 = vadd.f32 %v3205, %v3079
      %v3238 = vadd.f32 %v3206, %v3084
      %v3239 = vadd.f32 %v3207, %v3089
      %v3240 = vadd.f32 %v3208, %v3094
      %v3241 = vadd.f32 %v3209, %v3099
      %v3242 = vadd.f32 %v3210, %v3104
      %v3243 = vadd.f32 %v3211, %v3109
      %v3244 = vadd.f32 %v3212, %v3114
      %v3245 = vadd.f32 %v3213, %v3119
      %v3246 = vadd.f32 %v3214, %v3124
      %v3247 = vadd.f32 %v3215, %v3129
      %v3248 = vadd.f32 %v3216, %v3134
      %v3249 = vadd.f32 %v3217, %v3139
      %v3250 = vadd.f32 %v3218, %v3144
      %v3251 = vadd.f32 %v3219, %v3149
      %v3252 = vadd.f32 %v3220, %v3154
      %v3253 = vadd.f32 %v3221, %v3159
      %v3254 = vadd.f32 %v3222, %v3164
      %v3255 = vadd.f32 %v3223, %v3169
      %v3256 = vadd.f32 %v3224, %v3174
      %v3257 = vadd.f32 %v3225, %v3179
      %v3258 = vadd.f32 %v3226, %v3184
      %v3259 = vadd.f32 %v3227, %v3189
      %v3260 = vadd.f32 %v3228, %v3194
      %3261 = vst [vmem:[#allocation2] sm:$0xff] %v3229
      %3262 = vst [vmem:[#allocation2 + $0x8] sm:$0xff] %v3230
      %3263 = vst [vmem:[#allocation2 + $0x10] sm:$0xff] %v3231
      %3264 = vst [vmem:[#allocation2 + $0x18] sm:$0xff] %v3232
      %3265 = vst [vmem:[#allocation2 + $0x20] sm:$0xff] %v3233
      %3266 = vst [vmem:[#allocation2 + $0x28] sm:$0xff] %v3234
      %3267 = vst [vmem:[#allocation2 + $0x30] sm:$0xff] %v3235
      %3268 = vst [vmem:[#allocation2 + $0x38] sm:$0xff] %v3236
      %3269 = vst [vmem:[#allocation2 + $0x40] sm:$0xff] %v3237
      %3270 = vst [vmem:[#allocation2 + $0x48] sm:$0xff] %v3238
      %3271 = vst [vmem:[#allocation2 + $0x50] sm:$0xff] %v3239
      %3272 = vst [vmem:[#allocation2 + $0x58] sm:$0xff] %v3240
      %3273 = vst [vmem:[#allocation2 + $0x60] sm:$0xff] %v3241
      %3274 = vst [vmem:[#allocation2 + $0x68] sm:$0xff] %v3242
      %3275 = vst [vmem:[#allocation2 + $0x70] sm:$0xff] %v3243
      %3276 = vst [vmem:[#allocation2 + $0x78] sm:$0xff] %v3244
      %3277 = vst [vmem:[#allocation2 + $0x80] sm:$0xff] %v3245
      %3278 = vst [vmem:[#allocation2 + $0x88] sm:$0xff] %v3246
      %3279 = vst [vmem:[#allocation2 + $0x90] sm:$0xff] %v3247
      %3280 = vst [vmem:[#allocation2 + $0x98] sm:$0xff] %v3248
      %3281 = vst [vmem:[#allocation2 + $0xa0] sm:$0xff] %v3249
      %3282 = vst [vmem:[#allocation2 + $0xa8] sm:$0xff] %v3250
      %3283 = vst [vmem:[#allocation2 + $0xb0] sm:$0xff] %v3251
      %3284 = vst [vmem:[#allocation2 + $0xb8] sm:$0xff] %v3252
      %3285 = vst [vmem:[#allocation2 + $0xc0] sm:$0xff] %v3253
      %3286 = vst [vmem:[#allocation2 + $0xc8] sm:$0xff] %v3254
      %3287 = vst [vmem:[#allocation2 + $0xd0] sm:$0xff] %v3255
      %3288 = vst [vmem:[#allocation2 + $0xd8] sm:$0xff] %v3256
      %3289 = vst [vmem:[#allocation2 + $0xe0] sm:$0xff] %v3257
      %3290 = vst [vmem:[#allocation2 + $0xe8] sm:$0xff] %v3258
      %3291 = vst [vmem:[#allocation2 + $0xf0] sm:$0xff] %v3259
      %3292 = vst [vmem:[#allocation2 + $0xf8] sm:$0xff] %v3260
      %v3293 = vld [vmem:[%s2838 + $0x1] sm:$0xff]
      %v3294 = vld [vmem:[%s2838 + $0x9] sm:$0xff]
      %v3295 = vld [vmem:[%s2838 + $0x19] sm:$0xff]
      %v3296 = vld [vmem:[%s2838 + $0x21] sm:$0xff]
      %v3297 = vld [vmem:[%s2838 + $0x31] sm:$0xff]
      %v3298 = vld [vmem:[%s2838 + $0x39] sm:$0xff]
      %v3299 = vld [vmem:[%s2838 + $0x49] sm:$0xff]
      %v3300 = vld [vmem:[%s2838 + $0x51] sm:$0xff]
      %v3301 = vld [vmem:[%s2838 + $0x61] sm:$0xff]
      %v3302 = vld [vmem:[%s2838 + $0x69] sm:$0xff]
      %v3303 = vld [vmem:[%s2838 + $0x79] sm:$0xff]
      %v3304 = vld [vmem:[%s2838 + $0x81] sm:$0xff]
      %v3305 = vld [vmem:[%s2838 + $0x91] sm:$0xff]
      %v3306 = vld [vmem:[%s2838 + $0x99] sm:$0xff]
      %v3307 = vld [vmem:[%s2838 + $0xa9] sm:$0xff]
      %v3308 = vld [vmem:[%s2838 + $0xb1] sm:$0xff]
      %v3309 = vld [vmem:[%s2838 + $0xc1] sm:$0xff]
      %v3310 = vld [vmem:[%s2838 + $0xc9] sm:$0xff]
      %v3311 = vld [vmem:[%s2838 + $0xd9] sm:$0xff]
      %v3312 = vld [vmem:[%s2838 + $0xe1] sm:$0xff]
      %v3313 = vld [vmem:[%s2838 + $0xf1] sm:$0xff]
      %v3314 = vld [vmem:[%s2838 + $0xf9] sm:$0xff]
      %v3315 = vld [vmem:[%s2838 + $0x109] sm:$0xff]
      %v3316 = vld [vmem:[%s2838 + $0x111] sm:$0xff]
      %v3317 = vld [vmem:[%s2838 + $0x121] sm:$0xff]
      %v3318 = vld [vmem:[%s2838 + $0x129] sm:$0xff]
      %v3319 = vld [vmem:[%s2838 + $0x139] sm:$0xff]
      %v3320 = vld [vmem:[%s2838 + $0x141] sm:$0xff]
      %v3321 = vld [vmem:[%s2838 + $0x151] sm:$0xff]
      %v3322 = vld [vmem:[%s2838 + $0x159] sm:$0xff]
      %v3323 = vld [vmem:[%s2838 + $0x169] sm:$0xff]
      %v3324 = vld [vmem:[%s2838 + $0x171] sm:$0xff]
      %s3325 = scalar_lea.vmem %s1, 28
      %v3326 = vld [vmem:[%s3325] sm:$0xf]
      %v3328 = vsel %vm209, %v3293, 0
      %v3331 = vsel %vm209, %v3294, 0
      %v3334 = vsel %vm209, %v3295, 0
      %v3337 = vsel %vm209, %v3296, 0
      %v3340 = vsel %vm209, %v3297, 0
      %v3343 = vsel %vm209, %v3298, 0
      %v3346 = vsel %vm209, %v3299, 0
      %v3349 = vsel %vm209, %v3300, 0
      %v3352 = vsel %vm209, %v3301, 0
      %v3355 = vsel %vm209, %v3302, 0
      %v3358 = vsel %vm209, %v3303, 0
      %v3361 = vsel %vm209, %v3304, 0
      %v3364 = vsel %vm209, %v3305, 0
      %v3367 = vsel %vm209, %v3306, 0
      %v3370 = vsel %vm209, %v3307, 0
      %v3373 = vsel %vm209, %v3308, 0
      %v3376 = vsel %vm209, %v3309, 0
      %v3379 = vsel %vm209, %v3310, 0
      %v3382 = vsel %vm209, %v3311, 0
      %v3385 = vsel %vm209, %v3312, 0
      %v3388 = vsel %vm209, %v3313, 0
      %v3391 = vsel %vm209, %v3314, 0
      %v3394 = vsel %vm209, %v3315, 0
      %v3397 = vsel %vm209, %v3316, 0
      %v3400 = vsel %vm209, %v3317, 0
      %v3403 = vsel %vm209, %v3318, 0
      %v3406 = vsel %vm209, %v3319, 0
      %v3409 = vsel %vm209, %v3320, 0
      %v3412 = vsel %vm209, %v3321, 0
      %v3415 = vsel %vm209, %v3322, 0
      %v3418 = vsel %vm209, %v3323, 0
      %v3421 = vsel %vm209, %v3324, 0
      %v3424 = vsel %vm306, %v3326, 0
      %3426 = vmatprep.subr.mxu0 0.0
      %3427 = vmatpush1.msra.mxu0 %v3424
      %3428 = vmatprep.subr.mxu0 0.0
      %3429 = vmatpush1.msra.mxu0 0.0
      %3430 = vmatprep.subr.mxu0 0.0
      %3431 = vmatpush1.msra.mxu0 0.0
      %3432 = vmatprep.subr.mxu0 0.0
      %3433 = vmatpush1.msra.mxu0 0.0
      %3434 = vmatprep.subr.mxu0 0.0
      %3435 = vmatpush1.msra.mxu0 0.0
      %3436 = vmatprep.subr.mxu0 0.0
      %3437 = vmatpush1.msra.mxu0 0.0
      %3438 = vmatprep.subr.mxu0 0.0
      %3439 = vmatpush1.msra.mxu0 0.0
      %3440 = vmatprep.subr.mxu0 0.0
      %3441 = vmatpush1.msra.mxu0 0.0
      %3442 = vmatprep.subr.mxu0 0.0
      %3443 = vmatpush1.msra.mxu0 0.0
      %3444 = vmatprep.subr.mxu0 0.0
      %3445 = vmatpush1.msra.mxu0 0.0
      %3446 = vmatprep.subr.mxu0 0.0
      %3447 = vmatpush1.msra.mxu0 0.0
      %3448 = vmatprep.subr.mxu0 0.0
      %3449 = vmatpush1.msra.mxu0 0.0
      %3450 = vmatprep.subr.mxu0 0.0
      %3451 = vmatpush1.msra.mxu0 0.0
      %3452 = vmatprep.subr.mxu0 0.0
      %3453 = vmatpush1.msra.mxu0 0.0
      %3454 = vmatprep.subr.mxu0 0.0
      %3455 = vmatpush1.msra.mxu0 0.0
      %3456 = vmatprep.subr.mxu0 0.0
      %3457 = vmatpush1.msra.mxu0 0.0
      %3458 = vmatprep.subr.mxu0 0.0
      %3459 = vmatpush1.msra.mxu0 0.0
      %3460 = vmatprep.subr.mxu0 0.0
      %3461 = vmatpush1.msra.mxu0 0.0
      %3462 = vmatprep.subr.mxu0 0.0
      %3463 = vmatpush1.msra.mxu0 0.0
      %3464 = vmatprep.subr.mxu0 0.0
      %3465 = vmatpush1.msra.mxu0 0.0
      %3466 = vmatprep.subr.mxu0 0.0
      %3467 = vmatpush1.msra.mxu0 0.0
      %3468 = vmatprep.subr.mxu0 0.0
      %3469 = vmatpush1.msra.mxu0 0.0
      %3470 = vmatprep.subr.mxu0 0.0
      %3471 = vmatpush1.msra.mxu0 0.0
      %3472 = vmatprep.subr.mxu0 0.0
      %3473 = vmatpush1.msra.mxu0 0.0
      %3474 = vmatprep.subr.mxu0 0.0
      %3475 = vmatpush1.msra.mxu0 0.0
      %3476 = vmatprep.subr.mxu0 0.0
      %3477 = vmatpush1.msra.mxu0 0.0
      %3478 = vmatprep.subr.mxu0 0.0
      %3479 = vmatpush1.msra.mxu0 0.0
      %3480 = vmatprep.subr.mxu0 0.0
      %3481 = vmatpush1.msra.mxu0 0.0
      %3482 = vmatprep.subr.mxu0 0.0
      %3483 = vmatpush1.msra.mxu0 0.0
      %3484 = vmatprep.subr.mxu0 0.0
      %3485 = vmatpush1.msra.mxu0 0.0
      %3486 = vmatprep.subr.mxu0 0.0
      %3487 = vmatpush1.msra.mxu0 0.0
      %3488 = vmatprep.subr.mxu0 0.0
      %3489 = vmatpush1.msra.mxu0 0.0
      %3490 = vmatprep.mubr.f32.mxu0 0.0
      %3491 = vmatmul.mubr.f32.gmra.mrb[0].mxu0 %v3328
      %v3492 = vpop.f32.mrb[0].mxu0
      %v3493 = vadd.f32 0.0, %v3492
      %v3494 = vpop.f32.mrb[0].mxu0
      %3495 = vmatprep.mubr.f32.mxu0 0.0
      %3496 = vmatmul.mubr.f32.gmra.mrb[0].mxu0 %v3331
      %v3497 = vpop.f32.mrb[0].mxu0
      %v3498 = vadd.f32 0.0, %v3497
      %v3499 = vpop.f32.mrb[0].mxu0
      %3500 = vmatprep.mubr.f32.mxu0 0.0
      %3501 = vmatmul.mubr.f32.gmra.mrb[0].mxu0 %v3334
      %v3502 = vpop.f32.mrb[0].mxu0
      %v3503 = vadd.f32 0.0, %v3502
      %v3504 = vpop.f32.mrb[0].mxu0
      %3505 = vmatprep.mubr.f32.mxu0 0.0
      %3506 = vmatmul.mubr.f32.gmra.mrb[0].mxu0 %v3337
      %v3507 = vpop.f32.mrb[0].mxu0
      %v3508 = vadd.f32 0.0, %v3507
      %v3509 = vpop.f32.mrb[0].mxu0
      %3510 = vmatprep.mubr.f32.mxu0 0.0
      %3511 = vmatmul.mubr.f32.gmra.mrb[0].mxu0 %v3340
      %v3512 = vpop.f32.mrb[0].mxu0
      %v3513 = vadd.f32 0.0, %v3512
      %v3514 = vpop.f32.mrb[0].mxu0
      %3515 = vmatprep.mubr.f32.mxu0 0.0
      %3516 = vmatmul.mubr.f32.gmra.mrb[0].mxu0 %v3343
      %v3517 = vpop.f32.mrb[0].mxu0
      %v3518 = vadd.f32 0.0, %v3517
      %v3519 = vpop.f32.mrb[0].mxu0
      %3520 = vmatprep.mubr.f32.mxu0 0.0
      %3521 = vmatmul.mubr.f32.gmra.mrb[0].mxu0 %v3346
      %v3522 = vpop.f32.mrb[0].mxu0
      %v3523 = vadd.f32 0.0, %v3522
      %v3524 = vpop.f32.mrb[0].mxu0
      %3525 = vmatprep.mubr.f32.mxu0 0.0
      %3526 = vmatmul.mubr.f32.gmra.mrb[0].mxu0 %v3349
      %v3527 = vpop.f32.mrb[0].mxu0
      %v3528 = vadd.f32 0.0, %v3527
      %v3529 = vpop.f32.mrb[0].mxu0
      %3530 = vmatprep.mubr.f32.mxu0 0.0
      %3531 = vmatmul.mubr.f32.gmra.mrb[0].mxu0 %v3352
      %v3532 = vpop.f32.mrb[0].mxu0
      %v3533 = vadd.f32 0.0, %v3532
      %v3534 = vpop.f32.mrb[0].mxu0
      %3535 = vmatprep.mubr.f32.mxu0 0.0
      %3536 = vmatmul.mubr.f32.gmra.mrb[0].mxu0 %v3355
      %v3537 = vpop.f32.mrb[0].mxu0
      %v3538 = vadd.f32 0.0, %v3537
      %v3539 = vpop.f32.mrb[0].mxu0
      %3540 = vmatprep.mubr.f32.mxu0 0.0
      %3541 = vmatmul.mubr.f32.gmra.mrb[0].mxu0 %v3358
      %v3542 = vpop.f32.mrb[0].mxu0
      %v3543 = vadd.f32 0.0, %v3542
      %v3544 = vpop.f32.mrb[0].mxu0
      %3545 = vmatprep.mubr.f32.mxu0 0.0
      %3546 = vmatmul.mubr.f32.gmra.mrb[0].mxu0 %v3361
      %v3547 = vpop.f32.mrb[0].mxu0
      %v3548 = vadd.f32 0.0, %v3547
      %v3549 = vpop.f32.mrb[0].mxu0
      %3550 = vmatprep.mubr.f32.mxu0 0.0
      %3551 = vmatmul.mubr.f32.gmra.mrb[0].mxu0 %v3364
      %v3552 = vpop.f32.mrb[0].mxu0
      %v3553 = vadd.f32 0.0, %v3552
      %v3554 = vpop.f32.mrb[0].mxu0
      %3555 = vmatprep.mubr.f32.mxu0 0.0
      %3556 = vmatmul.mubr.f32.gmra.mrb[0].mxu0 %v3367
      %v3557 = vpop.f32.mrb[0].mxu0
      %v3558 = vadd.f32 0.0, %v3557
      %v3559 = vpop.f32.mrb[0].mxu0
      %3560 = vmatprep.mubr.f32.mxu0 0.0
      %3561 = vmatmul.mubr.f32.gmra.mrb[0].mxu0 %v3370
      %v3562 = vpop.f32.mrb[0].mxu0
      %v3563 = vadd.f32 0.0, %v3562
      %v3564 = vpop.f32.mrb[0].mxu0
      %3565 = vmatprep.mubr.f32.mxu0 0.0
      %3566 = vmatmul.mubr.f32.gmra.mrb[0].mxu0 %v3373
      %v3567 = vpop.f32.mrb[0].mxu0
      %v3568 = vadd.f32 0.0, %v3567
      %v3569 = vpop.f32.mrb[0].mxu0
      %3570 = vmatprep.mubr.f32.mxu0 0.0
      %3571 = vmatmul.mubr.f32.gmra.mrb[0].mxu0 %v3376
      %v3572 = vpop.f32.mrb[0].mxu0
      %v3573 = vadd.f32 0.0, %v3572
      %v3574 = vpop.f32.mrb[0].mxu0
      %3575 = vmatprep.mubr.f32.mxu0 0.0
      %3576 = vmatmul.mubr.f32.gmra.mrb[0].mxu0 %v3379
      %v3577 = vpop.f32.mrb[0].mxu0
      %v3578 = vadd.f32 0.0, %v3577
      %v3579 = vpop.f32.mrb[0].mxu0
      %3580 = vmatprep.mubr.f32.mxu0 0.0
      %3581 = vmatmul.mubr.f32.gmra.mrb[0].mxu0 %v3382
      %v3582 = vpop.f32.mrb[0].mxu0
      %v3583 = vadd.f32 0.0, %v3582
      %v3584 = vpop.f32.mrb[0].mxu0
      %3585 = vmatprep.mubr.f32.mxu0 0.0
      %3586 = vmatmul.mubr.f32.gmra.mrb[0].mxu0 %v3385
      %v3587 = vpop.f32.mrb[0].mxu0
      %v3588 = vadd.f32 0.0, %v3587
      %v3589 = vpop.f32.mrb[0].mxu0
      %3590 = vmatprep.mubr.f32.mxu0 0.0
      %3591 = vmatmul.mubr.f32.gmra.mrb[0].mxu0 %v3388
      %v3592 = vpop.f32.mrb[0].mxu0
      %v3593 = vadd.f32 0.0, %v3592
      %v3594 = vpop.f32.mrb[0].mxu0
      %3595 = vmatprep.mubr.f32.mxu0 0.0
      %3596 = vmatmul.mubr.f32.gmra.mrb[0].mxu0 %v3391
      %v3597 = vpop.f32.mrb[0].mxu0
      %v3598 = vadd.f32 0.0, %v3597
      %v3599 = vpop.f32.mrb[0].mxu0
      %3600 = vmatprep.mubr.f32.mxu0 0.0
      %3601 = vmatmul.mubr.f32.gmra.mrb[0].mxu0 %v3394
      %v3602 = vpop.f32.mrb[0].mxu0
      %v3603 = vadd.f32 0.0, %v3602
      %v3604 = vpop.f32.mrb[0].mxu0
      %3605 = vmatprep.mubr.f32.mxu0 0.0
      %3606 = vmatmul.mubr.f32.gmra.mrb[0].mxu0 %v3397
      %v3607 = vpop.f32.mrb[0].mxu0
      %v3608 = vadd.f32 0.0, %v3607
      %v3609 = vpop.f32.mrb[0].mxu0
      %3610 = vmatprep.mubr.f32.mxu0 0.0
      %3611 = vmatmul.mubr.f32.gmra.mrb[0].mxu0 %v3400
      %v3612 = vpop.f32.mrb[0].mxu0
      %v3613 = vadd.f32 0.0, %v3612
      %v3614 = vpop.f32.mrb[0].mxu0
      %3615 = vmatprep.mubr.f32.mxu0 0.0
      %3616 = vmatmul.mubr.f32.gmra.mrb[0].mxu0 %v3403
      %v3617 = vpop.f32.mrb[0].mxu0
      %v3618 = vadd.f32 0.0, %v3617
      %v3619 = vpop.f32.mrb[0].mxu0
      %3620 = vmatprep.mubr.f32.mxu0 0.0
      %3621 = vmatmul.mubr.f32.gmra.mrb[0].mxu0 %v3406
      %v3622 = vpop.f32.mrb[0].mxu0
      %v3623 = vadd.f32 0.0, %v3622
      %v3624 = vpop.f32.mrb[0].mxu0
      %3625 = vmatprep.mubr.f32.mxu0 0.0
      %3626 = vmatmul.mubr.f32.gmra.mrb[0].mxu0 %v3409
      %v3627 = vpop.f32.mrb[0].mxu0
      %v3628 = vadd.f32 0.0, %v3627
      %v3629 = vpop.f32.mrb[0].mxu0
      %3630 = vmatprep.mubr.f32.mxu0 0.0
      %3631 = vmatmul.mubr.f32.gmra.mrb[0].mxu0 %v3412
      %v3632 = vpop.f32.mrb[0].mxu0
      %v3633 = vadd.f32 0.0, %v3632
      %v3634 = vpop.f32.mrb[0].mxu0
      %3635 = vmatprep.mubr.f32.mxu0 0.0
      %3636 = vmatmul.mubr.f32.gmra.mrb[0].mxu0 %v3415
      %v3637 = vpop.f32.mrb[0].mxu0
      %v3638 = vadd.f32 0.0, %v3637
      %v3639 = vpop.f32.mrb[0].mxu0
      %3640 = vmatprep.mubr.f32.mxu0 0.0
      %3641 = vmatmul.mubr.f32.gmra.mrb[0].mxu0 %v3418
      %v3642 = vpop.f32.mrb[0].mxu0
      %v3643 = vadd.f32 0.0, %v3642
      %v3644 = vpop.f32.mrb[0].mxu0
      %3645 = vmatprep.mubr.f32.mxu0 0.0
      %3646 = vmatmul.mubr.f32.gmra.mrb[0].mxu0 %v3421
      %v3647 = vpop.f32.mrb[0].mxu0
      %v3648 = vadd.f32 0.0, %v3647
      %v3649 = vpop.f32.mrb[0].mxu0
      %3650 = vdwg.mxu0
      %v3651 = vld [vmem:[#allocation2] sm:$0xff]
      %v3652 = vld [vmem:[#allocation2 + $0x8] sm:$0xff]
      %v3653 = vld [vmem:[#allocation2 + $0x10] sm:$0xff]
      %v3654 = vld [vmem:[#allocation2 + $0x18] sm:$0xff]
      %v3655 = vld [vmem:[#allocation2 + $0x20] sm:$0xff]
      %v3656 = vld [vmem:[#allocation2 + $0x28] sm:$0xff]
      %v3657 = vld [vmem:[#allocation2 + $0x30] sm:$0xff]
      %v3658 = vld [vmem:[#allocation2 + $0x38] sm:$0xff]
      %v3659 = vld [vmem:[#allocation2 + $0x40] sm:$0xff]
      %v3660 = vld [vmem:[#allocation2 + $0x48] sm:$0xff]
      %v3661 = vld [vmem:[#allocation2 + $0x50] sm:$0xff]
      %v3662 = vld [vmem:[#allocation2 + $0x58] sm:$0xff]
      %v3663 = vld [vmem:[#allocation2 + $0x60] sm:$0xff]
      %v3664 = vld [vmem:[#allocation2 + $0x68] sm:$0xff]
      %v3665 = vld [vmem:[#allocation2 + $0x70] sm:$0xff]
      %v3666 = vld [vmem:[#allocation2 + $0x78] sm:$0xff]
      %v3667 = vld [vmem:[#allocation2 + $0x80] sm:$0xff]
      %v3668 = vld [vmem:[#allocation2 + $0x88] sm:$0xff]
      %v3669 = vld [vmem:[#allocation2 + $0x90] sm:$0xff]
      %v3670 = vld [vmem:[#allocation2 + $0x98] sm:$0xff]
      %v3671 = vld [vmem:[#allocation2 + $0xa0] sm:$0xff]
      %v3672 = vld [vmem:[#allocation2 + $0xa8] sm:$0xff]
      %v3673 = vld [vmem:[#allocation2 + $0xb0] sm:$0xff]
      %v3674 = vld [vmem:[#allocation2 + $0xb8] sm:$0xff]
      %v3675 = vld [vmem:[#allocation2 + $0xc0] sm:$0xff]
      %v3676 = vld [vmem:[#allocation2 + $0xc8] sm:$0xff]
      %v3677 = vld [vmem:[#allocation2 + $0xd0] sm:$0xff]
      %v3678 = vld [vmem:[#allocation2 + $0xd8] sm:$0xff]
      %v3679 = vld [vmem:[#allocation2 + $0xe0] sm:$0xff]
      %v3680 = vld [vmem:[#allocation2 + $0xe8] sm:$0xff]
      %v3681 = vld [vmem:[#allocation2 + $0xf0] sm:$0xff]
      %v3682 = vld [vmem:[#allocation2 + $0xf8] sm:$0xff]
      %v3683 = vadd.f32 %v3651, %v3493
      %v3684 = vadd.f32 %v3652, %v3498
      %v3685 = vadd.f32 %v3653, %v3503
      %v3686 = vadd.f32 %v3654, %v3508
      %v3687 = vadd.f32 %v3655, %v3513
      %v3688 = vadd.f32 %v3656, %v3518
      %v3689 = vadd.f32 %v3657, %v3523
      %v3690 = vadd.f32 %v3658, %v3528
      %v3691 = vadd.f32 %v3659, %v3533
      %v3692 = vadd.f32 %v3660, %v3538
      %v3693 = vadd.f32 %v3661, %v3543
      %v3694 = vadd.f32 %v3662, %v3548
      %v3695 = vadd.f32 %v3663, %v3553
      %v3696 = vadd.f32 %v3664, %v3558
      %v3697 = vadd.f32 %v3665, %v3563
      %v3698 = vadd.f32 %v3666, %v3568
      %v3699 = vadd.f32 %v3667, %v3573
      %v3700 = vadd.f32 %v3668, %v3578
      %v3701 = vadd.f32 %v3669, %v3583
      %v3702 = vadd.f32 %v3670, %v3588
      %v3703 = vadd.f32 %v3671, %v3593
      %v3704 = vadd.f32 %v3672, %v3598
      %v3705 = vadd.f32 %v3673, %v3603
      %v3706 = vadd.f32 %v3674, %v3608
      %v3707 = vadd.f32 %v3675, %v3613
      %v3708 = vadd.f32 %v3676, %v3618
      %v3709 = vadd.f32 %v3677, %v3623
      %v3710 = vadd.f32 %v3678, %v3628
      %v3711 = vadd.f32 %v3679, %v3633
      %v3712 = vadd.f32 %v3680, %v3638
      %v3713 = vadd.f32 %v3681, %v3643
      %v3714 = vadd.f32 %v3682, %v3648
      %3715 = vst [vmem:[#allocation2] sm:$0xff] %v3683
      %3716 = vst [vmem:[#allocation2 + $0x8] sm:$0xff] %v3684
      %3717 = vst [vmem:[#allocation2 + $0x10] sm:$0xff] %v3685
      %3718 = vst [vmem:[#allocation2 + $0x18] sm:$0xff] %v3686
      %3719 = vst [vmem:[#allocation2 + $0x20] sm:$0xff] %v3687
      %3720 = vst [vmem:[#allocation2 + $0x28] sm:$0xff] %v3688
      %3721 = vst [vmem:[#allocation2 + $0x30] sm:$0xff] %v3689
      %3722 = vst [vmem:[#allocation2 + $0x38] sm:$0xff] %v3690
      %3723 = vst [vmem:[#allocation2 + $0x40] sm:$0xff] %v3691
      %3724 = vst [vmem:[#allocation2 + $0x48] sm:$0xff] %v3692
      %3725 = vst [vmem:[#allocation2 + $0x50] sm:$0xff] %v3693
      %3726 = vst [vmem:[#allocation2 + $0x58] sm:$0xff] %v3694
      %3727 = vst [vmem:[#allocation2 + $0x60] sm:$0xff] %v3695
      %3728 = vst [vmem:[#allocation2 + $0x68] sm:$0xff] %v3696
      %3729 = vst [vmem:[#allocation2 + $0x70] sm:$0xff] %v3697
      %3730 = vst [vmem:[#allocation2 + $0x78] sm:$0xff] %v3698
      %3731 = vst [vmem:[#allocation2 + $0x80] sm:$0xff] %v3699
      %3732 = vst [vmem:[#allocation2 + $0x88] sm:$0xff] %v3700
      %3733 = vst [vmem:[#allocation2 + $0x90] sm:$0xff] %v3701
      %3734 = vst [vmem:[#allocation2 + $0x98] sm:$0xff] %v3702
      %3735 = vst [vmem:[#allocation2 + $0xa0] sm:$0xff] %v3703
      %3736 = vst [vmem:[#allocation2 + $0xa8] sm:$0xff] %v3704
      %3737 = vst [vmem:[#allocation2 + $0xb0] sm:$0xff] %v3705
      %3738 = vst [vmem:[#allocation2 + $0xb8] sm:$0xff] %v3706
      %3739 = vst [vmem:[#allocation2 + $0xc0] sm:$0xff] %v3707
      %3740 = vst [vmem:[#allocation2 + $0xc8] sm:$0xff] %v3708
      %3741 = vst [vmem:[#allocation2 + $0xd0] sm:$0xff] %v3709
      %3742 = vst [vmem:[#allocation2 + $0xd8] sm:$0xff] %v3710
      %3743 = vst [vmem:[#allocation2 + $0xe0] sm:$0xff] %v3711
      %3744 = vst [vmem:[#allocation2 + $0xe8] sm:$0xff] %v3712
      %3745 = vst [vmem:[#allocation2 + $0xf0] sm:$0xff] %v3713
      %3746 = vst [vmem:[#allocation2 + $0xf8] sm:$0xff] %v3714
      %v3747 = vld [vmem:[%s2838 + $0x2] sm:$0xff]
      %v3748 = vld [vmem:[%s2838 + $0xa] sm:$0xff]
      %v3749 = vld [vmem:[%s2838 + $0x1a] sm:$0xff]
      %v3750 = vld [vmem:[%s2838 + $0x22] sm:$0xff]
      %v3751 = vld [vmem:[%s2838 + $0x32] sm:$0xff]
      %v3752 = vld [vmem:[%s2838 + $0x3a] sm:$0xff]
      %v3753 = vld [vmem:[%s2838 + $0x4a] sm:$0xff]
      %v3754 = vld [vmem:[%s2838 + $0x52] sm:$0xff]
      %v3755 = vld [vmem:[%s2838 + $0x62] sm:$0xff]
      %v3756 = vld [vmem:[%s2838 + $0x6a] sm:$0xff]
      %v3757 = vld [vmem:[%s2838 + $0x7a] sm:$0xff]
      %v3758 = vld [vmem:[%s2838 + $0x82] sm:$0xff]
      %v3759 = vld [vmem:[%s2838 + $0x92] sm:$0xff]
      %v3760 = vld [vmem:[%s2838 + $0x9a] sm:$0xff]
      %v3761 = vld [vmem:[%s2838 + $0xaa] sm:$0xff]
      %v3762 = vld [vmem:[%s2838 + $0xb2] sm:$0xff]
      %v3763 = vld [vmem:[%s2838 + $0xc2] sm:$0xff]
      %v3764 = vld [vmem:[%s2838 + $0xca] sm:$0xff]
      %v3765 = vld [vmem:[%s2838 + $0xda] sm:$0xff]
      %v3766 = vld [vmem:[%s2838 + $0xe2] sm:$0xff]
      %v3767 = vld [vmem:[%s2838 + $0xf2] sm:$0xff]
      %v3768 = vld [vmem:[%s2838 + $0xfa] sm:$0xff]
      %v3769 = vld [vmem:[%s2838 + $0x10a] sm:$0xff]
      %v3770 = vld [vmem:[%s2838 + $0x112] sm:$0xff]
      %v3771 = vld [vmem:[%s2838 + $0x122] sm:$0xff]
      %v3772 = vld [vmem:[%s2838 + $0x12a] sm:$0xff]
      %v3773 = vld [vmem:[%s2838 + $0x13a] sm:$0xff]
      %v3774 = vld [vmem:[%s2838 + $0x142] sm:$0xff]
      %v3775 = vld [vmem:[%s2838 + $0x152] sm:$0xff]
      %v3776 = vld [vmem:[%s2838 + $0x15a] sm:$0xff]
      %v3777 = vld [vmem:[%s2838 + $0x16a] sm:$0xff]
      %v3778 = vld [vmem:[%s2838 + $0x172] sm:$0xff]
      %s3779 = scalar_lea.vmem %s1, 32
      %v3780 = vld [vmem:[%s3779] sm:$0xf]
      %v3782 = vsel %vm209, %v3747, 0
      %v3785 = vsel %vm209, %v3748, 0
      %v3788 = vsel %vm209, %v3749, 0
      %v3791 = vsel %vm209, %v3750, 0
      %v3794 = vsel %vm209, %v3751, 0
      %v3797 = vsel %vm209, %v3752, 0
      %v3800 = vsel %vm209, %v3753, 0
      %v3803 = vsel %vm209, %v3754, 0
      %v3806 = vsel %vm209, %v3755, 0
      %v3809 = vsel %vm209, %v3756, 0
      %v3812 = vsel %vm209, %v3757, 0
      %v3815 = vsel %vm209, %v3758, 0
      %v3818 = vsel %vm209, %v3759, 0
      %v3821 = vsel %vm209, %v3760, 0
      %v3824 = vsel %vm209, %v3761, 0
      %v3827 = vsel %vm209, %v3762, 0
      %v3830 = vsel %vm209, %v3763, 0
      %v3833 = vsel %vm209, %v3764, 0
      %v3836 = vsel %vm209, %v3765, 0
      %v3839 = vsel %vm209, %v3766, 0
      %v3842 = vsel %vm209, %v3767, 0
      %v3845 = vsel %vm209, %v3768, 0
      %v3848 = vsel %vm209, %v3769, 0
      %v3851 = vsel %vm209, %v3770, 0
      %v3854 = vsel %vm209, %v3771, 0
      %v3857 = vsel %vm209, %v3772, 0
      %v3860 = vsel %vm209, %v3773, 0
      %v3863 = vsel %vm209, %v3774, 0
      %v3866 = vsel %vm209, %v3775, 0
      %v3869 = vsel %vm209, %v3776, 0
      %v3872 = vsel %vm209, %v3777, 0
      %v3875 = vsel %vm209, %v3778, 0
      %v3878 = vsel %vm306, %v3780, 0
      %3880 = vmatprep.subr.mxu0 0.0
      %3881 = vmatpush1.msra.mxu0 %v3878
      %3882 = vmatprep.subr.mxu0 0.0
      %3883 = vmatpush1.msra.mxu0 0.0
      %3884 = vmatprep.subr.mxu0 0.0
      %3885 = vmatpush1.msra.mxu0 0.0
      %3886 = vmatprep.subr.mxu0 0.0
      %3887 = vmatpush1.msra.mxu0 0.0
      %3888 = vmatprep.subr.mxu0 0.0
      %3889 = vmatpush1.msra.mxu0 0.0
      %3890 = vmatprep.subr.mxu0 0.0
      %3891 = vmatpush1.msra.mxu0 0.0
      %3892 = vmatprep.subr.mxu0 0.0
      %3893 = vmatpush1.msra.mxu0 0.0
      %3894 = vmatprep.subr.mxu0 0.0
      %3895 = vmatpush1.msra.mxu0 0.0
      %3896 = vmatprep.subr.mxu0 0.0
      %3897 = vmatpush1.msra.mxu0 0.0
      %3898 = vmatprep.subr.mxu0 0.0
      %3899 = vmatpush1.msra.mxu0 0.0
      %3900 = vmatprep.subr.mxu0 0.0
      %3901 = vmatpush1.msra.mxu0 0.0
      %3902 = vmatprep.subr.mxu0 0.0
      %3903 = vmatpush1.msra.mxu0 0.0
      %3904 = vmatprep.subr.mxu0 0.0
      %3905 = vmatpush1.msra.mxu0 0.0
      %3906 = vmatprep.subr.mxu0 0.0
      %3907 = vmatpush1.msra.mxu0 0.0
      %3908 = vmatprep.subr.mxu0 0.0
      %3909 = vmatpush1.msra.mxu0 0.0
      %3910 = vmatprep.subr.mxu0 0.0
      %3911 = vmatpush1.msra.mxu0 0.0
      %3912 = vmatprep.subr.mxu0 0.0
      %3913 = vmatpush1.msra.mxu0 0.0
      %3914 = vmatprep.subr.mxu0 0.0
      %3915 = vmatpush1.msra.mxu0 0.0
      %3916 = vmatprep.subr.mxu0 0.0
      %3917 = vmatpush1.msra.mxu0 0.0
      %3918 = vmatprep.subr.mxu0 0.0
      %3919 = vmatpush1.msra.mxu0 0.0
      %3920 = vmatprep.subr.mxu0 0.0
      %3921 = vmatpush1.msra.mxu0 0.0
      %3922 = vmatprep.subr.mxu0 0.0
      %3923 = vmatpush1.msra.mxu0 0.0
      %3924 = vmatprep.subr.mxu0 0.0
      %3925 = vmatpush1.msra.mxu0 0.0
      %3926 = vmatprep.subr.mxu0 0.0
      %3927 = vmatpush1.msra.mxu0 0.0
      %3928 = vmatprep.subr.mxu0 0.0
      %3929 = vmatpush1.msra.mxu0 0.0
      %3930 = vmatprep.subr.mxu0 0.0
      %3931 = vmatpush1.msra.mxu0 0.0
      %3932 = vmatprep.subr.mxu0 0.0
      %3933 = vmatpush1.msra.mxu0 0.0
      %3934 = vmatprep.subr.mxu0 0.0
      %3935 = vmatpush1.msra.mxu0 0.0
      %3936 = vmatprep.subr.mxu0 0.0
      %3937 = vmatpush1.msra.mxu0 0.0
      %3938 = vmatprep.subr.mxu0 0.0
      %3939 = vmatpush1.msra.mxu0 0.0
      %3940 = vmatprep.subr.mxu0 0.0
      %3941 = vmatpush1.msra.mxu0 0.0
      %3942 = vmatprep.subr.mxu0 0.0
      %3943 = vmatpush1.msra.mxu0 0.0
      %3944 = vmatprep.mubr.f32.mxu0 0.0
      %3945 = vmatmul.mubr.f32.gmra.mrb[0].mxu0 %v3782
      %v3946 = vpop.f32.mrb[0].mxu0
      %v3947 = vadd.f32 0.0, %v3946
      %v3948 = vpop.f32.mrb[0].mxu0
      %3949 = vmatprep.mubr.f32.mxu0 0.0
      %3950 = vmatmul.mubr.f32.gmra.mrb[0].mxu0 %v3785
      %v3951 = vpop.f32.mrb[0].mxu0
      %v3952 = vadd.f32 0.0, %v3951
      %v3953 = vpop.f32.mrb[0].mxu0
      %3954 = vmatprep.mubr.f32.mxu0 0.0
      %3955 = vmatmul.mubr.f32.gmra.mrb[0].mxu0 %v3788
      %v3956 = vpop.f32.mrb[0].mxu0
      %v3957 = vadd.f32 0.0, %v3956
      %v3958 = vpop.f32.mrb[0].mxu0
      %3959 = vmatprep.mubr.f32.mxu0 0.0
      %3960 = vmatmul.mubr.f32.gmra.mrb[0].mxu0 %v3791
      %v3961 = vpop.f32.mrb[0].mxu0
      %v3962 = vadd.f32 0.0, %v3961
      %v3963 = vpop.f32.mrb[0].mxu0
      %3964 = vmatprep.mubr.f32.mxu0 0.0
      %3965 = vmatmul.mubr.f32.gmra.mrb[0].mxu0 %v3794
      %v3966 = vpop.f32.mrb[0].mxu0
      %v3967 = vadd.f32 0.0, %v3966
      %v3968 = vpop.f32.mrb[0].mxu0
      %3969 = vmatprep.mubr.f32.mxu0 0.0
      %3970 = vmatmul.mubr.f32.gmra.mrb[0].mxu0 %v3797
      %v3971 = vpop.f32.mrb[0].mxu0
      %v3972 = vadd.f32 0.0, %v3971
      %v3973 = vpop.f32.mrb[0].mxu0
      %3974 = vmatprep.mubr.f32.mxu0 0.0
      %3975 = vmatmul.mubr.f32.gmra.mrb[0].mxu0 %v3800
      %v3976 = vpop.f32.mrb[0].mxu0
      %v3977 = vadd.f32 0.0, %v3976
      %v3978 = vpop.f32.mrb[0].mxu0
      %3979 = vmatprep.mubr.f32.mxu0 0.0
      %3980 = vmatmul.mubr.f32.gmra.mrb[0].mxu0 %v3803
      %v3981 = vpop.f32.mrb[0].mxu0
      %v3982 = vadd.f32 0.0, %v3981
      %v3983 = vpop.f32.mrb[0].mxu0
      %3984 = vmatprep.mubr.f32.mxu0 0.0
      %3985 = vmatmul.mubr.f32.gmra.mrb[0].mxu0 %v3806
      %v3986 = vpop.f32.mrb[0].mxu0
      %v3987 = vadd.f32 0.0, %v3986
      %v3988 = vpop.f32.mrb[0].mxu0
      %3989 = vmatprep.mubr.f32.mxu0 0.0
      %3990 = vmatmul.mubr.f32.gmra.mrb[0].mxu0 %v3809
      %v3991 = vpop.f32.mrb[0].mxu0
      %v3992 = vadd.f32 0.0, %v3991
      %v3993 = vpop.f32.mrb[0].mxu0
      %3994 = vmatprep.mubr.f32.mxu0 0.0
      %3995 = vmatmul.mubr.f32.gmra.mrb[0].mxu0 %v3812
      %v3996 = vpop.f32.mrb[0].mxu0
      %v3997 = vadd.f32 0.0, %v3996
      %v3998 = vpop.f32.mrb[0].mxu0
      %3999 = vmatprep.mubr.f32.mxu0 0.0
      %4000 = vmatmul.mubr.f32.gmra.mrb[0].mxu0 %v3815
      %v4001 = vpop.f32.mrb[0].mxu0
      %v4002 = vadd.f32 0.0, %v4001
      %v4003 = vpop.f32.mrb[0].mxu0
      %4004 = vmatprep.mubr.f32.mxu0 0.0
      %4005 = vmatmul.mubr.f32.gmra.mrb[0].mxu0 %v3818
      %v4006 = vpop.f32.mrb[0].mxu0
      %v4007 = vadd.f32 0.0, %v4006
      %v4008 = vpop.f32.mrb[0].mxu0
      %4009 = vmatprep.mubr.f32.mxu0 0.0
      %4010 = vmatmul.mubr.f32.gmra.mrb[0].mxu0 %v3821
      %v4011 = vpop.f32.mrb[0].mxu0
      %v4012 = vadd.f32 0.0, %v4011
      %v4013 = vpop.f32.mrb[0].mxu0
      %4014 = vmatprep.mubr.f32.mxu0 0.0
      %4015 = vmatmul.mubr.f32.gmra.mrb[0].mxu0 %v3824
      %v4016 = vpop.f32.mrb[0].mxu0
      %v4017 = vadd.f32 0.0, %v4016
      %v4018 = vpop.f32.mrb[0].mxu0
      %4019 = vmatprep.mubr.f32.mxu0 0.0
      %4020 = vmatmul.mubr.f32.gmra.mrb[0].mxu0 %v3827
      %v4021 = vpop.f32.mrb[0].mxu0
      %v4022 = vadd.f32 0.0, %v4021
      %v4023 = vpop.f32.mrb[0].mxu0
      %4024 = vmatprep.mubr.f32.mxu0 0.0
      %4025 = vmatmul.mubr.f32.gmra.mrb[0].mxu0 %v3830
      %v4026 = vpop.f32.mrb[0].mxu0
      %v4027 = vadd.f32 0.0, %v4026
      %v4028 = vpop.f32.mrb[0].mxu0
      %4029 = vmatprep.mubr.f32.mxu0 0.0
      %4030 = vmatmul.mubr.f32.gmra.mrb[0].mxu0 %v3833
      %v4031 = vpop.f32.mrb[0].mxu0
      %v4032 = vadd.f32 0.0, %v4031
      %v4033 = vpop.f32.mrb[0].mxu0
      %4034 = vmatprep.mubr.f32.mxu0 0.0
      %4035 = vmatmul.mubr.f32.gmra.mrb[0].mxu0 %v3836
      %v4036 = vpop.f32.mrb[0].mxu0
      %v4037 = vadd.f32 0.0, %v4036
      %v4038 = vpop.f32.mrb[0].mxu0
      %4039 = vmatprep.mubr.f32.mxu0 0.0
      %4040 = vmatmul.mubr.f32.gmra.mrb[0].mxu0 %v3839
      %v4041 = vpop.f32.mrb[0].mxu0
      %v4042 = vadd.f32 0.0, %v4041
      %v4043 = vpop.f32.mrb[0].mxu0
      %4044 = vmatprep.mubr.f32.mxu0 0.0
      %4045 = vmatmul.mubr.f32.gmra.mrb[0].mxu0 %v3842
      %v4046 = vpop.f32.mrb[0].mxu0
      %v4047 = vadd.f32 0.0, %v4046
      %v4048 = vpop.f32.mrb[0].mxu0
      %4049 = vmatprep.mubr.f32.mxu0 0.0
      %4050 = vmatmul.mubr.f32.gmra.mrb[0].mxu0 %v3845
      %v4051 = vpop.f32.mrb[0].mxu0
      %v4052 = vadd.f32 0.0, %v4051
      %v4053 = vpop.f32.mrb[0].mxu0
      %4054 = vmatprep.mubr.f32.mxu0 0.0
      %4055 = vmatmul.mubr.f32.gmra.mrb[0].mxu0 %v3848
      %v4056 = vpop.f32.mrb[0].mxu0
      %v4057 = vadd.f32 0.0, %v4056
      %v4058 = vpop.f32.mrb[0].mxu0
      %4059 = vmatprep.mubr.f32.mxu0 0.0
      %4060 = vmatmul.mubr.f32.gmra.mrb[0].mxu0 %v3851
      %v4061 = vpop.f32.mrb[0].mxu0
      %v4062 = vadd.f32 0.0, %v4061
      %v4063 = vpop.f32.mrb[0].mxu0
      %4064 = vmatprep.mubr.f32.mxu0 0.0
      %4065 = vmatmul.mubr.f32.gmra.mrb[0].mxu0 %v3854
      %v4066 = vpop.f32.mrb[0].mxu0
      %v4067 = vadd.f32 0.0, %v4066
      %v4068 = vpop.f32.mrb[0].mxu0
      %4069 = vmatprep.mubr.f32.mxu0 0.0
      %4070 = vmatmul.mubr.f32.gmra.mrb[0].mxu0 %v3857
      %v4071 = vpop.f32.mrb[0].mxu0
      %v4072 = vadd.f32 0.0, %v4071
      %v4073 = vpop.f32.mrb[0].mxu0
      %4074 = vmatprep.mubr.f32.mxu0 0.0
      %4075 = vmatmul.mubr.f32.gmra.mrb[0].mxu0 %v3860
      %v4076 = vpop.f32.mrb[0].mxu0
      %v4077 = vadd.f32 0.0, %v4076
      %v4078 = vpop.f32.mrb[0].mxu0
      %4079 = vmatprep.mubr.f32.mxu0 0.0
      %4080 = vmatmul.mubr.f32.gmra.mrb[0].mxu0 %v3863
      %v4081 = vpop.f32.mrb[0].mxu0
      %v4082 = vadd.f32 0.0, %v4081
      %v4083 = vpop.f32.mrb[0].mxu0
      %4084 = vmatprep.mubr.f32.mxu0 0.0
      %4085 = vmatmul.mubr.f32.gmra.mrb[0].mxu0 %v3866
      %v4086 = vpop.f32.mrb[0].mxu0
      %v4087 = vadd.f32 0.0, %v4086
      %v4088 = vpop.f32.mrb[0].mxu0
      %4089 = vmatprep.mubr.f32.mxu0 0.0
      %4090 = vmatmul.mubr.f32.gmra.mrb[0].mxu0 %v3869
      %v4091 = vpop.f32.mrb[0].mxu0
      %v4092 = vadd.f32 0.0, %v4091
      %v4093 = vpop.f32.mrb[0].mxu0
      %4094 = vmatprep.mubr.f32.mxu0 0.0
      %4095 = vmatmul.mubr.f32.gmra.mrb[0].mxu0 %v3872
      %v4096 = vpop.f32.mrb[0].mxu0
      %v4097 = vadd.f32 0.0, %v4096
      %v4098 = vpop.f32.mrb[0].mxu0
      %4099 = vmatprep.mubr.f32.mxu0 0.0
      %4100 = vmatmul.mubr.f32.gmra.mrb[0].mxu0 %v3875
      %v4101 = vpop.f32.mrb[0].mxu0
      %v4102 = vadd.f32 0.0, %v4101
      %v4103 = vpop.f32.mrb[0].mxu0
      %4104 = vdwg.mxu0
      %v4105 = vld [vmem:[#allocation2] sm:$0xff]
      %v4106 = vld [vmem:[#allocation2 + $0x8] sm:$0xff]
      %v4107 = vld [vmem:[#allocation2 + $0x10] sm:$0xff]
      %v4108 = vld [vmem:[#allocation2 + $0x18] sm:$0xff]
      %v4109 = vld [vmem:[#allocation2 + $0x20] sm:$0xff]
      %v4110 = vld [vmem:[#allocation2 + $0x28] sm:$0xff]
      %v4111 = vld [vmem:[#allocation2 + $0x30] sm:$0xff]
      %v4112 = vld [vmem:[#allocation2 + $0x38] sm:$0xff]
      %v4113 = vld [vmem:[#allocation2 + $0x40] sm:$0xff]
      %v4114 = vld [vmem:[#allocation2 + $0x48] sm:$0xff]
      %v4115 = vld [vmem:[#allocation2 + $0x50] sm:$0xff]
      %v4116 = vld [vmem:[#allocation2 + $0x58] sm:$0xff]
      %v4117 = vld [vmem:[#allocation2 + $0x60] sm:$0xff]
      %v4118 = vld [vmem:[#allocation2 + $0x68] sm:$0xff]
      %v4119 = vld [vmem:[#allocation2 + $0x70] sm:$0xff]
      %v4120 = vld [vmem:[#allocation2 + $0x78] sm:$0xff]
      %v4121 = vld [vmem:[#allocation2 + $0x80] sm:$0xff]
      %v4122 = vld [vmem:[#allocation2 + $0x88] sm:$0xff]
      %v4123 = vld [vmem:[#allocation2 + $0x90] sm:$0xff]
      %v4124 = vld [vmem:[#allocation2 + $0x98] sm:$0xff]
      %v4125 = vld [vmem:[#allocation2 + $0xa0] sm:$0xff]
      %v4126 = vld [vmem:[#allocation2 + $0xa8] sm:$0xff]
      %v4127 = vld [vmem:[#allocation2 + $0xb0] sm:$0xff]
      %v4128 = vld [vmem:[#allocation2 + $0xb8] sm:$0xff]
      %v4129 = vld [vmem:[#allocation2 + $0xc0] sm:$0xff]
      %v4130 = vld [vmem:[#allocation2 + $0xc8] sm:$0xff]
      %v4131 = vld [vmem:[#allocation2 + $0xd0] sm:$0xff]
      %v4132 = vld [vmem:[#allocation2 + $0xd8] sm:$0xff]
      %v4133 = vld [vmem:[#allocation2 + $0xe0] sm:$0xff]
      %v4134 = vld [vmem:[#allocation2 + $0xe8] sm:$0xff]
      %v4135 = vld [vmem:[#allocation2 + $0xf0] sm:$0xff]
      %v4136 = vld [vmem:[#allocation2 + $0xf8] sm:$0xff]
      %v4137 = vadd.f32 %v4105, %v3947
      %v4138 = vadd.f32 %v4106, %v3952
      %v4139 = vadd.f32 %v4107, %v3957
      %v4140 = vadd.f32 %v4108, %v3962
      %v4141 = vadd.f32 %v4109, %v3967
      %v4142 = vadd.f32 %v4110, %v3972
      %v4143 = vadd.f32 %v4111, %v3977
      %v4144 = vadd.f32 %v4112, %v3982
      %v4145 = vadd.f32 %v4113, %v3987
      %v4146 = vadd.f32 %v4114, %v3992
      %v4147 = vadd.f32 %v4115, %v3997
      %v4148 = vadd.f32 %v4116, %v4002
      %v4149 = vadd.f32 %v4117, %v4007
      %v4150 = vadd.f32 %v4118, %v4012
      %v4151 = vadd.f32 %v4119, %v4017
      %v4152 = vadd.f32 %v4120, %v4022
      %v4153 = vadd.f32 %v4121, %v4027
      %v4154 = vadd.f32 %v4122, %v4032
      %v4155 = vadd.f32 %v4123, %v4037
      %v4156 = vadd.f32 %v4124, %v4042
      %v4157 = vadd.f32 %v4125, %v4047
      %v4158 = vadd.f32 %v4126, %v4052
      %v4159 = vadd.f32 %v4127, %v4057
      %v4160 = vadd.f32 %v4128, %v4062
      %v4161 = vadd.f32 %v4129, %v4067
      %v4162 = vadd.f32 %v4130, %v4072
      %v4163 = vadd.f32 %v4131, %v4077
      %v4164 = vadd.f32 %v4132, %v4082
      %v4165 = vadd.f32 %v4133, %v4087
      %v4166 = vadd.f32 %v4134, %v4092
      %v4167 = vadd.f32 %v4135, %v4097
      %v4168 = vadd.f32 %v4136, %v4102
      %4169 = vst [vmem:[#allocation2] sm:$0xff] %v4137
      %4170 = vst [vmem:[#allocation2 + $0x8] sm:$0xff] %v4138
      %4171 = vst [vmem:[#allocation2 + $0x10] sm:$0xff] %v4139
      %4172 = vst [vmem:[#allocation2 + $0x18] sm:$0xff] %v4140
      %4173 = vst [vmem:[#allocation2 + $0x20] sm:$0xff] %v4141
      %4174 = vst [vmem:[#allocation2 + $0x28] sm:$0xff] %v4142
      %4175 = vst [vmem:[#allocation2 + $0x30] sm:$0xff] %v4143
      %4176 = vst [vmem:[#allocation2 + $0x38] sm:$0xff] %v4144
      %4177 = vst [vmem:[#allocation2 + $0x40] sm:$0xff] %v4145
      %4178 = vst [vmem:[#allocation2 + $0x48] sm:$0xff] %v4146
      %4179 = vst [vmem:[#allocation2 + $0x50] sm:$0xff] %v4147
      %4180 = vst [vmem:[#allocation2 + $0x58] sm:$0xff] %v4148
      %4181 = vst [vmem:[#allocation2 + $0x60] sm:$0xff] %v4149
      %4182 = vst [vmem:[#allocation2 + $0x68] sm:$0xff] %v4150
      %4183 = vst [vmem:[#allocation2 + $0x70] sm:$0xff] %v4151
      %4184 = vst [vmem:[#allocation2 + $0x78] sm:$0xff] %v4152
      %4185 = vst [vmem:[#allocation2 + $0x80] sm:$0xff] %v4153
      %4186 = vst [vmem:[#allocation2 + $0x88] sm:$0xff] %v4154
      %4187 = vst [vmem:[#allocation2 + $0x90] sm:$0xff] %v4155
      %4188 = vst [vmem:[#allocation2 + $0x98] sm:$0xff] %v4156
      %4189 = vst [vmem:[#allocation2 + $0xa0] sm:$0xff] %v4157
      %4190 = vst [vmem:[#allocation2 + $0xa8] sm:$0xff] %v4158
      %4191 = vst [vmem:[#allocation2 + $0xb0] sm:$0xff] %v4159
      %4192 = vst [vmem:[#allocation2 + $0xb8] sm:$0xff] %v4160
      %4193 = vst [vmem:[#allocation2 + $0xc0] sm:$0xff] %v4161
      %4194 = vst [vmem:[#allocation2 + $0xc8] sm:$0xff] %v4162
      %4195 = vst [vmem:[#allocation2 + $0xd0] sm:$0xff] %v4163
      %4196 = vst [vmem:[#allocation2 + $0xd8] sm:$0xff] %v4164
      %4197 = vst [vmem:[#allocation2 + $0xe0] sm:$0xff] %v4165
      %4198 = vst [vmem:[#allocation2 + $0xe8] sm:$0xff] %v4166
      %4199 = vst [vmem:[#allocation2 + $0xf0] sm:$0xff] %v4167
      %4200 = vst [vmem:[#allocation2 + $0xf8] sm:$0xff] %v4168
      %v4201 = vld [vmem:[#allocation2] sm:$0xff]
      %v4202 = vld [vmem:[#allocation2 + $0x8] sm:$0xff]
      %v4203 = vld [vmem:[#allocation2 + $0x10] sm:$0xff]
      %v4204 = vld [vmem:[#allocation2 + $0x18] sm:$0xff]
      %v4205 = vld [vmem:[#allocation2 + $0x20] sm:$0xff]
      %v4206 = vld [vmem:[#allocation2 + $0x28] sm:$0xff]
      %v4207 = vld [vmem:[#allocation2 + $0x30] sm:$0xff]
      %v4208 = vld [vmem:[#allocation2 + $0x38] sm:$0xff]
      %v4209 = vld [vmem:[#allocation2 + $0x40] sm:$0xff]
      %v4210 = vld [vmem:[#allocation2 + $0x48] sm:$0xff]
      %v4211 = vld [vmem:[#allocation2 + $0x50] sm:$0xff]
      %v4212 = vld [vmem:[#allocation2 + $0x58] sm:$0xff]
      %v4213 = vld [vmem:[#allocation2 + $0x60] sm:$0xff]
      %v4214 = vld [vmem:[#allocation2 + $0x68] sm:$0xff]
      %v4215 = vld [vmem:[#allocation2 + $0x70] sm:$0xff]
      %v4216 = vld [vmem:[#allocation2 + $0x78] sm:$0xff]
      %v4217 = vld [vmem:[#allocation2 + $0x80] sm:$0xff]
      %v4218 = vld [vmem:[#allocation2 + $0x88] sm:$0xff]
      %v4219 = vld [vmem:[#allocation2 + $0x90] sm:$0xff]
      %v4220 = vld [vmem:[#allocation2 + $0x98] sm:$0xff]
      %v4221 = vld [vmem:[#allocation2 + $0xa0] sm:$0xff]
      %v4222 = vld [vmem:[#allocation2 + $0xa8] sm:$0xff]
      %v4223 = vld [vmem:[#allocation2 + $0xb0] sm:$0xff]
      %v4224 = vld [vmem:[#allocation2 + $0xb8] sm:$0xff]
      %v4225 = vld [vmem:[#allocation2 + $0xc0] sm:$0xff]
      %v4226 = vld [vmem:[#allocation2 + $0xc8] sm:$0xff]
      %v4227 = vld [vmem:[#allocation2 + $0xd0] sm:$0xff]
      %v4228 = vld [vmem:[#allocation2 + $0xd8] sm:$0xff]
      %v4229 = vld [vmem:[#allocation2 + $0xe0] sm:$0xff]
      %v4230 = vld [vmem:[#allocation2 + $0xe8] sm:$0xff]
      %v4231 = vld [vmem:[#allocation2 + $0xf0] sm:$0xff]
      %v4232 = vld [vmem:[#allocation2 + $0xf8] sm:$0xff]
      %v4233 = vadd.f32 %v4201, %v4202
      %v4234 = vadd.f32 %v4233, %v4203
      %v4235 = vadd.f32 %v4234, %v4204
      %v4236 = vadd.f32 %v4235, %v4205
      %v4237 = vadd.f32 %v4236, %v4206
      %v4238 = vadd.f32 %v4237, %v4207
      %v4239 = vadd.f32 %v4238, %v4208
      %v4240 = vadd.f32 %v4239, %v4209
      %v4241 = vadd.f32 %v4240, %v4210
      %v4242 = vadd.f32 %v4241, %v4211
      %v4243 = vadd.f32 %v4242, %v4212
      %v4244 = vadd.f32 %v4243, %v4213
      %v4245 = vadd.f32 %v4244, %v4214
      %v4246 = vadd.f32 %v4245, %v4215
      %v4247 = vadd.f32 %v4246, %v4216
      %v4248 = vadd.f32 %v4247, %v4217
      %v4249 = vadd.f32 %v4248, %v4218
      %v4250 = vadd.f32 %v4249, %v4219
      %v4251 = vadd.f32 %v4250, %v4220
      %v4252 = vadd.f32 %v4251, %v4221
      %v4253 = vadd.f32 %v4252, %v4222
      %v4254 = vadd.f32 %v4253, %v4223
      %v4255 = vadd.f32 %v4254, %v4224
      %v4256 = vadd.f32 %v4255, %v4225
      %v4257 = vadd.f32 %v4256, %v4226
      %v4258 = vadd.f32 %v4257, %v4227
      %v4259 = vadd.f32 %v4258, %v4228
      %v4260 = vadd.f32 %v4259, %v4229
      %v4261 = vadd.f32 %v4260, %v4230
      %v4262 = vadd.f32 %v4261, %v4231
      %v4263 = vadd.f32 %v4262, %v4232
      %v4264 = vrot.slane %v4263, 4
      %v4265 = vadd.f32 %v4263, %v4264
      %v4266 = vrot.slane %v4265, 2
      %v4267 = vadd.f32 %v4265, %v4266
      %v4268 = vrot.slane %v4267, 1
      %v4269 = vadd.f32 %v4267, %v4268
      %4270 = vst [vmem:[%s172] sm:$0x1] %v4269
      %v4271 = vmul.f32 %v4201, %v4201
      %v4272 = vmul.f32 %v4202, %v4202
      %v4273 = vmul.f32 %v4203, %v4203
      %v4274 = vmul.f32 %v4204, %v4204
      %v4275 = vmul.f32 %v4205, %v4205
      %v4276 = vmul.f32 %v4206, %v4206
      %v4277 = vmul.f32 %v4207, %v4207
      %v4278 = vmul.f32 %v4208, %v4208
      %v4279 = vmul.f32 %v4209, %v4209
      %v4280 = vmul.f32 %v4210, %v4210
      %v4281 = vmul.f32 %v4211, %v4211
      %v4282 = vmul.f32 %v4212, %v4212
      %v4283 = vmul.f32 %v4213, %v4213
      %v4284 = vmul.f32 %v4214, %v4214
      %v4285 = vmul.f32 %v4215, %v4215
      %v4286 = vmul.f32 %v4216, %v4216
      %v4287 = vmul.f32 %v4217, %v4217
      %v4288 = vmul.f32 %v4218, %v4218
      %v4289 = vmul.f32 %v4219, %v4219
      %v4290 = vmul.f32 %v4220, %v4220
      %v4291 = vmul.f32 %v4221, %v4221
      %v4292 = vmul.f32 %v4222, %v4222
      %v4293 = vmul.f32 %v4223, %v4223
      %v4294 = vmul.f32 %v4224, %v4224
      %v4295 = vmul.f32 %v4225, %v4225
      %v4296 = vmul.f32 %v4226, %v4226
      %v4297 = vmul.f32 %v4227, %v4227
      %v4298 = vmul.f32 %v4228, %v4228
      %v4299 = vmul.f32 %v4229, %v4229
      %v4300 = vmul.f32 %v4230, %v4230
      %v4301 = vmul.f32 %v4231, %v4231
      %v4302 = vmul.f32 %v4232, %v4232
      %v4303 = vadd.f32 %v4271, %v4272
      %v4304 = vadd.f32 %v4303, %v4273
      %v4305 = vadd.f32 %v4304, %v4274
      %v4306 = vadd.f32 %v4305, %v4275
      %v4307 = vadd.f32 %v4306, %v4276
      %v4308 = vadd.f32 %v4307, %v4277
      %v4309 = vadd.f32 %v4308, %v4278
      %v4310 = vadd.f32 %v4309, %v4279
      %v4311 = vadd.f32 %v4310, %v4280
      %v4312 = vadd.f32 %v4311, %v4281
      %v4313 = vadd.f32 %v4312, %v4282
      %v4314 = vadd.f32 %v4313, %v4283
      %v4315 = vadd.f32 %v4314, %v4284
      %v4316 = vadd.f32 %v4315, %v4285
      %v4317 = vadd.f32 %v4316, %v4286
      %v4318 = vadd.f32 %v4317, %v4287
      %v4319 = vadd.f32 %v4318, %v4288
      %v4320 = vadd.f32 %v4319, %v4289
      %v4321 = vadd.f32 %v4320, %v4290
      %v4322 = vadd.f32 %v4321, %v4291
      %v4323 = vadd.f32 %v4322, %v4292
      %v4324 = vadd.f32 %v4323, %v4293
      %v4325 = vadd.f32 %v4324, %v4294
      %v4326 = vadd.f32 %v4325, %v4295
      %v4327 = vadd.f32 %v4326, %v4296
      %v4328 = vadd.f32 %v4327, %v4297
      %v4329 = vadd.f32 %v4328, %v4298
      %v4330 = vadd.f32 %v4329, %v4299
      %v4331 = vadd.f32 %v4330, %v4300
      %v4332 = vadd.f32 %v4331, %v4301
      %v4333 = vadd.f32 %v4332, %v4302
      %v4334 = vrot.slane %v4333, 4
      %v4335 = vadd.f32 %v4333, %v4334
      %v4336 = vrot.slane %v4335, 2
      %v4337 = vadd.f32 %v4335, %v4336
      %v4338 = vrot.slane %v4337, 1
      %v4339 = vadd.f32 %v4337, %v4338
      %4340 = vst [vmem:[%s175] sm:$0x1] %v4339
      %p4341 = scmp.lt.s32.totalorder %s15, 1
      %s4342 = scalar_select %p4341, %s15, 1
      %s4343 = scalar_lea.vmem %s2, %s4342
      %p4344 = scmp.lt.s32.totalorder %s15, 1
      %s4345 = scalar_select %p4344, %s15, 1
      %s4346 = scalar_lea.vmem %s3, %s4345
      // Predicated region
      $region29: #{block_forward.2} parent=27 // pred_check
        %p4347 = pneg %p80
      $region30: #{block_forward.2} parent=27 // pred_check_branch
        %4349 = sbr.rel (%p4347) target = $region32
      $region31: #{block_forward.2} parent=27 // pred_region
        _
      $region32: #{block_forward.2} parent=27 // pred_fallthru
        _
      // Predicated region
      $region33: #{block_forward.2} parent=27 // pred_check
        %p4350 = pneg %p106
      $region34: #{block_forward.2} parent=27 // pred_check_branch
        %4352 = sbr.rel (%p4350) target = $region36
      $region35: #{block_forward.2} parent=27 // pred_region
        _
      $region36: #{block_forward.2} parent=27 // pred_fallthru
        _
    $region28: #{block_forward.2} parent=5 // pred_fallthru
      _
    %p4353 = scmp.le.s32.totalorder 2, %s10
    // Predicated region
    $region37: #{block_forward.2} parent=5 // pred_check
      %p4354 = pneg %p4353
    $region38: #{block_forward.2} parent=5 // pred_check_branch
      %4356 = sbr.rel (%p4354) target = $region40
    $region39: #{block_forward.2} parent=5 // pred_region
      %s4357 = ssub.s32 %s10, 2
      // Predicated region
      $region41: #{block_forward.2} parent=39 // pred_check
        %p4358 = pneg %p86
      $region42: #{block_forward.2} parent=39 // pred_check_branch
        %4360 = sbr.rel (%p4358) target = $region44
      $region43: #{block_forward.2} parent=39 // pred_region
        %p4361 = scmp.lt.s32.totalorder %s16, 1
        %s4362 = scalar_select %p4361, %s16, 1
        %s4363 = scalar_lea.vmem %s2, %s4362
      $region44: #{block_forward.2} parent=39 // pred_fallthru
        _
      // Predicated region
      $region45: #{block_forward.2} parent=39 // pred_check
        %p4364 = pneg %p112
      $region46: #{block_forward.2} parent=39 // pred_check_branch
        %4366 = sbr.rel (%p4364) target = $region48
      $region47: #{block_forward.2} parent=39 // pred_region
        %p4367 = scmp.lt.s32.totalorder %s16, 1
        %s4368 = scalar_select %p4367, %s16, 1
        %s4369 = scalar_lea.vmem %s3, %s4368
      $region48: #{block_forward.2} parent=39 // pred_fallthru
        _
    $region40: #{block_forward.2} parent=5 // pred_fallthru
      _
  $region6: #{block_forward.2} parent=0 // loop_footer
    %s14 = sadd.s32 1, %s10
  $region7: #{block_forward.2} parent=0 // loop_footer_branch
    %9 = sbr.rel target = $region3
  $region8: #{block_forward.2} parent=0 // loop_exit
    _

</llo_original>
